<compile_context>
chip_gen: v5e
topology: v5e:2x2
jax: 0.10.0
libtpu: 0.0.40
codegen_flags: <defaults>
</compile_context>

<pallas_src>
import math
import functools

import numpy as np
import jax
import jax.numpy as jnp
from jax.experimental import pallas as pl
from jax.experimental.pallas import tpu as pltpu


_LN_EPS = 1e-5
_ROW_TILE = 512          # M tile for row-tiled kernels (multiple of 8)
_ATTN_TARGET_ROWS = 512  # target G*N rows per attention grid step


# ----------------------------------------------------------------------------
# small in-kernel helpers
# ----------------------------------------------------------------------------
def _gelu_tanh(x):
    # TODO(synk): torch nn.GELU default is the exact erf form; tanh approx used here.
    c = math.sqrt(2.0 / math.pi)
    return 0.5 * x * (1.0 + jnp.tanh(c * (x + 0.044715 * x * x * x)))


def _layernorm(y, g, b, eps):
    mean = jnp.mean(y, axis=-1, keepdims=True)
    var = jnp.mean(jnp.square(y - mean), axis=-1, keepdims=True)
    return (y - mean) * jax.lax.rsqrt(var + eps) * g + b


def _pick_row_tile(M, tm_max=_ROW_TILE):
    if M <= tm_max:
        return M, M
    Mp = ((M + tm_max - 1) // tm_max) * tm_max
    return tm_max, Mp


def _pad_rows(x, Mp):
    M = x.shape[0]
    return x if Mp == M else jnp.pad(x, ((0, Mp - M), (0, 0)))


# ----------------------------------------------------------------------------
# Kernel 1: fused linear + LayerNorm (patch embed, patch-merging reduction)
# ----------------------------------------------------------------------------
def _linear_ln_kernel(x_ref, w_ref, b_ref, g_ref, beta_ref, o_ref, *, eps):
    x = x_ref[...].astype(jnp.bfloat16)                               # (TM, K)
    y = jnp.dot(x, w_ref[...], preferred_element_type=jnp.float32) + b_ref[...]
    o_ref[...] = _layernorm(y, g_ref[...], beta_ref[...], eps).astype(o_ref.dtype)


def pallas_linear_ln(x, w_t, b, gamma, beta, *, eps=_LN_EPS):
    # x: (M, K); w_t: (K, N) bf16 (pre-transposed); returns LayerNorm(x @ w_t + b)
    M, K = x.shape
    N = w_t.shape[1]
    if b is None:
        b = jnp.zeros((N,), jnp.float32)
    tm, Mp = _pick_row_tile(M)
    xp = _pad_rows(x, Mp)
    out = pl.pallas_call(
        functools.partial(_linear_ln_kernel, eps=eps),
        out_shape=jax.ShapeDtypeStruct((Mp, N), x.dtype),
        grid=(Mp // tm,),
        in_specs=[
            pl.BlockSpec((tm, K), lambda i: (i, 0)),
            pl.BlockSpec((K, N), lambda i: (0, 0)),    # resident weight
            pl.BlockSpec((1, N), lambda i: (0, 0)),
            pl.BlockSpec((1, N), lambda i: (0, 0)),
            pl.BlockSpec((1, N), lambda i: (0, 0)),
        ],
        out_specs=pl.BlockSpec((tm, N), lambda i: (i, 0)),
        compiler_params=pltpu.CompilerParams(dimension_semantics=("parallel",)),
    )(xp, w_t,
      b.reshape(1, N).astype(jnp.float32),
      gamma.reshape(1, N).astype(jnp.float32),
      beta.reshape(1, N).astype(jnp.float32))
    return out if Mp == M else out[:M]


# ----------------------------------------------------------------------------
# Kernel 2: fused MLP  (fc1 -> GELU -> fc2 -> LayerNorm -> + residual)
# ----------------------------------------------------------------------------
def _mlp_kernel(x_ref, w1_ref, b1_ref, w2_ref, b2_ref, g_ref, beta_ref, o_ref, *, eps):
    x = x_ref[...].astype(jnp.float32)                                # (TM, C)
    h = jnp.dot(x.astype(jnp.bfloat16), w1_ref[...],
                preferred_element_type=jnp.float32) + b1_ref[...]     # (TM, 4C)
    h = _gelu_tanh(h)
    y = jnp.dot(h.astype(jnp.bfloat16), w2_ref[...],
                preferred_element_type=jnp.float32) + b2_ref[...]     # (TM, C)
    y = _layernorm(y, g_ref[...], beta_ref[...], eps)                 # SwinV2 post-norm
    o_ref[...] = (x + y).astype(o_ref.dtype)                          # fused residual


def pallas_fused_mlp(x, w1_t, b1, w2_t, b2, gamma, beta, *, eps=_LN_EPS):
    # x: (M, C); w1_t: (C, H) bf16; w2_t: (H, C) bf16
    M, C = x.shape
    Hd = w1_t.shape[1]
    tm, Mp = _pick_row_tile(M)
    xp = _pad_rows(x, Mp)
    out = pl.pallas_call(
        functools.partial(_mlp_kernel, eps=eps),
        out_shape=jax.ShapeDtypeStruct((Mp, C), x.dtype),
        grid=(Mp // tm,),
        in_specs=[
            pl.BlockSpec((tm, C), lambda i: (i, 0)),
            pl.BlockSpec((C, Hd), lambda i: (0, 0)),   # resident fc1 weight
            pl.BlockSpec((1, Hd), lambda i: (0, 0)),
            pl.BlockSpec((Hd, C), lambda i: (0, 0)),   # resident fc2 weight
            pl.BlockSpec((1, C), lambda i: (0, 0)),
            pl.BlockSpec((1, C), lambda i: (0, 0)),
            pl.BlockSpec((1, C), lambda i: (0, 0)),
        ],
        out_specs=pl.BlockSpec((tm, C), lambda i: (i, 0)),
        compiler_params=pltpu.CompilerParams(dimension_semantics=("parallel",)),
    )(xp, w1_t,
      b1.reshape(1, Hd).astype(jnp.float32),
      w2_t,
      b2.reshape(1, C).astype(jnp.float32),
      gamma.reshape(1, C).astype(jnp.float32),
      beta.reshape(1, C).astype(jnp.float32))
    return out if Mp == M else out[:M]


# ----------------------------------------------------------------------------
# Kernel 3: batched-window SwinV2 cosine attention (+ post-norm + residual)
# ----------------------------------------------------------------------------
def _window_attn_kernel(*refs, num_heads, has_mask, eps):
    if has_mask:
        (x_ref, qkvw_ref, qkvb_ref, ls_ref, bias_ref, mask_ref,
         projw_ref, projb_ref, g_ref, beta_ref, o_ref) = refs
    else:
        (x_ref, qkvw_ref, qkvb_ref, ls_ref, bias_ref,
         projw_ref, projb_ref, g_ref, beta_ref, o_ref) = refs
        mask_ref = None

    G, N, C = x_ref.shape
    hd = C // num_heads

    x = x_ref[...].astype(jnp.float32)                                # (G, N, C)
    # fused QKV projection for the whole window group (bf16 in, f32 acc)
    qkv = jnp.dot(x.astype(jnp.bfloat16), qkvw_ref[...],
                  preferred_element_type=jnp.float32) + qkvb_ref[...]  # (G, N, 3C)
    ls = ls_ref[...]                                                  # (1, nH) pre-exp'd
    mask = mask_ref[...].astype(jnp.float32) if has_mask else None    # (G, N, N)

    heads = []
    for h in range(num_heads):                                        # small static unroll
        q = qkv[:, :, h * hd:(h + 1) * hd]                            # (G, N, hd)
        k = qkv[:, :, C + h * hd:C + (h + 1) * hd]
        v = qkv[:, :, 2 * C + h * hd:2 * C + (h + 1) * hd]
        # cosine attention: F.normalize (eps=1e-12), kept in f32
        qn = q * jax.lax.rsqrt(jnp.maximum(jnp.sum(q * q, -1, keepdims=True), 1e-24))
        kn = k * jax.lax.rsqrt(jnp.maximum(jnp.sum(k * k, -1, keepdims=True), 1e-24))
        attn = jnp.einsum("gqd,gkd->gqk", qn, kn,
                          preferred_element_type=jnp.float32) * ls[0, h]
        attn = attn + bias_ref[h].astype(jnp.float32)                 # (N,N) -> bcast G
        if has_mask:
            attn = attn + mask
        m = jnp.max(attn, axis=-1, keepdims=True)
        e = jnp.exp(attn - m)
        p = e * pl.reciprocal(jnp.sum(e, axis=-1, keepdims=True), approx=True)
        heads.append(jnp.einsum("gqk,gkd->gqd",
                                p.astype(jnp.bfloat16), v.astype(jnp.bfloat16),
                                preferred_element_type=jnp.float32))  # (G, N, hd)
    out = jnp.concatenate(heads, axis=-1)                             # (G, N, C)

    y = jnp.dot(out.astype(jnp.bfloat16), projw_ref[...],
                preferred_element_type=jnp.float32) + projb_ref[...]  # (G, N, C)
    y = _layernorm(y, g_ref[...], beta_ref[...], eps)                 # SwinV2 post-norm
    o_ref[...] = (x + y).astype(o_ref.dtype)                          # fused residual


def _choose_window_group(Bw, N, target_rows=_ATTN_TARGET_ROWS):
    g = max(1, min(Bw, max(1, target_rows // max(N, 1))))
    while Bw % g:
        g -= 1
    return g


def pallas_window_attention(x_windows, qkv_wt, qkv_b, attn_scale, rel_bias, mask,
                            proj_wt, proj_b, norm_g, norm_b, num_heads, *, eps=_LN_EPS):
    # x_windows: (Bw, N, C); mask: None or (Bw, N, N); weights pre-transposed bf16.
    Bw, N, C = x_windows.shape
    G = _choose_window_group(Bw, N)
    has_mask = mask is not None

    in_specs = [
        pl.BlockSpec((G, N, C), lambda i: (i, 0, 0)),
        pl.BlockSpec((C, 3 * C), lambda i: (0, 0)),          # resident QKV weight
        pl.BlockSpec((1, 3 * C), lambda i: (0, 0)),
        pl.BlockSpec((1, num_heads), lambda i: (0, 0)),
        pl.BlockSpec((num_heads, N, N), lambda i: (0, 0, 0)),
    ]
    args = [x_windows, qkv_wt,
            qkv_b.reshape(1, 3 * C).astype(jnp.float32),
            attn_scale.reshape(1, num_heads).astype(jnp.float32),
            rel_bias.astype(jnp.float32)]
    if has_mask:
        in_specs.append(pl.BlockSpec((G, N, N), lambda i: (i, 0, 0)))
        args.append(mask)
    in_specs += [
        pl.BlockSpec((C, C), lambda i: (0, 0)),               # resident proj weight
        pl.BlockSpec((1, C), lambda i: (0, 0)),
        pl.BlockSpec((1, C), lambda i: (0, 0)),
        pl.BlockSpec((1, C), lambda i: (0, 0)),
    ]
    args += [proj_wt,
             proj_b.reshape(1, C).astype(jnp.float32),
             norm_g.reshape(1, C).astype(jnp.float32),
             norm_b.reshape(1, C).astype(jnp.float32)]

    return pl.pallas_call(
        functools.partial(_window_attn_kernel, num_heads=num_heads,
                          has_mask=has_mask, eps=eps),
        out_shape=jax.ShapeDtypeStruct((Bw, N, C), x_windows.dtype),
        grid=(Bw // G,),
        in_specs=in_specs,
        out_specs=pl.BlockSpec((G, N, C), lambda i: (i, 0, 0)),
        compiler_params=pltpu.CompilerParams(dimension_semantics=("parallel",)),
    )(*args)


# ----------------------------------------------------------------------------
# SwinV2 glue (plain JAX / numpy): windows, shift masks, continuous rel. bias
# ----------------------------------------------------------------------------
def window_partition(x, ws):
    B, H, W, C = x.shape
    x = x.reshape(B, H // ws, ws, W // ws, ws, C)
    return x.transpose(0, 1, 3, 2, 4, 5).reshape(-1, ws * ws, C)


def window_reverse(windows, ws, H, W, C):
    B = windows.shape[0] // ((H // ws) * (W // ws))
    x = windows.reshape(B, H // ws, W // ws, ws, ws, C)
    return x.transpose(0, 1, 3, 2, 4, 5).reshape(B, H, W, C)


def compute_rel_bias(ws, num_heads, cpb_w1, cpb_b1, cpb_w2):
    # log-spaced relative coords table -> CPB MLP -> 16*sigmoid, gathered to (nH, N, N)
    rel = np.arange(-(ws - 1), ws, dtype=np.float32)
    table = np.stack(np.meshgrid(rel, rel, indexing="ij"), axis=-1)   # (2ws-1, 2ws-1, 2)
    if ws > 1:
        table = table / float(ws - 1)
    table = table * 8.0
    table = np.sign(table) * np.log2(np.abs(table) + 1.0) / np.log2(8.0)
    t = jnp.asarray(table.reshape(-1, 2), jnp.float32)
    h = jax.nn.relu(t @ cpb_w1.T + cpb_b1)
    bias_table = h @ cpb_w2.T                                          # ((2ws-1)^2, nH)

    coords = np.stack(np.meshgrid(np.arange(ws), np.arange(ws), indexing="ij"))
    cf = coords.reshape(2, -1)
    relc = (cf[:, :, None] - cf[:, None, :]).transpose(1, 2, 0) + (ws - 1)
    idx = relc[..., 0] * (2 * ws - 1) + relc[..., 1]                   # (N, N)
    bias = bias_table[jnp.asarray(idx.reshape(-1))].reshape(ws * ws, ws * ws, num_heads)
    bias = jnp.transpose(bias, (2, 0, 1))
    return 16.0 * jax.nn.sigmoid(bias)                                 # (nH, N, N)


def compute_attn_mask(H, W, ws, shift):
    nW = (H // ws) * (W // ws)
    if shift == 0:
        return jnp.zeros((nW, ws * ws, ws * ws), jnp.float32)
    img_mask = np.zeros((1, H, W, 1), np.float32)
    slices = (slice(0, -ws), slice(-ws, -shift), slice(-shift, None))
    cnt = 0
    for hs in slices:
        for wsl in slices:
            img_mask[:, hs, wsl, :] = cnt
            cnt += 1
    mw = (img_mask.reshape(1, H // ws, ws, W // ws, ws, 1)
          .transpose(0, 1, 3, 2, 4, 5).reshape(-1, ws * ws))
    diff = mw[:, None, :] - mw[:, :, None]
    return jnp.asarray(np.where(diff != 0, -100.0, 0.0).astype(np.float32))


# ----------------------------------------------------------------------------
# Parameters (deterministic, synthetic — no checkpoint loading)
# ----------------------------------------------------------------------------
def init_params(key, in_chans, embed_dim, depths, num_heads, patch_size):
    def trunc(k, shape, std=0.02):
        return std * jax.random.truncated_normal(k, -2.0, 2.0, shape, jnp.float32)

    keys = iter(jax.random.split(key, 256))
    params = {
        "patch_embed": {
            "proj_w": trunc(next(keys), (embed_dim, in_chans * patch_size * patch_size)),
            "proj_b": jnp.zeros((embed_dim,), jnp.float32),
            "norm_g": jnp.ones((embed_dim,), jnp.float32),
            "norm_b": jnp.zeros((embed_dim,), jnp.float32),
        },
        "layers": [],
    }
    dim = embed_dim
    for i, depth in enumerate(depths):
        nH = num_heads[i]
        blocks = []
        for _ in range(depth):
            blocks.append({
                "qkv_w": trunc(next(keys), (3 * dim, dim)),
                "q_bias": jnp.zeros((dim,), jnp.float32),
                "v_bias": jnp.zeros((dim,), jnp.float32),
                "logit_scale": jnp.full((nH,), math.log(10.0), jnp.float32),
                "cpb_w1": trunc(next(keys), (512, 2)),
                "cpb_b1": jnp.zeros((512,), jnp.float32),
                "cpb_w2": trunc(next(keys), (nH, 512)),
                "proj_w": trunc(next(keys), (dim, dim)),
                "proj_b": jnp.zeros((dim,), jnp.float32),
                "norm1_g": jnp.ones((dim,), jnp.float32),
                "norm1_b": jnp.zeros((dim,), jnp.float32),
                "fc1_w": trunc(next(keys), (4 * dim, dim)),
                "fc1_b": jnp.zeros((4 * dim,), jnp.float32),
                "fc2_w": trunc(next(keys), (dim, 4 * dim)),
                "fc2_b": jnp.zeros((dim,), jnp.float32),
                "norm2_g": jnp.ones((dim,), jnp.float32),
                "norm2_b": jnp.zeros((dim,), jnp.float32),
            })
        layer = {"blocks": blocks}
        if i < len(depths) - 1:
            layer["downsample"] = {
                "reduction_w": trunc(next(keys), (2 * dim, 4 * dim)),
                "norm_g": jnp.ones((2 * dim,), jnp.float32),
                "norm_b": jnp.zeros((2 * dim,), jnp.float32),
            }
            dim *= 2
        params["layers"].append(layer)
    return params


def prepare_params(params):
    """One-time prep: transpose weights to (K, N) bf16 (lane-dense MXU RHS),
    build the (q,0,v) qkv bias and the clamped/exp'd cosine-attention scale."""
    pe = params["patch_embed"]
    rp = {
        "patch_embed": {
            "proj_wt": pe["proj_w"].T.astype(jnp.bfloat16),
            "proj_b": pe["proj_b"],
            "norm_g": pe["norm_g"], "norm_b": pe["norm_b"],
        },
        "layers": [],
    }
    for layer in params["layers"]:
        blocks = []
        for blk in layer["blocks"]:
            qkv_bias = jnp.concatenate(
                [blk["q_bias"], jnp.zeros_like(blk["v_bias"]), blk["v_bias"]])
            blocks.append({
                "qkv_wt": blk["qkv_w"].T.astype(jnp.bfloat16),
                "qkv_b": qkv_bias,
                "attn_scale": jnp.exp(jnp.minimum(blk["logit_scale"],
                                                  math.log(1.0 / 0.01))),
                "cpb_w1": blk["cpb_w1"], "cpb_b1": blk["cpb_b1"], "cpb_w2": blk["cpb_w2"],
                "proj_wt": blk["proj_w"].T.astype(jnp.bfloat16),
                "proj_b": blk["proj_b"],
                "norm1_g": blk["norm1_g"], "norm1_b": blk["norm1_b"],
                "fc1_wt": blk["fc1_w"].T.astype(jnp.bfloat16),
                "fc1_b": blk["fc1_b"],
                "fc2_wt": blk["fc2_w"].T.astype(jnp.bfloat16),
                "fc2_b": blk["fc2_b"],
                "norm2_g": blk["norm2_g"], "norm2_b": blk["norm2_b"],
            })
        lyr = {"blocks": blocks}
        if "downsample" in layer:
            ds = layer["downsample"]
            lyr["downsample"] = {
                "reduction_wt": ds["reduction_w"].T.astype(jnp.bfloat16),
                "norm_g": ds["norm_g"], "norm_b": ds["norm_b"],
            }
        rp["layers"].append(lyr)
    return rp


# ----------------------------------------------------------------------------
# Forward pass (mirrors CustomSwinEncoder.forward: patch_embed -> pos_drop
# (identity at eval) -> layers; self.model.norm is None so no final norm)
# ----------------------------------------------------------------------------
def custom_swin_encoder_forward(x, rp, *, patch_size, window_size, num_heads):
    B, Cin, Himg, Wimg = x.shape
    p = patch_size
    Hp, Wp = Himg // p, Wimg // p

    # PatchEmbed: Conv2d(k=s=patch) == unfold + matmul, fused with LayerNorm
    xp = (x.reshape(B, Cin, Hp, p, Wp, p)
           .transpose(0, 2, 4, 1, 3, 5)
           .reshape(B * Hp * Wp, Cin * p * p))
    pe = rp["patch_embed"]
    C = pe["proj_wt"].shape[1]
    t = pallas_linear_ln(xp, pe["proj_wt"], pe["proj_b"], pe["norm_g"], pe["norm_b"])
    xt = t.reshape(B, Hp * Wp, C)
    H, W = Hp, Wp

    for li, layer in enumerate(rp["layers"]):
        nH = num_heads[li]
        ws_eff = min(window_size, H, W)
        shift_masks = {}                       # hoisted per-layer shifted masks
        for bi, blk in enumerate(layer["blocks"]):
            shift = 0 if (bi % 2 == 0 or min(H, W) <= window_size) else window_size // 2
            rel_bias = compute_rel_bias(ws_eff, nH, blk["cpb_w1"], blk["cpb_b1"],
                                        blk["cpb_w2"])
            if shift > 0:
                if shift not in shift_masks:
                    m = compute_attn_mask(H, W, ws_eff, shift)       # (nW, N, N)
                    shift_masks[shift] = jnp.tile(m, (B, 1, 1))      # (Bw, N, N)
                mask = shift_masks[shift]
            else:
                mask = None                    # zero mask skipped entirely

            xi = xt.reshape(B, H, W, C)
            if shift > 0:
                xi = jnp.roll(xi, (-shift, -shift), axis=(1, 2))
            xw = window_partition(xi, ws_eff)                        # (B*nW, N, C)
            # attention kernel already applies norm1 + residual (both commute
            # with the roll/window permutation, and the permuted shortcut == xw)
            yw = pallas_window_attention(xw, blk["qkv_wt"], blk["qkv_b"],
                                         blk["attn_scale"], rel_bias, mask,
                                         blk["proj_wt"], blk["proj_b"],
                                         blk["norm1_g"], blk["norm1_b"], nH)
            xr = window_reverse(yw, ws_eff, H, W, C)
            if shift > 0:
                xr = jnp.roll(xr, (shift, shift), axis=(1, 2))
            xt = xr.reshape(B, H * W, C)

            # fused MLP: fc1 + GELU + fc2 + norm2 + residual in one kernel
            xt = pallas_fused_mlp(xt.reshape(B * H * W, C),
                                  blk["fc1_wt"], blk["fc1_b"],
                                  blk["fc2_wt"], blk["fc2_b"],
                                  blk["norm2_g"], blk["norm2_b"]).reshape(B, H * W, C)

        if "downsample" in layer:
            ds = layer["downsample"]
            xi = xt.reshape(B, H, W, C)
            x0 = xi[:, 0::2, 0::2, :]
            x1 = xi[:, 1::2, 0::2, :]
            x2 = xi[:, 0::2, 1::2, :]
            x3 = xi[:, 1::2, 1::2, :]
            xm = jnp.concatenate([x0, x1, x2, x3], axis=-1).reshape(
                B * (H // 2) * (W // 2), 4 * C)
            # V2 PatchMerging: bias-free reduction then LayerNorm (fused)
            xm = pallas_linear_ln(xm, ds["reduction_wt"], None,
                                  ds["norm_g"], ds["norm_b"])
            H, W, C = H // 2, W // 2, 2 * C
            xt = xm.reshape(B, H * W, C)

    return xt


# ----------------------------------------------------------------------------
if __name__ == "__main__":
    # Small synthetic configuration consistent with the module's forward:
    # img 16x16, patch 4, embed_dim 32, depths [2,2], heads [2,4], window 2.
    input_size = [16, 16]
    window_size = 2
    depths = [2, 2]
    num_heads = [2, 4]
    embed_dim = 32
    patch_size = 4
    in_chans = 3
    batch = 2

    key = jax.random.PRNGKey(0)
    k_params, k_x = jax.random.split(key)
    params = init_params(k_params, in_chans, embed_dim, depths, num_heads, patch_size)
    rparams = prepare_params(params)
    x = jax.random.normal(k_x, (batch, in_chans, input_size[0], input_size[1]), jnp.float32)

    forward_fn = jax.jit(functools.partial(custom_swin_encoder_forward,
                                           patch_size=patch_size,
                                           window_size=window_size,
                                           num_heads=tuple(num_heads)))
    out = forward_fn(x, rparams)
    out = jax.block_until_ready(out)

    final_hw = (input_size[0] // patch_size // 2) * (input_size[1] // patch_size // 2)
    assert out.shape == (batch, final_hw, embed_dim * 2), out.shape
    assert bool(jnp.all(jnp.isfinite(out)))
    print("KERNEL_OK")
</pallas_src>

<mosaic_0001>
module attributes {stable_mosaic.version = 11 : i64} {
  func.func @_linear_ln_kernel(%arg0: i32, %arg1: memref<32x48xf32, #tpu.memory_space<vmem>>, %arg2: memref<48x32xbf16, #tpu.memory_space<vmem>>, %arg3: memref<1x32xf32, #tpu.memory_space<vmem>>, %arg4: memref<1x32xf32, #tpu.memory_space<vmem>>, %arg5: memref<1x32xf32, #tpu.memory_space<vmem>>, %arg6: memref<32x32xf32, #tpu.memory_space<vmem>>) attributes {dimension_semantics = [#tpu.dimension_semantics<parallel>], iteration_bounds = array<i64: 1>, scalar_prefetch = 0 : i64, scratch_operands = 0 : i64, tpu.core_type = #tpu.core_type<tc>, window_params = [{transform_indices = @transform_0, window_bounds = array<i64: 32, 48>}, {pipeline_mode = #tpu.pipeline_mode<synchronous>, transform_indices = @transform_1, window_bounds = array<i64: 48, 32>}, {pipeline_mode = #tpu.pipeline_mode<synchronous>, transform_indices = @transform_2, window_bounds = array<i64: 1, 32>}, {pipeline_mode = #tpu.pipeline_mode<synchronous>, transform_indices = @transform_3, window_bounds = array<i64: 1, 32>}, {pipeline_mode = #tpu.pipeline_mode<synchronous>, transform_indices = @transform_4, window_bounds = array<i64: 1, 32>}, {transform_indices = @transform_5, window_bounds = array<i64: 32, 32>}]} {
    %c0 = arith.constant 0 : index
    %c0_0 = arith.constant 0 : index
    %0 = vector.load %arg1[%c0, %c0_0] : memref<32x48xf32, #tpu.memory_space<vmem>>, vector<32x48xf32>
    %1 = arith.truncf %0 : vector<32x48xf32> to vector<32x48xbf16>
    %c0_1 = arith.constant 0 : index
    %c0_2 = arith.constant 0 : index
    %2 = vector.load %arg2[%c0_1, %c0_2] : memref<48x32xbf16, #tpu.memory_space<vmem>>, vector<48x32xbf16>
    %cst = arith.constant dense<0.000000e+00> : vector<32x32xf32>
    %3 = tpu.matmul %1, %2, %cst {dimension_numbers = #tpu.dot_dimension_numbers<[1], [0], [0], [1], [0, 0, 1, 1], [], []>} : vector<32x48xbf16>, vector<48x32xbf16>, vector<32x32xf32> -> vector<32x32xf32>
    %c0_3 = arith.constant 0 : index
    %c0_4 = arith.constant 0 : index
    %4 = vector.load %arg3[%c0_3, %c0_4] : memref<1x32xf32, #tpu.memory_space<vmem>>, vector<1x32xf32>
    %5 = vector.broadcast %4 : vector<1x32xf32> to vector<32x32xf32>
    %6 = arith.addf %3, %5 : vector<32x32xf32>
    %c0_5 = arith.constant 0 : index
    %c0_6 = arith.constant 0 : index
    %7 = vector.load %arg4[%c0_5, %c0_6] : memref<1x32xf32, #tpu.memory_space<vmem>>, vector<1x32xf32>
    %c0_7 = arith.constant 0 : index
    %c0_8 = arith.constant 0 : index
    %8 = vector.load %arg5[%c0_7, %c0_8] : memref<1x32xf32, #tpu.memory_space<vmem>>, vector<1x32xf32>
    %cst_9 = arith.constant dense<0.000000e+00> : vector<32xf32>
    %9 = vector.multi_reduction <add>, %6, %cst_9 [1] : vector<32x32xf32> to vector<32xf32>
    %10 = vector.shape_cast %9 : vector<32xf32> to vector<32x1xf32>
    %cst_10 = arith.constant 3.200000e+01 : f32
    %11 = vector.broadcast %cst_10 : f32 to vector<32x1xf32>
    %12 = arith.divf %10, %11 : vector<32x1xf32>
    %13 = vector.broadcast %12 : vector<32x1xf32> to vector<32x32xf32>
    %14 = arith.subf %6, %13 : vector<32x32xf32>
    %15 = arith.mulf %14, %14 : vector<32x32xf32>
    %cst_11 = arith.constant dense<0.000000e+00> : vector<32xf32>
    %16 = vector.multi_reduction <add>, %15, %cst_11 [1] : vector<32x32xf32> to vector<32xf32>
    %17 = vector.shape_cast %16 : vector<32xf32> to vector<32x1xf32>
    %cst_12 = arith.constant 3.200000e+01 : f32
    %18 = vector.broadcast %cst_12 : f32 to vector<32x1xf32>
    %19 = arith.divf %17, %18 : vector<32x1xf32>
    %20 = vector.broadcast %12 : vector<32x1xf32> to vector<32x32xf32>
    %21 = arith.subf %6, %20 : vector<32x32xf32>
    %cst_13 = arith.constant 9.99999974E-6 : f32
    %22 = vector.broadcast %cst_13 : f32 to vector<32x1xf32>
    %23 = arith.addf %19, %22 : vector<32x1xf32>
    %24 = math.rsqrt %23 : vector<32x1xf32>
    %25 = vector.broadcast %24 : vector<32x1xf32> to vector<32x32xf32>
    %26 = arith.mulf %21, %25 : vector<32x32xf32>
    %27 = vector.broadcast %7 : vector<1x32xf32> to vector<32x32xf32>
    %28 = arith.mulf %26, %27 : vector<32x32xf32>
    %29 = vector.broadcast %8 : vector<1x32xf32> to vector<32x32xf32>
    %30 = arith.addf %28, %29 : vector<32x32xf32>
    %c0_14 = arith.constant 0 : index
    %c0_15 = arith.constant 0 : index
    %31 = vector.load %arg6[%c0_14, %c0_15] : memref<32x32xf32, #tpu.memory_space<vmem>>, vector<32x32xf32>
    tpu.vector_store %arg6[%c0_14, %c0_15], %30 {strides = array<i32>} : memref<32x32xf32, #tpu.memory_space<vmem>>, vector<32x32xf32>,
    return
  }
  func.func @transform_0(%arg0: i32) -> (i32, i32) {
    %c0_i32 = arith.constant 0 : i32
    %c0_i32_0 = arith.constant 0 : i32
    return %arg0, %c0_i32 : i32, i32
  }
  func.func @transform_1(%arg0: i32) -> (i32, i32) {
    %c0_i32 = arith.constant 0 : i32
    %c0_i32_0 = arith.constant 0 : i32
    %c0_i32_1 = arith.constant 0 : i32
    return %c0_i32, %c0_i32_0 : i32, i32
  }
  func.func @transform_2(%arg0: i32) -> (i32, i32) {
    %c0_i32 = arith.constant 0 : i32
    %c0_i32_0 = arith.constant 0 : i32
    %c0_i32_1 = arith.constant 0 : i32
    return %c0_i32, %c0_i32_0 : i32, i32
  }
  func.func @transform_3(%arg0: i32) -> (i32, i32) {
    %c0_i32 = arith.constant 0 : i32
    %c0_i32_0 = arith.constant 0 : i32
    %c0_i32_1 = arith.constant 0 : i32
    return %c0_i32, %c0_i32_0 : i32, i32
  }
  func.func @transform_4(%arg0: i32) -> (i32, i32) {
    %c0_i32 = arith.constant 0 : i32
    %c0_i32_0 = arith.constant 0 : i32
    %c0_i32_1 = arith.constant 0 : i32
    return %c0_i32, %c0_i32_0 : i32, i32
  }
  func.func @transform_5(%arg0: i32) -> (i32, i32) {
    %c0_i32 = arith.constant 0 : i32
    %c0_i32_0 = arith.constant 0 : i32
    return %arg0, %c0_i32 : i32, i32
  }
}

module attributes {stable_mosaic.version = 11 : i64} {
  func.func @_mlp_kernel(%arg0: i32, %arg1: memref<32x32xf32, #tpu.memory_space<vmem>>, %arg2: memref<32x128xbf16, #tpu.memory_space<vmem>>, %arg3: memref<1x128xf32, #tpu.memory_space<vmem>>, %arg4: memref<128x32xbf16, #tpu.memory_space<vmem>>, %arg5: memref<1x32xf32, #tpu.memory_space<vmem>>, %arg6: memref<1x32xf32, #tpu.memory_space<vmem>>, %arg7: memref<1x32xf32, #tpu.memory_space<vmem>>, %arg8: memref<32x32xf32, #tpu.memory_space<vmem>>) attributes {dimension_semantics = [#tpu.dimension_semantics<parallel>], iteration_bounds = array<i64: 1>, scalar_prefetch = 0 : i64, scratch_operands = 0 : i64, tpu.core_type = #tpu.core_type<tc>, window_params = [{transform_indices = @transform_0, window_bounds = array<i64: 32, 32>}, {pipeline_mode = #tpu.pipeline_mode<synchronous>, transform_indices = @transform_1, window_bounds = array<i64: 32, 128>}, {pipeline_mode = #tpu.pipeline_mode<synchronous>, transform_indices = @transform_2, window_bounds = array<i64: 1, 128>}, {pipeline_mode = #tpu.pipeline_mode<synchronous>, transform_indices = @transform_3, window_bounds = array<i64: 128, 32>}, {pipeline_mode = #tpu.pipeline_mode<synchronous>, transform_indices = @transform_4, window_bounds = array<i64: 1, 32>}, {pipeline_mode = #tpu.pipeline_mode<synchronous>, transform_indices = @transform_5, window_bounds = array<i64: 1, 32>}, {pipeline_mode = #tpu.pipeline_mode<synchronous>, transform_indices = @transform_6, window_bounds = array<i64: 1, 32>}, {transform_indices = @transform_7, window_bounds = array<i64: 32, 32>}]} {
    %c0 = arith.constant 0 : index
    %c0_0 = arith.constant 0 : index
    %0 = vector.load %arg1[%c0, %c0_0] : memref<32x32xf32, #tpu.memory_space<vmem>>, vector<32x32xf32>
    %1 = arith.truncf %0 : vector<32x32xf32> to vector<32x32xbf16>
    %c0_1 = arith.constant 0 : index
    %c0_2 = arith.constant 0 : index
    %2 = vector.load %arg2[%c0_1, %c0_2] : memref<32x128xbf16, #tpu.memory_space<vmem>>, vector<32x128xbf16>
    %cst = arith.constant dense<0.000000e+00> : vector<32x128xf32>
    %3 = tpu.matmul %1, %2, %cst {dimension_numbers = #tpu.dot_dimension_numbers<[1], [0], [0], [1], [0, 0, 1, 1], [], []>} : vector<32x32xbf16>, vector<32x128xbf16>, vector<32x128xf32> -> vector<32x128xf32>
    %c0_3 = arith.constant 0 : index
    %c0_4 = arith.constant 0 : index
    %4 = vector.load %arg3[%c0_3, %c0_4] : memref<1x128xf32, #tpu.memory_space<vmem>>, vector<1x128xf32>
    %5 = vector.broadcast %4 : vector<1x128xf32> to vector<32x128xf32>
    %6 = arith.addf %3, %5 : vector<32x128xf32>
    %cst_5 = arith.constant 5.000000e-01 : f32
    %7 = vector.broadcast %cst_5 : f32 to vector<32x128xf32>
    %8 = arith.mulf %7, %6 : vector<32x128xf32>
    %cst_6 = arith.constant 4.471500e-02 : f32
    %9 = vector.broadcast %cst_6 : f32 to vector<32x128xf32>
    %10 = arith.mulf %9, %6 : vector<32x128xf32>
    %11 = arith.mulf %10, %6 : vector<32x128xf32>
    %12 = arith.mulf %11, %6 : vector<32x128xf32>
    %13 = arith.addf %6, %12 : vector<32x128xf32>
    %cst_7 = arith.constant 0.797884583 : f32
    %14 = vector.broadcast %cst_7 : f32 to vector<32x128xf32>
    %15 = arith.mulf %14, %13 : vector<32x128xf32>
    %16 = math.tanh %15 : vector<32x128xf32>
    %cst_8 = arith.constant 1.000000e+00 : f32
    %17 = vector.broadcast %cst_8 : f32 to vector<32x128xf32>
    %18 = arith.addf %17, %16 : vector<32x128xf32>
    %19 = arith.mulf %8, %18 : vector<32x128xf32>
    %20 = arith.truncf %19 : vector<32x128xf32> to vector<32x128xbf16>
    %c0_9 = arith.constant 0 : index
    %c0_10 = arith.constant 0 : index
    %21 = vector.load %arg4[%c0_9, %c0_10] : memref<128x32xbf16, #tpu.memory_space<vmem>>, vector<128x32xbf16>
    %cst_11 = arith.constant dense<0.000000e+00> : vector<32x32xf32>
    %22 = tpu.matmul %20, %21, %cst_11 {dimension_numbers = #tpu.dot_dimension_numbers<[1], [0], [0], [1], [0, 0, 1, 1], [], []>} : vector<32x128xbf16>, vector<128x32xbf16>, vector<32x32xf32> -> vector<32x32xf32>
    %c0_12 = arith.constant 0 : index
    %c0_13 = arith.constant 0 : index
    %23 = vector.load %arg5[%c0_12, %c0_13] : memref<1x32xf32, #tpu.memory_space<vmem>>, vector<1x32xf32>
    %24 = vector.broadcast %23 : vector<1x32xf32> to vector<32x32xf32>
    %25 = arith.addf %22, %24 : vector<32x32xf32>
    %c0_14 = arith.constant 0 : index
    %c0_15 = arith.constant 0 : index
    %26 = vector.load %arg6[%c0_14, %c0_15] : memref<1x32xf32, #tpu.memory_space<vmem>>, vector<1x32xf32>
    %c0_16 = arith.constant 0 : index
    %c0_17 = arith.constant 0 : index
    %27 = vector.load %arg7[%c0_16, %c0_17] : memref<1x32xf32, #tpu.memory_space<vmem>>, vector<1x32xf32>
    %cst_18 = arith.constant dense<0.000000e+00> : vector<32xf32>
    %28 = vector.multi_reduction <add>, %25, %cst_18 [1] : vector<32x32xf32> to vector<32xf32>
    %29 = vector.shape_cast %28 : vector<32xf32> to vector<32x1xf32>
    %cst_19 = arith.constant 3.200000e+01 : f32
    %30 = vector.broadcast %cst_19 : f32 to vector<32x1xf32>
    %31 = arith.divf %29, %30 : vector<32x1xf32>
    %32 = vector.broadcast %31 : vector<32x1xf32> to vector<32x32xf32>
    %33 = arith.subf %25, %32 : vector<32x32xf32>
    %34 = arith.mulf %33, %33 : vector<32x32xf32>
    %cst_20 = arith.constant dense<0.000000e+00> : vector<32xf32>
    %35 = vector.multi_reduction <add>, %34, %cst_20 [1] : vector<32x32xf32> to vector<32xf32>
    %36 = vector.shape_cast %35 : vector<32xf32> to vector<32x1xf32>
    %cst_21 = arith.constant 3.200000e+01 : f32
    %37 = vector.broadcast %cst_21 : f32 to vector<32x1xf32>
    %38 = arith.divf %36, %37 : vector<32x1xf32>
    %39 = vector.broadcast %31 : vector<32x1xf32> to vector<32x32xf32>
    %40 = arith.subf %25, %39 : vector<32x32xf32>
    %cst_22 = arith.constant 9.99999974E-6 : f32
    %41 = vector.broadcast %cst_22 : f32 to vector<32x1xf32>
    %42 = arith.addf %38, %41 : vector<32x1xf32>
    %43 = math.rsqrt %42 : vector<32x1xf32>
    %44 = vector.broadcast %43 : vector<32x1xf32> to vector<32x32xf32>
    %45 = arith.mulf %40, %44 : vector<32x32xf32>
    %46 = vector.broadcast %26 : vector<1x32xf32> to vector<32x32xf32>
    %47 = arith.mulf %45, %46 : vector<32x32xf32>
    %48 = vector.broadcast %27 : vector<1x32xf32> to vector<32x32xf32>
    %49 = arith.addf %47, %48 : vector<32x32xf32>
    %50 = arith.addf %0, %49 : vector<32x32xf32>
    %c0_23 = arith.constant 0 : index
    %c0_24 = arith.constant 0 : index
    %51 = vector.load %arg8[%c0_23, %c0_24] : memref<32x32xf32, #tpu.memory_space<vmem>>, vector<32x32xf32>
    tpu.vector_store %arg8[%c0_23, %c0_24], %50 {strides = array<i32>} : memref<32x32xf32, #tpu.memory_space<vmem>>, vector<32x32xf32>,
    return
  }
  func.func @transform_0(%arg0: i32) -> (i32, i32) {
    %c0_i32 = arith.constant 0 : i32
    %c0_i32_0 = arith.constant 0 : i32
    return %arg0, %c0_i32 : i32, i32
  }
  func.func @transform_1(%arg0: i32) -> (i32, i32) {
    %c0_i32 = arith.constant 0 : i32
    %c0_i32_0 = arith.constant 0 : i32
    %c0_i32_1 = arith.constant 0 : i32
    return %c0_i32, %c0_i32_0 : i32, i32
  }
  func.func @transform_2(%arg0: i32) -> (i32, i32) {
    %c0_i32 = arith.constant 0 : i32
    %c0_i32_0 = arith.constant 0 : i32
    %c0_i32_1 = arith.constant 0 : i32
    return %c0_i32, %c0_i32_0 : i32, i32
  }
  func.func @transform_3(%arg0: i32) -> (i32, i32) {
    %c0_i32 = arith.constant 0 : i32
    %c0_i32_0 = arith.constant 0 : i32
    %c0_i32_1 = arith.constant 0 : i32
    return %c0_i32, %c0_i32_0 : i32, i32
  }
  func.func @transform_4(%arg0: i32) -> (i32, i32) {
    %c0_i32 = arith.constant 0 : i32
    %c0_i32_0 = arith.constant 0 : i32
    %c0_i32_1 = arith.constant 0 : i32
    return %c0_i32, %c0_i32_0 : i32, i32
  }
  func.func @transform_5(%arg0: i32) -> (i32, i32) {
    %c0_i32 = arith.constant 0 : i32
    %c0_i32_0 = arith.constant 0 : i32
    %c0_i32_1 = arith.constant 0 : i32
    return %c0_i32, %c0_i32_0 : i32, i32
  }
  func.func @transform_6(%arg0: i32) -> (i32, i32) {
    %c0_i32 = arith.constant 0 : i32
    %c0_i32_0 = arith.constant 0 : i32
    %c0_i32_1 = arith.constant 0 : i32
    return %c0_i32, %c0_i32_0 : i32, i32
  }
  func.func @transform_7(%arg0: i32) -> (i32, i32) {
    %c0_i32 = arith.constant 0 : i32
    %c0_i32_0 = arith.constant 0 : i32
    return %arg0, %c0_i32 : i32, i32
  }
}

module attributes {stable_mosaic.version = 11 : i64} {
  func.func @_window_attn_kernel(%arg0: i32, %arg1: memref<8x4x32xf32, #tpu.memory_space<vmem>>, %arg2: memref<32x96xbf16, #tpu.memory_space<vmem>>, %arg3: memref<1x96xf32, #tpu.memory_space<vmem>>, %arg4: memref<1x2xf32, #tpu.memory_space<vmem>>, %arg5: memref<2x4x4xf32, #tpu.memory_space<vmem>>, %arg6: memref<32x32xbf16, #tpu.memory_space<vmem>>, %arg7: memref<1x32xf32, #tpu.memory_space<vmem>>, %arg8: memref<1x32xf32, #tpu.memory_space<vmem>>, %arg9: memref<1x32xf32, #tpu.memory_space<vmem>>, %arg10: memref<8x4x32xf32, #tpu.memory_space<vmem>>) attributes {dimension_semantics = [#tpu.dimension_semantics<parallel>], iteration_bounds = array<i64: 1>, scalar_prefetch = 0 : i64, scratch_operands = 0 : i64, tpu.core_type = #tpu.core_type<tc>, window_params = [{transform_indices = @transform_0, window_bounds = array<i64: 8, 4, 32>}, {pipeline_mode = #tpu.pipeline_mode<synchronous>, transform_indices = @transform_1, window_bounds = array<i64: 32, 96>}, {pipeline_mode = #tpu.pipeline_mode<synchronous>, transform_indices = @transform_2, window_bounds = array<i64: 1, 96>}, {pipeline_mode = #tpu.pipeline_mode<synchronous>, transform_indices = @transform_3, window_bounds = array<i64: 1, 2>}, {pipeline_mode = #tpu.pipeline_mode<synchronous>, transform_indices = @transform_4, window_bounds = array<i64: 2, 4, 4>}, {pipeline_mode = #tpu.pipeline_mode<synchronous>, transform_indices = @transform_5, window_bounds = array<i64: 32, 32>}, {pipeline_mode = #tpu.pipeline_mode<synchronous>, transform_indices = @transform_6, window_bounds = array<i64: 1, 32>}, {pipeline_mode = #tpu.pipeline_mode<synchronous>, transform_indices = @transform_7, window_bounds = array<i64: 1, 32>}, {pipeline_mode = #tpu.pipeline_mode<synchronous>, transform_indices = @transform_8, window_bounds = array<i64: 1, 32>}, {transform_indices = @transform_9, window_bounds = array<i64: 8, 4, 32>}]} {
    %c0 = arith.constant 0 : index
    %c0_0 = arith.constant 0 : index
    %c0_1 = arith.constant 0 : index
    %0 = vector.load %arg1[%c0, %c0_0, %c0_1] : memref<8x4x32xf32, #tpu.memory_space<vmem>>, vector<8x4x32xf32>
    %1 = arith.truncf %0 : vector<8x4x32xf32> to vector<8x4x32xbf16>
    %c0_2 = arith.constant 0 : index
    %c0_3 = arith.constant 0 : index
    %2 = vector.load %arg2[%c0_2, %c0_3] : memref<32x96xbf16, #tpu.memory_space<vmem>>, vector<32x96xbf16>
    %cst = arith.constant dense<0.000000e+00> : vector<8x4x96xf32>
    %3 = tpu.matmul %1, %2, %cst {dimension_numbers = #tpu.dot_dimension_numbers<[2], [0], [0, 1], [1], [0, 0, 0, 1, 1, 1], [], []>} : vector<8x4x32xbf16>, vector<32x96xbf16>, vector<8x4x96xf32> -> vector<8x4x96xf32>
    %c0_4 = arith.constant 0 : index
    %c0_5 = arith.constant 0 : index
    %4 = vector.load %arg3[%c0_4, %c0_5] : memref<1x96xf32, #tpu.memory_space<vmem>>, vector<1x96xf32>
    %5 = vector.shape_cast %4 : vector<1x96xf32> to vector<1x1x96xf32>
    %6 = vector.broadcast %5 : vector<1x1x96xf32> to vector<8x4x96xf32>
    %7 = arith.addf %3, %6 : vector<8x4x96xf32>
    %c0_6 = arith.constant 0 : index
    %c0_7 = arith.constant 0 : index
    %8 = vector.load %arg4[%c0_6, %c0_7] : memref<1x2xf32, #tpu.memory_space<vmem>>, vector<1x2xf32>
    %9 = vector.extract_strided_slice %7 {offsets = [0, 0, 0], sizes = [8, 4, 16], strides = [1, 1, 1]} : vector<8x4x96xf32> to vector<8x4x16xf32>
    %10 = vector.extract_strided_slice %7 {offsets = [0, 0, 32], sizes = [8, 4, 16], strides = [1, 1, 1]} : vector<8x4x96xf32> to vector<8x4x16xf32>
    %11 = vector.extract_strided_slice %7 {offsets = [0, 0, 64], sizes = [8, 4, 16], strides = [1, 1, 1]} : vector<8x4x96xf32> to vector<8x4x16xf32>
    %12 = arith.mulf %9, %9 : vector<8x4x16xf32>
    %cst_8 = arith.constant dense<0.000000e+00> : vector<8x4xf32>
    %13 = vector.multi_reduction <add>, %12, %cst_8 [2] : vector<8x4x16xf32> to vector<8x4xf32>
    %14 = vector.shape_cast %13 : vector<8x4xf32> to vector<8x4x1xf32>
    %cst_9 = arith.constant 1.000000e-24 : f32
    %15 = vector.broadcast %cst_9 : f32 to vector<8x4x1xf32>
    %16 = arith.maximumf %14, %15 : vector<8x4x1xf32>
    %17 = math.rsqrt %16 : vector<8x4x1xf32>
    %18 = vector.broadcast %17 : vector<8x4x1xf32> to vector<8x4x16xf32>
    %19 = arith.mulf %9, %18 : vector<8x4x16xf32>
    %20 = arith.mulf %10, %10 : vector<8x4x16xf32>
    %cst_10 = arith.constant dense<0.000000e+00> : vector<8x4xf32>
    %21 = vector.multi_reduction <add>, %20, %cst_10 [2] : vector<8x4x16xf32> to vector<8x4xf32>
    %22 = vector.shape_cast %21 : vector<8x4xf32> to vector<8x4x1xf32>
    %cst_11 = arith.constant 1.000000e-24 : f32
    %23 = vector.broadcast %cst_11 : f32 to vector<8x4x1xf32>
    %24 = arith.maximumf %22, %23 : vector<8x4x1xf32>
    %25 = math.rsqrt %24 : vector<8x4x1xf32>
    %26 = vector.broadcast %25 : vector<8x4x1xf32> to vector<8x4x16xf32>
    %27 = arith.mulf %10, %26 : vector<8x4x16xf32>
    "tpu.trace_start"() <{level = 10 : i32, message = "gqd,gkd->gqk"}> : () -> ()
    %cst_12 = arith.constant dense<0.000000e+00> : vector<8x4x4xf32>
    %28 = tpu.matmul %19, %27, %cst_12 {dimension_numbers = #tpu.dot_dimension_numbers<[2], [2], [1], [1], [0, 0, 0, 1, 1, 1], [0], [0]>} : vector<8x4x16xf32>, vector<8x4x16xf32>, vector<8x4x4xf32> -> vector<8x4x4xf32>
    "tpu.trace_stop"() : () -> ()
    %29 = vector.extract_strided_slice %8 {offsets = [0, 0], sizes = [1, 1], strides = [1, 1]} : vector<1x2xf32> to vector<1x1xf32>
    %30 = vector.extract %29[0, 0] : f32 from vector<1x1xf32>
    %31 = vector.broadcast %30 : f32 to vector<8x4x4xf32>
    %32 = arith.mulf %28, %31 : vector<8x4x4xf32>
    %c0_13 = arith.constant 0 : index
    %c0_14 = arith.constant 0 : index
    %c0_15 = arith.constant 0 : index
    %33 = vector.load %arg5[%c0_13, %c0_14, %c0_15] : memref<2x4x4xf32, #tpu.memory_space<vmem>>, vector<1x4x4xf32>
    %34 = vector.shape_cast %33 : vector<1x4x4xf32> to vector<4x4xf32>
    %35 = vector.shape_cast %34 : vector<4x4xf32> to vector<1x4x4xf32>
    %36 = vector.broadcast %35 : vector<1x4x4xf32> to vector<8x4x4xf32>
    %37 = arith.addf %32, %36 : vector<8x4x4xf32>
    %cst_16 = arith.constant dense<0xFF800000> : vector<8x4xf32>
    %38 = vector.multi_reduction <maximumf>, %37, %cst_16 [2] : vector<8x4x4xf32> to vector<8x4xf32>
    %39 = vector.shape_cast %38 : vector<8x4xf32> to vector<8x4x1xf32>
    %40 = vector.broadcast %39 : vector<8x4x1xf32> to vector<8x4x4xf32>
    %41 = arith.subf %37, %40 : vector<8x4x4xf32>
    %42 = math.exp %41 : vector<8x4x4xf32>
    %cst_17 = arith.constant dense<0.000000e+00> : vector<8x4xf32>
    %43 = vector.multi_reduction <add>, %42, %cst_17 [2] : vector<8x4x4xf32> to vector<8x4xf32>
    %44 = vector.shape_cast %43 : vector<8x4xf32> to vector<8x4x1xf32>
    %45 = tpu.reciprocal %44 {approx = true} : vector<8x4x1xf32> -> vector<8x4x1xf32>
    %46 = vector.broadcast %45 : vector<8x4x1xf32> to vector<8x4x4xf32>
    %47 = arith.mulf %42, %46 : vector<8x4x4xf32>
    %48 = arith.truncf %47 : vector<8x4x4xf32> to vector<8x4x4xbf16>
    %49 = arith.truncf %11 : vector<8x4x16xf32> to vector<8x4x16xbf16>
    "tpu.trace_start"() <{level = 10 : i32, message = "gqk,gkd->gqd"}> : () -> ()
    %cst_18 = arith.constant dense<0.000000e+00> : vector<8x4x16xf32>
    %50 = tpu.matmul %48, %49, %cst_18 {dimension_numbers = #tpu.dot_dimension_numbers<[2], [1], [1], [2], [0, 0, 0, 1, 1, 2], [0], [0]>} : vector<8x4x4xbf16>, vector<8x4x16xbf16>, vector<8x4x16xf32> -> vector<8x4x16xf32>
    "tpu.trace_stop"() : () -> ()
    %51 = vector.extract_strided_slice %7 {offsets = [0, 0, 16], sizes = [8, 4, 16], strides = [1, 1, 1]} : vector<8x4x96xf32> to vector<8x4x16xf32>
    %52 = vector.extract_strided_slice %7 {offsets = [0, 0, 48], sizes = [8, 4, 16], strides = [1, 1, 1]} : vector<8x4x96xf32> to vector<8x4x16xf32>
    %53 = vector.extract_strided_slice %7 {offsets = [0, 0, 80], sizes = [8, 4, 16], strides = [1, 1, 1]} : vector<8x4x96xf32> to vector<8x4x16xf32>
    %54 = arith.mulf %51, %51 : vector<8x4x16xf32>
    %cst_19 = arith.constant dense<0.000000e+00> : vector<8x4xf32>
    %55 = vector.multi_reduction <add>, %54, %cst_19 [2] : vector<8x4x16xf32> to vector<8x4xf32>
    %56 = vector.shape_cast %55 : vector<8x4xf32> to vector<8x4x1xf32>
    %cst_20 = arith.constant 1.000000e-24 : f32
    %57 = vector.broadcast %cst_20 : f32 to vector<8x4x1xf32>
    %58 = arith.maximumf %56, %57 : vector<8x4x1xf32>
    %59 = math.rsqrt %58 : vector<8x4x1xf32>
    %60 = vector.broadcast %59 : vector<8x4x1xf32> to vector<8x4x16xf32>
    %61 = arith.mulf %51, %60 : vector<8x4x16xf32>
    %62 = arith.mulf %52, %52 : vector<8x4x16xf32>
    %cst_21 = arith.constant dense<0.000000e+00> : vector<8x4xf32>
    %63 = vector.multi_reduction <add>, %62, %cst_21 [2] : vector<8x4x16xf32> to vector<8x4xf32>
    %64 = vector.shape_cast %63 : vector<8x4xf32> to vector<8x4x1xf32>
    %cst_22 = arith.constant 1.000000e-24 : f32
    %65 = vector.broadcast %cst_22 : f32 to vector<8x4x1xf32>
    %66 = arith.maximumf %64, %65 : vector<8x4x1xf32>
    %67 = math.rsqrt %66 : vector<8x4x1xf32>
    %68 = vector.broadcast %67 : vector<8x4x1xf32> to vector<8x4x16xf32>
    %69 = arith.mulf %52, %68 : vector<8x4x16xf32>
    "tpu.trace_start"() <{level = 10 : i32, message = "gqd,gkd->gqk"}> : () -> ()
    %cst_23 = arith.constant dense<0.000000e+00> : vector<8x4x4xf32>
    %70 = tpu.matmul %61, %69, %cst_23 {dimension_numbers = #tpu.dot_dimension_numbers<[2], [2], [1], [1], [0, 0, 0, 1, 1, 1], [0], [0]>} : vector<8x4x16xf32>, vector<8x4x16xf32>, vector<8x4x4xf32> -> vector<8x4x4xf32>
    "tpu.trace_stop"() : () -> ()
    %71 = vector.extract_strided_slice %8 {offsets = [0, 1], sizes = [1, 1], strides = [1, 1]} : vector<1x2xf32> to vector<1x1xf32>
    %72 = vector.extract %71[0, 0] : f32 from vector<1x1xf32>
    %73 = vector.broadcast %72 : f32 to vector<8x4x4xf32>
    %74 = arith.mulf %70, %73 : vector<8x4x4xf32>
    %c1 = arith.constant 1 : index
    %c0_24 = arith.constant 0 : index
    %c0_25 = arith.constant 0 : index
    %75 = vector.load %arg5[%c1, %c0_24, %c0_25] : memref<2x4x4xf32, #tpu.memory_space<vmem>>, vector<1x4x4xf32>
    %76 = vector.shape_cast %75 : vector<1x4x4xf32> to vector<4x4xf32>
    %77 = vector.shape_cast %76 : vector<4x4xf32> to vector<1x4x4xf32>
    %78 = vector.broadcast %77 : vector<1x4x4xf32> to vector<8x4x4xf32>
    %79 = arith.addf %74, %78 : vector<8x4x4xf32>
    %cst_26 = arith.constant dense<0xFF800000> : vector<8x4xf32>
    %80 = vector.multi_reduction <maximumf>, %79, %cst_26 [2] : vector<8x4x4xf32> to vector<8x4xf32>
    %81 = vector.shape_cast %80 : vector<8x4xf32> to vector<8x4x1xf32>
    %82 = vector.broadcast %81 : vector<8x4x1xf32> to vector<8x4x4xf32>
    %83 = arith.subf %79, %82 : vector<8x4x4xf32>
    %84 = math.exp %83 : vector<8x4x4xf32>
    %cst_27 = arith.constant dense<0.000000e+00> : vector<8x4xf32>
    %85 = vector.multi_reduction <add>, %84, %cst_27 [2] : vector<8x4x4xf32> to vector<8x4xf32>
    %86 = vector.shape_cast %85 : vector<8x4xf32> to vector<8x4x1xf32>
    %87 = tpu.reciprocal %86 {approx = true} : vector<8x4x1xf32> -> vector<8x4x1xf32>
    %88 = vector.broadcast %87 : vector<8x4x1xf32> to vector<8x4x4xf32>
    %89 = arith.mulf %84, %88 : vector<8x4x4xf32>
    %90 = arith.truncf %89 : vector<8x4x4xf32> to vector<8x4x4xbf16>
    %91 = arith.truncf %53 : vector<8x4x16xf32> to vector<8x4x16xbf16>
    "tpu.trace_start"() <{level = 10 : i32, message = "gqk,gkd->gqd"}> : () -> ()
    %cst_28 = arith.constant dense<0.000000e+00> : vector<8x4x16xf32>
    %92 = tpu.matmul %90, %91, %cst_28 {dimension_numbers = #tpu.dot_dimension_numbers<[2], [1], [1], [2], [0, 0, 0, 1, 1, 2], [0], [0]>} : vector<8x4x4xbf16>, vector<8x4x16xbf16>, vector<8x4x16xf32> -> vector<8x4x16xf32>
    "tpu.trace_stop"() : () -> ()
    %93 = tpu.concatenate %50, %92 in 2 : vector<8x4x16xf32>, vector<8x4x16xf32> -> vector<8x4x32xf32>
    %94 = arith.truncf %93 : vector<8x4x32xf32> to vector<8x4x32xbf16>
    %c0_29 = arith.constant 0 : index
    %c0_30 = arith.constant 0 : index
    %95 = vector.load %arg6[%c0_29, %c0_30] : memref<32x32xbf16, #tpu.memory_space<vmem>>, vector<32x32xbf16>
    %cst_31 = arith.constant dense<0.000000e+00> : vector<8x4x32xf32>
    %96 = tpu.matmul %94, %95, %cst_31 {dimension_numbers = #tpu.dot_dimension_numbers<[2], [0], [0, 1], [1], [0, 0, 0, 1, 1, 1], [], []>} : vector<8x4x32xbf16>, vector<32x32xbf16>, vector<8x4x32xf32> -> vector<8x4x32xf32>
    %c0_32 = arith.constant 0 : index
    %c0_33 = arith.constant 0 : index
    %97 = vector.load %arg7[%c0_32, %c0_33] : memref<1x32xf32, #tpu.memory_space<vmem>>, vector<1x32xf32>
    %98 = vector.shape_cast %97 : vector<1x32xf32> to vector<1x1x32xf32>
    %99 = vector.broadcast %98 : vector<1x1x32xf32> to vector<8x4x32xf32>
    %100 = arith.addf %96, %99 : vector<8x4x32xf32>
    %c0_34 = arith.constant 0 : index
    %c0_35 = arith.constant 0 : index
    %101 = vector.load %arg8[%c0_34, %c0_35] : memref<1x32xf32, #tpu.memory_space<vmem>>, vector<1x32xf32>
    %c0_36 = arith.constant 0 : index
    %c0_37 = arith.constant 0 : index
    %102 = vector.load %arg9[%c0_36, %c0_37] : memref<1x32xf32, #tpu.memory_space<vmem>>, vector<1x32xf32>
    %cst_38 = arith.constant dense<0.000000e+00> : vector<8x4xf32>
    %103 = vector.multi_reduction <add>, %100, %cst_38 [2] : vector<8x4x32xf32> to vector<8x4xf32>
    %104 = vector.shape_cast %103 : vector<8x4xf32> to vector<8x4x1xf32>
    %cst_39 = arith.constant 3.200000e+01 : f32
    %105 = vector.broadcast %cst_39 : f32 to vector<8x4x1xf32>
    %106 = arith.divf %104, %105 : vector<8x4x1xf32>
    %107 = vector.broadcast %106 : vector<8x4x1xf32> to vector<8x4x32xf32>
    %108 = arith.subf %100, %107 : vector<8x4x32xf32>
    %109 = arith.mulf %108, %108 : vector<8x4x32xf32>
    %cst_40 = arith.constant dense<0.000000e+00> : vector<8x4xf32>
    %110 = vector.multi_reduction <add>, %109, %cst_40 [2] : vector<8x4x32xf32> to vector<8x4xf32>
    %111 = vector.shape_cast %110 : vector<8x4xf32> to vector<8x4x1xf32>
    %cst_41 = arith.constant 3.200000e+01 : f32
    %112 = vector.broadcast %cst_41 : f32 to vector<8x4x1xf32>
    %113 = arith.divf %111, %112 : vector<8x4x1xf32>
    %114 = vector.broadcast %106 : vector<8x4x1xf32> to vector<8x4x32xf32>
    %115 = arith.subf %100, %114 : vector<8x4x32xf32>
    %cst_42 = arith.constant 9.99999974E-6 : f32
    %116 = vector.broadcast %cst_42 : f32 to vector<8x4x1xf32>
    %117 = arith.addf %113, %116 : vector<8x4x1xf32>
    %118 = math.rsqrt %117 : vector<8x4x1xf32>
    %119 = vector.broadcast %118 : vector<8x4x1xf32> to vector<8x4x32xf32>
    %120 = arith.mulf %115, %119 : vector<8x4x32xf32>
    %121 = vector.shape_cast %101 : vector<1x32xf32> to vector<1x1x32xf32>
    %122 = vector.broadcast %121 : vector<1x1x32xf32> to vector<8x4x32xf32>
    %123 = arith.mulf %120, %122 : vector<8x4x32xf32>
    %124 = vector.shape_cast %102 : vector<1x32xf32> to vector<1x1x32xf32>
    %125 = vector.broadcast %124 : vector<1x1x32xf32> to vector<8x4x32xf32>
    %126 = arith.addf %123, %125 : vector<8x4x32xf32>
    %127 = arith.addf %0, %126 : vector<8x4x32xf32>
    %c0_43 = arith.constant 0 : index
    %c0_44 = arith.constant 0 : index
    %c0_45 = arith.constant 0 : index
    %128 = vector.load %arg10[%c0_43, %c0_44, %c0_45] : memref<8x4x32xf32, #tpu.memory_space<vmem>>, vector<8x4x32xf32>
    tpu.vector_store %arg10[%c0_43, %c0_44, %c0_45], %127 {strides = array<i32>} : memref<8x4x32xf32, #tpu.memory_space<vmem>>, vector<8x4x32xf32>,
    return
  }
  func.func @transform_0(%arg0: i32) -> (i32, i32, i32) {
    %c0_i32 = arith.constant 0 : i32
    %c0_i32_0 = arith.constant 0 : i32
    %c0_i32_1 = arith.constant 0 : i32
    return %arg0, %c0_i32, %c0_i32_0 : i32, i32, i32
  }
  func.func @transform_1(%arg0: i32) -> (i32, i32) {
    %c0_i32 = arith.constant 0 : i32
    %c0_i32_0 = arith.constant 0 : i32
    %c0_i32_1 = arith.constant 0 : i32
    return %c0_i32, %c0_i32_0 : i32, i32
  }
  func.func @transform_2(%arg0: i32) -> (i32, i32) {
    %c0_i32 = arith.constant 0 : i32
    %c0_i32_0 = arith.constant 0 : i32
    %c0_i32_1 = arith.constant 0 : i32
    return %c0_i32, %c0_i32_0 : i32, i32
  }
  func.func @transform_3(%arg0: i32) -> (i32, i32) {
    %c0_i32 = arith.constant 0 : i32
    %c0_i32_0 = arith.constant 0 : i32
    %c0_i32_1 = arith.constant 0 : i32
    return %c0_i32, %c0_i32_0 : i32, i32
  }
  func.func @transform_4(%arg0: i32) -> (i32, i32, i32) {
    %c0_i32 = arith.constant 0 : i32
    %c0_i32_0 = arith.constant 0 : i32
    %c0_i32_1 = arith.constant 0 : i32
    %c0_i32_2 = arith.constant 0 : i32
    return %c0_i32, %c0_i32_0, %c0_i32_1 : i32, i32, i32
  }
  func.func @transform_5(%arg0: i32) -> (i32, i32) {
    %c0_i32 = arith.constant 0 : i32
    %c0_i32_0 = arith.constant 0 : i32
    %c0_i32_1 = arith.constant 0 : i32
    return %c0_i32, %c0_i32_0 : i32, i32
  }
  func.func @transform_6(%arg0: i32) -> (i32, i32) {
    %c0_i32 = arith.constant 0 : i32
    %c0_i32_0 = arith.constant 0 : i32
    %c0_i32_1 = arith.constant 0 : i32
    return %c0_i32, %c0_i32_0 : i32, i32
  }
  func.func @transform_7(%arg0: i32) -> (i32, i32) {
    %c0_i32 = arith.constant 0 : i32
    %c0_i32_0 = arith.constant 0 : i32
    %c0_i32_1 = arith.constant 0 : i32
    return %c0_i32, %c0_i32_0 : i32, i32
  }
  func.func @transform_8(%arg0: i32) -> (i32, i32) {
    %c0_i32 = arith.constant 0 : i32
    %c0_i32_0 = arith.constant 0 : i32
    %c0_i32_1 = arith.constant 0 : i32
    return %c0_i32, %c0_i32_0 : i32, i32
  }
  func.func @transform_9(%arg0: i32) -> (i32, i32, i32) {
    %c0_i32 = arith.constant 0 : i32
    %c0_i32_0 = arith.constant 0 : i32
    %c0_i32_1 = arith.constant 0 : i32
    return %arg0, %c0_i32, %c0_i32_0 : i32, i32, i32
  }
}

module attributes {stable_mosaic.version = 11 : i64} {
  func.func @_window_attn_kernel(%arg0: i32, %arg1: memref<8x4x32xf32, #tpu.memory_space<vmem>>, %arg2: memref<32x96xbf16, #tpu.memory_space<vmem>>, %arg3: memref<1x96xf32, #tpu.memory_space<vmem>>, %arg4: memref<1x2xf32, #tpu.memory_space<vmem>>, %arg5: memref<2x4x4xf32, #tpu.memory_space<vmem>>, %arg6: memref<8x4x4xf32, #tpu.memory_space<vmem>>, %arg7: memref<32x32xbf16, #tpu.memory_space<vmem>>, %arg8: memref<1x32xf32, #tpu.memory_space<vmem>>, %arg9: memref<1x32xf32, #tpu.memory_space<vmem>>, %arg10: memref<1x32xf32, #tpu.memory_space<vmem>>, %arg11: memref<8x4x32xf32, #tpu.memory_space<vmem>>) attributes {dimension_semantics = [#tpu.dimension_semantics<parallel>], iteration_bounds = array<i64: 1>, scalar_prefetch = 0 : i64, scratch_operands = 0 : i64, tpu.core_type = #tpu.core_type<tc>, window_params = [{transform_indices = @transform_0, window_bounds = array<i64: 8, 4, 32>}, {pipeline_mode = #tpu.pipeline_mode<synchronous>, transform_indices = @transform_1, window_bounds = array<i64: 32, 96>}, {pipeline_mode = #tpu.pipeline_mode<synchronous>, transform_indices = @transform_2, window_bounds = array<i64: 1, 96>}, {pipeline_mode = #tpu.pipeline_mode<synchronous>, transform_indices = @transform_3, window_bounds = array<i64: 1, 2>}, {pipeline_mode = #tpu.pipeline_mode<synchronous>, transform_indices = @transform_4, window_bounds = array<i64: 2, 4, 4>}, {transform_indices = @transform_5, window_bounds = array<i64: 8, 4, 4>}, {pipeline_mode = #tpu.pipeline_mode<synchronous>, transform_indices = @transform_6, window_bounds = array<i64: 32, 32>}, {pipeline_mode = #tpu.pipeline_mode<synchronous>, transform_indices = @transform_7, window_bounds = array<i64: 1, 32>}, {pipeline_mode = #tpu.pipeline_mode<synchronous>, transform_indices = @transform_8, window_bounds = array<i64: 1, 32>}, {pipeline_mode = #tpu.pipeline_mode<synchronous>, transform_indices = @transform_9, window_bounds = array<i64: 1, 32>}, {transform_indices = @transform_10, window_bounds = array<i64: 8, 4, 32>}]} {
    %c0 = arith.constant 0 : index
    %c0_0 = arith.constant 0 : index
    %c0_1 = arith.constant 0 : index
    %0 = vector.load %arg1[%c0, %c0_0, %c0_1] : memref<8x4x32xf32, #tpu.memory_space<vmem>>, vector<8x4x32xf32>
    %1 = arith.truncf %0 : vector<8x4x32xf32> to vector<8x4x32xbf16>
    %c0_2 = arith.constant 0 : index
    %c0_3 = arith.constant 0 : index
    %2 = vector.load %arg2[%c0_2, %c0_3] : memref<32x96xbf16, #tpu.memory_space<vmem>>, vector<32x96xbf16>
    %cst = arith.constant dense<0.000000e+00> : vector<8x4x96xf32>
    %3 = tpu.matmul %1, %2, %cst {dimension_numbers = #tpu.dot_dimension_numbers<[2], [0], [0, 1], [1], [0, 0, 0, 1, 1, 1], [], []>} : vector<8x4x32xbf16>, vector<32x96xbf16>, vector<8x4x96xf32> -> vector<8x4x96xf32>
    %c0_4 = arith.constant 0 : index
    %c0_5 = arith.constant 0 : index
    %4 = vector.load %arg3[%c0_4, %c0_5] : memref<1x96xf32, #tpu.memory_space<vmem>>, vector<1x96xf32>
    %5 = vector.shape_cast %4 : vector<1x96xf32> to vector<1x1x96xf32>
    %6 = vector.broadcast %5 : vector<1x1x96xf32> to vector<8x4x96xf32>
    %7 = arith.addf %3, %6 : vector<8x4x96xf32>
    %c0_6 = arith.constant 0 : index
    %c0_7 = arith.constant 0 : index
    %8 = vector.load %arg4[%c0_6, %c0_7] : memref<1x2xf32, #tpu.memory_space<vmem>>, vector<1x2xf32>
    %c0_8 = arith.constant 0 : index
    %c0_9 = arith.constant 0 : index
    %c0_10 = arith.constant 0 : index
    %9 = vector.load %arg6[%c0_8, %c0_9, %c0_10] : memref<8x4x4xf32, #tpu.memory_space<vmem>>, vector<8x4x4xf32>
    %10 = vector.extract_strided_slice %7 {offsets = [0, 0, 0], sizes = [8, 4, 16], strides = [1, 1, 1]} : vector<8x4x96xf32> to vector<8x4x16xf32>
    %11 = vector.extract_strided_slice %7 {offsets = [0, 0, 32], sizes = [8, 4, 16], strides = [1, 1, 1]} : vector<8x4x96xf32> to vector<8x4x16xf32>
    %12 = vector.extract_strided_slice %7 {offsets = [0, 0, 64], sizes = [8, 4, 16], strides = [1, 1, 1]} : vector<8x4x96xf32> to vector<8x4x16xf32>
    %13 = arith.mulf %10, %10 : vector<8x4x16xf32>
    %cst_11 = arith.constant dense<0.000000e+00> : vector<8x4xf32>
    %14 = vector.multi_reduction <add>, %13, %cst_11 [2] : vector<8x4x16xf32> to vector<8x4xf32>
    %15 = vector.shape_cast %14 : vector<8x4xf32> to vector<8x4x1xf32>
    %cst_12 = arith.constant 1.000000e-24 : f32
    %16 = vector.broadcast %cst_12 : f32 to vector<8x4x1xf32>
    %17 = arith.maximumf %15, %16 : vector<8x4x1xf32>
    %18 = math.rsqrt %17 : vector<8x4x1xf32>
    %19 = vector.broadcast %18 : vector<8x4x1xf32> to vector<8x4x16xf32>
    %20 = arith.mulf %10, %19 : vector<8x4x16xf32>
    %21 = arith.mulf %11, %11 : vector<8x4x16xf32>
    %cst_13 = arith.constant dense<0.000000e+00> : vector<8x4xf32>
    %22 = vector.multi_reduction <add>, %21, %cst_13 [2] : vector<8x4x16xf32> to vector<8x4xf32>
    %23 = vector.shape_cast %22 : vector<8x4xf32> to vector<8x4x1xf32>
    %cst_14 = arith.constant 1.000000e-24 : f32
    %24 = vector.broadcast %cst_14 : f32 to vector<8x4x1xf32>
    %25 = arith.maximumf %23, %24 : vector<8x4x1xf32>
    %26 = math.rsqrt %25 : vector<8x4x1xf32>
    %27 = vector.broadcast %26 : vector<8x4x1xf32> to vector<8x4x16xf32>
    %28 = arith.mulf %11, %27 : vector<8x4x16xf32>
    "tpu.trace_start"() <{level = 10 : i32, message = "gqd,gkd->gqk"}> : () -> ()
    %cst_15 = arith.constant dense<0.000000e+00> : vector<8x4x4xf32>
    %29 = tpu.matmul %20, %28, %cst_15 {dimension_numbers = #tpu.dot_dimension_numbers<[2], [2], [1], [1], [0, 0, 0, 1, 1, 1], [0], [0]>} : vector<8x4x16xf32>, vector<8x4x16xf32>, vector<8x4x4xf32> -> vector<8x4x4xf32>
    "tpu.trace_stop"() : () -> ()
    %30 = vector.extract_strided_slice %8 {offsets = [0, 0], sizes = [1, 1], strides = [1, 1]} : vector<1x2xf32> to vector<1x1xf32>
    %31 = vector.extract %30[0, 0] : f32 from vector<1x1xf32>
    %32 = vector.broadcast %31 : f32 to vector<8x4x4xf32>
    %33 = arith.mulf %29, %32 : vector<8x4x4xf32>
    %c0_16 = arith.constant 0 : index
    %c0_17 = arith.constant 0 : index
    %c0_18 = arith.constant 0 : index
    %34 = vector.load %arg5[%c0_16, %c0_17, %c0_18] : memref<2x4x4xf32, #tpu.memory_space<vmem>>, vector<1x4x4xf32>
    %35 = vector.shape_cast %34 : vector<1x4x4xf32> to vector<4x4xf32>
    %36 = vector.shape_cast %35 : vector<4x4xf32> to vector<1x4x4xf32>
    %37 = vector.broadcast %36 : vector<1x4x4xf32> to vector<8x4x4xf32>
    %38 = arith.addf %33, %37 : vector<8x4x4xf32>
    %39 = arith.addf %38, %9 : vector<8x4x4xf32>
    %cst_19 = arith.constant dense<0xFF800000> : vector<8x4xf32>
    %40 = vector.multi_reduction <maximumf>, %39, %cst_19 [2] : vector<8x4x4xf32> to vector<8x4xf32>
    %41 = vector.shape_cast %40 : vector<8x4xf32> to vector<8x4x1xf32>
    %42 = vector.broadcast %41 : vector<8x4x1xf32> to vector<8x4x4xf32>
    %43 = arith.subf %39, %42 : vector<8x4x4xf32>
    %44 = math.exp %43 : vector<8x4x4xf32>
    %cst_20 = arith.constant dense<0.000000e+00> : vector<8x4xf32>
    %45 = vector.multi_reduction <add>, %44, %cst_20 [2] : vector<8x4x4xf32> to vector<8x4xf32>
    %46 = vector.shape_cast %45 : vector<8x4xf32> to vector<8x4x1xf32>
    %47 = tpu.reciprocal %46 {approx = true} : vector<8x4x1xf32> -> vector<8x4x1xf32>
    %48 = vector.broadcast %47 : vector<8x4x1xf32> to vector<8x4x4xf32>
    %49 = arith.mulf %44, %48 : vector<8x4x4xf32>
    %50 = arith.truncf %49 : vector<8x4x4xf32> to vector<8x4x4xbf16>
    %51 = arith.truncf %12 : vector<8x4x16xf32> to vector<8x4x16xbf16>
    "tpu.trace_start"() <{level = 10 : i32, message = "gqk,gkd->gqd"}> : () -> ()
    %cst_21 = arith.constant dense<0.000000e+00> : vector<8x4x16xf32>
    %52 = tpu.matmul %50, %51, %cst_21 {dimension_numbers = #tpu.dot_dimension_numbers<[2], [1], [1], [2], [0, 0, 0, 1, 1, 2], [0], [0]>} : vector<8x4x4xbf16>, vector<8x4x16xbf16>, vector<8x4x16xf32> -> vector<8x4x16xf32>
    "tpu.trace_stop"() : () -> ()
    %53 = vector.extract_strided_slice %7 {offsets = [0, 0, 16], sizes = [8, 4, 16], strides = [1, 1, 1]} : vector<8x4x96xf32> to vector<8x4x16xf32>
    %54 = vector.extract_strided_slice %7 {offsets = [0, 0, 48], sizes = [8, 4, 16], strides = [1, 1, 1]} : vector<8x4x96xf32> to vector<8x4x16xf32>
    %55 = vector.extract_strided_slice %7 {offsets = [0, 0, 80], sizes = [8, 4, 16], strides = [1, 1, 1]} : vector<8x4x96xf32> to vector<8x4x16xf32>
    %56 = arith.mulf %53, %53 : vector<8x4x16xf32>
    %cst_22 = arith.constant dense<0.000000e+00> : vector<8x4xf32>
    %57 = vector.multi_reduction <add>, %56, %cst_22 [2] : vector<8x4x16xf32> to vector<8x4xf32>
    %58 = vector.shape_cast %57 : vector<8x4xf32> to vector<8x4x1xf32>
    %cst_23 = arith.constant 1.000000e-24 : f32
    %59 = vector.broadcast %cst_23 : f32 to vector<8x4x1xf32>
    %60 = arith.maximumf %58, %59 : vector<8x4x1xf32>
    %61 = math.rsqrt %60 : vector<8x4x1xf32>
    %62 = vector.broadcast %61 : vector<8x4x1xf32> to vector<8x4x16xf32>
    %63 = arith.mulf %53, %62 : vector<8x4x16xf32>
    %64 = arith.mulf %54, %54 : vector<8x4x16xf32>
    %cst_24 = arith.constant dense<0.000000e+00> : vector<8x4xf32>
    %65 = vector.multi_reduction <add>, %64, %cst_24 [2] : vector<8x4x16xf32> to vector<8x4xf32>
    %66 = vector.shape_cast %65 : vector<8x4xf32> to vector<8x4x1xf32>
    %cst_25 = arith.constant 1.000000e-24 : f32
    %67 = vector.broadcast %cst_25 : f32 to vector<8x4x1xf32>
    %68 = arith.maximumf %66, %67 : vector<8x4x1xf32>
    %69 = math.rsqrt %68 : vector<8x4x1xf32>
    %70 = vector.broadcast %69 : vector<8x4x1xf32> to vector<8x4x16xf32>
    %71 = arith.mulf %54, %70 : vector<8x4x16xf32>
    "tpu.trace_start"() <{level = 10 : i32, message = "gqd,gkd->gqk"}> : () -> ()
    %cst_26 = arith.constant dense<0.000000e+00> : vector<8x4x4xf32>
    %72 = tpu.matmul %63, %71, %cst_26 {dimension_numbers = #tpu.dot_dimension_numbers<[2], [2], [1], [1], [0, 0, 0, 1, 1, 1], [0], [0]>} : vector<8x4x16xf32>, vector<8x4x16xf32>, vector<8x4x4xf32> -> vector<8x4x4xf32>
    "tpu.trace_stop"() : () -> ()
    %73 = vector.extract_strided_slice %8 {offsets = [0, 1], sizes = [1, 1], strides = [1, 1]} : vector<1x2xf32> to vector<1x1xf32>
    %74 = vector.extract %73[0, 0] : f32 from vector<1x1xf32>
    %75 = vector.broadcast %74 : f32 to vector<8x4x4xf32>
    %76 = arith.mulf %72, %75 : vector<8x4x4xf32>
    %c1 = arith.constant 1 : index
    %c0_27 = arith.constant 0 : index
    %c0_28 = arith.constant 0 : index
    %77 = vector.load %arg5[%c1, %c0_27, %c0_28] : memref<2x4x4xf32, #tpu.memory_space<vmem>>, vector<1x4x4xf32>
    %78 = vector.shape_cast %77 : vector<1x4x4xf32> to vector<4x4xf32>
    %79 = vector.shape_cast %78 : vector<4x4xf32> to vector<1x4x4xf32>
    %80 = vector.broadcast %79 : vector<1x4x4xf32> to vector<8x4x4xf32>
    %81 = arith.addf %76, %80 : vector<8x4x4xf32>
    %82 = arith.addf %81, %9 : vector<8x4x4xf32>
    %cst_29 = arith.constant dense<0xFF800000> : vector<8x4xf32>
    %83 = vector.multi_reduction <maximumf>, %82, %cst_29 [2] : vector<8x4x4xf32> to vector<8x4xf32>
    %84 = vector.shape_cast %83 : vector<8x4xf32> to vector<8x4x1xf32>
    %85 = vector.broadcast %84 : vector<8x4x1xf32> to vector<8x4x4xf32>
    %86 = arith.subf %82, %85 : vector<8x4x4xf32>
    %87 = math.exp %86 : vector<8x4x4xf32>
    %cst_30 = arith.constant dense<0.000000e+00> : vector<8x4xf32>
    %88 = vector.multi_reduction <add>, %87, %cst_30 [2] : vector<8x4x4xf32> to vector<8x4xf32>
    %89 = vector.shape_cast %88 : vector<8x4xf32> to vector<8x4x1xf32>
    %90 = tpu.reciprocal %89 {approx = true} : vector<8x4x1xf32> -> vector<8x4x1xf32>
    %91 = vector.broadcast %90 : vector<8x4x1xf32> to vector<8x4x4xf32>
    %92 = arith.mulf %87, %91 : vector<8x4x4xf32>
    %93 = arith.truncf %92 : vector<8x4x4xf32> to vector<8x4x4xbf16>
    %94 = arith.truncf %55 : vector<8x4x16xf32> to vector<8x4x16xbf16>
    "tpu.trace_start"() <{level = 10 : i32, message = "gqk,gkd->gqd"}> : () -> ()
    %cst_31 = arith.constant dense<0.000000e+00> : vector<8x4x16xf32>
    %95 = tpu.matmul %93, %94, %cst_31 {dimension_numbers = #tpu.dot_dimension_numbers<[2], [1], [1], [2], [0, 0, 0, 1, 1, 2], [0], [0]>} : vector<8x4x4xbf16>, vector<8x4x16xbf16>, vector<8x4x16xf32> -> vector<8x4x16xf32>
    "tpu.trace_stop"() : () -> ()
    %96 = tpu.concatenate %52, %95 in 2 : vector<8x4x16xf32>, vector<8x4x16xf32> -> vector<8x4x32xf32>
    %97 = arith.truncf %96 : vector<8x4x32xf32> to vector<8x4x32xbf16>
    %c0_32 = arith.constant 0 : index
    %c0_33 = arith.constant 0 : index
    %98 = vector.load %arg7[%c0_32, %c0_33] : memref<32x32xbf16, #tpu.memory_space<vmem>>, vector<32x32xbf16>
    %cst_34 = arith.constant dense<0.000000e+00> : vector<8x4x32xf32>
    %99 = tpu.matmul %97, %98, %cst_34 {dimension_numbers = #tpu.dot_dimension_numbers<[2], [0], [0, 1], [1], [0, 0, 0, 1, 1, 1], [], []>} : vector<8x4x32xbf16>, vector<32x32xbf16>, vector<8x4x32xf32> -> vector<8x4x32xf32>
    %c0_35 = arith.constant 0 : index
    %c0_36 = arith.constant 0 : index
    %100 = vector.load %arg8[%c0_35, %c0_36] : memref<1x32xf32, #tpu.memory_space<vmem>>, vector<1x32xf32>
    %101 = vector.shape_cast %100 : vector<1x32xf32> to vector<1x1x32xf32>
    %102 = vector.broadcast %101 : vector<1x1x32xf32> to vector<8x4x32xf32>
    %103 = arith.addf %99, %102 : vector<8x4x32xf32>
    %c0_37 = arith.constant 0 : index
    %c0_38 = arith.constant 0 : index
    %104 = vector.load %arg9[%c0_37, %c0_38] : memref<1x32xf32, #tpu.memory_space<vmem>>, vector<1x32xf32>
    %c0_39 = arith.constant 0 : index
    %c0_40 = arith.constant 0 : index
    %105 = vector.load %arg10[%c0_39, %c0_40] : memref<1x32xf32, #tpu.memory_space<vmem>>, vector<1x32xf32>
    %cst_41 = arith.constant dense<0.000000e+00> : vector<8x4xf32>
    %106 = vector.multi_reduction <add>, %103, %cst_41 [2] : vector<8x4x32xf32> to vector<8x4xf32>
    %107 = vector.shape_cast %106 : vector<8x4xf32> to vector<8x4x1xf32>
    %cst_42 = arith.constant 3.200000e+01 : f32
    %108 = vector.broadcast %cst_42 : f32 to vector<8x4x1xf32>
    %109 = arith.divf %107, %108 : vector<8x4x1xf32>
    %110 = vector.broadcast %109 : vector<8x4x1xf32> to vector<8x4x32xf32>
    %111 = arith.subf %103, %110 : vector<8x4x32xf32>
    %112 = arith.mulf %111, %111 : vector<8x4x32xf32>
    %cst_43 = arith.constant dense<0.000000e+00> : vector<8x4xf32>
    %113 = vector.multi_reduction <add>, %112, %cst_43 [2] : vector<8x4x32xf32> to vector<8x4xf32>
    %114 = vector.shape_cast %113 : vector<8x4xf32> to vector<8x4x1xf32>
    %cst_44 = arith.constant 3.200000e+01 : f32
    %115 = vector.broadcast %cst_44 : f32 to vector<8x4x1xf32>
    %116 = arith.divf %114, %115 : vector<8x4x1xf32>
    %117 = vector.broadcast %109 : vector<8x4x1xf32> to vector<8x4x32xf32>
    %118 = arith.subf %103, %117 : vector<8x4x32xf32>
    %cst_45 = arith.constant 9.99999974E-6 : f32
    %119 = vector.broadcast %cst_45 : f32 to vector<8x4x1xf32>
    %120 = arith.addf %116, %119 : vector<8x4x1xf32>
    %121 = math.rsqrt %120 : vector<8x4x1xf32>
    %122 = vector.broadcast %121 : vector<8x4x1xf32> to vector<8x4x32xf32>
    %123 = arith.mulf %118, %122 : vector<8x4x32xf32>
    %124 = vector.shape_cast %104 : vector<1x32xf32> to vector<1x1x32xf32>
    %125 = vector.broadcast %124 : vector<1x1x32xf32> to vector<8x4x32xf32>
    %126 = arith.mulf %123, %125 : vector<8x4x32xf32>
    %127 = vector.shape_cast %105 : vector<1x32xf32> to vector<1x1x32xf32>
    %128 = vector.broadcast %127 : vector<1x1x32xf32> to vector<8x4x32xf32>
    %129 = arith.addf %126, %128 : vector<8x4x32xf32>
    %130 = arith.addf %0, %129 : vector<8x4x32xf32>
    %c0_46 = arith.constant 0 : index
    %c0_47 = arith.constant 0 : index
    %c0_48 = arith.constant 0 : index
    %131 = vector.load %arg11[%c0_46, %c0_47, %c0_48] : memref<8x4x32xf32, #tpu.memory_space<vmem>>, vector<8x4x32xf32>
    tpu.vector_store %arg11[%c0_46, %c0_47, %c0_48], %130 {strides = array<i32>} : memref<8x4x32xf32, #tpu.memory_space<vmem>>, vector<8x4x32xf32>,
    return
  }
  func.func @transform_0(%arg0: i32) -> (i32, i32, i32) {
    %c0_i32 = arith.constant 0 : i32
    %c0_i32_0 = arith.constant 0 : i32
    %c0_i32_1 = arith.constant 0 : i32
    return %arg0, %c0_i32, %c0_i32_0 : i32, i32, i32
  }
  func.func @transform_1(%arg0: i32) -> (i32, i32) {
    %c0_i32 = arith.constant 0 : i32
    %c0_i32_0 = arith.constant 0 : i32
    %c0_i32_1 = arith.constant 0 : i32
    return %c0_i32, %c0_i32_0 : i32, i32
  }
  func.func @transform_2(%arg0: i32) -> (i32, i32) {
    %c0_i32 = arith.constant 0 : i32
    %c0_i32_0 = arith.constant 0 : i32
    %c0_i32_1 = arith.constant 0 : i32
    return %c0_i32, %c0_i32_0 : i32, i32
  }
  func.func @transform_3(%arg0: i32) -> (i32, i32) {
    %c0_i32 = arith.constant 0 : i32
    %c0_i32_0 = arith.constant 0 : i32
    %c0_i32_1 = arith.constant 0 : i32
    return %c0_i32, %c0_i32_0 : i32, i32
  }
  func.func @transform_4(%arg0: i32) -> (i32, i32, i32) {
    %c0_i32 = arith.constant 0 : i32
    %c0_i32_0 = arith.constant 0 : i32
    %c0_i32_1 = arith.constant 0 : i32
    %c0_i32_2 = arith.constant 0 : i32
    return %c0_i32, %c0_i32_0, %c0_i32_1 : i32, i32, i32
  }
  func.func @transform_5(%arg0: i32) -> (i32, i32, i32) {
    %c0_i32 = arith.constant 0 : i32
    %c0_i32_0 = arith.constant 0 : i32
    %c0_i32_1 = arith.constant 0 : i32
    return %arg0, %c0_i32, %c0_i32_0 : i32, i32, i32
  }
  func.func @transform_6(%arg0: i32) -> (i32, i32) {
    %c0_i32 = arith.constant 0 : i32
    %c0_i32_0 = arith.constant 0 : i32
    %c0_i32_1 = arith.constant 0 : i32
    return %c0_i32, %c0_i32_0 : i32, i32
  }
  func.func @transform_7(%arg0: i32) -> (i32, i32) {
    %c0_i32 = arith.constant 0 : i32
    %c0_i32_0 = arith.constant 0 : i32
    %c0_i32_1 = arith.constant 0 : i32
    return %c0_i32, %c0_i32_0 : i32, i32
  }
  func.func @transform_8(%arg0: i32) -> (i32, i32) {
    %c0_i32 = arith.constant 0 : i32
    %c0_i32_0 = arith.constant 0 : i32
    %c0_i32_1 = arith.constant 0 : i32
    return %c0_i32, %c0_i32_0 : i32, i32
  }
  func.func @transform_9(%arg0: i32) -> (i32, i32) {
    %c0_i32 = arith.constant 0 : i32
    %c0_i32_0 = arith.constant 0 : i32
    %c0_i32_1 = arith.constant 0 : i32
    return %c0_i32, %c0_i32_0 : i32, i32
  }
  func.func @transform_10(%arg0: i32) -> (i32, i32, i32) {
    %c0_i32 = arith.constant 0 : i32
    %c0_i32_0 = arith.constant 0 : i32
    %c0_i32_1 = arith.constant 0 : i32
    return %arg0, %c0_i32, %c0_i32_0 : i32, i32, i32
  }
}

module attributes {stable_mosaic.version = 11 : i64} {
  func.func @_linear_ln_kernel(%arg0: i32, %arg1: memref<8x128xf32, #tpu.memory_space<vmem>>, %arg2: memref<128x64xbf16, #tpu.memory_space<vmem>>, %arg3: memref<1x64xf32, #tpu.memory_space<vmem>>, %arg4: memref<1x64xf32, #tpu.memory_space<vmem>>, %arg5: memref<1x64xf32, #tpu.memory_space<vmem>>, %arg6: memref<8x64xf32, #tpu.memory_space<vmem>>) attributes {dimension_semantics = [#tpu.dimension_semantics<parallel>], iteration_bounds = array<i64: 1>, scalar_prefetch = 0 : i64, scratch_operands = 0 : i64, tpu.core_type = #tpu.core_type<tc>, window_params = [{transform_indices = @transform_0, window_bounds = array<i64: 8, 128>}, {pipeline_mode = #tpu.pipeline_mode<synchronous>, transform_indices = @transform_1, window_bounds = array<i64: 128, 64>}, {pipeline_mode = #tpu.pipeline_mode<synchronous>, transform_indices = @transform_2, window_bounds = array<i64: 1, 64>}, {pipeline_mode = #tpu.pipeline_mode<synchronous>, transform_indices = @transform_3, window_bounds = array<i64: 1, 64>}, {pipeline_mode = #tpu.pipeline_mode<synchronous>, transform_indices = @transform_4, window_bounds = array<i64: 1, 64>}, {transform_indices = @transform_5, window_bounds = array<i64: 8, 64>}]} {
    %c0 = arith.constant 0 : index
    %c0_0 = arith.constant 0 : index
    %0 = vector.load %arg1[%c0, %c0_0] : memref<8x128xf32, #tpu.memory_space<vmem>>, vector<8x128xf32>
    %1 = arith.truncf %0 : vector<8x128xf32> to vector<8x128xbf16>
    %c0_1 = arith.constant 0 : index
    %c0_2 = arith.constant 0 : index
    %2 = vector.load %arg2[%c0_1, %c0_2] : memref<128x64xbf16, #tpu.memory_space<vmem>>, vector<128x64xbf16>
    %cst = arith.constant dense<0.000000e+00> : vector<8x64xf32>
    %3 = tpu.matmul %1, %2, %cst {dimension_numbers = #tpu.dot_dimension_numbers<[1], [0], [0], [1], [0, 0, 1, 1], [], []>} : vector<8x128xbf16>, vector<128x64xbf16>, vector<8x64xf32> -> vector<8x64xf32>
    %c0_3 = arith.constant 0 : index
    %c0_4 = arith.constant 0 : index
    %4 = vector.load %arg3[%c0_3, %c0_4] : memref<1x64xf32, #tpu.memory_space<vmem>>, vector<1x64xf32>
    %5 = vector.broadcast %4 : vector<1x64xf32> to vector<8x64xf32>
    %6 = arith.addf %3, %5 : vector<8x64xf32>
    %c0_5 = arith.constant 0 : index
    %c0_6 = arith.constant 0 : index
    %7 = vector.load %arg4[%c0_5, %c0_6] : memref<1x64xf32, #tpu.memory_space<vmem>>, vector<1x64xf32>
    %c0_7 = arith.constant 0 : index
    %c0_8 = arith.constant 0 : index
    %8 = vector.load %arg5[%c0_7, %c0_8] : memref<1x64xf32, #tpu.memory_space<vmem>>, vector<1x64xf32>
    %cst_9 = arith.constant dense<0.000000e+00> : vector<8xf32>
    %9 = vector.multi_reduction <add>, %6, %cst_9 [1] : vector<8x64xf32> to vector<8xf32>
    %10 = vector.shape_cast %9 : vector<8xf32> to vector<8x1xf32>
    %cst_10 = arith.constant 6.400000e+01 : f32
    %11 = vector.broadcast %cst_10 : f32 to vector<8x1xf32>
    %12 = arith.divf %10, %11 : vector<8x1xf32>
    %13 = vector.broadcast %12 : vector<8x1xf32> to vector<8x64xf32>
    %14 = arith.subf %6, %13 : vector<8x64xf32>
    %15 = arith.mulf %14, %14 : vector<8x64xf32>
    %cst_11 = arith.constant dense<0.000000e+00> : vector<8xf32>
    %16 = vector.multi_reduction <add>, %15, %cst_11 [1] : vector<8x64xf32> to vector<8xf32>
    %17 = vector.shape_cast %16 : vector<8xf32> to vector<8x1xf32>
    %cst_12 = arith.constant 6.400000e+01 : f32
    %18 = vector.broadcast %cst_12 : f32 to vector<8x1xf32>
    %19 = arith.divf %17, %18 : vector<8x1xf32>
    %20 = vector.broadcast %12 : vector<8x1xf32> to vector<8x64xf32>
    %21 = arith.subf %6, %20 : vector<8x64xf32>
    %cst_13 = arith.constant 9.99999974E-6 : f32
    %22 = vector.broadcast %cst_13 : f32 to vector<8x1xf32>
    %23 = arith.addf %19, %22 : vector<8x1xf32>
    %24 = math.rsqrt %23 : vector<8x1xf32>
    %25 = vector.broadcast %24 : vector<8x1xf32> to vector<8x64xf32>
    %26 = arith.mulf %21, %25 : vector<8x64xf32>
    %27 = vector.broadcast %7 : vector<1x64xf32> to vector<8x64xf32>
    %28 = arith.mulf %26, %27 : vector<8x64xf32>
    %29 = vector.broadcast %8 : vector<1x64xf32> to vector<8x64xf32>
    %30 = arith.addf %28, %29 : vector<8x64xf32>
    %c0_14 = arith.constant 0 : index
    %c0_15 = arith.constant 0 : index
    %31 = vector.load %arg6[%c0_14, %c0_15] : memref<8x64xf32, #tpu.memory_space<vmem>>, vector<8x64xf32>
    tpu.vector_store %arg6[%c0_14, %c0_15], %30 {strides = array<i32>} : memref<8x64xf32, #tpu.memory_space<vmem>>, vector<8x64xf32>,
    return
  }
  func.func @transform_0(%arg0: i32) -> (i32, i32) {
    %c0_i32 = arith.constant 0 : i32
    %c0_i32_0 = arith.constant 0 : i32
    return %arg0, %c0_i32 : i32, i32
  }
  func.func @transform_1(%arg0: i32) -> (i32, i32) {
    %c0_i32 = arith.constant 0 : i32
    %c0_i32_0 = arith.constant 0 : i32
    %c0_i32_1 = arith.constant 0 : i32
    return %c0_i32, %c0_i32_0 : i32, i32
  }
  func.func @transform_2(%arg0: i32) -> (i32, i32) {
    %c0_i32 = arith.constant 0 : i32
    %c0_i32_0 = arith.constant 0 : i32
    %c0_i32_1 = arith.constant 0 : i32
    return %c0_i32, %c0_i32_0 : i32, i32
  }
  func.func @transform_3(%arg0: i32) -> (i32, i32) {
    %c0_i32 = arith.constant 0 : i32
    %c0_i32_0 = arith.constant 0 : i32
    %c0_i32_1 = arith.constant 0 : i32
    return %c0_i32, %c0_i32_0 : i32, i32
  }
  func.func @transform_4(%arg0: i32) -> (i32, i32) {
    %c0_i32 = arith.constant 0 : i32
    %c0_i32_0 = arith.constant 0 : i32
    %c0_i32_1 = arith.constant 0 : i32
    return %c0_i32, %c0_i32_0 : i32, i32
  }
  func.func @transform_5(%arg0: i32) -> (i32, i32) {
    %c0_i32 = arith.constant 0 : i32
    %c0_i32_0 = arith.constant 0 : i32
    return %arg0, %c0_i32 : i32, i32
  }
}

module attributes {stable_mosaic.version = 11 : i64} {
  func.func @_window_attn_kernel(%arg0: i32, %arg1: memref<2x4x64xf32, #tpu.memory_space<vmem>>, %arg2: memref<64x192xbf16, #tpu.memory_space<vmem>>, %arg3: memref<1x192xf32, #tpu.memory_space<vmem>>, %arg4: memref<1x4xf32, #tpu.memory_space<vmem>>, %arg5: memref<4x4x4xf32, #tpu.memory_space<vmem>>, %arg6: memref<64x64xbf16, #tpu.memory_space<vmem>>, %arg7: memref<1x64xf32, #tpu.memory_space<vmem>>, %arg8: memref<1x64xf32, #tpu.memory_space<vmem>>, %arg9: memref<1x64xf32, #tpu.memory_space<vmem>>, %arg10: memref<2x4x64xf32, #tpu.memory_space<vmem>>) attributes {dimension_semantics = [#tpu.dimension_semantics<parallel>], iteration_bounds = array<i64: 1>, scalar_prefetch = 0 : i64, scratch_operands = 0 : i64, tpu.core_type = #tpu.core_type<tc>, window_params = [{transform_indices = @transform_0, window_bounds = array<i64: 2, 4, 64>}, {pipeline_mode = #tpu.pipeline_mode<synchronous>, transform_indices = @transform_1, window_bounds = array<i64: 64, 192>}, {pipeline_mode = #tpu.pipeline_mode<synchronous>, transform_indices = @transform_2, window_bounds = array<i64: 1, 192>}, {pipeline_mode = #tpu.pipeline_mode<synchronous>, transform_indices = @transform_3, window_bounds = array<i64: 1, 4>}, {pipeline_mode = #tpu.pipeline_mode<synchronous>, transform_indices = @transform_4, window_bounds = array<i64: 4, 4, 4>}, {pipeline_mode = #tpu.pipeline_mode<synchronous>, transform_indices = @transform_5, window_bounds = array<i64: 64, 64>}, {pipeline_mode = #tpu.pipeline_mode<synchronous>, transform_indices = @transform_6, window_bounds = array<i64: 1, 64>}, {pipeline_mode = #tpu.pipeline_mode<synchronous>, transform_indices = @transform_7, window_bounds = array<i64: 1, 64>}, {pipeline_mode = #tpu.pipeline_mode<synchronous>, transform_indices = @transform_8, window_bounds = array<i64: 1, 64>}, {transform_indices = @transform_9, window_bounds = array<i64: 2, 4, 64>}]} {
    %c0 = arith.constant 0 : index
    %c0_0 = arith.constant 0 : index
    %c0_1 = arith.constant 0 : index
    %0 = vector.load %arg1[%c0, %c0_0, %c0_1] : memref<2x4x64xf32, #tpu.memory_space<vmem>>, vector<2x4x64xf32>
    %1 = arith.truncf %0 : vector<2x4x64xf32> to vector<2x4x64xbf16>
    %c0_2 = arith.constant 0 : index
    %c0_3 = arith.constant 0 : index
    %2 = vector.load %arg2[%c0_2, %c0_3] : memref<64x192xbf16, #tpu.memory_space<vmem>>, vector<64x192xbf16>
    %cst = arith.constant dense<0.000000e+00> : vector<2x4x192xf32>
    %3 = tpu.matmul %1, %2, %cst {dimension_numbers = #tpu.dot_dimension_numbers<[2], [0], [0, 1], [1], [0, 0, 0, 1, 1, 1], [], []>} : vector<2x4x64xbf16>, vector<64x192xbf16>, vector<2x4x192xf32> -> vector<2x4x192xf32>
    %c0_4 = arith.constant 0 : index
    %c0_5 = arith.constant 0 : index
    %4 = vector.load %arg3[%c0_4, %c0_5] : memref<1x192xf32, #tpu.memory_space<vmem>>, vector<1x192xf32>
    %5 = vector.shape_cast %4 : vector<1x192xf32> to vector<1x1x192xf32>
    %6 = vector.broadcast %5 : vector<1x1x192xf32> to vector<2x4x192xf32>
    %7 = arith.addf %3, %6 : vector<2x4x192xf32>
    %c0_6 = arith.constant 0 : index
    %c0_7 = arith.constant 0 : index
    %8 = vector.load %arg4[%c0_6, %c0_7] : memref<1x4xf32, #tpu.memory_space<vmem>>, vector<1x4xf32>
    %9 = vector.extract_strided_slice %7 {offsets = [0, 0, 0], sizes = [2, 4, 16], strides = [1, 1, 1]} : vector<2x4x192xf32> to vector<2x4x16xf32>
    %10 = vector.extract_strided_slice %7 {offsets = [0, 0, 64], sizes = [2, 4, 16], strides = [1, 1, 1]} : vector<2x4x192xf32> to vector<2x4x16xf32>
    %11 = vector.extract_strided_slice %7 {offsets = [0, 0, 128], sizes = [2, 4, 16], strides = [1, 1, 1]} : vector<2x4x192xf32> to vector<2x4x16xf32>
    %12 = arith.mulf %9, %9 : vector<2x4x16xf32>
    %cst_8 = arith.constant dense<0.000000e+00> : vector<2x4xf32>
    %13 = vector.multi_reduction <add>, %12, %cst_8 [2] : vector<2x4x16xf32> to vector<2x4xf32>
    %14 = vector.shape_cast %13 : vector<2x4xf32> to vector<2x4x1xf32>
    %cst_9 = arith.constant 1.000000e-24 : f32
    %15 = vector.broadcast %cst_9 : f32 to vector<2x4x1xf32>
    %16 = arith.maximumf %14, %15 : vector<2x4x1xf32>
    %17 = math.rsqrt %16 : vector<2x4x1xf32>
    %18 = vector.broadcast %17 : vector<2x4x1xf32> to vector<2x4x16xf32>
    %19 = arith.mulf %9, %18 : vector<2x4x16xf32>
    %20 = arith.mulf %10, %10 : vector<2x4x16xf32>
    %cst_10 = arith.constant dense<0.000000e+00> : vector<2x4xf32>
    %21 = vector.multi_reduction <add>, %20, %cst_10 [2] : vector<2x4x16xf32> to vector<2x4xf32>
    %22 = vector.shape_cast %21 : vector<2x4xf32> to vector<2x4x1xf32>
    %cst_11 = arith.constant 1.000000e-24 : f32
    %23 = vector.broadcast %cst_11 : f32 to vector<2x4x1xf32>
    %24 = arith.maximumf %22, %23 : vector<2x4x1xf32>
    %25 = math.rsqrt %24 : vector<2x4x1xf32>
    %26 = vector.broadcast %25 : vector<2x4x1xf32> to vector<2x4x16xf32>
    %27 = arith.mulf %10, %26 : vector<2x4x16xf32>
    "tpu.trace_start"() <{level = 10 : i32, message = "gqd,gkd->gqk"}> : () -> ()
    %cst_12 = arith.constant dense<0.000000e+00> : vector<2x4x4xf32>
    %28 = tpu.matmul %19, %27, %cst_12 {dimension_numbers = #tpu.dot_dimension_numbers<[2], [2], [1], [1], [0, 0, 0, 1, 1, 1], [0], [0]>} : vector<2x4x16xf32>, vector<2x4x16xf32>, vector<2x4x4xf32> -> vector<2x4x4xf32>
    "tpu.trace_stop"() : () -> ()
    %29 = vector.extract_strided_slice %8 {offsets = [0, 0], sizes = [1, 1], strides = [1, 1]} : vector<1x4xf32> to vector<1x1xf32>
    %30 = vector.extract %29[0, 0] : f32 from vector<1x1xf32>
    %31 = vector.broadcast %30 : f32 to vector<2x4x4xf32>
    %32 = arith.mulf %28, %31 : vector<2x4x4xf32>
    %c0_13 = arith.constant 0 : index
    %c0_14 = arith.constant 0 : index
    %c0_15 = arith.constant 0 : index
    %33 = vector.load %arg5[%c0_13, %c0_14, %c0_15] : memref<4x4x4xf32, #tpu.memory_space<vmem>>, vector<1x4x4xf32>
    %34 = vector.shape_cast %33 : vector<1x4x4xf32> to vector<4x4xf32>
    %35 = vector.shape_cast %34 : vector<4x4xf32> to vector<1x4x4xf32>
    %36 = vector.broadcast %35 : vector<1x4x4xf32> to vector<2x4x4xf32>
    %37 = arith.addf %32, %36 : vector<2x4x4xf32>
    %cst_16 = arith.constant dense<0xFF800000> : vector<2x4xf32>
    %38 = vector.multi_reduction <maximumf>, %37, %cst_16 [2] : vector<2x4x4xf32> to vector<2x4xf32>
    %39 = vector.shape_cast %38 : vector<2x4xf32> to vector<2x4x1xf32>
    %40 = vector.broadcast %39 : vector<2x4x1xf32> to vector<2x4x4xf32>
    %41 = arith.subf %37, %40 : vector<2x4x4xf32>
    %42 = math.exp %41 : vector<2x4x4xf32>
    %cst_17 = arith.constant dense<0.000000e+00> : vector<2x4xf32>
    %43 = vector.multi_reduction <add>, %42, %cst_17 [2] : vector<2x4x4xf32> to vector<2x4xf32>
    %44 = vector.shape_cast %43 : vector<2x4xf32> to vector<2x4x1xf32>
    %45 = tpu.reciprocal %44 {approx = true} : vector<2x4x1xf32> -> vector<2x4x1xf32>
    %46 = vector.broadcast %45 : vector<2x4x1xf32> to vector<2x4x4xf32>
    %47 = arith.mulf %42, %46 : vector<2x4x4xf32>
    %48 = arith.truncf %47 : vector<2x4x4xf32> to vector<2x4x4xbf16>
    %49 = arith.truncf %11 : vector<2x4x16xf32> to vector<2x4x16xbf16>
    "tpu.trace_start"() <{level = 10 : i32, message = "gqk,gkd->gqd"}> : () -> ()
    %cst_18 = arith.constant dense<0.000000e+00> : vector<2x4x16xf32>
    %50 = tpu.matmul %48, %49, %cst_18 {dimension_numbers = #tpu.dot_dimension_numbers<[2], [1], [1], [2], [0, 0, 0, 1, 1, 2], [0], [0]>} : vector<2x4x4xbf16>, vector<2x4x16xbf16>, vector<2x4x16xf32> -> vector<2x4x16xf32>
    "tpu.trace_stop"() : () -> ()
    %51 = vector.extract_strided_slice %7 {offsets = [0, 0, 16], sizes = [2, 4, 16], strides = [1, 1, 1]} : vector<2x4x192xf32> to vector<2x4x16xf32>
    %52 = vector.extract_strided_slice %7 {offsets = [0, 0, 80], sizes = [2, 4, 16], strides = [1, 1, 1]} : vector<2x4x192xf32> to vector<2x4x16xf32>
    %53 = vector.extract_strided_slice %7 {offsets = [0, 0, 144], sizes = [2, 4, 16], strides = [1, 1, 1]} : vector<2x4x192xf32> to vector<2x4x16xf32>
    %54 = arith.mulf %51, %51 : vector<2x4x16xf32>
    %cst_19 = arith.constant dense<0.000000e+00> : vector<2x4xf32>
    %55 = vector.multi_reduction <add>, %54, %cst_19 [2] : vector<2x4x16xf32> to vector<2x4xf32>
    %56 = vector.shape_cast %55 : vector<2x4xf32> to vector<2x4x1xf32>
    %cst_20 = arith.constant 1.000000e-24 : f32
    %57 = vector.broadcast %cst_20 : f32 to vector<2x4x1xf32>
    %58 = arith.maximumf %56, %57 : vector<2x4x1xf32>
    %59 = math.rsqrt %58 : vector<2x4x1xf32>
    %60 = vector.broadcast %59 : vector<2x4x1xf32> to vector<2x4x16xf32>
    %61 = arith.mulf %51, %60 : vector<2x4x16xf32>
    %62 = arith.mulf %52, %52 : vector<2x4x16xf32>
    %cst_21 = arith.constant dense<0.000000e+00> : vector<2x4xf32>
    %63 = vector.multi_reduction <add>, %62, %cst_21 [2] : vector<2x4x16xf32> to vector<2x4xf32>
    %64 = vector.shape_cast %63 : vector<2x4xf32> to vector<2x4x1xf32>
    %cst_22 = arith.constant 1.000000e-24 : f32
    %65 = vector.broadcast %cst_22 : f32 to vector<2x4x1xf32>
    %66 = arith.maximumf %64, %65 : vector<2x4x1xf32>
    %67 = math.rsqrt %66 : vector<2x4x1xf32>
    %68 = vector.broadcast %67 : vector<2x4x1xf32> to vector<2x4x16xf32>
    %69 = arith.mulf %52, %68 : vector<2x4x16xf32>
    "tpu.trace_start"() <{level = 10 : i32, message = "gqd,gkd->gqk"}> : () -> ()
    %cst_23 = arith.constant dense<0.000000e+00> : vector<2x4x4xf32>
    %70 = tpu.matmul %61, %69, %cst_23 {dimension_numbers = #tpu.dot_dimension_numbers<[2], [2], [1], [1], [0, 0, 0, 1, 1, 1], [0], [0]>} : vector<2x4x16xf32>, vector<2x4x16xf32>, vector<2x4x4xf32> -> vector<2x4x4xf32>
    "tpu.trace_stop"() : () -> ()
    %71 = vector.extract_strided_slice %8 {offsets = [0, 1], sizes = [1, 1], strides = [1, 1]} : vector<1x4xf32> to vector<1x1xf32>
    %72 = vector.extract %71[0, 0] : f32 from vector<1x1xf32>
    %73 = vector.broadcast %72 : f32 to vector<2x4x4xf32>
    %74 = arith.mulf %70, %73 : vector<2x4x4xf32>
    %c1 = arith.constant 1 : index
    %c0_24 = arith.constant 0 : index
    %c0_25 = arith.constant 0 : index
    %75 = vector.load %arg5[%c1, %c0_24, %c0_25] : memref<4x4x4xf32, #tpu.memory_space<vmem>>, vector<1x4x4xf32>
    %76 = vector.shape_cast %75 : vector<1x4x4xf32> to vector<4x4xf32>
    %77 = vector.shape_cast %76 : vector<4x4xf32> to vector<1x4x4xf32>
    %78 = vector.broadcast %77 : vector<1x4x4xf32> to vector<2x4x4xf32>
    %79 = arith.addf %74, %78 : vector<2x4x4xf32>
    %cst_26 = arith.constant dense<0xFF800000> : vector<2x4xf32>
    %80 = vector.multi_reduction <maximumf>, %79, %cst_26 [2] : vector<2x4x4xf32> to vector<2x4xf32>
    %81 = vector.shape_cast %80 : vector<2x4xf32> to vector<2x4x1xf32>
    %82 = vector.broadcast %81 : vector<2x4x1xf32> to vector<2x4x4xf32>
    %83 = arith.subf %79, %82 : vector<2x4x4xf32>
    %84 = math.exp %83 : vector<2x4x4xf32>
    %cst_27 = arith.constant dense<0.000000e+00> : vector<2x4xf32>
    %85 = vector.multi_reduction <add>, %84, %cst_27 [2] : vector<2x4x4xf32> to vector<2x4xf32>
    %86 = vector.shape_cast %85 : vector<2x4xf32> to vector<2x4x1xf32>
    %87 = tpu.reciprocal %86 {approx = true} : vector<2x4x1xf32> -> vector<2x4x1xf32>
    %88 = vector.broadcast %87 : vector<2x4x1xf32> to vector<2x4x4xf32>
    %89 = arith.mulf %84, %88 : vector<2x4x4xf32>
    %90 = arith.truncf %89 : vector<2x4x4xf32> to vector<2x4x4xbf16>
    %91 = arith.truncf %53 : vector<2x4x16xf32> to vector<2x4x16xbf16>
    "tpu.trace_start"() <{level = 10 : i32, message = "gqk,gkd->gqd"}> : () -> ()
    %cst_28 = arith.constant dense<0.000000e+00> : vector<2x4x16xf32>
    %92 = tpu.matmul %90, %91, %cst_28 {dimension_numbers = #tpu.dot_dimension_numbers<[2], [1], [1], [2], [0, 0, 0, 1, 1, 2], [0], [0]>} : vector<2x4x4xbf16>, vector<2x4x16xbf16>, vector<2x4x16xf32> -> vector<2x4x16xf32>
    "tpu.trace_stop"() : () -> ()
    %93 = vector.extract_strided_slice %7 {offsets = [0, 0, 32], sizes = [2, 4, 16], strides = [1, 1, 1]} : vector<2x4x192xf32> to vector<2x4x16xf32>
    %94 = vector.extract_strided_slice %7 {offsets = [0, 0, 96], sizes = [2, 4, 16], strides = [1, 1, 1]} : vector<2x4x192xf32> to vector<2x4x16xf32>
    %95 = vector.extract_strided_slice %7 {offsets = [0, 0, 160], sizes = [2, 4, 16], strides = [1, 1, 1]} : vector<2x4x192xf32> to vector<2x4x16xf32>
    %96 = arith.mulf %93, %93 : vector<2x4x16xf32>
    %cst_29 = arith.constant dense<0.000000e+00> : vector<2x4xf32>
    %97 = vector.multi_reduction <add>, %96, %cst_29 [2] : vector<2x4x16xf32> to vector<2x4xf32>
    %98 = vector.shape_cast %97 : vector<2x4xf32> to vector<2x4x1xf32>
    %cst_30 = arith.constant 1.000000e-24 : f32
    %99 = vector.broadcast %cst_30 : f32 to vector<2x4x1xf32>
    %100 = arith.maximumf %98, %99 : vector<2x4x1xf32>
    %101 = math.rsqrt %100 : vector<2x4x1xf32>
    %102 = vector.broadcast %101 : vector<2x4x1xf32> to vector<2x4x16xf32>
    %103 = arith.mulf %93, %102 : vector<2x4x16xf32>
    %104 = arith.mulf %94, %94 : vector<2x4x16xf32>
    %cst_31 = arith.constant dense<0.000000e+00> : vector<2x4xf32>
    %105 = vector.multi_reduction <add>, %104, %cst_31 [2] : vector<2x4x16xf32> to vector<2x4xf32>
    %106 = vector.shape_cast %105 : vector<2x4xf32> to vector<2x4x1xf32>
    %cst_32 = arith.constant 1.000000e-24 : f32
    %107 = vector.broadcast %cst_32 : f32 to vector<2x4x1xf32>
    %108 = arith.maximumf %106, %107 : vector<2x4x1xf32>
    %109 = math.rsqrt %108 : vector<2x4x1xf32>
    %110 = vector.broadcast %109 : vector<2x4x1xf32> to vector<2x4x16xf32>
    %111 = arith.mulf %94, %110 : vector<2x4x16xf32>
    "tpu.trace_start"() <{level = 10 : i32, message = "gqd,gkd->gqk"}> : () -> ()
    %cst_33 = arith.constant dense<0.000000e+00> : vector<2x4x4xf32>
    %112 = tpu.matmul %103, %111, %cst_33 {dimension_numbers = #tpu.dot_dimension_numbers<[2], [2], [1], [1], [0, 0, 0, 1, 1, 1], [0], [0]>} : vector<2x4x16xf32>, vector<2x4x16xf32>, vector<2x4x4xf32> -> vector<2x4x4xf32>
    "tpu.trace_stop"() : () -> ()
    %113 = vector.extract_strided_slice %8 {offsets = [0, 2], sizes = [1, 1], strides = [1, 1]} : vector<1x4xf32> to vector<1x1xf32>
    %114 = vector.extract %113[0, 0] : f32 from vector<1x1xf32>
    %115 = vector.broadcast %114 : f32 to vector<2x4x4xf32>
    %116 = arith.mulf %112, %115 : vector<2x4x4xf32>
    %c2 = arith.constant 2 : index
    %c0_34 = arith.constant 0 : index
    %c0_35 = arith.constant 0 : index
    %117 = vector.load %arg5[%c2, %c0_34, %c0_35] : memref<4x4x4xf32, #tpu.memory_space<vmem>>, vector<1x4x4xf32>
    %118 = vector.shape_cast %117 : vector<1x4x4xf32> to vector<4x4xf32>
    %119 = vector.shape_cast %118 : vector<4x4xf32> to vector<1x4x4xf32>
    %120 = vector.broadcast %119 : vector<1x4x4xf32> to vector<2x4x4xf32>
    %121 = arith.addf %116, %120 : vector<2x4x4xf32>
    %cst_36 = arith.constant dense<0xFF800000> : vector<2x4xf32>
    %122 = vector.multi_reduction <maximumf>, %121, %cst_36 [2] : vector<2x4x4xf32> to vector<2x4xf32>
    %123 = vector.shape_cast %122 : vector<2x4xf32> to vector<2x4x1xf32>
    %124 = vector.broadcast %123 : vector<2x4x1xf32> to vector<2x4x4xf32>
    %125 = arith.subf %121, %124 : vector<2x4x4xf32>
    %126 = math.exp %125 : vector<2x4x4xf32>
    %cst_37 = arith.constant dense<0.000000e+00> : vector<2x4xf32>
    %127 = vector.multi_reduction <add>, %126, %cst_37 [2] : vector<2x4x4xf32> to vector<2x4xf32>
    %128 = vector.shape_cast %127 : vector<2x4xf32> to vector<2x4x1xf32>
    %129 = tpu.reciprocal %128 {approx = true} : vector<2x4x1xf32> -> vector<2x4x1xf32>
    %130 = vector.broadcast %129 : vector<2x4x1xf32> to vector<2x4x4xf32>
    %131 = arith.mulf %126, %130 : vector<2x4x4xf32>
    %132 = arith.truncf %131 : vector<2x4x4xf32> to vector<2x4x4xbf16>
    %133 = arith.truncf %95 : vector<2x4x16xf32> to vector<2x4x16xbf16>
    "tpu.trace_start"() <{level = 10 : i32, message = "gqk,gkd->gqd"}> : () -> ()
    %cst_38 = arith.constant dense<0.000000e+00> : vector<2x4x16xf32>
    %134 = tpu.matmul %132, %133, %cst_38 {dimension_numbers = #tpu.dot_dimension_numbers<[2], [1], [1], [2], [0, 0, 0, 1, 1, 2], [0], [0]>} : vector<2x4x4xbf16>, vector<2x4x16xbf16>, vector<2x4x16xf32> -> vector<2x4x16xf32>
    "tpu.trace_stop"() : () -> ()
    %135 = vector.extract_strided_slice %7 {offsets = [0, 0, 48], sizes = [2, 4, 16], strides = [1, 1, 1]} : vector<2x4x192xf32> to vector<2x4x16xf32>
    %136 = vector.extract_strided_slice %7 {offsets = [0, 0, 112], sizes = [2, 4, 16], strides = [1, 1, 1]} : vector<2x4x192xf32> to vector<2x4x16xf32>
    %137 = vector.extract_strided_slice %7 {offsets = [0, 0, 176], sizes = [2, 4, 16], strides = [1, 1, 1]} : vector<2x4x192xf32> to vector<2x4x16xf32>
    %138 = arith.mulf %135, %135 : vector<2x4x16xf32>
    %cst_39 = arith.constant dense<0.000000e+00> : vector<2x4xf32>
    %139 = vector.multi_reduction <add>, %138, %cst_39 [2] : vector<2x4x16xf32> to vector<2x4xf32>
    %140 = vector.shape_cast %139 : vector<2x4xf32> to vector<2x4x1xf32>
    %cst_40 = arith.constant 1.000000e-24 : f32
    %141 = vector.broadcast %cst_40 : f32 to vector<2x4x1xf32>
    %142 = arith.maximumf %140, %141 : vector<2x4x1xf32>
    %143 = math.rsqrt %142 : vector<2x4x1xf32>
    %144 = vector.broadcast %143 : vector<2x4x1xf32> to vector<2x4x16xf32>
    %145 = arith.mulf %135, %144 : vector<2x4x16xf32>
    %146 = arith.mulf %136, %136 : vector<2x4x16xf32>
    %cst_41 = arith.constant dense<0.000000e+00> : vector<2x4xf32>
    %147 = vector.multi_reduction <add>, %146, %cst_41 [2] : vector<2x4x16xf32> to vector<2x4xf32>
    %148 = vector.shape_cast %147 : vector<2x4xf32> to vector<2x4x1xf32>
    %cst_42 = arith.constant 1.000000e-24 : f32
    %149 = vector.broadcast %cst_42 : f32 to vector<2x4x1xf32>
    %150 = arith.maximumf %148, %149 : vector<2x4x1xf32>
    %151 = math.rsqrt %150 : vector<2x4x1xf32>
    %152 = vector.broadcast %151 : vector<2x4x1xf32> to vector<2x4x16xf32>
    %153 = arith.mulf %136, %152 : vector<2x4x16xf32>
    "tpu.trace_start"() <{level = 10 : i32, message = "gqd,gkd->gqk"}> : () -> ()
    %cst_43 = arith.constant dense<0.000000e+00> : vector<2x4x4xf32>
    %154 = tpu.matmul %145, %153, %cst_43 {dimension_numbers = #tpu.dot_dimension_numbers<[2], [2], [1], [1], [0, 0, 0, 1, 1, 1], [0], [0]>} : vector<2x4x16xf32>, vector<2x4x16xf32>, vector<2x4x4xf32> -> vector<2x4x4xf32>
    "tpu.trace_stop"() : () -> ()
    %155 = vector.extract_strided_slice %8 {offsets = [0, 3], sizes = [1, 1], strides = [1, 1]} : vector<1x4xf32> to vector<1x1xf32>
    %156 = vector.extract %155[0, 0] : f32 from vector<1x1xf32>
    %157 = vector.broadcast %156 : f32 to vector<2x4x4xf32>
    %158 = arith.mulf %154, %157 : vector<2x4x4xf32>
    %c3 = arith.constant 3 : index
    %c0_44 = arith.constant 0 : index
    %c0_45 = arith.constant 0 : index
    %159 = vector.load %arg5[%c3, %c0_44, %c0_45] : memref<4x4x4xf32, #tpu.memory_space<vmem>>, vector<1x4x4xf32>
    %160 = vector.shape_cast %159 : vector<1x4x4xf32> to vector<4x4xf32>
    %161 = vector.shape_cast %160 : vector<4x4xf32> to vector<1x4x4xf32>
    %162 = vector.broadcast %161 : vector<1x4x4xf32> to vector<2x4x4xf32>
    %163 = arith.addf %158, %162 : vector<2x4x4xf32>
    %cst_46 = arith.constant dense<0xFF800000> : vector<2x4xf32>
    %164 = vector.multi_reduction <maximumf>, %163, %cst_46 [2] : vector<2x4x4xf32> to vector<2x4xf32>
    %165 = vector.shape_cast %164 : vector<2x4xf32> to vector<2x4x1xf32>
    %166 = vector.broadcast %165 : vector<2x4x1xf32> to vector<2x4x4xf32>
    %167 = arith.subf %163, %166 : vector<2x4x4xf32>
    %168 = math.exp %167 : vector<2x4x4xf32>
    %cst_47 = arith.constant dense<0.000000e+00> : vector<2x4xf32>
    %169 = vector.multi_reduction <add>, %168, %cst_47 [2] : vector<2x4x4xf32> to vector<2x4xf32>
    %170 = vector.shape_cast %169 : vector<2x4xf32> to vector<2x4x1xf32>
    %171 = tpu.reciprocal %170 {approx = true} : vector<2x4x1xf32> -> vector<2x4x1xf32>
    %172 = vector.broadcast %171 : vector<2x4x1xf32> to vector<2x4x4xf32>
    %173 = arith.mulf %168, %172 : vector<2x4x4xf32>
    %174 = arith.truncf %173 : vector<2x4x4xf32> to vector<2x4x4xbf16>
    %175 = arith.truncf %137 : vector<2x4x16xf32> to vector<2x4x16xbf16>
    "tpu.trace_start"() <{level = 10 : i32, message = "gqk,gkd->gqd"}> : () -> ()
    %cst_48 = arith.constant dense<0.000000e+00> : vector<2x4x16xf32>
    %176 = tpu.matmul %174, %175, %cst_48 {dimension_numbers = #tpu.dot_dimension_numbers<[2], [1], [1], [2], [0, 0, 0, 1, 1, 2], [0], [0]>} : vector<2x4x4xbf16>, vector<2x4x16xbf16>, vector<2x4x16xf32> -> vector<2x4x16xf32>
    "tpu.trace_stop"() : () -> ()
    %177 = tpu.concatenate %50, %92, %134, %176 in 2 : vector<2x4x16xf32>, vector<2x4x16xf32>, vector<2x4x16xf32>, vector<2x4x16xf32> -> vector<2x4x64xf32>
    %178 = arith.truncf %177 : vector<2x4x64xf32> to vector<2x4x64xbf16>
    %c0_49 = arith.constant 0 : index
    %c0_50 = arith.constant 0 : index
    %179 = vector.load %arg6[%c0_49, %c0_50] : memref<64x64xbf16, #tpu.memory_space<vmem>>, vector<64x64xbf16>
    %cst_51 = arith.constant dense<0.000000e+00> : vector<2x4x64xf32>
    %180 = tpu.matmul %178, %179, %cst_51 {dimension_numbers = #tpu.dot_dimension_numbers<[2], [0], [0, 1], [1], [0, 0, 0, 1, 1, 1], [], []>} : vector<2x4x64xbf16>, vector<64x64xbf16>, vector<2x4x64xf32> -> vector<2x4x64xf32>
    %c0_52 = arith.constant 0 : index
    %c0_53 = arith.constant 0 : index
    %181 = vector.load %arg7[%c0_52, %c0_53] : memref<1x64xf32, #tpu.memory_space<vmem>>, vector<1x64xf32>
    %182 = vector.shape_cast %181 : vector<1x64xf32> to vector<1x1x64xf32>
    %183 = vector.broadcast %182 : vector<1x1x64xf32> to vector<2x4x64xf32>
    %184 = arith.addf %180, %183 : vector<2x4x64xf32>
    %c0_54 = arith.constant 0 : index
    %c0_55 = arith.constant 0 : index
    %185 = vector.load %arg8[%c0_54, %c0_55] : memref<1x64xf32, #tpu.memory_space<vmem>>, vector<1x64xf32>
    %c0_56 = arith.constant 0 : index
    %c0_57 = arith.constant 0 : index
    %186 = vector.load %arg9[%c0_56, %c0_57] : memref<1x64xf32, #tpu.memory_space<vmem>>, vector<1x64xf32>
    %cst_58 = arith.constant dense<0.000000e+00> : vector<2x4xf32>
    %187 = vector.multi_reduction <add>, %184, %cst_58 [2] : vector<2x4x64xf32> to vector<2x4xf32>
    %188 = vector.shape_cast %187 : vector<2x4xf32> to vector<2x4x1xf32>
    %cst_59 = arith.constant 6.400000e+01 : f32
    %189 = vector.broadcast %cst_59 : f32 to vector<2x4x1xf32>
    %190 = arith.divf %188, %189 : vector<2x4x1xf32>
    %191 = vector.broadcast %190 : vector<2x4x1xf32> to vector<2x4x64xf32>
    %192 = arith.subf %184, %191 : vector<2x4x64xf32>
    %193 = arith.mulf %192, %192 : vector<2x4x64xf32>
    %cst_60 = arith.constant dense<0.000000e+00> : vector<2x4xf32>
    %194 = vector.multi_reduction <add>, %193, %cst_60 [2] : vector<2x4x64xf32> to vector<2x4xf32>
    %195 = vector.shape_cast %194 : vector<2x4xf32> to vector<2x4x1xf32>
    %cst_61 = arith.constant 6.400000e+01 : f32
    %196 = vector.broadcast %cst_61 : f32 to vector<2x4x1xf32>
    %197 = arith.divf %195, %196 : vector<2x4x1xf32>
    %198 = vector.broadcast %190 : vector<2x4x1xf32> to vector<2x4x64xf32>
    %199 = arith.subf %184, %198 : vector<2x4x64xf32>
    %cst_62 = arith.constant 9.99999974E-6 : f32
    %200 = vector.broadcast %cst_62 : f32 to vector<2x4x1xf32>
    %201 = arith.addf %197, %200 : vector<2x4x1xf32>
    %202 = math.rsqrt %201 : vector<2x4x1xf32>
    %203 = vector.broadcast %202 : vector<2x4x1xf32> to vector<2x4x64xf32>
    %204 = arith.mulf %199, %203 : vector<2x4x64xf32>
    %205 = vector.shape_cast %185 : vector<1x64xf32> to vector<1x1x64xf32>
    %206 = vector.broadcast %205 : vector<1x1x64xf32> to vector<2x4x64xf32>
    %207 = arith.mulf %204, %206 : vector<2x4x64xf32>
    %208 = vector.shape_cast %186 : vector<1x64xf32> to vector<1x1x64xf32>
    %209 = vector.broadcast %208 : vector<1x1x64xf32> to vector<2x4x64xf32>
    %210 = arith.addf %207, %209 : vector<2x4x64xf32>
    %211 = arith.addf %0, %210 : vector<2x4x64xf32>
    %c0_63 = arith.constant 0 : index
    %c0_64 = arith.constant 0 : index
    %c0_65 = arith.constant 0 : index
    %212 = vector.load %arg10[%c0_63, %c0_64, %c0_65] : memref<2x4x64xf32, #tpu.memory_space<vmem>>, vector<2x4x64xf32>
    tpu.vector_store %arg10[%c0_63, %c0_64, %c0_65], %211 {strides = array<i32>} : memref<2x4x64xf32, #tpu.memory_space<vmem>>, vector<2x4x64xf32>,
    return
  }
  func.func @transform_0(%arg0: i32) -> (i32, i32, i32) {
    %c0_i32 = arith.constant 0 : i32
    %c0_i32_0 = arith.constant 0 : i32
    %c0_i32_1 = arith.constant 0 : i32
    return %arg0, %c0_i32, %c0_i32_0 : i32, i32, i32
  }
  func.func @transform_1(%arg0: i32) -> (i32, i32) {
    %c0_i32 = arith.constant 0 : i32
    %c0_i32_0 = arith.constant 0 : i32
    %c0_i32_1 = arith.constant 0 : i32
    return %c0_i32, %c0_i32_0 : i32, i32
  }
  func.func @transform_2(%arg0: i32) -> (i32, i32) {
    %c0_i32 = arith.constant 0 : i32
    %c0_i32_0 = arith.constant 0 : i32
    %c0_i32_1 = arith.constant 0 : i32
    return %c0_i32, %c0_i32_0 : i32, i32
  }
  func.func @transform_3(%arg0: i32) -> (i32, i32) {
    %c0_i32 = arith.constant 0 : i32
    %c0_i32_0 = arith.constant 0 : i32
    %c0_i32_1 = arith.constant 0 : i32
    return %c0_i32, %c0_i32_0 : i32, i32
  }
  func.func @transform_4(%arg0: i32) -> (i32, i32, i32) {
    %c0_i32 = arith.constant 0 : i32
    %c0_i32_0 = arith.constant 0 : i32
    %c0_i32_1 = arith.constant 0 : i32
    %c0_i32_2 = arith.constant 0 : i32
    return %c0_i32, %c0_i32_0, %c0_i32_1 : i32, i32, i32
  }
  func.func @transform_5(%arg0: i32) -> (i32, i32) {
    %c0_i32 = arith.constant 0 : i32
    %c0_i32_0 = arith.constant 0 : i32
    %c0_i32_1 = arith.constant 0 : i32
    return %c0_i32, %c0_i32_0 : i32, i32
  }
  func.func @transform_6(%arg0: i32) -> (i32, i32) {
    %c0_i32 = arith.constant 0 : i32
    %c0_i32_0 = arith.constant 0 : i32
    %c0_i32_1 = arith.constant 0 : i32
    return %c0_i32, %c0_i32_0 : i32, i32
  }
  func.func @transform_7(%arg0: i32) -> (i32, i32) {
    %c0_i32 = arith.constant 0 : i32
    %c0_i32_0 = arith.constant 0 : i32
    %c0_i32_1 = arith.constant 0 : i32
    return %c0_i32, %c0_i32_0 : i32, i32
  }
  func.func @transform_8(%arg0: i32) -> (i32, i32) {
    %c0_i32 = arith.constant 0 : i32
    %c0_i32_0 = arith.constant 0 : i32
    %c0_i32_1 = arith.constant 0 : i32
    return %c0_i32, %c0_i32_0 : i32, i32
  }
  func.func @transform_9(%arg0: i32) -> (i32, i32, i32) {
    %c0_i32 = arith.constant 0 : i32
    %c0_i32_0 = arith.constant 0 : i32
    %c0_i32_1 = arith.constant 0 : i32
    return %arg0, %c0_i32, %c0_i32_0 : i32, i32, i32
  }
}

module attributes {stable_mosaic.version = 11 : i64} {
  func.func @_mlp_kernel(%arg0: i32, %arg1: memref<8x64xf32, #tpu.memory_space<vmem>>, %arg2: memref<64x256xbf16, #tpu.memory_space<vmem>>, %arg3: memref<1x256xf32, #tpu.memory_space<vmem>>, %arg4: memref<256x64xbf16, #tpu.memory_space<vmem>>, %arg5: memref<1x64xf32, #tpu.memory_space<vmem>>, %arg6: memref<1x64xf32, #tpu.memory_space<vmem>>, %arg7: memref<1x64xf32, #tpu.memory_space<vmem>>, %arg8: memref<8x64xf32, #tpu.memory_space<vmem>>) attributes {dimension_semantics = [#tpu.dimension_semantics<parallel>], iteration_bounds = array<i64: 1>, scalar_prefetch = 0 : i64, scratch_operands = 0 : i64, tpu.core_type = #tpu.core_type<tc>, window_params = [{transform_indices = @transform_0, window_bounds = array<i64: 8, 64>}, {pipeline_mode = #tpu.pipeline_mode<synchronous>, transform_indices = @transform_1, window_bounds = array<i64: 64, 256>}, {pipeline_mode = #tpu.pipeline_mode<synchronous>, transform_indices = @transform_2, window_bounds = array<i64: 1, 256>}, {pipeline_mode = #tpu.pipeline_mode<synchronous>, transform_indices = @transform_3, window_bounds = array<i64: 256, 64>}, {pipeline_mode = #tpu.pipeline_mode<synchronous>, transform_indices = @transform_4, window_bounds = array<i64: 1, 64>}, {pipeline_mode = #tpu.pipeline_mode<synchronous>, transform_indices = @transform_5, window_bounds = array<i64: 1, 64>}, {pipeline_mode = #tpu.pipeline_mode<synchronous>, transform_indices = @transform_6, window_bounds = array<i64: 1, 64>}, {transform_indices = @transform_7, window_bounds = array<i64: 8, 64>}]} {
    %c0 = arith.constant 0 : index
    %c0_0 = arith.constant 0 : index
    %0 = vector.load %arg1[%c0, %c0_0] : memref<8x64xf32, #tpu.memory_space<vmem>>, vector<8x64xf32>
    %1 = arith.truncf %0 : vector<8x64xf32> to vector<8x64xbf16>
    %c0_1 = arith.constant 0 : index
    %c0_2 = arith.constant 0 : index
    %2 = vector.load %arg2[%c0_1, %c0_2] : memref<64x256xbf16, #tpu.memory_space<vmem>>, vector<64x256xbf16>
    %cst = arith.constant dense<0.000000e+00> : vector<8x256xf32>
    %3 = tpu.matmul %1, %2, %cst {dimension_numbers = #tpu.dot_dimension_numbers<[1], [0], [0], [1], [0, 0, 1, 1], [], []>} : vector<8x64xbf16>, vector<64x256xbf16>, vector<8x256xf32> -> vector<8x256xf32>
    %c0_3 = arith.constant 0 : index
    %c0_4 = arith.constant 0 : index
    %4 = vector.load %arg3[%c0_3, %c0_4] : memref<1x256xf32, #tpu.memory_space<vmem>>, vector<1x256xf32>
    %5 = vector.broadcast %4 : vector<1x256xf32> to vector<8x256xf32>
    %6 = arith.addf %3, %5 : vector<8x256xf32>
    %cst_5 = arith.constant 5.000000e-01 : f32
    %7 = vector.broadcast %cst_5 : f32 to vector<8x256xf32>
    %8 = arith.mulf %7, %6 : vector<8x256xf32>
    %cst_6 = arith.constant 4.471500e-02 : f32
    %9 = vector.broadcast %cst_6 : f32 to vector<8x256xf32>
    %10 = arith.mulf %9, %6 : vector<8x256xf32>
    %11 = arith.mulf %10, %6 : vector<8x256xf32>
    %12 = arith.mulf %11, %6 : vector<8x256xf32>
    %13 = arith.addf %6, %12 : vector<8x256xf32>
    %cst_7 = arith.constant 0.797884583 : f32
    %14 = vector.broadcast %cst_7 : f32 to vector<8x256xf32>
    %15 = arith.mulf %14, %13 : vector<8x256xf32>
    %16 = math.tanh %15 : vector<8x256xf32>
    %cst_8 = arith.constant 1.000000e+00 : f32
    %17 = vector.broadcast %cst_8 : f32 to vector<8x256xf32>
    %18 = arith.addf %17, %16 : vector<8x256xf32>
    %19 = arith.mulf %8, %18 : vector<8x256xf32>
    %20 = arith.truncf %19 : vector<8x256xf32> to vector<8x256xbf16>
    %c0_9 = arith.constant 0 : index
    %c0_10 = arith.constant 0 : index
    %21 = vector.load %arg4[%c0_9, %c0_10] : memref<256x64xbf16, #tpu.memory_space<vmem>>, vector<256x64xbf16>
    %cst_11 = arith.constant dense<0.000000e+00> : vector<8x64xf32>
    %22 = tpu.matmul %20, %21, %cst_11 {dimension_numbers = #tpu.dot_dimension_numbers<[1], [0], [0], [1], [0, 0, 1, 1], [], []>} : vector<8x256xbf16>, vector<256x64xbf16>, vector<8x64xf32> -> vector<8x64xf32>
    %c0_12 = arith.constant 0 : index
    %c0_13 = arith.constant 0 : index
    %23 = vector.load %arg5[%c0_12, %c0_13] : memref<1x64xf32, #tpu.memory_space<vmem>>, vector<1x64xf32>
    %24 = vector.broadcast %23 : vector<1x64xf32> to vector<8x64xf32>
    %25 = arith.addf %22, %24 : vector<8x64xf32>
    %c0_14 = arith.constant 0 : index
    %c0_15 = arith.constant 0 : index
    %26 = vector.load %arg6[%c0_14, %c0_15] : memref<1x64xf32, #tpu.memory_space<vmem>>, vector<1x64xf32>
    %c0_16 = arith.constant 0 : index
    %c0_17 = arith.constant 0 : index
    %27 = vector.load %arg7[%c0_16, %c0_17] : memref<1x64xf32, #tpu.memory_space<vmem>>, vector<1x64xf32>
    %cst_18 = arith.constant dense<0.000000e+00> : vector<8xf32>
    %28 = vector.multi_reduction <add>, %25, %cst_18 [1] : vector<8x64xf32> to vector<8xf32>
    %29 = vector.shape_cast %28 : vector<8xf32> to vector<8x1xf32>
    %cst_19 = arith.constant 6.400000e+01 : f32
    %30 = vector.broadcast %cst_19 : f32 to vector<8x1xf32>
    %31 = arith.divf %29, %30 : vector<8x1xf32>
    %32 = vector.broadcast %31 : vector<8x1xf32> to vector<8x64xf32>
    %33 = arith.subf %25, %32 : vector<8x64xf32>
    %34 = arith.mulf %33, %33 : vector<8x64xf32>
    %cst_20 = arith.constant dense<0.000000e+00> : vector<8xf32>
    %35 = vector.multi_reduction <add>, %34, %cst_20 [1] : vector<8x64xf32> to vector<8xf32>
    %36 = vector.shape_cast %35 : vector<8xf32> to vector<8x1xf32>
    %cst_21 = arith.constant 6.400000e+01 : f32
    %37 = vector.broadcast %cst_21 : f32 to vector<8x1xf32>
    %38 = arith.divf %36, %37 : vector<8x1xf32>
    %39 = vector.broadcast %31 : vector<8x1xf32> to vector<8x64xf32>
    %40 = arith.subf %25, %39 : vector<8x64xf32>
    %cst_22 = arith.constant 9.99999974E-6 : f32
    %41 = vector.broadcast %cst_22 : f32 to vector<8x1xf32>
    %42 = arith.addf %38, %41 : vector<8x1xf32>
    %43 = math.rsqrt %42 : vector<8x1xf32>
    %44 = vector.broadcast %43 : vector<8x1xf32> to vector<8x64xf32>
    %45 = arith.mulf %40, %44 : vector<8x64xf32>
    %46 = vector.broadcast %26 : vector<1x64xf32> to vector<8x64xf32>
    %47 = arith.mulf %45, %46 : vector<8x64xf32>
    %48 = vector.broadcast %27 : vector<1x64xf32> to vector<8x64xf32>
    %49 = arith.addf %47, %48 : vector<8x64xf32>
    %50 = arith.addf %0, %49 : vector<8x64xf32>
    %c0_23 = arith.constant 0 : index
    %c0_24 = arith.constant 0 : index
    %51 = vector.load %arg8[%c0_23, %c0_24] : memref<8x64xf32, #tpu.memory_space<vmem>>, vector<8x64xf32>
    tpu.vector_store %arg8[%c0_23, %c0_24], %50 {strides = array<i32>} : memref<8x64xf32, #tpu.memory_space<vmem>>, vector<8x64xf32>,
    return
  }
  func.func @transform_0(%arg0: i32) -> (i32, i32) {
    %c0_i32 = arith.constant 0 : i32
    %c0_i32_0 = arith.constant 0 : i32
    return %arg0, %c0_i32 : i32, i32
  }
  func.func @transform_1(%arg0: i32) -> (i32, i32) {
    %c0_i32 = arith.constant 0 : i32
    %c0_i32_0 = arith.constant 0 : i32
    %c0_i32_1 = arith.constant 0 : i32
    return %c0_i32, %c0_i32_0 : i32, i32
  }
  func.func @transform_2(%arg0: i32) -> (i32, i32) {
    %c0_i32 = arith.constant 0 : i32
    %c0_i32_0 = arith.constant 0 : i32
    %c0_i32_1 = arith.constant 0 : i32
    return %c0_i32, %c0_i32_0 : i32, i32
  }
  func.func @transform_3(%arg0: i32) -> (i32, i32) {
    %c0_i32 = arith.constant 0 : i32
    %c0_i32_0 = arith.constant 0 : i32
    %c0_i32_1 = arith.constant 0 : i32
    return %c0_i32, %c0_i32_0 : i32, i32
  }
  func.func @transform_4(%arg0: i32) -> (i32, i32) {
    %c0_i32 = arith.constant 0 : i32
    %c0_i32_0 = arith.constant 0 : i32
    %c0_i32_1 = arith.constant 0 : i32
    return %c0_i32, %c0_i32_0 : i32, i32
  }
  func.func @transform_5(%arg0: i32) -> (i32, i32) {
    %c0_i32 = arith.constant 0 : i32
    %c0_i32_0 = arith.constant 0 : i32
    %c0_i32_1 = arith.constant 0 : i32
    return %c0_i32, %c0_i32_0 : i32, i32
  }
  func.func @transform_6(%arg0: i32) -> (i32, i32) {
    %c0_i32 = arith.constant 0 : i32
    %c0_i32_0 = arith.constant 0 : i32
    %c0_i32_1 = arith.constant 0 : i32
    return %c0_i32, %c0_i32_0 : i32, i32
  }
  func.func @transform_7(%arg0: i32) -> (i32, i32) {
    %c0_i32 = arith.constant 0 : i32
    %c0_i32_0 = arith.constant 0 : i32
    return %arg0, %c0_i32 : i32, i32
  }
}

module attributes {stable_mosaic.version = 11 : i64} {
  func.func @_mlp_kernel(%arg0: i32, %arg1: memref<8x64xf32, #tpu.memory_space<vmem>>, %arg2: memref<64x256xbf16, #tpu.memory_space<vmem>>, %arg3: memref<1x256xf32, #tpu.memory_space<vmem>>, %arg4: memref<256x64xbf16, #tpu.memory_space<vmem>>, %arg5: memref<1x64xf32, #tpu.memory_space<vmem>>, %arg6: memref<1x64xf32, #tpu.memory_space<vmem>>, %arg7: memref<1x64xf32, #tpu.memory_space<vmem>>, %arg8: memref<8x64xf32, #tpu.memory_space<vmem>>) attributes {dimension_semantics = [#tpu.dimension_semantics<parallel>], iteration_bounds = array<i64: 1>, scalar_prefetch = 0 : i64, scratch_operands = 0 : i64, tpu.core_type = #tpu.core_type<tc>, window_params = [{transform_indices = @transform_0, window_bounds = array<i64: 8, 64>}, {pipeline_mode = #tpu.pipeline_mode<synchronous>, transform_indices = @transform_1, window_bounds = array<i64: 64, 256>}, {pipeline_mode = #tpu.pipeline_mode<synchronous>, transform_indices = @transform_2, window_bounds = array<i64: 1, 256>}, {pipeline_mode = #tpu.pipeline_mode<synchronous>, transform_indices = @transform_3, window_bounds = array<i64: 256, 64>}, {pipeline_mode = #tpu.pipeline_mode<synchronous>, transform_indices = @transform_4, window_bounds = array<i64: 1, 64>}, {pipeline_mode = #tpu.pipeline_mode<synchronous>, transform_indices = @transform_5, window_bounds = array<i64: 1, 64>}, {pipeline_mode = #tpu.pipeline_mode<synchronous>, transform_indices = @transform_6, window_bounds = array<i64: 1, 64>}, {transform_indices = @transform_7, window_bounds = array<i64: 8, 64>}]} {
    %c0 = arith.constant 0 : index
    %c0_0 = arith.constant 0 : index
    %0 = vector.load %arg1[%c0, %c0_0] : memref<8x64xf32, #tpu.memory_space<vmem>>, vector<8x64xf32>
    %1 = arith.truncf %0 : vector<8x64xf32> to vector<8x64xbf16>
    %c0_1 = arith.constant 0 : index
    %c0_2 = arith.constant 0 : index
    %2 = vector.load %arg2[%c0_1, %c0_2] : memref<64x256xbf16, #tpu.memory_space<vmem>>, vector<64x256xbf16>
    %cst = arith.constant dense<0.000000e+00> : vector<8x256xf32>
    %3 = tpu.matmul %1, %2, %cst {dimension_numbers = #tpu.dot_dimension_numbers<[1], [0], [0], [1], [0, 0, 1, 1], [], []>} : vector<8x64xbf16>, vector<64x256xbf16>, vector<8x256xf32> -> vector<8x256xf32>
    %c0_3 = arith.constant 0 : index
    %c0_4 = arith.constant 0 : index
    %4 = vector.load %arg3[%c0_3, %c0_4] : memref<1x256xf32, #tpu.memory_space<vmem>>, vector<1x256xf32>
    %5 = vector.broadcast %4 : vector<1x256xf32> to vector<8x256xf32>
    %6 = arith.addf %3, %5 : vector<8x256xf32>
    %cst_5 = arith.constant 5.000000e-01 : f32
    %7 = vector.broadcast %cst_5 : f32 to vector<8x256xf32>
    %8 = arith.mulf %7, %6 : vector<8x256xf32>
    %cst_6 = arith.constant 4.471500e-02 : f32
    %9 = vector.broadcast %cst_6 : f32 to vector<8x256xf32>
    %10 = arith.mulf %9, %6 : vector<8x256xf32>
    %11 = arith.mulf %10, %6 : vector<8x256xf32>
    %12 = arith.mulf %11, %6 : vector<8x256xf32>
    %13 = arith.addf %6, %12 : vector<8x256xf32>
    %cst_7 = arith.constant 0.797884583 : f32
    %14 = vector.broadcast %cst_7 : f32 to vector<8x256xf32>
    %15 = arith.mulf %14, %13 : vector<8x256xf32>
    %16 = math.tanh %15 : vector<8x256xf32>
    %cst_8 = arith.constant 1.000000e+00 : f32
    %17 = vector.broadcast %cst_8 : f32 to vector<8x256xf32>
    %18 = arith.addf %17, %16 : vector<8x256xf32>
    %19 = arith.mulf %8, %18 : vector<8x256xf32>
    %20 = arith.truncf %19 : vector<8x256xf32> to vector<8x256xbf16>
    %c0_9 = arith.constant 0 : index
    %c0_10 = arith.constant 0 : index
    %21 = vector.load %arg4[%c0_9, %c0_10] : memref<256x64xbf16, #tpu.memory_space<vmem>>, vector<256x64xbf16>
    %cst_11 = arith.constant dense<0.000000e+00> : vector<8x64xf32>
    %22 = tpu.matmul %20, %21, %cst_11 {dimension_numbers = #tpu.dot_dimension_numbers<[1], [0], [0], [1], [0, 0, 1, 1], [], []>} : vector<8x256xbf16>, vector<256x64xbf16>, vector<8x64xf32> -> vector<8x64xf32>
    %c0_12 = arith.constant 0 : index
    %c0_13 = arith.constant 0 : index
    %23 = vector.load %arg5[%c0_12, %c0_13] : memref<1x64xf32, #tpu.memory_space<vmem>>, vector<1x64xf32>
    %24 = vector.broadcast %23 : vector<1x64xf32> to vector<8x64xf32>
    %25 = arith.addf %22, %24 : vector<8x64xf32>
    %c0_14 = arith.constant 0 : index
    %c0_15 = arith.constant 0 : index
    %26 = vector.load %arg6[%c0_14, %c0_15] : memref<1x64xf32, #tpu.memory_space<vmem>>, vector<1x64xf32>
    %c0_16 = arith.constant 0 : index
    %c0_17 = arith.constant 0 : index
    %27 = vector.load %arg7[%c0_16, %c0_17] : memref<1x64xf32, #tpu.memory_space<vmem>>, vector<1x64xf32>
    %cst_18 = arith.constant dense<0.000000e+00> : vector<8xf32>
    %28 = vector.multi_reduction <add>, %25, %cst_18 [1] : vector<8x64xf32> to vector<8xf32>
    %29 = vector.shape_cast %28 : vector<8xf32> to vector<8x1xf32>
    %cst_19 = arith.constant 6.400000e+01 : f32
    %30 = vector.broadcast %cst_19 : f32 to vector<8x1xf32>
    %31 = arith.divf %29, %30 : vector<8x1xf32>
    %32 = vector.broadcast %31 : vector<8x1xf32> to vector<8x64xf32>
    %33 = arith.subf %25, %32 : vector<8x64xf32>
    %34 = arith.mulf %33, %33 : vector<8x64xf32>
    %cst_20 = arith.constant dense<0.000000e+00> : vector<8xf32>
    %35 = vector.multi_reduction <add>, %34, %cst_20 [1] : vector<8x64xf32> to vector<8xf32>
    %36 = vector.shape_cast %35 : vector<8xf32> to vector<8x1xf32>
    %cst_21 = arith.constant 6.400000e+01 : f32
    %37 = vector.broadcast %cst_21 : f32 to vector<8x1xf32>
    %38 = arith.divf %36, %37 : vector<8x1xf32>
    %39 = vector.broadcast %31 : vector<8x1xf32> to vector<8x64xf32>
    %40 = arith.subf %25, %39 : vector<8x64xf32>
    %cst_22 = arith.constant 9.99999974E-6 : f32
    %41 = vector.broadcast %cst_22 : f32 to vector<8x1xf32>
    %42 = arith.addf %38, %41 : vector<8x1xf32>
    %43 = math.rsqrt %42 : vector<8x1xf32>
    %44 = vector.broadcast %43 : vector<8x1xf32> to vector<8x64xf32>
    %45 = arith.mulf %40, %44 : vector<8x64xf32>
    %46 = vector.broadcast %26 : vector<1x64xf32> to vector<8x64xf32>
    %47 = arith.mulf %45, %46 : vector<8x64xf32>
    %48 = vector.broadcast %27 : vector<1x64xf32> to vector<8x64xf32>
    %49 = arith.addf %47, %48 : vector<8x64xf32>
    %50 = arith.addf %0, %49 : vector<8x64xf32>
    %c0_23 = arith.constant 0 : index
    %c0_24 = arith.constant 0 : index
    %51 = vector.load %arg8[%c0_23, %c0_24] : memref<8x64xf32, #tpu.memory_space<vmem>>, vector<8x64xf32>
    tpu.vector_store %arg8[%c0_23, %c0_24], %50 {strides = array<i32>} : memref<8x64xf32, #tpu.memory_space<vmem>>, vector<8x64xf32>,
    return
  }
  func.func @transform_0(%arg0: i32) -> (i32, i32) {
    %c0_i32 = arith.constant 0 : i32
    %c0_i32_0 = arith.constant 0 : i32
    return %arg0, %c0_i32 : i32, i32
  }
  func.func @transform_1(%arg0: i32) -> (i32, i32) {
    %c0_i32 = arith.constant 0 : i32
    %c0_i32_0 = arith.constant 0 : i32
    %c0_i32_1 = arith.constant 0 : i32
    return %c0_i32, %c0_i32_0 : i32, i32
  }
  func.func @transform_2(%arg0: i32) -> (i32, i32) {
    %c0_i32 = arith.constant 0 : i32
    %c0_i32_0 = arith.constant 0 : i32
    %c0_i32_1 = arith.constant 0 : i32
    return %c0_i32, %c0_i32_0 : i32, i32
  }
  func.func @transform_3(%arg0: i32) -> (i32, i32) {
    %c0_i32 = arith.constant 0 : i32
    %c0_i32_0 = arith.constant 0 : i32
    %c0_i32_1 = arith.constant 0 : i32
    return %c0_i32, %c0_i32_0 : i32, i32
  }
  func.func @transform_4(%arg0: i32) -> (i32, i32) {
    %c0_i32 = arith.constant 0 : i32
    %c0_i32_0 = arith.constant 0 : i32
    %c0_i32_1 = arith.constant 0 : i32
    return %c0_i32, %c0_i32_0 : i32, i32
  }
  func.func @transform_5(%arg0: i32) -> (i32, i32) {
    %c0_i32 = arith.constant 0 : i32
    %c0_i32_0 = arith.constant 0 : i32
    %c0_i32_1 = arith.constant 0 : i32
    return %c0_i32, %c0_i32_0 : i32, i32
  }
  func.func @transform_6(%arg0: i32) -> (i32, i32) {
    %c0_i32 = arith.constant 0 : i32
    %c0_i32_0 = arith.constant 0 : i32
    %c0_i32_1 = arith.constant 0 : i32
    return %c0_i32, %c0_i32_0 : i32, i32
  }
  func.func @transform_7(%arg0: i32) -> (i32, i32) {
    %c0_i32 = arith.constant 0 : i32
    %c0_i32_0 = arith.constant 0 : i32
    return %arg0, %c0_i32 : i32, i32
  }
}

</mosaic_0001>

<llo_original>
// kernel: custom_swin_encoder_forward.10
$region0: #{custom_swin_encoder_forward.10}
  #allocation0 [shape = 'u32[]', space=smem, size = 0x4, offset = 0x4, fixed_abs, tag = 'smem constant byte address 0x4 - core index']
  #allocation1 [shape = 'u32[72,128]{1,0:T(1,128)}', space=vmem, size = 0x9000, scoped, tag = 'internal scratch']
  %s0 = inlined_call_operand.vmem [shape: f32[32,48], index: 0, kind: input, shape index: {}]
  %s1 = inlined_call_operand.vmem [shape: bf16[48,32], index: 1, kind: input, shape index: {}]
  %s2 = inlined_call_operand.vmem [shape: f32[1,32], index: 2, kind: input, shape index: {}]
  %s3 = inlined_call_operand.vmem [shape: f32[1,32], index: 3, kind: input, shape index: {}]
  %s4 = inlined_call_operand.vmem [shape: f32[1,32], index: 4, kind: input, shape index: {}]
  %s5 = inlined_call_operand.vmem [shape: f32[32,32], index: 5, kind: output, shape index: {}]
  %s6 = sld [smem:[#allocation0]]
  $region30: #{custom_swin_encoder_forward.10} parent=0
    _
  %s8 = ssub.s32 1, %s6
  %s9 = scalar_select 0, %s8, %s6
  // Predicated region
  $region2: #{custom_swin_encoder_forward.10} parent=0 // pred_check
    _
  $region3: #{custom_swin_encoder_forward.10} parent=0 // pred_check_branch
    %11 = sbr.rel (0) target = $region5
  $region4: #{custom_swin_encoder_forward.10} parent=0 // pred_region
    _
  $region5: #{custom_swin_encoder_forward.10} parent=0 // pred_fallthru
    _
  // Predicated region
  $region6: #{custom_swin_encoder_forward.10} parent=0 // pred_check
    _
  $region7: #{custom_swin_encoder_forward.10} parent=0 // pred_check_branch
    %13 = sbr.rel (0) target = $region9
  $region8: #{custom_swin_encoder_forward.10} parent=0 // pred_region
    _
  $region9: #{custom_swin_encoder_forward.10} parent=0 // pred_fallthru
    _
  // Predicated region
  $region10: #{custom_swin_encoder_forward.10} parent=0 // pred_check
    _
  $region11: #{custom_swin_encoder_forward.10} parent=0 // pred_check_branch
    %15 = sbr.rel (0) target = $region13
  $region12: #{custom_swin_encoder_forward.10} parent=0 // pred_region
    _
  $region13: #{custom_swin_encoder_forward.10} parent=0 // pred_fallthru
    _
  // Predicated region
  $region14: #{custom_swin_encoder_forward.10} parent=0 // pred_check
    _
  $region15: #{custom_swin_encoder_forward.10} parent=0 // pred_check_branch
    %17 = sbr.rel (0) target = $region17
  $region16: #{custom_swin_encoder_forward.10} parent=0 // pred_region
    _
  $region17: #{custom_swin_encoder_forward.10} parent=0 // pred_fallthru
    _
  // Predicated region
  $region18: #{custom_swin_encoder_forward.10} parent=0 // pred_check
    _
  $region19: #{custom_swin_encoder_forward.10} parent=0 // pred_check_branch
    %19 = sbr.rel (0) target = $region21
  $region20: #{custom_swin_encoder_forward.10} parent=0 // pred_region
    _
  $region21: #{custom_swin_encoder_forward.10} parent=0 // pred_fallthru
    _
  %v21 = vld [vmem:[%s0] sm:$0xff]
  %v22 = vld [vmem:[%s0 + $0x8] sm:$0xff]
  %v23 = vld [vmem:[%s0 + $0x10] sm:$0xff]
  %v24 = vld [vmem:[%s0 + $0x18] sm:$0xff]
  %v25 = vpack.c.bf16 %v22, %v21
  %v26 = vpack.c.bf16 %v24, %v23
  %v27 = vld [vmem:[%s1] sm:$0xf]
  %v28 = vld [vmem:[%s1 + $0x4] sm:$0xf]
  %v29 = vld [vmem:[%s1 + $0x8] sm:$0xf]
  %v30 = vld [vmem:[%s1 + $0xc] sm:$0xf]
  %v31 = vld [vmem:[%s1 + $0x10] sm:$0xf]
  %v32 = vld [vmem:[%s1 + $0x14] sm:$0xf]
  %v33 = vld [vmem:[%s2] sm:$0x1]
  %v35 = vperm.slane %v33, 0
  %v43 = vunpack.c.l.b16 %v27
  %v44 = vunpack.c.l.b16 %v28
  %v45 = vunpack.c.l.b16 %v29
  %v46 = vunpack.c.l.b16 %v30
  %v47 = vunpack.c.l.b16 %v31
  %v48 = vunpack.c.l.b16 %v32
  %v49 = vpack.c.b16 %v44, %v43
  %v50 = vpack.c.b16 %v46, %v45
  %v51 = vpack.c.b16 %v48, %v47
  %vm55 = vcmask 392192
  %v57 = vsel %vm55, %v25, 0
  %v60 = vsel %vm55, %v26, 0
  %62 = vmatpush.bf16.msra.mxu0 0
  %63 = vmatpush.bf16.msra.mxu0 0
  %64 = vmatpush.bf16.msra.mxu0 0
  %65 = vmatpush.bf16.msra.mxu0 0
  %66 = vmatpush.bf16.msra.mxu0 0
  %67 = vmatpush.bf16.msra.mxu0 %v51
  %68 = vmatpush.bf16.msra.mxu0 %v50
  %69 = vmatpush.bf16.msra.mxu0 %v49
  %70 = vmatmul.bf16.gmra.mxu0 %v57
  %v71 = vpop.f32.mrf.mxu0
  %v72 = vadd.f32 %v35, %v71
  %v73 = vpop.f32.mrf.mxu0
  %v74 = vadd.f32 %v35, %v73
  %75 = vmatmul.bf16.gmra.mxu0 %v60
  %v76 = vpop.f32.mrf.mxu0
  %v77 = vadd.f32 %v35, %v76
  %v78 = vpop.f32.mrf.mxu0
  %v79 = vadd.f32 %v35, %v78
  %80 = vdwg.mxu0
  %v81 = vld [vmem:[%s3] sm:$0x1]
  %v82 = vld [vmem:[%s4] sm:$0x1]
  %vm83 = vcmask 261120
  %v84 = vsel %vm83, %v72, 0.0
  %85 = vadd.xlane.f32.xlu0 %v84
  %v86 = vpop.xlane.xlu0 %85
  %v87 = vsel %vm83, %v74, 0.0
  %88 = vadd.xlane.f32.xlu0 %v87
  %v89 = vpop.xlane.xlu0 %88
  %v90 = vsel %vm83, %v77, 0.0
  %91 = vadd.xlane.f32.xlu0 %v90
  %v92 = vpop.xlane.xlu0 %91
  %v93 = vsel %vm83, %v79, 0.0
  %94 = vadd.xlane.f32.xlu0 %v93
  %v95 = vpop.xlane.xlu0 %94
  %v96 = vrcp.pop 32.0
  %v97 = vmul.f32 32.0, %v96
  %v98 = vsub.f32 1.0, %v97
  %v99 = vmul.f32 %v96, %v98
  %v100 = vadd.f32 %v96, %v99
  %vm101 = vweird.f32 %v96
  %v102 = vsel %vm101, %v96, %v100
  %v103 = vmul.f32 %v86, %v102
  %v104 = vmul.f32 %v89, %v102
  %v105 = vmul.f32 %v92, %v102
  %v106 = vmul.f32 %v95, %v102
  %v107 = vsub.f32 %v72, %v103
  %v108 = vsub.f32 %v74, %v104
  %v109 = vsub.f32 %v77, %v105
  %v110 = vsub.f32 %v79, %v106
  %v111 = vmul.f32 %v107, %v107
  %v112 = vmul.f32 %v108, %v108
  %v113 = vmul.f32 %v109, %v109
  %v114 = vmul.f32 %v110, %v110
  %v115 = vsel %vm83, %v111, 0.0
  %116 = vadd.xlane.f32.xlu0 %v115
  %v117 = vpop.xlane.xlu0 %116
  %v118 = vsel %vm83, %v112, 0.0
  %119 = vadd.xlane.f32.xlu0 %v118
  %v120 = vpop.xlane.xlu0 %119
  %v121 = vsel %vm83, %v113, 0.0
  %122 = vadd.xlane.f32.xlu0 %v121
  %v123 = vpop.xlane.xlu0 %122
  %v124 = vsel %vm83, %v114, 0.0
  %125 = vadd.xlane.f32.xlu0 %v124
  %v126 = vpop.xlane.xlu0 %125
  %v127 = vmul.f32 %v117, %v102
  %v128 = vmul.f32 %v120, %v102
  %v129 = vmul.f32 %v123, %v102
  %v130 = vmul.f32 %v126, %v102
  %v131 = vadd.f32 %v127, 1e-05
  %v132 = vadd.f32 %v128, 1e-05
  %v133 = vadd.f32 %v129, 1e-05
  %v134 = vadd.f32 %v130, 1e-05
  %v135 = vrsqrt.pop %v131
  %v136 = vmul.f32 %v135, %v131
  %v137 = vmul.f32 %v136, %v135
  %v138 = vmul.f32 0.5, %v137
  %v139 = vsub.f32 1.5, %v138
  %v140 = vmul.f32 %v135, %v139
  %vm141 = vweird.f32 %v131
  %vm142 = vweird.f32 %v135
  %vm143 = vmor %vm141, %vm142
  %v144 = vsel %vm143, %v135, %v140
  %v145 = vrsqrt.pop %v132
  %v146 = vmul.f32 %v145, %v132
  %v147 = vmul.f32 %v146, %v145
  %v148 = vmul.f32 0.5, %v147
  %v149 = vsub.f32 1.5, %v148
  %v150 = vmul.f32 %v145, %v149
  %vm151 = vweird.f32 %v132
  %vm152 = vweird.f32 %v145
  %vm153 = vmor %vm151, %vm152
  %v154 = vsel %vm153, %v145, %v150
  %v155 = vrsqrt.pop %v133
  %v156 = vmul.f32 %v155, %v133
  %v157 = vmul.f32 %v156, %v155
  %v158 = vmul.f32 0.5, %v157
  %v159 = vsub.f32 1.5, %v158
  %v160 = vmul.f32 %v155, %v159
  %vm161 = vweird.f32 %v133
  %vm162 = vweird.f32 %v155
  %vm163 = vmor %vm161, %vm162
  %v164 = vsel %vm163, %v155, %v160
  %v165 = vrsqrt.pop %v134
  %v166 = vmul.f32 %v165, %v134
  %v167 = vmul.f32 %v166, %v165
  %v168 = vmul.f32 0.5, %v167
  %v169 = vsub.f32 1.5, %v168
  %v170 = vmul.f32 %v165, %v169
  %vm171 = vweird.f32 %v134
  %vm172 = vweird.f32 %v165
  %vm173 = vmor %vm171, %vm172
  %v174 = vsel %vm173, %v165, %v170
  %v175 = vmul.f32 %v107, %v144
  %v176 = vmul.f32 %v108, %v154
  %v177 = vmul.f32 %v109, %v164
  %v178 = vmul.f32 %v110, %v174
  %v180 = vperm.slane %v81, 0
  %v182 = vmul.f32 %v175, %v180
  %v183 = vmul.f32 %v176, %v180
  %v184 = vmul.f32 %v177, %v180
  %v185 = vmul.f32 %v178, %v180
  %v187 = vperm.slane %v82, 0
  %v189 = vadd.f32 %v182, %v187
  %v190 = vadd.f32 %v183, %v187
  %v191 = vadd.f32 %v184, %v187
  %v192 = vadd.f32 %v185, %v187
  %193 = vst.msk [vmem:[%s5] sm:$0xff] %vm83, %v189
  %194 = vst.msk [vmem:[%s5 + $0x8] sm:$0xff] %vm83, %v190
  %195 = vst.msk [vmem:[%s5 + $0x10] sm:$0xff] %vm83, %v191
  %196 = vst.msk [vmem:[%s5 + $0x18] sm:$0xff] %vm83, %v192
  // Predicated region
  $region22: #{custom_swin_encoder_forward.10} parent=0 // pred_check
    _
  $region23: #{custom_swin_encoder_forward.10} parent=0 // pred_check_branch
    %198 = sbr.rel (0) target = $region25
  $region24: #{custom_swin_encoder_forward.10} parent=0 // pred_region
    _
  $region25: #{custom_swin_encoder_forward.10} parent=0 // pred_fallthru
    _
  // Predicated region
  $region26: #{custom_swin_encoder_forward.10} parent=0 // pred_check
    _
  $region27: #{custom_swin_encoder_forward.10} parent=0 // pred_check_branch
    %200 = sbr.rel (0) target = $region29
  $region28: #{custom_swin_encoder_forward.10} parent=0 // pred_region
    _
  $region29: #{custom_swin_encoder_forward.10} parent=0 // pred_fallthru
    _

// kernel: custom_swin_encoder_forward.12
$region0: #{custom_swin_encoder_forward.12}
  #allocation0 [shape = 'u32[]', space=smem, size = 0x4, offset = 0x4, fixed_abs, tag = 'smem constant byte address 0x4 - core index']
  #allocation1 [shape = 'u32[72,128]{1,0:T(1,128)}', space=vmem, size = 0x9000, scoped, tag = 'internal scratch']
  %s0 = inlined_call_operand.vmem [shape: f32[32,32], index: 0, kind: input, shape index: {}]
  %s1 = inlined_call_operand.vmem [shape: bf16[32,128], index: 1, kind: input, shape index: {}]
  %s2 = inlined_call_operand.vmem [shape: f32[1,128], index: 2, kind: input, shape index: {}]
  %s3 = inlined_call_operand.vmem [shape: bf16[128,32], index: 3, kind: input, shape index: {}]
  %s4 = inlined_call_operand.vmem [shape: f32[1,32], index: 4, kind: input, shape index: {}]
  %s5 = inlined_call_operand.vmem [shape: f32[1,32], index: 5, kind: input, shape index: {}]
  %s6 = inlined_call_operand.vmem [shape: f32[1,32], index: 6, kind: input, shape index: {}]
  %s7 = inlined_call_operand.vmem [shape: f32[32,32], index: 7, kind: output, shape index: {}]
  %s8 = sld [smem:[#allocation0]]
  $region38: #{custom_swin_encoder_forward.12} parent=0
    _
  %s10 = ssub.s32 1, %s8
  %s11 = scalar_select 0, %s10, %s8
  // Predicated region
  $region2: #{custom_swin_encoder_forward.12} parent=0 // pred_check
    _
  $region3: #{custom_swin_encoder_forward.12} parent=0 // pred_check_branch
    %13 = sbr.rel (0) target = $region5
  $region4: #{custom_swin_encoder_forward.12} parent=0 // pred_region
    _
  $region5: #{custom_swin_encoder_forward.12} parent=0 // pred_fallthru
    _
  // Predicated region
  $region6: #{custom_swin_encoder_forward.12} parent=0 // pred_check
    _
  $region7: #{custom_swin_encoder_forward.12} parent=0 // pred_check_branch
    %15 = sbr.rel (0) target = $region9
  $region8: #{custom_swin_encoder_forward.12} parent=0 // pred_region
    _
  $region9: #{custom_swin_encoder_forward.12} parent=0 // pred_fallthru
    _
  // Predicated region
  $region10: #{custom_swin_encoder_forward.12} parent=0 // pred_check
    _
  $region11: #{custom_swin_encoder_forward.12} parent=0 // pred_check_branch
    %17 = sbr.rel (0) target = $region13
  $region12: #{custom_swin_encoder_forward.12} parent=0 // pred_region
    _
  $region13: #{custom_swin_encoder_forward.12} parent=0 // pred_fallthru
    _
  // Predicated region
  $region14: #{custom_swin_encoder_forward.12} parent=0 // pred_check
    _
  $region15: #{custom_swin_encoder_forward.12} parent=0 // pred_check_branch
    %19 = sbr.rel (0) target = $region17
  $region16: #{custom_swin_encoder_forward.12} parent=0 // pred_region
    _
  $region17: #{custom_swin_encoder_forward.12} parent=0 // pred_fallthru
    _
  // Predicated region
  $region18: #{custom_swin_encoder_forward.12} parent=0 // pred_check
    _
  $region19: #{custom_swin_encoder_forward.12} parent=0 // pred_check_branch
    %21 = sbr.rel (0) target = $region21
  $region20: #{custom_swin_encoder_forward.12} parent=0 // pred_region
    _
  $region21: #{custom_swin_encoder_forward.12} parent=0 // pred_fallthru
    _
  // Predicated region
  $region22: #{custom_swin_encoder_forward.12} parent=0 // pred_check
    _
  $region23: #{custom_swin_encoder_forward.12} parent=0 // pred_check_branch
    %23 = sbr.rel (0) target = $region25
  $region24: #{custom_swin_encoder_forward.12} parent=0 // pred_region
    _
  $region25: #{custom_swin_encoder_forward.12} parent=0 // pred_fallthru
    _
  // Predicated region
  $region26: #{custom_swin_encoder_forward.12} parent=0 // pred_check
    _
  $region27: #{custom_swin_encoder_forward.12} parent=0 // pred_check_branch
    %25 = sbr.rel (0) target = $region29
  $region28: #{custom_swin_encoder_forward.12} parent=0 // pred_region
    _
  $region29: #{custom_swin_encoder_forward.12} parent=0 // pred_fallthru
    _
  %v27 = vld [vmem:[%s0] sm:$0xff]
  %v28 = vld [vmem:[%s0 + $0x8] sm:$0xff]
  %v29 = vld [vmem:[%s0 + $0x10] sm:$0xff]
  %v30 = vld [vmem:[%s0 + $0x18] sm:$0xff]
  %v31 = vpack.c.bf16 %v28, %v27
  %v32 = vpack.c.bf16 %v30, %v29
  %v33 = vld [vmem:[%s1] sm:$0xf]
  %v34 = vld [vmem:[%s1 + $0x4] sm:$0xf]
  %v35 = vld [vmem:[%s1 + $0x8] sm:$0xf]
  %v36 = vld [vmem:[%s1 + $0xc] sm:$0xf]
  %v37 = vld [vmem:[%s2] sm:$0x1]
  %v39 = vperm.slane %v37, 0
  %v45 = vunpack.c.l.b16 %v33
  %v46 = vunpack.c.l.b16 %v34
  %v47 = vunpack.c.l.b16 %v35
  %v48 = vunpack.c.l.b16 %v36
  %v49 = vpack.c.b16 %v46, %v45
  %v50 = vpack.c.b16 %v48, %v47
  %vm53 = vcmask 261120
  %v55 = vsel %vm53, %v31, 0
  %v58 = vsel %vm53, %v32, 0
  %60 = vmatpush.bf16.msra.mxu0 0
  %61 = vmatpush.bf16.msra.mxu0 0
  %62 = vmatpush.bf16.msra.mxu0 0
  %63 = vmatpush.bf16.msra.mxu0 0
  %64 = vmatpush.bf16.msra.mxu0 0
  %65 = vmatpush.bf16.msra.mxu0 0
  %66 = vmatpush.bf16.msra.mxu0 %v50
  %67 = vmatpush.bf16.msra.mxu0 %v49
  %68 = vmatmul.bf16.gmra.mxu0 %v55
  %v69 = vpop.f32.mrf.mxu0
  %v70 = vadd.f32 %v39, %v69
  %v71 = vpop.f32.mrf.mxu0
  %v72 = vadd.f32 %v39, %v71
  %73 = vmatmul.bf16.gmra.mxu0 %v58
  %v74 = vpop.f32.mrf.mxu0
  %v75 = vadd.f32 %v39, %v74
  %v76 = vpop.f32.mrf.mxu0
  %v77 = vadd.f32 %v39, %v76
  %78 = vdwg.mxu0
  %v79 = vmul.f32 %v70, 0.5
  %v80 = vmul.f32 %v72, 0.5
  %v81 = vmul.f32 %v75, 0.5
  %v82 = vmul.f32 %v77, 0.5
  %v83 = vmul.f32 %v70, 0.044715
  %v84 = vmul.f32 %v72, 0.044715
  %v85 = vmul.f32 %v75, 0.044715
  %v86 = vmul.f32 %v77, 0.044715
  %v87 = vmul.f32 %v83, %v70
  %v88 = vmul.f32 %v84, %v72
  %v89 = vmul.f32 %v85, %v75
  %v90 = vmul.f32 %v86, %v77
  %v91 = vmul.f32 %v87, %v70
  %v92 = vmul.f32 %v88, %v72
  %v93 = vmul.f32 %v89, %v75
  %v94 = vmul.f32 %v90, %v77
  %v95 = vadd.f32 %v70, %v91
  %v96 = vadd.f32 %v72, %v92
  %v97 = vadd.f32 %v75, %v93
  %v98 = vadd.f32 %v77, %v94
  %v99 = vmul.f32 %v95, 0.7978846
  %v100 = vmul.f32 %v96, 0.7978846
  %v101 = vmul.f32 %v97, 0.7978846
  %v102 = vmul.f32 %v98, 0.7978846
  %v103 = vtanh.pop %v99
  %v104 = vtanh.pop %v100
  %v105 = vtanh.pop %v101
  %v106 = vtanh.pop %v102
  %v107 = vadd.f32 %v103, 1.0
  %v108 = vadd.f32 %v104, 1.0
  %v109 = vadd.f32 %v105, 1.0
  %v110 = vadd.f32 %v106, 1.0
  %v111 = vmul.f32 %v79, %v107
  %v112 = vmul.f32 %v80, %v108
  %v113 = vmul.f32 %v81, %v109
  %v114 = vmul.f32 %v82, %v110
  %v115 = vpack.c.bf16 %v112, %v111
  %v116 = vpack.c.bf16 %v114, %v113
  %v117 = vld [vmem:[%s3] sm:$0xf]
  %v118 = vld [vmem:[%s3 + $0x4] sm:$0xf]
  %v119 = vld [vmem:[%s3 + $0x8] sm:$0xf]
  %v120 = vld [vmem:[%s3 + $0xc] sm:$0xf]
  %v121 = vld [vmem:[%s3 + $0x10] sm:$0xf]
  %v122 = vld [vmem:[%s3 + $0x14] sm:$0xf]
  %v123 = vld [vmem:[%s3 + $0x18] sm:$0xf]
  %v124 = vld [vmem:[%s3 + $0x1c] sm:$0xf]
  %v125 = vld [vmem:[%s3 + $0x20] sm:$0xf]
  %v126 = vld [vmem:[%s3 + $0x24] sm:$0xf]
  %v127 = vld [vmem:[%s3 + $0x28] sm:$0xf]
  %v128 = vld [vmem:[%s3 + $0x2c] sm:$0xf]
  %v129 = vld [vmem:[%s3 + $0x30] sm:$0xf]
  %v130 = vld [vmem:[%s3 + $0x34] sm:$0xf]
  %v131 = vld [vmem:[%s3 + $0x38] sm:$0xf]
  %v132 = vld [vmem:[%s3 + $0x3c] sm:$0xf]
  %v133 = vld [vmem:[%s4] sm:$0x1]
  %v135 = vperm.slane %v133, 0
  %v153 = vunpack.c.l.b16 %v117
  %v154 = vunpack.c.l.b16 %v118
  %v155 = vunpack.c.l.b16 %v119
  %v156 = vunpack.c.l.b16 %v120
  %v157 = vunpack.c.l.b16 %v121
  %v158 = vunpack.c.l.b16 %v122
  %v159 = vunpack.c.l.b16 %v123
  %v160 = vunpack.c.l.b16 %v124
  %v161 = vunpack.c.l.b16 %v125
  %v162 = vunpack.c.l.b16 %v126
  %v163 = vunpack.c.l.b16 %v127
  %v164 = vunpack.c.l.b16 %v128
  %v165 = vunpack.c.l.b16 %v129
  %v166 = vunpack.c.l.b16 %v130
  %v167 = vunpack.c.l.b16 %v131
  %v168 = vunpack.c.l.b16 %v132
  %v169 = vpack.c.b16 %v154, %v153
  %v170 = vpack.c.b16 %v156, %v155
  %v171 = vpack.c.b16 %v158, %v157
  %v172 = vpack.c.b16 %v160, %v159
  %v173 = vpack.c.b16 %v162, %v161
  %v174 = vpack.c.b16 %v164, %v163
  %v175 = vpack.c.b16 %v166, %v165
  %v176 = vpack.c.b16 %v168, %v167
  %185 = vmatpush.bf16.msra.mxu0 %v176
  %186 = vmatpush.bf16.msra.mxu0 %v175
  %187 = vmatpush.bf16.msra.mxu0 %v174
  %188 = vmatpush.bf16.msra.mxu0 %v173
  %189 = vmatpush.bf16.msra.mxu0 %v172
  %190 = vmatpush.bf16.msra.mxu0 %v171
  %191 = vmatpush.bf16.msra.mxu0 %v170
  %192 = vmatpush.bf16.msra.mxu0 %v169
  %193 = vmatmul.bf16.gmra.mxu0 %v115
  %v194 = vpop.f32.mrf.mxu0
  %v195 = vadd.f32 %v135, %v194
  %v196 = vpop.f32.mrf.mxu0
  %v197 = vadd.f32 %v135, %v196
  %198 = vmatmul.bf16.gmra.mxu0 %v116
  %v199 = vpop.f32.mrf.mxu0
  %v200 = vadd.f32 %v135, %v199
  %v201 = vpop.f32.mrf.mxu0
  %v202 = vadd.f32 %v135, %v201
  %203 = vdwg.mxu0
  %v204 = vld [vmem:[%s5] sm:$0x1]
  %v205 = vld [vmem:[%s6] sm:$0x1]
  %v206 = vsel %vm53, %v195, 0.0
  %207 = vadd.xlane.f32.xlu0 %v206
  %v208 = vpop.xlane.xlu0 %207
  %v209 = vsel %vm53, %v197, 0.0
  %210 = vadd.xlane.f32.xlu0 %v209
  %v211 = vpop.xlane.xlu0 %210
  %v212 = vsel %vm53, %v200, 0.0
  %213 = vadd.xlane.f32.xlu0 %v212
  %v214 = vpop.xlane.xlu0 %213
  %v215 = vsel %vm53, %v202, 0.0
  %216 = vadd.xlane.f32.xlu0 %v215
  %v217 = vpop.xlane.xlu0 %216
  %v218 = vrcp.pop 32.0
  %v219 = vmul.f32 32.0, %v218
  %v220 = vsub.f32 1.0, %v219
  %v221 = vmul.f32 %v218, %v220
  %v222 = vadd.f32 %v218, %v221
  %vm223 = vweird.f32 %v218
  %v224 = vsel %vm223, %v218, %v222
  %v225 = vmul.f32 %v208, %v224
  %v226 = vmul.f32 %v211, %v224
  %v227 = vmul.f32 %v214, %v224
  %v228 = vmul.f32 %v217, %v224
  %v229 = vsub.f32 %v195, %v225
  %v230 = vsub.f32 %v197, %v226
  %v231 = vsub.f32 %v200, %v227
  %v232 = vsub.f32 %v202, %v228
  %v233 = vmul.f32 %v229, %v229
  %v234 = vmul.f32 %v230, %v230
  %v235 = vmul.f32 %v231, %v231
  %v236 = vmul.f32 %v232, %v232
  %v237 = vsel %vm53, %v233, 0.0
  %238 = vadd.xlane.f32.xlu0 %v237
  %v239 = vpop.xlane.xlu0 %238
  %v240 = vsel %vm53, %v234, 0.0
  %241 = vadd.xlane.f32.xlu0 %v240
  %v242 = vpop.xlane.xlu0 %241
  %v243 = vsel %vm53, %v235, 0.0
  %244 = vadd.xlane.f32.xlu0 %v243
  %v245 = vpop.xlane.xlu0 %244
  %v246 = vsel %vm53, %v236, 0.0
  %247 = vadd.xlane.f32.xlu0 %v246
  %v248 = vpop.xlane.xlu0 %247
  %v249 = vmul.f32 %v239, %v224
  %v250 = vmul.f32 %v242, %v224
  %v251 = vmul.f32 %v245, %v224
  %v252 = vmul.f32 %v248, %v224
  %v253 = vadd.f32 %v249, 1e-05
  %v254 = vadd.f32 %v250, 1e-05
  %v255 = vadd.f32 %v251, 1e-05
  %v256 = vadd.f32 %v252, 1e-05
  %v257 = vrsqrt.pop %v253
  %v258 = vmul.f32 %v257, %v253
  %v259 = vmul.f32 %v258, %v257
  %v260 = vmul.f32 0.5, %v259
  %v261 = vsub.f32 1.5, %v260
  %v262 = vmul.f32 %v257, %v261
  %vm263 = vweird.f32 %v253
  %vm264 = vweird.f32 %v257
  %vm265 = vmor %vm263, %vm264
  %v266 = vsel %vm265, %v257, %v262
  %v267 = vrsqrt.pop %v254
  %v268 = vmul.f32 %v267, %v254
  %v269 = vmul.f32 %v268, %v267
  %v270 = vmul.f32 0.5, %v269
  %v271 = vsub.f32 1.5, %v270
  %v272 = vmul.f32 %v267, %v271
  %vm273 = vweird.f32 %v254
  %vm274 = vweird.f32 %v267
  %vm275 = vmor %vm273, %vm274
  %v276 = vsel %vm275, %v267, %v272
  %v277 = vrsqrt.pop %v255
  %v278 = vmul.f32 %v277, %v255
  %v279 = vmul.f32 %v278, %v277
  %v280 = vmul.f32 0.5, %v279
  %v281 = vsub.f32 1.5, %v280
  %v282 = vmul.f32 %v277, %v281
  %vm283 = vweird.f32 %v255
  %vm284 = vweird.f32 %v277
  %vm285 = vmor %vm283, %vm284
  %v286 = vsel %vm285, %v277, %v282
  %v287 = vrsqrt.pop %v256
  %v288 = vmul.f32 %v287, %v256
  %v289 = vmul.f32 %v288, %v287
  %v290 = vmul.f32 0.5, %v289
  %v291 = vsub.f32 1.5, %v290
  %v292 = vmul.f32 %v287, %v291
  %vm293 = vweird.f32 %v256
  %vm294 = vweird.f32 %v287
  %vm295 = vmor %vm293, %vm294
  %v296 = vsel %vm295, %v287, %v292
  %v297 = vmul.f32 %v229, %v266
  %v298 = vmul.f32 %v230, %v276
  %v299 = vmul.f32 %v231, %v286
  %v300 = vmul.f32 %v232, %v296
  %v302 = vperm.slane %v204, 0
  %v304 = vmul.f32 %v297, %v302
  %v305 = vmul.f32 %v298, %v302
  %v306 = vmul.f32 %v299, %v302
  %v307 = vmul.f32 %v300, %v302
  %v309 = vperm.slane %v205, 0
  %v311 = vadd.f32 %v304, %v309
  %v312 = vadd.f32 %v305, %v309
  %v313 = vadd.f32 %v306, %v309
  %v314 = vadd.f32 %v307, %v309
  %v315 = vadd.f32 %v27, %v311
  %v316 = vadd.f32 %v28, %v312
  %v317 = vadd.f32 %v29, %v313
  %v318 = vadd.f32 %v30, %v314
  %319 = vst.msk [vmem:[%s7] sm:$0xff] %vm53, %v315
  %320 = vst.msk [vmem:[%s7 + $0x8] sm:$0xff] %vm53, %v316
  %321 = vst.msk [vmem:[%s7 + $0x10] sm:$0xff] %vm53, %v317
  %322 = vst.msk [vmem:[%s7 + $0x18] sm:$0xff] %vm53, %v318
  // Predicated region
  $region30: #{custom_swin_encoder_forward.12} parent=0 // pred_check
    _
  $region31: #{custom_swin_encoder_forward.12} parent=0 // pred_check_branch
    %324 = sbr.rel (0) target = $region33
  $region32: #{custom_swin_encoder_forward.12} parent=0 // pred_region
    _
  $region33: #{custom_swin_encoder_forward.12} parent=0 // pred_fallthru
    _
  // Predicated region
  $region34: #{custom_swin_encoder_forward.12} parent=0 // pred_check
    _
  $region35: #{custom_swin_encoder_forward.12} parent=0 // pred_check_branch
    %326 = sbr.rel (0) target = $region37
  $region36: #{custom_swin_encoder_forward.12} parent=0 // pred_region
    _
  $region37: #{custom_swin_encoder_forward.12} parent=0 // pred_fallthru
    _

// kernel: custom_swin_encoder_forward.15
$region0: #{custom_swin_encoder_forward.15}
  #allocation0 [shape = 'u32[]', space=smem, size = 0x4, offset = 0x4, fixed_abs, tag = 'smem constant byte address 0x4 - core index']
  #allocation1 [shape = 'u32[72,128]{1,0:T(1,128)}', space=vmem, size = 0x9000, scoped, tag = 'internal scratch']
  %s0 = inlined_call_operand.vmem [shape: f32[8,128], index: 0, kind: input, shape index: {}]
  %s1 = inlined_call_operand.vmem [shape: bf16[128,64], index: 1, kind: input, shape index: {}]
  %s2 = inlined_call_operand.vmem [shape: f32[1,64], index: 2, kind: input, shape index: {}]
  %s3 = inlined_call_operand.vmem [shape: f32[1,64], index: 3, kind: input, shape index: {}]
  %s4 = inlined_call_operand.vmem [shape: f32[1,64], index: 4, kind: input, shape index: {}]
  %s5 = inlined_call_operand.vmem [shape: f32[8,64], index: 5, kind: output, shape index: {}]
  %s6 = sld [smem:[#allocation0]]
  $region30: #{custom_swin_encoder_forward.15} parent=0
    _
  %s8 = ssub.s32 1, %s6
  %s9 = scalar_select 0, %s8, %s6
  // Predicated region
  $region2: #{custom_swin_encoder_forward.15} parent=0 // pred_check
    _
  $region3: #{custom_swin_encoder_forward.15} parent=0 // pred_check_branch
    %11 = sbr.rel (0) target = $region5
  $region4: #{custom_swin_encoder_forward.15} parent=0 // pred_region
    _
  $region5: #{custom_swin_encoder_forward.15} parent=0 // pred_fallthru
    _
  // Predicated region
  $region6: #{custom_swin_encoder_forward.15} parent=0 // pred_check
    _
  $region7: #{custom_swin_encoder_forward.15} parent=0 // pred_check_branch
    %13 = sbr.rel (0) target = $region9
  $region8: #{custom_swin_encoder_forward.15} parent=0 // pred_region
    _
  $region9: #{custom_swin_encoder_forward.15} parent=0 // pred_fallthru
    _
  // Predicated region
  $region10: #{custom_swin_encoder_forward.15} parent=0 // pred_check
    _
  $region11: #{custom_swin_encoder_forward.15} parent=0 // pred_check_branch
    %15 = sbr.rel (0) target = $region13
  $region12: #{custom_swin_encoder_forward.15} parent=0 // pred_region
    _
  $region13: #{custom_swin_encoder_forward.15} parent=0 // pred_fallthru
    _
  // Predicated region
  $region14: #{custom_swin_encoder_forward.15} parent=0 // pred_check
    _
  $region15: #{custom_swin_encoder_forward.15} parent=0 // pred_check_branch
    %17 = sbr.rel (0) target = $region17
  $region16: #{custom_swin_encoder_forward.15} parent=0 // pred_region
    _
  $region17: #{custom_swin_encoder_forward.15} parent=0 // pred_fallthru
    _
  // Predicated region
  $region18: #{custom_swin_encoder_forward.15} parent=0 // pred_check
    _
  $region19: #{custom_swin_encoder_forward.15} parent=0 // pred_check_branch
    %19 = sbr.rel (0) target = $region21
  $region20: #{custom_swin_encoder_forward.15} parent=0 // pred_region
    _
  $region21: #{custom_swin_encoder_forward.15} parent=0 // pred_fallthru
    _
  %v20 = vld [vmem:[%s0] sm:$0xff]
  %v21 = vpack.c.bf16 %v20, %v20
  %v22 = vld [vmem:[%s1] sm:$0xf]
  %v23 = vld [vmem:[%s1 + $0x4] sm:$0xf]
  %v24 = vld [vmem:[%s1 + $0x8] sm:$0xf]
  %v25 = vld [vmem:[%s1 + $0xc] sm:$0xf]
  %v26 = vld [vmem:[%s1 + $0x10] sm:$0xf]
  %v27 = vld [vmem:[%s1 + $0x14] sm:$0xf]
  %v28 = vld [vmem:[%s1 + $0x18] sm:$0xf]
  %v29 = vld [vmem:[%s1 + $0x1c] sm:$0xf]
  %v30 = vld [vmem:[%s1 + $0x20] sm:$0xf]
  %v31 = vld [vmem:[%s1 + $0x24] sm:$0xf]
  %v32 = vld [vmem:[%s1 + $0x28] sm:$0xf]
  %v33 = vld [vmem:[%s1 + $0x2c] sm:$0xf]
  %v34 = vld [vmem:[%s1 + $0x30] sm:$0xf]
  %v35 = vld [vmem:[%s1 + $0x34] sm:$0xf]
  %v36 = vld [vmem:[%s1 + $0x38] sm:$0xf]
  %v37 = vld [vmem:[%s1 + $0x3c] sm:$0xf]
  %v38 = vld [vmem:[%s2] sm:$0x1]
  %v40 = vperm.slane %v38, 0
  %v58 = vunpack.c.l.b16 %v22
  %v59 = vunpack.c.l.b16 %v23
  %v60 = vunpack.c.l.b16 %v24
  %v61 = vunpack.c.l.b16 %v25
  %v62 = vunpack.c.l.b16 %v26
  %v63 = vunpack.c.l.b16 %v27
  %v64 = vunpack.c.l.b16 %v28
  %v65 = vunpack.c.l.b16 %v29
  %v66 = vunpack.c.l.b16 %v30
  %v67 = vunpack.c.l.b16 %v31
  %v68 = vunpack.c.l.b16 %v32
  %v69 = vunpack.c.l.b16 %v33
  %v70 = vunpack.c.l.b16 %v34
  %v71 = vunpack.c.l.b16 %v35
  %v72 = vunpack.c.l.b16 %v36
  %v73 = vunpack.c.l.b16 %v37
  %v74 = vpack.c.b16 %v59, %v58
  %v75 = vpack.c.b16 %v61, %v60
  %v76 = vpack.c.b16 %v63, %v62
  %v77 = vpack.c.b16 %v65, %v64
  %v78 = vpack.c.b16 %v67, %v66
  %v79 = vpack.c.b16 %v69, %v68
  %v80 = vpack.c.b16 %v71, %v70
  %v81 = vpack.c.b16 %v73, %v72
  %90 = vmatpush.bf16.msra.mxu0 %v81
  %91 = vmatpush.bf16.msra.mxu0 %v80
  %92 = vmatpush.bf16.msra.mxu0 %v79
  %93 = vmatpush.bf16.msra.mxu0 %v78
  %94 = vmatpush.bf16.msra.mxu0 %v77
  %95 = vmatpush.bf16.msra.mxu0 %v76
  %96 = vmatpush.bf16.msra.mxu0 %v75
  %97 = vmatpush.bf16.msra.mxu0 %v74
  %98 = vmatmul.bf16.gmra.mxu0 %v21
  %v99 = vpop.f32.mrf.mxu0
  %v100 = vadd.f32 %v40, %v99
  %v101 = vpop.f32.mrf.mxu0
  %102 = vdwg.mxu0
  %v103 = vld [vmem:[%s3] sm:$0x1]
  %v104 = vld [vmem:[%s4] sm:$0x1]
  %vm105 = vcmask 523264
  %v106 = vsel %vm105, %v100, 0.0
  %107 = vadd.xlane.f32.xlu0 %v106
  %v108 = vpop.xlane.xlu0 %107
  %v109 = vrcp.pop 64.0
  %v110 = vmul.f32 64.0, %v109
  %v111 = vsub.f32 1.0, %v110
  %v112 = vmul.f32 %v109, %v111
  %v113 = vadd.f32 %v109, %v112
  %vm114 = vweird.f32 %v109
  %v115 = vsel %vm114, %v109, %v113
  %v116 = vmul.f32 %v108, %v115
  %v117 = vsub.f32 %v100, %v116
  %v118 = vmul.f32 %v117, %v117
  %v119 = vsel %vm105, %v118, 0.0
  %120 = vadd.xlane.f32.xlu0 %v119
  %v121 = vpop.xlane.xlu0 %120
  %v122 = vmul.f32 %v121, %v115
  %v123 = vadd.f32 %v122, 1e-05
  %v124 = vrsqrt.pop %v123
  %v125 = vmul.f32 %v124, %v123
  %v126 = vmul.f32 %v125, %v124
  %v127 = vmul.f32 0.5, %v126
  %v128 = vsub.f32 1.5, %v127
  %v129 = vmul.f32 %v124, %v128
  %vm130 = vweird.f32 %v123
  %vm131 = vweird.f32 %v124
  %vm132 = vmor %vm130, %vm131
  %v133 = vsel %vm132, %v124, %v129
  %v134 = vmul.f32 %v117, %v133
  %v136 = vperm.slane %v103, 0
  %v138 = vmul.f32 %v134, %v136
  %v140 = vperm.slane %v104, 0
  %v142 = vadd.f32 %v138, %v140
  %143 = vst.msk [vmem:[%s5] sm:$0xff] %vm105, %v142
  // Predicated region
  $region22: #{custom_swin_encoder_forward.15} parent=0 // pred_check
    _
  $region23: #{custom_swin_encoder_forward.15} parent=0 // pred_check_branch
    %145 = sbr.rel (0) target = $region25
  $region24: #{custom_swin_encoder_forward.15} parent=0 // pred_region
    _
  $region25: #{custom_swin_encoder_forward.15} parent=0 // pred_fallthru
    _
  // Predicated region
  $region26: #{custom_swin_encoder_forward.15} parent=0 // pred_check
    _
  $region27: #{custom_swin_encoder_forward.15} parent=0 // pred_check_branch
    %147 = sbr.rel (0) target = $region29
  $region28: #{custom_swin_encoder_forward.15} parent=0 // pred_region
    _
  $region29: #{custom_swin_encoder_forward.15} parent=0 // pred_fallthru
    _

// kernel: custom_swin_encoder_forward.11
$region0: #{custom_swin_encoder_forward.11}
  #allocation0 [shape = 'u32[]', space=smem, size = 0x4, offset = 0x4, fixed_abs, tag = 'smem constant byte address 0x4 - core index']
  #allocation1 [shape = 'u32[72,128]{1,0:T(1,128)}', space=vmem, size = 0x9000, scoped, tag = 'internal scratch']
  %s0 = inlined_call_operand.vmem [shape: f32[8,4,32], index: 0, kind: input, shape index: {}]
  %s1 = inlined_call_operand.vmem [shape: bf16[32,96], index: 1, kind: input, shape index: {}]
  %s2 = inlined_call_operand.vmem [shape: f32[1,96], index: 2, kind: input, shape index: {}]
  %s3 = inlined_call_operand.vmem [shape: f32[1,2], index: 3, kind: input, shape index: {}]
  %s4 = inlined_call_operand.vmem [shape: f32[2,4,4], index: 4, kind: input, shape index: {}]
  %s5 = inlined_call_operand.vmem [shape: bf16[32,32], index: 5, kind: input, shape index: {}]
  %s6 = inlined_call_operand.vmem [shape: f32[1,32], index: 6, kind: input, shape index: {}]
  %s7 = inlined_call_operand.vmem [shape: f32[1,32], index: 7, kind: input, shape index: {}]
  %s8 = inlined_call_operand.vmem [shape: f32[1,32], index: 8, kind: input, shape index: {}]
  %s9 = inlined_call_operand.vmem [shape: f32[8,4,32], index: 9, kind: output, shape index: {}]
  %s10 = sld [smem:[#allocation0]]
  $region46: #{custom_swin_encoder_forward.11} parent=0
    _
  %s12 = ssub.s32 1, %s10
  %s13 = scalar_select 0, %s12, %s10
  // Predicated region
  $region2: #{custom_swin_encoder_forward.11} parent=0 // pred_check
    _
  $region3: #{custom_swin_encoder_forward.11} parent=0 // pred_check_branch
    %15 = sbr.rel (0) target = $region5
  $region4: #{custom_swin_encoder_forward.11} parent=0 // pred_region
    _
  $region5: #{custom_swin_encoder_forward.11} parent=0 // pred_fallthru
    _
  // Predicated region
  $region6: #{custom_swin_encoder_forward.11} parent=0 // pred_check
    _
  $region7: #{custom_swin_encoder_forward.11} parent=0 // pred_check_branch
    %17 = sbr.rel (0) target = $region9
  $region8: #{custom_swin_encoder_forward.11} parent=0 // pred_region
    _
  $region9: #{custom_swin_encoder_forward.11} parent=0 // pred_fallthru
    _
  // Predicated region
  $region10: #{custom_swin_encoder_forward.11} parent=0 // pred_check
    _
  $region11: #{custom_swin_encoder_forward.11} parent=0 // pred_check_branch
    %19 = sbr.rel (0) target = $region13
  $region12: #{custom_swin_encoder_forward.11} parent=0 // pred_region
    _
  $region13: #{custom_swin_encoder_forward.11} parent=0 // pred_fallthru
    _
  // Predicated region
  $region14: #{custom_swin_encoder_forward.11} parent=0 // pred_check
    _
  $region15: #{custom_swin_encoder_forward.11} parent=0 // pred_check_branch
    %21 = sbr.rel (0) target = $region17
  $region16: #{custom_swin_encoder_forward.11} parent=0 // pred_region
    _
  $region17: #{custom_swin_encoder_forward.11} parent=0 // pred_fallthru
    _
  // Predicated region
  $region18: #{custom_swin_encoder_forward.11} parent=0 // pred_check
    _
  $region19: #{custom_swin_encoder_forward.11} parent=0 // pred_check_branch
    %23 = sbr.rel (0) target = $region21
  $region20: #{custom_swin_encoder_forward.11} parent=0 // pred_region
    _
  $region21: #{custom_swin_encoder_forward.11} parent=0 // pred_fallthru
    _
  // Predicated region
  $region22: #{custom_swin_encoder_forward.11} parent=0 // pred_check
    _
  $region23: #{custom_swin_encoder_forward.11} parent=0 // pred_check_branch
    %25 = sbr.rel (0) target = $region25
  $region24: #{custom_swin_encoder_forward.11} parent=0 // pred_region
    _
  $region25: #{custom_swin_encoder_forward.11} parent=0 // pred_fallthru
    _
  // Predicated region
  $region26: #{custom_swin_encoder_forward.11} parent=0 // pred_check
    _
  $region27: #{custom_swin_encoder_forward.11} parent=0 // pred_check_branch
    %27 = sbr.rel (0) target = $region29
  $region28: #{custom_swin_encoder_forward.11} parent=0 // pred_region
    _
  $region29: #{custom_swin_encoder_forward.11} parent=0 // pred_fallthru
    _
  // Predicated region
  $region30: #{custom_swin_encoder_forward.11} parent=0 // pred_check
    _
  $region31: #{custom_swin_encoder_forward.11} parent=0 // pred_check_branch
    %29 = sbr.rel (0) target = $region33
  $region32: #{custom_swin_encoder_forward.11} parent=0 // pred_region
    _
  $region33: #{custom_swin_encoder_forward.11} parent=0 // pred_fallthru
    _
  // Predicated region
  $region34: #{custom_swin_encoder_forward.11} parent=0 // pred_check
    _
  $region35: #{custom_swin_encoder_forward.11} parent=0 // pred_check_branch
    %31 = sbr.rel (0) target = $region37
  $region36: #{custom_swin_encoder_forward.11} parent=0 // pred_region
    _
  $region37: #{custom_swin_encoder_forward.11} parent=0 // pred_fallthru
    _
  %v33 = vld [vmem:[%s0] sm:$0xf]
  %v34 = vld [vmem:[%s0 + $0x4] sm:$0xf]
  %v35 = vld [vmem:[%s0 + $0x8] sm:$0xf]
  %v36 = vld [vmem:[%s0 + $0xc] sm:$0xf]
  %v37 = vld [vmem:[%s0 + $0x10] sm:$0xf]
  %v38 = vld [vmem:[%s0 + $0x14] sm:$0xf]
  %v39 = vld [vmem:[%s0 + $0x18] sm:$0xf]
  %v40 = vld [vmem:[%s0 + $0x1c] sm:$0xf]
  %v41 = vpack.c.bf16 %v33, %v33
  %v42 = vpack.c.bf16 %v34, %v34
  %v43 = vpack.c.bf16 %v35, %v35
  %v44 = vpack.c.bf16 %v36, %v36
  %v45 = vpack.c.bf16 %v37, %v37
  %v46 = vpack.c.bf16 %v38, %v38
  %v47 = vpack.c.bf16 %v39, %v39
  %v48 = vpack.c.bf16 %v40, %v40
  %v49 = vld [vmem:[%s1] sm:$0xf]
  %v50 = vld [vmem:[%s1 + $0x4] sm:$0xf]
  %v51 = vld [vmem:[%s1 + $0x8] sm:$0xf]
  %v52 = vld [vmem:[%s1 + $0xc] sm:$0xf]
  %v53 = vld [vmem:[%s2] sm:$0x1]
  %v55 = vperm.slane %v53, 0
  %57 = vst [vmem:[#allocation1] ss:$4 sm:$0xff] %v41
  %s59 = scalar_lea.vmem [#allocation1], 1
  %60 = vst [vmem:[%s59] ss:$4 sm:$0xff] %v42
  %s62 = scalar_lea.vmem [#allocation1], 2
  %63 = vst [vmem:[%s62] ss:$4 sm:$0xff] %v43
  %s65 = scalar_lea.vmem [#allocation1], 3
  %66 = vst [vmem:[%s65] ss:$4 sm:$0xff] %v44
  %s68 = scalar_lea.vmem [#allocation1], 32
  %69 = vst [vmem:[%s68] ss:$4 sm:$0xff] %v45
  %s71 = scalar_lea.vmem [#allocation1], 33
  %72 = vst [vmem:[%s71] ss:$4 sm:$0xff] %v46
  %s74 = scalar_lea.vmem [#allocation1], 34
  %75 = vst [vmem:[%s74] ss:$4 sm:$0xff] %v47
  %s77 = scalar_lea.vmem [#allocation1], 35
  %78 = vst [vmem:[%s77] ss:$4 sm:$0xff] %v48
  %v79 = vld.sshfl [vmem:[#allocation1] sm:$0xff pattern:$0x73625140]
  %v80 = vld.sshfl [vmem:[#allocation1 + $0x20] sm:$0xff pattern:$0x73625140]
  %v85 = vunpack.c.l.b16 %v49
  %v86 = vunpack.c.l.b16 %v50
  %v87 = vunpack.c.l.b16 %v51
  %v88 = vunpack.c.l.b16 %v52
  %v89 = vpack.c.b16 %v86, %v85
  %v90 = vpack.c.b16 %v88, %v87
  %93 = vst [vmem:[#allocation1] ss:$2 sm:$0xff] %v55
  %s94 = scalar_lea.vmem [#allocation1], 1
  %95 = vst [vmem:[%s94] ss:$2 sm:$0xff] %v55
  %s96 = scalar_lea.vmem [#allocation1], 16
  %97 = vst [vmem:[%s96] ss:$2 sm:$0xff] %v55
  %s98 = scalar_lea.vmem [#allocation1], 17
  %99 = vst [vmem:[%s98] ss:$2 sm:$0xff] %v55
  %s100 = scalar_lea.vmem [#allocation1], 32
  %101 = vst [vmem:[%s100] ss:$2 sm:$0xff] %v55
  %s102 = scalar_lea.vmem [#allocation1], 33
  %103 = vst [vmem:[%s102] ss:$2 sm:$0xff] %v55
  %s104 = scalar_lea.vmem [#allocation1], 48
  %105 = vst [vmem:[%s104] ss:$2 sm:$0xff] %v55
  %s106 = scalar_lea.vmem [#allocation1], 49
  %107 = vst [vmem:[%s106] ss:$2 sm:$0xff] %v55
  %v108 = vld.sshfl [vmem:[#allocation1] sm:$0xff pattern:$0x75316420]
  %v109 = vld.sshfl [vmem:[#allocation1 + $0x10] sm:$0xff pattern:$0x75316420]
  %v110 = vld.sshfl [vmem:[#allocation1 + $0x20] sm:$0xff pattern:$0x75316420]
  %v111 = vld.sshfl [vmem:[#allocation1 + $0x30] sm:$0xff pattern:$0x75316420]
  %vm116 = vcmask 261120
  %v117 = vsel %vm116, %v79, 0
  %v119 = vsel %vm116, %v80, 0
  %121 = vmatpush.bf16.msra.mxu0 0
  %122 = vmatpush.bf16.msra.mxu0 0
  %123 = vmatpush.bf16.msra.mxu0 0
  %124 = vmatpush.bf16.msra.mxu0 0
  %125 = vmatpush.bf16.msra.mxu0 0
  %126 = vmatpush.bf16.msra.mxu0 0
  %127 = vmatpush.bf16.msra.mxu0 %v90
  %128 = vmatpush.bf16.msra.mxu0 %v89
  %129 = vmatmul.bf16.gmra.mxu0 %v117
  %v130 = vpop.f32.mrf.mxu0
  %v131 = vadd.f32 %v108, %v130
  %v132 = vpop.f32.mrf.mxu0
  %v133 = vadd.f32 %v109, %v132
  %134 = vmatmul.bf16.gmra.mxu0 %v119
  %v135 = vpop.f32.mrf.mxu0
  %v136 = vadd.f32 %v110, %v135
  %v137 = vpop.f32.mrf.mxu0
  %v138 = vadd.f32 %v111, %v137
  %139 = vdwg.mxu0
  %v144 = vrot.slane %v131, 4
  %v145 = vrot.slane %v133, 4
  %v146 = vrot.slane %v136, 4
  %v147 = vrot.slane %v138, 4
  %v152 = vld [vmem:[%s3] sm:$0x1]
  %v153 = vmul.f32 %v131, %v131
  %v154 = vmul.f32 %v144, %v144
  %v155 = vmul.f32 %v133, %v133
  %v156 = vmul.f32 %v145, %v145
  %v157 = vmul.f32 %v136, %v136
  %v158 = vmul.f32 %v146, %v146
  %v159 = vmul.f32 %v138, %v138
  %v160 = vmul.f32 %v147, %v147
  %vm161 = vcmask 125952
  %v162 = vsel %vm161, %v153, 0.0
  %163 = vadd.xlane.f32.xlu0 %v162
  %v164 = vpop.xlane.xlu0 %163
  %v165 = vsel %vm161, %v154, 0.0
  %166 = vadd.xlane.f32.xlu0 %v165
  %v167 = vpop.xlane.xlu0 %166
  %v168 = vsel %vm161, %v155, 0.0
  %169 = vadd.xlane.f32.xlu0 %v168
  %v170 = vpop.xlane.xlu0 %169
  %v171 = vsel %vm161, %v156, 0.0
  %172 = vadd.xlane.f32.xlu0 %v171
  %v173 = vpop.xlane.xlu0 %172
  %v174 = vsel %vm161, %v157, 0.0
  %175 = vadd.xlane.f32.xlu0 %v174
  %v176 = vpop.xlane.xlu0 %175
  %v177 = vsel %vm161, %v158, 0.0
  %178 = vadd.xlane.f32.xlu0 %v177
  %v179 = vpop.xlane.xlu0 %178
  %v180 = vsel %vm161, %v159, 0.0
  %181 = vadd.xlane.f32.xlu0 %v180
  %v182 = vpop.xlane.xlu0 %181
  %v183 = vsel %vm161, %v160, 0.0
  %184 = vadd.xlane.f32.xlu0 %v183
  %v185 = vpop.xlane.xlu0 %184
  %v186 = vmax.f32 %v164, 1e-24
  %v187 = vmax.f32 %v167, 1e-24
  %v188 = vmax.f32 %v170, 1e-24
  %v189 = vmax.f32 %v173, 1e-24
  %v190 = vmax.f32 %v176, 1e-24
  %v191 = vmax.f32 %v179, 1e-24
  %v192 = vmax.f32 %v182, 1e-24
  %v193 = vmax.f32 %v185, 1e-24
  %v194 = vrsqrt.pop %v186
  %v195 = vmul.f32 %v194, %v186
  %v196 = vmul.f32 %v195, %v194
  %v197 = vmul.f32 0.5, %v196
  %v198 = vsub.f32 1.5, %v197
  %v199 = vmul.f32 %v194, %v198
  %vm200 = vweird.f32 %v186
  %vm201 = vweird.f32 %v194
  %vm202 = vmor %vm200, %vm201
  %v203 = vsel %vm202, %v194, %v199
  %v204 = vrsqrt.pop %v187
  %v205 = vmul.f32 %v204, %v187
  %v206 = vmul.f32 %v205, %v204
  %v207 = vmul.f32 0.5, %v206
  %v208 = vsub.f32 1.5, %v207
  %v209 = vmul.f32 %v204, %v208
  %vm210 = vweird.f32 %v187
  %vm211 = vweird.f32 %v204
  %vm212 = vmor %vm210, %vm211
  %v213 = vsel %vm212, %v204, %v209
  %v214 = vrsqrt.pop %v188
  %v215 = vmul.f32 %v214, %v188
  %v216 = vmul.f32 %v215, %v214
  %v217 = vmul.f32 0.5, %v216
  %v218 = vsub.f32 1.5, %v217
  %v219 = vmul.f32 %v214, %v218
  %vm220 = vweird.f32 %v188
  %vm221 = vweird.f32 %v214
  %vm222 = vmor %vm220, %vm221
  %v223 = vsel %vm222, %v214, %v219
  %v224 = vrsqrt.pop %v189
  %v225 = vmul.f32 %v224, %v189
  %v226 = vmul.f32 %v225, %v224
  %v227 = vmul.f32 0.5, %v226
  %v228 = vsub.f32 1.5, %v227
  %v229 = vmul.f32 %v224, %v228
  %vm230 = vweird.f32 %v189
  %vm231 = vweird.f32 %v224
  %vm232 = vmor %vm230, %vm231
  %v233 = vsel %vm232, %v224, %v229
  %v234 = vrsqrt.pop %v190
  %v235 = vmul.f32 %v234, %v190
  %v236 = vmul.f32 %v235, %v234
  %v237 = vmul.f32 0.5, %v236
  %v238 = vsub.f32 1.5, %v237
  %v239 = vmul.f32 %v234, %v238
  %vm240 = vweird.f32 %v190
  %vm241 = vweird.f32 %v234
  %vm242 = vmor %vm240, %vm241
  %v243 = vsel %vm242, %v234, %v239
  %v244 = vrsqrt.pop %v191
  %v245 = vmul.f32 %v244, %v191
  %v246 = vmul.f32 %v245, %v244
  %v247 = vmul.f32 0.5, %v246
  %v248 = vsub.f32 1.5, %v247
  %v249 = vmul.f32 %v244, %v248
  %vm250 = vweird.f32 %v191
  %vm251 = vweird.f32 %v244
  %vm252 = vmor %vm250, %vm251
  %v253 = vsel %vm252, %v244, %v249
  %v254 = vrsqrt.pop %v192
  %v255 = vmul.f32 %v254, %v192
  %v256 = vmul.f32 %v255, %v254
  %v257 = vmul.f32 0.5, %v256
  %v258 = vsub.f32 1.5, %v257
  %v259 = vmul.f32 %v254, %v258
  %vm260 = vweird.f32 %v192
  %vm261 = vweird.f32 %v254
  %vm262 = vmor %vm260, %vm261
  %v263 = vsel %vm262, %v254, %v259
  %v264 = vrsqrt.pop %v193
  %v265 = vmul.f32 %v264, %v193
  %v266 = vmul.f32 %v265, %v264
  %v267 = vmul.f32 0.5, %v266
  %v268 = vsub.f32 1.5, %v267
  %v269 = vmul.f32 %v264, %v268
  %vm270 = vweird.f32 %v193
  %vm271 = vweird.f32 %v264
  %vm272 = vmor %vm270, %vm271
  %v273 = vsel %vm272, %v264, %v269
  %v274 = vmul.f32 %v131, %v203
  %v275 = vmul.f32 %v144, %v213
  %v276 = vmul.f32 %v133, %v223
  %v277 = vmul.f32 %v145, %v233
  %v278 = vmul.f32 %v136, %v243
  %v279 = vmul.f32 %v146, %v253
  %v280 = vmul.f32 %v138, %v263
  %v281 = vmul.f32 %v147, %v273
  %290 = vst [vmem:[#allocation1] ss:$2 sm:$0xff] %v153
  %v291 = vld.sshfl [vmem:[#allocation1] sm:$0xff pattern:$0x75316420]
  %s292 = scalar_lea.vmem [#allocation1], 16
  %293 = vst [vmem:[%s292] ss:$2 sm:$0xff] %v154
  %v294 = vld.sshfl [vmem:[#allocation1 + $0x10] sm:$0xff pattern:$0x75316420]
  %s295 = scalar_lea.vmem [#allocation1], 32
  %296 = vst [vmem:[%s295] ss:$2 sm:$0xff] %v155
  %v297 = vld.sshfl [vmem:[#allocation1 + $0x20] sm:$0xff pattern:$0x75316420]
  %s298 = scalar_lea.vmem [#allocation1], 48
  %299 = vst [vmem:[%s298] ss:$2 sm:$0xff] %v156
  %v300 = vld.sshfl [vmem:[#allocation1 + $0x30] sm:$0xff pattern:$0x75316420]
  %301 = vst [vmem:[#allocation1] ss:$2 sm:$0xff] %v157
  %v302 = vld.sshfl [vmem:[#allocation1] sm:$0xff pattern:$0x75316420]
  %303 = vst [vmem:[%s292] ss:$2 sm:$0xff] %v158
  %v304 = vld.sshfl [vmem:[#allocation1 + $0x10] sm:$0xff pattern:$0x75316420]
  %305 = vst [vmem:[%s295] ss:$2 sm:$0xff] %v159
  %v306 = vld.sshfl [vmem:[#allocation1 + $0x20] sm:$0xff pattern:$0x75316420]
  %307 = vst [vmem:[%s298] ss:$2 sm:$0xff] %v160
  %v308 = vld.sshfl [vmem:[#allocation1 + $0x30] sm:$0xff pattern:$0x75316420]
  %309 = vrot.lane.b32.xlu0 %v291, 96
  %v310 = vpop.permute.xlu0 %309
  %311 = vrot.lane.b32.xlu0 %v294, 96
  %v312 = vpop.permute.xlu0 %311
  %313 = vrot.lane.b32.xlu0 %v297, 96
  %v314 = vpop.permute.xlu0 %313
  %315 = vrot.lane.b32.xlu0 %v300, 96
  %v316 = vpop.permute.xlu0 %315
  %317 = vrot.lane.b32.xlu0 %v302, 96
  %v318 = vpop.permute.xlu0 %317
  %319 = vrot.lane.b32.xlu0 %v304, 96
  %v320 = vpop.permute.xlu0 %319
  %321 = vrot.lane.b32.xlu0 %v306, 96
  %v322 = vpop.permute.xlu0 %321
  %323 = vrot.lane.b32.xlu0 %v308, 96
  %v324 = vpop.permute.xlu0 %323
  %v333 = vsel %vm161, %v310, 0.0
  %334 = vadd.xlane.f32.xlu0 %v333
  %v335 = vpop.xlane.xlu0 %334
  %v336 = vsel %vm161, %v312, 0.0
  %337 = vadd.xlane.f32.xlu0 %v336
  %v338 = vpop.xlane.xlu0 %337
  %v339 = vsel %vm161, %v314, 0.0
  %340 = vadd.xlane.f32.xlu0 %v339
  %v341 = vpop.xlane.xlu0 %340
  %v342 = vsel %vm161, %v316, 0.0
  %343 = vadd.xlane.f32.xlu0 %v342
  %v344 = vpop.xlane.xlu0 %343
  %v345 = vsel %vm161, %v318, 0.0
  %346 = vadd.xlane.f32.xlu0 %v345
  %v347 = vpop.xlane.xlu0 %346
  %v348 = vsel %vm161, %v320, 0.0
  %349 = vadd.xlane.f32.xlu0 %v348
  %v350 = vpop.xlane.xlu0 %349
  %v351 = vsel %vm161, %v322, 0.0
  %352 = vadd.xlane.f32.xlu0 %v351
  %v353 = vpop.xlane.xlu0 %352
  %v354 = vsel %vm161, %v324, 0.0
  %355 = vadd.xlane.f32.xlu0 %v354
  %v356 = vpop.xlane.xlu0 %355
  %v357 = vmax.f32 %v335, 1e-24
  %v358 = vmax.f32 %v338, 1e-24
  %v359 = vmax.f32 %v341, 1e-24
  %v360 = vmax.f32 %v344, 1e-24
  %v361 = vmax.f32 %v347, 1e-24
  %v362 = vmax.f32 %v350, 1e-24
  %v363 = vmax.f32 %v353, 1e-24
  %v364 = vmax.f32 %v356, 1e-24
  %v365 = vrsqrt.pop %v357
  %v366 = vmul.f32 %v365, %v357
  %v367 = vmul.f32 %v366, %v365
  %v368 = vmul.f32 0.5, %v367
  %v369 = vsub.f32 1.5, %v368
  %v370 = vmul.f32 %v365, %v369
  %vm371 = vweird.f32 %v357
  %vm372 = vweird.f32 %v365
  %vm373 = vmor %vm371, %vm372
  %v374 = vsel %vm373, %v365, %v370
  %v375 = vrsqrt.pop %v358
  %v376 = vmul.f32 %v375, %v358
  %v377 = vmul.f32 %v376, %v375
  %v378 = vmul.f32 0.5, %v377
  %v379 = vsub.f32 1.5, %v378
  %v380 = vmul.f32 %v375, %v379
  %vm381 = vweird.f32 %v358
  %vm382 = vweird.f32 %v375
  %vm383 = vmor %vm381, %vm382
  %v384 = vsel %vm383, %v375, %v380
  %v385 = vrsqrt.pop %v359
  %v386 = vmul.f32 %v385, %v359
  %v387 = vmul.f32 %v386, %v385
  %v388 = vmul.f32 0.5, %v387
  %v389 = vsub.f32 1.5, %v388
  %v390 = vmul.f32 %v385, %v389
  %vm391 = vweird.f32 %v359
  %vm392 = vweird.f32 %v385
  %vm393 = vmor %vm391, %vm392
  %v394 = vsel %vm393, %v385, %v390
  %v395 = vrsqrt.pop %v360
  %v396 = vmul.f32 %v395, %v360
  %v397 = vmul.f32 %v396, %v395
  %v398 = vmul.f32 0.5, %v397
  %v399 = vsub.f32 1.5, %v398
  %v400 = vmul.f32 %v395, %v399
  %vm401 = vweird.f32 %v360
  %vm402 = vweird.f32 %v395
  %vm403 = vmor %vm401, %vm402
  %v404 = vsel %vm403, %v395, %v400
  %v405 = vrsqrt.pop %v361
  %v406 = vmul.f32 %v405, %v361
  %v407 = vmul.f32 %v406, %v405
  %v408 = vmul.f32 0.5, %v407
  %v409 = vsub.f32 1.5, %v408
  %v410 = vmul.f32 %v405, %v409
  %vm411 = vweird.f32 %v361
  %vm412 = vweird.f32 %v405
  %vm413 = vmor %vm411, %vm412
  %v414 = vsel %vm413, %v405, %v410
  %v415 = vrsqrt.pop %v362
  %v416 = vmul.f32 %v415, %v362
  %v417 = vmul.f32 %v416, %v415
  %v418 = vmul.f32 0.5, %v417
  %v419 = vsub.f32 1.5, %v418
  %v420 = vmul.f32 %v415, %v419
  %vm421 = vweird.f32 %v362
  %vm422 = vweird.f32 %v415
  %vm423 = vmor %vm421, %vm422
  %v424 = vsel %vm423, %v415, %v420
  %v425 = vrsqrt.pop %v363
  %v426 = vmul.f32 %v425, %v363
  %v427 = vmul.f32 %v426, %v425
  %v428 = vmul.f32 0.5, %v427
  %v429 = vsub.f32 1.5, %v428
  %v430 = vmul.f32 %v425, %v429
  %vm431 = vweird.f32 %v363
  %vm432 = vweird.f32 %v425
  %vm433 = vmor %vm431, %vm432
  %v434 = vsel %vm433, %v425, %v430
  %v435 = vrsqrt.pop %v364
  %v436 = vmul.f32 %v435, %v364
  %v437 = vmul.f32 %v436, %v435
  %v438 = vmul.f32 0.5, %v437
  %v439 = vsub.f32 1.5, %v438
  %v440 = vmul.f32 %v435, %v439
  %vm441 = vweird.f32 %v364
  %vm442 = vweird.f32 %v435
  %vm443 = vmor %vm441, %vm442
  %v444 = vsel %vm443, %v435, %v440
  %v445 = vmul.f32 %v131, %v374
  %v446 = vmul.f32 %v144, %v384
  %v447 = vmul.f32 %v133, %v394
  %v448 = vmul.f32 %v145, %v404
  %v449 = vmul.f32 %v136, %v414
  %v450 = vmul.f32 %v146, %v424
  %v451 = vmul.f32 %v138, %v434
  %v452 = vmul.f32 %v147, %v444
  %454 = vst [vmem:[#allocation1] ss:$2 sm:$0xff] %v445
  %v455 = vld.sshfl [vmem:[#allocation1] sm:$0xff pattern:$0x75316420]
  %456 = vrot.lane.b32.xlu0 %v455, 96
  %v457 = vpop.permute.xlu0 %456
  %vm458 = vcmask 130048
  %v460 = vsel %vm458, %v274, 0
  %v462 = vsel %vm458, %v457, 0
  %464 = vmatpush.xpose.msra.mxu0 0.0
  %465 = vmatpush.xpose.msra.mxu0 0.0
  %466 = vmatpush.xpose.msra.mxu0 0.0
  %467 = vmatpush.xpose.msra.mxu0 0.0
  %468 = vmatpush.xpose.msra.mxu0 0.0
  %469 = vmatpush.xpose.msra.mxu0 0.0
  %470 = vmatpush.xpose.msra.mxu0 0.0
  %471 = vmatpush.xpose.msra.mxu0 0.0
  %472 = vmatpush.xpose.msra.mxu0 0.0
  %473 = vmatpush.xpose.msra.mxu0 0.0
  %474 = vmatpush.xpose.msra.mxu0 0.0
  %475 = vmatpush.xpose.msra.mxu0 0.0
  %476 = vmatpush.xpose.msra.mxu0 0.0
  %477 = vmatpush.xpose.msra.mxu0 0.0
  %478 = vmatpush.xpose.msra.mxu0 0.0
  %479 = vmatpush.xpose.msra.mxu0 %v462
  %480 = vmatmul.f32.gmra.mxu0 %v460
  %v481 = vpop.f32.mrf.mxu0
  %v482 = vadd.f32 0.0, %v481
  %483 = vdwg.mxu0
  %485 = vst [vmem:[#allocation1] ss:$2 sm:$0xff] %v446
  %v486 = vld.sshfl [vmem:[#allocation1] sm:$0xff pattern:$0x75316420]
  %487 = vrot.lane.b32.xlu0 %v486, 96
  %v488 = vpop.permute.xlu0 %487
  %v490 = vsel %vm458, %v275, 0
  %v492 = vsel %vm458, %v488, 0
  %494 = vmatpush.xpose.msra.mxu0 0.0
  %495 = vmatpush.xpose.msra.mxu0 0.0
  %496 = vmatpush.xpose.msra.mxu0 0.0
  %497 = vmatpush.xpose.msra.mxu0 0.0
  %498 = vmatpush.xpose.msra.mxu0 0.0
  %499 = vmatpush.xpose.msra.mxu0 0.0
  %500 = vmatpush.xpose.msra.mxu0 0.0
  %501 = vmatpush.xpose.msra.mxu0 0.0
  %502 = vmatpush.xpose.msra.mxu0 0.0
  %503 = vmatpush.xpose.msra.mxu0 0.0
  %504 = vmatpush.xpose.msra.mxu0 0.0
  %505 = vmatpush.xpose.msra.mxu0 0.0
  %506 = vmatpush.xpose.msra.mxu0 0.0
  %507 = vmatpush.xpose.msra.mxu0 0.0
  %508 = vmatpush.xpose.msra.mxu0 0.0
  %509 = vmatpush.xpose.msra.mxu0 %v492
  %510 = vmatmul.f32.gmra.mxu0 %v490
  %v511 = vpop.f32.mrf.mxu0
  %v512 = vadd.f32 0.0, %v511
  %513 = vdwg.mxu0
  %515 = vst [vmem:[#allocation1] ss:$2 sm:$0xff] %v447
  %v516 = vld.sshfl [vmem:[#allocation1] sm:$0xff pattern:$0x75316420]
  %517 = vrot.lane.b32.xlu0 %v516, 96
  %v518 = vpop.permute.xlu0 %517
  %v520 = vsel %vm458, %v276, 0
  %v522 = vsel %vm458, %v518, 0
  %524 = vmatpush.xpose.msra.mxu0 0.0
  %525 = vmatpush.xpose.msra.mxu0 0.0
  %526 = vmatpush.xpose.msra.mxu0 0.0
  %527 = vmatpush.xpose.msra.mxu0 0.0
  %528 = vmatpush.xpose.msra.mxu0 0.0
  %529 = vmatpush.xpose.msra.mxu0 0.0
  %530 = vmatpush.xpose.msra.mxu0 0.0
  %531 = vmatpush.xpose.msra.mxu0 0.0
  %532 = vmatpush.xpose.msra.mxu0 0.0
  %533 = vmatpush.xpose.msra.mxu0 0.0
  %534 = vmatpush.xpose.msra.mxu0 0.0
  %535 = vmatpush.xpose.msra.mxu0 0.0
  %536 = vmatpush.xpose.msra.mxu0 0.0
  %537 = vmatpush.xpose.msra.mxu0 0.0
  %538 = vmatpush.xpose.msra.mxu0 0.0
  %539 = vmatpush.xpose.msra.mxu0 %v522
  %540 = vmatmul.f32.gmra.mxu0 %v520
  %v541 = vpop.f32.mrf.mxu0
  %v542 = vadd.f32 0.0, %v541
  %543 = vdwg.mxu0
  %545 = vst [vmem:[#allocation1] ss:$2 sm:$0xff] %v448
  %v546 = vld.sshfl [vmem:[#allocation1] sm:$0xff pattern:$0x75316420]
  %547 = vrot.lane.b32.xlu0 %v546, 96
  %v548 = vpop.permute.xlu0 %547
  %v550 = vsel %vm458, %v277, 0
  %v552 = vsel %vm458, %v548, 0
  %554 = vmatpush.xpose.msra.mxu0 0.0
  %555 = vmatpush.xpose.msra.mxu0 0.0
  %556 = vmatpush.xpose.msra.mxu0 0.0
  %557 = vmatpush.xpose.msra.mxu0 0.0
  %558 = vmatpush.xpose.msra.mxu0 0.0
  %559 = vmatpush.xpose.msra.mxu0 0.0
  %560 = vmatpush.xpose.msra.mxu0 0.0
  %561 = vmatpush.xpose.msra.mxu0 0.0
  %562 = vmatpush.xpose.msra.mxu0 0.0
  %563 = vmatpush.xpose.msra.mxu0 0.0
  %564 = vmatpush.xpose.msra.mxu0 0.0
  %565 = vmatpush.xpose.msra.mxu0 0.0
  %566 = vmatpush.xpose.msra.mxu0 0.0
  %567 = vmatpush.xpose.msra.mxu0 0.0
  %568 = vmatpush.xpose.msra.mxu0 0.0
  %569 = vmatpush.xpose.msra.mxu0 %v552
  %570 = vmatmul.f32.gmra.mxu0 %v550
  %v571 = vpop.f32.mrf.mxu0
  %v572 = vadd.f32 0.0, %v571
  %573 = vdwg.mxu0
  %575 = vst [vmem:[#allocation1] ss:$2 sm:$0xff] %v449
  %v576 = vld.sshfl [vmem:[#allocation1] sm:$0xff pattern:$0x75316420]
  %577 = vrot.lane.b32.xlu0 %v576, 96
  %v578 = vpop.permute.xlu0 %577
  %v580 = vsel %vm458, %v278, 0
  %v582 = vsel %vm458, %v578, 0
  %584 = vmatpush.xpose.msra.mxu0 0.0
  %585 = vmatpush.xpose.msra.mxu0 0.0
  %586 = vmatpush.xpose.msra.mxu0 0.0
  %587 = vmatpush.xpose.msra.mxu0 0.0
  %588 = vmatpush.xpose.msra.mxu0 0.0
  %589 = vmatpush.xpose.msra.mxu0 0.0
  %590 = vmatpush.xpose.msra.mxu0 0.0
  %591 = vmatpush.xpose.msra.mxu0 0.0
  %592 = vmatpush.xpose.msra.mxu0 0.0
  %593 = vmatpush.xpose.msra.mxu0 0.0
  %594 = vmatpush.xpose.msra.mxu0 0.0
  %595 = vmatpush.xpose.msra.mxu0 0.0
  %596 = vmatpush.xpose.msra.mxu0 0.0
  %597 = vmatpush.xpose.msra.mxu0 0.0
  %598 = vmatpush.xpose.msra.mxu0 0.0
  %599 = vmatpush.xpose.msra.mxu0 %v582
  %600 = vmatmul.f32.gmra.mxu0 %v580
  %v601 = vpop.f32.mrf.mxu0
  %v602 = vadd.f32 0.0, %v601
  %603 = vdwg.mxu0
  %605 = vst [vmem:[#allocation1] ss:$2 sm:$0xff] %v450
  %v606 = vld.sshfl [vmem:[#allocation1] sm:$0xff pattern:$0x75316420]
  %607 = vrot.lane.b32.xlu0 %v606, 96
  %v608 = vpop.permute.xlu0 %607
  %v610 = vsel %vm458, %v279, 0
  %v612 = vsel %vm458, %v608, 0
  %614 = vmatpush.xpose.msra.mxu0 0.0
  %615 = vmatpush.xpose.msra.mxu0 0.0
  %616 = vmatpush.xpose.msra.mxu0 0.0
  %617 = vmatpush.xpose.msra.mxu0 0.0
  %618 = vmatpush.xpose.msra.mxu0 0.0
  %619 = vmatpush.xpose.msra.mxu0 0.0
  %620 = vmatpush.xpose.msra.mxu0 0.0
  %621 = vmatpush.xpose.msra.mxu0 0.0
  %622 = vmatpush.xpose.msra.mxu0 0.0
  %623 = vmatpush.xpose.msra.mxu0 0.0
  %624 = vmatpush.xpose.msra.mxu0 0.0
  %625 = vmatpush.xpose.msra.mxu0 0.0
  %626 = vmatpush.xpose.msra.mxu0 0.0
  %627 = vmatpush.xpose.msra.mxu0 0.0
  %628 = vmatpush.xpose.msra.mxu0 0.0
  %629 = vmatpush.xpose.msra.mxu0 %v612
  %630 = vmatmul.f32.gmra.mxu0 %v610
  %v631 = vpop.f32.mrf.mxu0
  %v632 = vadd.f32 0.0, %v631
  %633 = vdwg.mxu0
  %635 = vst [vmem:[#allocation1] ss:$2 sm:$0xff] %v451
  %v636 = vld.sshfl [vmem:[#allocation1] sm:$0xff pattern:$0x75316420]
  %637 = vrot.lane.b32.xlu0 %v636, 96
  %v638 = vpop.permute.xlu0 %637
  %v640 = vsel %vm458, %v280, 0
  %v642 = vsel %vm458, %v638, 0
  %644 = vmatpush.xpose.msra.mxu0 0.0
  %645 = vmatpush.xpose.msra.mxu0 0.0
  %646 = vmatpush.xpose.msra.mxu0 0.0
  %647 = vmatpush.xpose.msra.mxu0 0.0
  %648 = vmatpush.xpose.msra.mxu0 0.0
  %649 = vmatpush.xpose.msra.mxu0 0.0
  %650 = vmatpush.xpose.msra.mxu0 0.0
  %651 = vmatpush.xpose.msra.mxu0 0.0
  %652 = vmatpush.xpose.msra.mxu0 0.0
  %653 = vmatpush.xpose.msra.mxu0 0.0
  %654 = vmatpush.xpose.msra.mxu0 0.0
  %655 = vmatpush.xpose.msra.mxu0 0.0
  %656 = vmatpush.xpose.msra.mxu0 0.0
  %657 = vmatpush.xpose.msra.mxu0 0.0
  %658 = vmatpush.xpose.msra.mxu0 0.0
  %659 = vmatpush.xpose.msra.mxu0 %v642
  %660 = vmatmul.f32.gmra.mxu0 %v640
  %v661 = vpop.f32.mrf.mxu0
  %v662 = vadd.f32 0.0, %v661
  %663 = vdwg.mxu0
  %665 = vst [vmem:[#allocation1] ss:$2 sm:$0xff] %v452
  %v666 = vld.sshfl [vmem:[#allocation1] sm:$0xff pattern:$0x75316420]
  %667 = vrot.lane.b32.xlu0 %v666, 96
  %v668 = vpop.permute.xlu0 %667
  %v670 = vsel %vm458, %v281, 0
  %v672 = vsel %vm458, %v668, 0
  %674 = vmatpush.xpose.msra.mxu0 0.0
  %675 = vmatpush.xpose.msra.mxu0 0.0
  %676 = vmatpush.xpose.msra.mxu0 0.0
  %677 = vmatpush.xpose.msra.mxu0 0.0
  %678 = vmatpush.xpose.msra.mxu0 0.0
  %679 = vmatpush.xpose.msra.mxu0 0.0
  %680 = vmatpush.xpose.msra.mxu0 0.0
  %681 = vmatpush.xpose.msra.mxu0 0.0
  %682 = vmatpush.xpose.msra.mxu0 0.0
  %683 = vmatpush.xpose.msra.mxu0 0.0
  %684 = vmatpush.xpose.msra.mxu0 0.0
  %685 = vmatpush.xpose.msra.mxu0 0.0
  %686 = vmatpush.xpose.msra.mxu0 0.0
  %687 = vmatpush.xpose.msra.mxu0 0.0
  %688 = vmatpush.xpose.msra.mxu0 0.0
  %689 = vmatpush.xpose.msra.mxu0 %v672
  %690 = vmatmul.f32.gmra.mxu0 %v670
  %v691 = vpop.f32.mrf.mxu0
  %v692 = vadd.f32 0.0, %v691
  %693 = vdwg.mxu0
  %s694 = vtos %v152
  %v695 = vstv %s694
  %v696 = vmul.f32 %v482, %v695
  %v697 = vmul.f32 %v512, %v695
  %v698 = vmul.f32 %v542, %v695
  %v699 = vmul.f32 %v572, %v695
  %v700 = vmul.f32 %v602, %v695
  %v701 = vmul.f32 %v632, %v695
  %v702 = vmul.f32 %v662, %v695
  %v703 = vmul.f32 %v692, %v695
  %v704 = vld [vmem:[%s4] sm:$0xf]
  %v705 = vadd.f32 %v696, %v704
  %v706 = vadd.f32 %v697, %v704
  %v707 = vadd.f32 %v698, %v704
  %v708 = vadd.f32 %v699, %v704
  %v709 = vadd.f32 %v700, %v704
  %v710 = vadd.f32 %v701, %v704
  %v711 = vadd.f32 %v702, %v704
  %v712 = vadd.f32 %v703, %v704
  %vm713 = vcmask 27648
  %v714 = vsel %vm713, %v705, -inf
  %715 = vmax.xlane.f32.xlu0 %v714
  %v716 = vpop.xlane.xlu0 %715
  %v717 = vsel %vm713, %v706, -inf
  %718 = vmax.xlane.f32.xlu0 %v717
  %v719 = vpop.xlane.xlu0 %718
  %v720 = vsel %vm713, %v707, -inf
  %721 = vmax.xlane.f32.xlu0 %v720
  %v722 = vpop.xlane.xlu0 %721
  %v723 = vsel %vm713, %v708, -inf
  %724 = vmax.xlane.f32.xlu0 %v723
  %v725 = vpop.xlane.xlu0 %724
  %v726 = vsel %vm713, %v709, -inf
  %727 = vmax.xlane.f32.xlu0 %v726
  %v728 = vpop.xlane.xlu0 %727
  %v729 = vsel %vm713, %v710, -inf
  %730 = vmax.xlane.f32.xlu0 %v729
  %v731 = vpop.xlane.xlu0 %730
  %v732 = vsel %vm713, %v711, -inf
  %733 = vmax.xlane.f32.xlu0 %v732
  %v734 = vpop.xlane.xlu0 %733
  %v735 = vsel %vm713, %v712, -inf
  %736 = vmax.xlane.f32.xlu0 %v735
  %v737 = vpop.xlane.xlu0 %736
  %v738 = vsub.f32 %v705, %v716
  %v739 = vsub.f32 %v706, %v719
  %v740 = vsub.f32 %v707, %v722
  %v741 = vsub.f32 %v708, %v725
  %v742 = vsub.f32 %v709, %v728
  %v743 = vsub.f32 %v710, %v731
  %v744 = vsub.f32 %v711, %v734
  %v745 = vsub.f32 %v712, %v737
  %v746 = vmul.f32 %v738, 1.442695
  %v747 = vpow.pop %v746
  %v748 = vmul.f32 %v739, 1.442695
  %v749 = vpow.pop %v748
  %v750 = vmul.f32 %v740, 1.442695
  %v751 = vpow.pop %v750
  %v752 = vmul.f32 %v741, 1.442695
  %v753 = vpow.pop %v752
  %v754 = vmul.f32 %v742, 1.442695
  %v755 = vpow.pop %v754
  %v756 = vmul.f32 %v743, 1.442695
  %v757 = vpow.pop %v756
  %v758 = vmul.f32 %v744, 1.442695
  %v759 = vpow.pop %v758
  %v760 = vmul.f32 %v745, 1.442695
  %v761 = vpow.pop %v760
  %v762 = vsel %vm713, %v747, 0.0
  %763 = vadd.xlane.f32.xlu0 %v762
  %v764 = vpop.xlane.xlu0 %763
  %v765 = vsel %vm713, %v749, 0.0
  %766 = vadd.xlane.f32.xlu0 %v765
  %v767 = vpop.xlane.xlu0 %766
  %v768 = vsel %vm713, %v751, 0.0
  %769 = vadd.xlane.f32.xlu0 %v768
  %v770 = vpop.xlane.xlu0 %769
  %v771 = vsel %vm713, %v753, 0.0
  %772 = vadd.xlane.f32.xlu0 %v771
  %v773 = vpop.xlane.xlu0 %772
  %v774 = vsel %vm713, %v755, 0.0
  %775 = vadd.xlane.f32.xlu0 %v774
  %v776 = vpop.xlane.xlu0 %775
  %v777 = vsel %vm713, %v757, 0.0
  %778 = vadd.xlane.f32.xlu0 %v777
  %v779 = vpop.xlane.xlu0 %778
  %v780 = vsel %vm713, %v759, 0.0
  %781 = vadd.xlane.f32.xlu0 %v780
  %v782 = vpop.xlane.xlu0 %781
  %v783 = vsel %vm713, %v761, 0.0
  %784 = vadd.xlane.f32.xlu0 %v783
  %v785 = vpop.xlane.xlu0 %784
  %v786 = vrcp.pop %v764
  %v787 = vrcp.pop %v767
  %v788 = vrcp.pop %v770
  %v789 = vrcp.pop %v773
  %v790 = vrcp.pop %v776
  %v791 = vrcp.pop %v779
  %v792 = vrcp.pop %v782
  %v793 = vrcp.pop %v785
  %v794 = vmul.f32 %v747, %v786
  %v795 = vmul.f32 %v749, %v787
  %v796 = vmul.f32 %v751, %v788
  %v797 = vmul.f32 %v753, %v789
  %v798 = vmul.f32 %v755, %v790
  %v799 = vmul.f32 %v757, %v791
  %v800 = vmul.f32 %v759, %v792
  %v801 = vmul.f32 %v761, %v793
  %v802 = vpack.c.bf16 %v794, %v794
  %v803 = vpack.c.bf16 %v795, %v795
  %v804 = vpack.c.bf16 %v796, %v796
  %v805 = vpack.c.bf16 %v797, %v797
  %v806 = vpack.c.bf16 %v798, %v798
  %v807 = vpack.c.bf16 %v799, %v799
  %v808 = vpack.c.bf16 %v800, %v800
  %v809 = vpack.c.bf16 %v801, %v801
  %v810 = vpack.c.bf16 %v131, %v131
  %v811 = vpack.c.bf16 %v144, %v144
  %v812 = vpack.c.bf16 %v133, %v133
  %v813 = vpack.c.bf16 %v145, %v145
  %v814 = vpack.c.bf16 %v136, %v136
  %v815 = vpack.c.bf16 %v146, %v146
  %v816 = vpack.c.bf16 %v138, %v138
  %v817 = vpack.c.bf16 %v147, %v147
  %v819 = vunpack.c.l.b16 %v810
  %v820 = vpack.c.b16 %v819, %v819
  %821 = vrot.lane.b32.xlu0 %v820, 64
  %v822 = vpop.permute.xlu0 %821
  %vm823 = vcmask 31744
  %v825 = vsel %vm823, %v802, 0
  %vm827 = vcmask 1041408
  %v829 = vsel %vm827, %v822, 0
  %831 = vmatpush.bf16.msra.mxu0 0
  %832 = vmatpush.bf16.msra.mxu0 0
  %833 = vmatpush.bf16.msra.mxu0 0
  %834 = vmatpush.bf16.msra.mxu0 0
  %835 = vmatpush.bf16.msra.mxu0 0
  %836 = vmatpush.bf16.msra.mxu0 0
  %837 = vmatpush.bf16.msra.mxu0 0
  %838 = vmatpush.bf16.msra.mxu0 %v829
  %839 = vmatmul.bf16.gmra.mxu0 %v825
  %v840 = vpop.f32.mrf.mxu0
  %v841 = vadd.f32 0.0, %v840
  %v842 = vpop.f32.mrf.mxu0
  %843 = vdwg.mxu0
  %v845 = vunpack.c.l.b16 %v811
  %v846 = vpack.c.b16 %v845, %v845
  %847 = vrot.lane.b32.xlu0 %v846, 64
  %v848 = vpop.permute.xlu0 %847
  %v850 = vsel %vm823, %v803, 0
  %v853 = vsel %vm827, %v848, 0
  %855 = vmatpush.bf16.msra.mxu0 0
  %856 = vmatpush.bf16.msra.mxu0 0
  %857 = vmatpush.bf16.msra.mxu0 0
  %858 = vmatpush.bf16.msra.mxu0 0
  %859 = vmatpush.bf16.msra.mxu0 0
  %860 = vmatpush.bf16.msra.mxu0 0
  %861 = vmatpush.bf16.msra.mxu0 0
  %862 = vmatpush.bf16.msra.mxu0 %v853
  %863 = vmatmul.bf16.gmra.mxu0 %v850
  %v864 = vpop.f32.mrf.mxu0
  %v865 = vadd.f32 0.0, %v864
  %v866 = vpop.f32.mrf.mxu0
  %867 = vdwg.mxu0
  %v869 = vunpack.c.l.b16 %v812
  %v870 = vpack.c.b16 %v869, %v869
  %871 = vrot.lane.b32.xlu0 %v870, 64
  %v872 = vpop.permute.xlu0 %871
  %v874 = vsel %vm823, %v804, 0
  %v877 = vsel %vm827, %v872, 0
  %879 = vmatpush.bf16.msra.mxu0 0
  %880 = vmatpush.bf16.msra.mxu0 0
  %881 = vmatpush.bf16.msra.mxu0 0
  %882 = vmatpush.bf16.msra.mxu0 0
  %883 = vmatpush.bf16.msra.mxu0 0
  %884 = vmatpush.bf16.msra.mxu0 0
  %885 = vmatpush.bf16.msra.mxu0 0
  %886 = vmatpush.bf16.msra.mxu0 %v877
  %887 = vmatmul.bf16.gmra.mxu0 %v874
  %v888 = vpop.f32.mrf.mxu0
  %v889 = vadd.f32 0.0, %v888
  %v890 = vpop.f32.mrf.mxu0
  %891 = vdwg.mxu0
  %v893 = vunpack.c.l.b16 %v813
  %v894 = vpack.c.b16 %v893, %v893
  %895 = vrot.lane.b32.xlu0 %v894, 64
  %v896 = vpop.permute.xlu0 %895
  %v898 = vsel %vm823, %v805, 0
  %v901 = vsel %vm827, %v896, 0
  %903 = vmatpush.bf16.msra.mxu0 0
  %904 = vmatpush.bf16.msra.mxu0 0
  %905 = vmatpush.bf16.msra.mxu0 0
  %906 = vmatpush.bf16.msra.mxu0 0
  %907 = vmatpush.bf16.msra.mxu0 0
  %908 = vmatpush.bf16.msra.mxu0 0
  %909 = vmatpush.bf16.msra.mxu0 0
  %910 = vmatpush.bf16.msra.mxu0 %v901
  %911 = vmatmul.bf16.gmra.mxu0 %v898
  %v912 = vpop.f32.mrf.mxu0
  %v913 = vadd.f32 0.0, %v912
  %v914 = vpop.f32.mrf.mxu0
  %915 = vdwg.mxu0
  %v917 = vunpack.c.l.b16 %v814
  %v918 = vpack.c.b16 %v917, %v917
  %919 = vrot.lane.b32.xlu0 %v918, 64
  %v920 = vpop.permute.xlu0 %919
  %v922 = vsel %vm823, %v806, 0
  %v925 = vsel %vm827, %v920, 0
  %927 = vmatpush.bf16.msra.mxu0 0
  %928 = vmatpush.bf16.msra.mxu0 0
  %929 = vmatpush.bf16.msra.mxu0 0
  %930 = vmatpush.bf16.msra.mxu0 0
  %931 = vmatpush.bf16.msra.mxu0 0
  %932 = vmatpush.bf16.msra.mxu0 0
  %933 = vmatpush.bf16.msra.mxu0 0
  %934 = vmatpush.bf16.msra.mxu0 %v925
  %935 = vmatmul.bf16.gmra.mxu0 %v922
  %v936 = vpop.f32.mrf.mxu0
  %v937 = vadd.f32 0.0, %v936
  %v938 = vpop.f32.mrf.mxu0
  %939 = vdwg.mxu0
  %v941 = vunpack.c.l.b16 %v815
  %v942 = vpack.c.b16 %v941, %v941
  %943 = vrot.lane.b32.xlu0 %v942, 64
  %v944 = vpop.permute.xlu0 %943
  %v946 = vsel %vm823, %v807, 0
  %v949 = vsel %vm827, %v944, 0
  %951 = vmatpush.bf16.msra.mxu0 0
  %952 = vmatpush.bf16.msra.mxu0 0
  %953 = vmatpush.bf16.msra.mxu0 0
  %954 = vmatpush.bf16.msra.mxu0 0
  %955 = vmatpush.bf16.msra.mxu0 0
  %956 = vmatpush.bf16.msra.mxu0 0
  %957 = vmatpush.bf16.msra.mxu0 0
  %958 = vmatpush.bf16.msra.mxu0 %v949
  %959 = vmatmul.bf16.gmra.mxu0 %v946
  %v960 = vpop.f32.mrf.mxu0
  %v961 = vadd.f32 0.0, %v960
  %v962 = vpop.f32.mrf.mxu0
  %963 = vdwg.mxu0
  %v965 = vunpack.c.l.b16 %v816
  %v966 = vpack.c.b16 %v965, %v965
  %967 = vrot.lane.b32.xlu0 %v966, 64
  %v968 = vpop.permute.xlu0 %967
  %v970 = vsel %vm823, %v808, 0
  %v973 = vsel %vm827, %v968, 0
  %975 = vmatpush.bf16.msra.mxu0 0
  %976 = vmatpush.bf16.msra.mxu0 0
  %977 = vmatpush.bf16.msra.mxu0 0
  %978 = vmatpush.bf16.msra.mxu0 0
  %979 = vmatpush.bf16.msra.mxu0 0
  %980 = vmatpush.bf16.msra.mxu0 0
  %981 = vmatpush.bf16.msra.mxu0 0
  %982 = vmatpush.bf16.msra.mxu0 %v973
  %983 = vmatmul.bf16.gmra.mxu0 %v970
  %v984 = vpop.f32.mrf.mxu0
  %v985 = vadd.f32 0.0, %v984
  %v986 = vpop.f32.mrf.mxu0
  %987 = vdwg.mxu0
  %v989 = vunpack.c.l.b16 %v817
  %v990 = vpack.c.b16 %v989, %v989
  %991 = vrot.lane.b32.xlu0 %v990, 64
  %v992 = vpop.permute.xlu0 %991
  %v994 = vsel %vm823, %v809, 0
  %v997 = vsel %vm827, %v992, 0
  %999 = vmatpush.bf16.msra.mxu0 0
  %1000 = vmatpush.bf16.msra.mxu0 0
  %1001 = vmatpush.bf16.msra.mxu0 0
  %1002 = vmatpush.bf16.msra.mxu0 0
  %1003 = vmatpush.bf16.msra.mxu0 0
  %1004 = vmatpush.bf16.msra.mxu0 0
  %1005 = vmatpush.bf16.msra.mxu0 0
  %1006 = vmatpush.bf16.msra.mxu0 %v997
  %1007 = vmatmul.bf16.gmra.mxu0 %v994
  %v1008 = vpop.f32.mrf.mxu0
  %v1009 = vadd.f32 0.0, %v1008
  %v1010 = vpop.f32.mrf.mxu0
  %1011 = vdwg.mxu0
  %1012 = vst [vmem:[#allocation1] ss:$2 sm:$0xff] %v153
  %v1013 = vld.sshfl [vmem:[#allocation1] sm:$0xff pattern:$0x75316420]
  %s1014 = scalar_lea.vmem [#allocation1], 16
  %1015 = vst [vmem:[%s1014] ss:$2 sm:$0xff] %v154
  %v1016 = vld.sshfl [vmem:[#allocation1 + $0x10] sm:$0xff pattern:$0x75316420]
  %s1017 = scalar_lea.vmem [#allocation1], 32
  %1018 = vst [vmem:[%s1017] ss:$2 sm:$0xff] %v155
  %v1019 = vld.sshfl [vmem:[#allocation1 + $0x20] sm:$0xff pattern:$0x75316420]
  %s1020 = scalar_lea.vmem [#allocation1], 48
  %1021 = vst [vmem:[%s1020] ss:$2 sm:$0xff] %v156
  %v1022 = vld.sshfl [vmem:[#allocation1 + $0x30] sm:$0xff pattern:$0x75316420]
  %1023 = vst [vmem:[#allocation1] ss:$2 sm:$0xff] %v157
  %v1024 = vld.sshfl [vmem:[#allocation1] sm:$0xff pattern:$0x75316420]
  %1025 = vst [vmem:[%s1014] ss:$2 sm:$0xff] %v158
  %v1026 = vld.sshfl [vmem:[#allocation1 + $0x10] sm:$0xff pattern:$0x75316420]
  %1027 = vst [vmem:[%s1017] ss:$2 sm:$0xff] %v159
  %v1028 = vld.sshfl [vmem:[#allocation1 + $0x20] sm:$0xff pattern:$0x75316420]
  %1029 = vst [vmem:[%s1020] ss:$2 sm:$0xff] %v160
  %v1030 = vld.sshfl [vmem:[#allocation1 + $0x30] sm:$0xff pattern:$0x75316420]
  %1031 = vrot.lane.b32.xlu0 %v1013, 112
  %v1032 = vpop.permute.xlu0 %1031
  %1033 = vrot.lane.b32.xlu0 %v1016, 112
  %v1034 = vpop.permute.xlu0 %1033
  %1035 = vrot.lane.b32.xlu0 %v1019, 112
  %v1036 = vpop.permute.xlu0 %1035
  %1037 = vrot.lane.b32.xlu0 %v1022, 112
  %v1038 = vpop.permute.xlu0 %1037
  %1039 = vrot.lane.b32.xlu0 %v1024, 112
  %v1040 = vpop.permute.xlu0 %1039
  %1041 = vrot.lane.b32.xlu0 %v1026, 112
  %v1042 = vpop.permute.xlu0 %1041
  %1043 = vrot.lane.b32.xlu0 %v1028, 112
  %v1044 = vpop.permute.xlu0 %1043
  %1045 = vrot.lane.b32.xlu0 %v1030, 112
  %v1046 = vpop.permute.xlu0 %1045
  %v1055 = vsel %vm161, %v1032, 0.0
  %1056 = vadd.xlane.f32.xlu0 %v1055
  %v1057 = vpop.xlane.xlu0 %1056
  %v1058 = vsel %vm161, %v1034, 0.0
  %1059 = vadd.xlane.f32.xlu0 %v1058
  %v1060 = vpop.xlane.xlu0 %1059
  %v1061 = vsel %vm161, %v1036, 0.0
  %1062 = vadd.xlane.f32.xlu0 %v1061
  %v1063 = vpop.xlane.xlu0 %1062
  %v1064 = vsel %vm161, %v1038, 0.0
  %1065 = vadd.xlane.f32.xlu0 %v1064
  %v1066 = vpop.xlane.xlu0 %1065
  %v1067 = vsel %vm161, %v1040, 0.0
  %1068 = vadd.xlane.f32.xlu0 %v1067
  %v1069 = vpop.xlane.xlu0 %1068
  %v1070 = vsel %vm161, %v1042, 0.0
  %1071 = vadd.xlane.f32.xlu0 %v1070
  %v1072 = vpop.xlane.xlu0 %1071
  %v1073 = vsel %vm161, %v1044, 0.0
  %1074 = vadd.xlane.f32.xlu0 %v1073
  %v1075 = vpop.xlane.xlu0 %1074
  %v1076 = vsel %vm161, %v1046, 0.0
  %1077 = vadd.xlane.f32.xlu0 %v1076
  %v1078 = vpop.xlane.xlu0 %1077
  %v1079 = vmax.f32 %v1057, 1e-24
  %v1080 = vmax.f32 %v1060, 1e-24
  %v1081 = vmax.f32 %v1063, 1e-24
  %v1082 = vmax.f32 %v1066, 1e-24
  %v1083 = vmax.f32 %v1069, 1e-24
  %v1084 = vmax.f32 %v1072, 1e-24
  %v1085 = vmax.f32 %v1075, 1e-24
  %v1086 = vmax.f32 %v1078, 1e-24
  %v1087 = vrsqrt.pop %v1079
  %v1088 = vmul.f32 %v1087, %v1079
  %v1089 = vmul.f32 %v1088, %v1087
  %v1090 = vmul.f32 0.5, %v1089
  %v1091 = vsub.f32 1.5, %v1090
  %v1092 = vmul.f32 %v1087, %v1091
  %vm1093 = vweird.f32 %v1079
  %vm1094 = vweird.f32 %v1087
  %vm1095 = vmor %vm1093, %vm1094
  %v1096 = vsel %vm1095, %v1087, %v1092
  %v1097 = vrsqrt.pop %v1080
  %v1098 = vmul.f32 %v1097, %v1080
  %v1099 = vmul.f32 %v1098, %v1097
  %v1100 = vmul.f32 0.5, %v1099
  %v1101 = vsub.f32 1.5, %v1100
  %v1102 = vmul.f32 %v1097, %v1101
  %vm1103 = vweird.f32 %v1080
  %vm1104 = vweird.f32 %v1097
  %vm1105 = vmor %vm1103, %vm1104
  %v1106 = vsel %vm1105, %v1097, %v1102
  %v1107 = vrsqrt.pop %v1081
  %v1108 = vmul.f32 %v1107, %v1081
  %v1109 = vmul.f32 %v1108, %v1107
  %v1110 = vmul.f32 0.5, %v1109
  %v1111 = vsub.f32 1.5, %v1110
  %v1112 = vmul.f32 %v1107, %v1111
  %vm1113 = vweird.f32 %v1081
  %vm1114 = vweird.f32 %v1107
  %vm1115 = vmor %vm1113, %vm1114
  %v1116 = vsel %vm1115, %v1107, %v1112
  %v1117 = vrsqrt.pop %v1082
  %v1118 = vmul.f32 %v1117, %v1082
  %v1119 = vmul.f32 %v1118, %v1117
  %v1120 = vmul.f32 0.5, %v1119
  %v1121 = vsub.f32 1.5, %v1120
  %v1122 = vmul.f32 %v1117, %v1121
  %vm1123 = vweird.f32 %v1082
  %vm1124 = vweird.f32 %v1117
  %vm1125 = vmor %vm1123, %vm1124
  %v1126 = vsel %vm1125, %v1117, %v1122
  %v1127 = vrsqrt.pop %v1083
  %v1128 = vmul.f32 %v1127, %v1083
  %v1129 = vmul.f32 %v1128, %v1127
  %v1130 = vmul.f32 0.5, %v1129
  %v1131 = vsub.f32 1.5, %v1130
  %v1132 = vmul.f32 %v1127, %v1131
  %vm1133 = vweird.f32 %v1083
  %vm1134 = vweird.f32 %v1127
  %vm1135 = vmor %vm1133, %vm1134
  %v1136 = vsel %vm1135, %v1127, %v1132
  %v1137 = vrsqrt.pop %v1084
  %v1138 = vmul.f32 %v1137, %v1084
  %v1139 = vmul.f32 %v1138, %v1137
  %v1140 = vmul.f32 0.5, %v1139
  %v1141 = vsub.f32 1.5, %v1140
  %v1142 = vmul.f32 %v1137, %v1141
  %vm1143 = vweird.f32 %v1084
  %vm1144 = vweird.f32 %v1137
  %vm1145 = vmor %vm1143, %vm1144
  %v1146 = vsel %vm1145, %v1137, %v1142
  %v1147 = vrsqrt.pop %v1085
  %v1148 = vmul.f32 %v1147, %v1085
  %v1149 = vmul.f32 %v1148, %v1147
  %v1150 = vmul.f32 0.5, %v1149
  %v1151 = vsub.f32 1.5, %v1150
  %v1152 = vmul.f32 %v1147, %v1151
  %vm1153 = vweird.f32 %v1085
  %vm1154 = vweird.f32 %v1147
  %vm1155 = vmor %vm1153, %vm1154
  %v1156 = vsel %vm1155, %v1147, %v1152
  %v1157 = vrsqrt.pop %v1086
  %v1158 = vmul.f32 %v1157, %v1086
  %v1159 = vmul.f32 %v1158, %v1157
  %v1160 = vmul.f32 0.5, %v1159
  %v1161 = vsub.f32 1.5, %v1160
  %v1162 = vmul.f32 %v1157, %v1161
  %vm1163 = vweird.f32 %v1086
  %vm1164 = vweird.f32 %v1157
  %vm1165 = vmor %vm1163, %vm1164
  %v1166 = vsel %vm1165, %v1157, %v1162
  %v1167 = vmul.f32 %v131, %v1096
  %v1168 = vmul.f32 %v144, %v1106
  %v1169 = vmul.f32 %v133, %v1116
  %v1170 = vmul.f32 %v145, %v1126
  %v1171 = vmul.f32 %v136, %v1136
  %v1172 = vmul.f32 %v146, %v1146
  %v1173 = vmul.f32 %v138, %v1156
  %v1174 = vmul.f32 %v147, %v1166
  %1175 = vst [vmem:[#allocation1] ss:$2 sm:$0xff] %v153
  %v1176 = vld.sshfl [vmem:[#allocation1] sm:$0xff pattern:$0x75316420]
  %s1177 = scalar_lea.vmem [#allocation1], 16
  %1178 = vst [vmem:[%s1177] ss:$2 sm:$0xff] %v154
  %v1179 = vld.sshfl [vmem:[#allocation1 + $0x10] sm:$0xff pattern:$0x75316420]
  %s1180 = scalar_lea.vmem [#allocation1], 32
  %1181 = vst [vmem:[%s1180] ss:$2 sm:$0xff] %v155
  %v1182 = vld.sshfl [vmem:[#allocation1 + $0x20] sm:$0xff pattern:$0x75316420]
  %s1183 = scalar_lea.vmem [#allocation1], 48
  %1184 = vst [vmem:[%s1183] ss:$2 sm:$0xff] %v156
  %v1185 = vld.sshfl [vmem:[#allocation1 + $0x30] sm:$0xff pattern:$0x75316420]
  %1186 = vst [vmem:[#allocation1] ss:$2 sm:$0xff] %v157
  %v1187 = vld.sshfl [vmem:[#allocation1] sm:$0xff pattern:$0x75316420]
  %1188 = vst [vmem:[%s1177] ss:$2 sm:$0xff] %v158
  %v1189 = vld.sshfl [vmem:[#allocation1 + $0x10] sm:$0xff pattern:$0x75316420]
  %1190 = vst [vmem:[%s1180] ss:$2 sm:$0xff] %v159
  %v1191 = vld.sshfl [vmem:[#allocation1 + $0x20] sm:$0xff pattern:$0x75316420]
  %1192 = vst [vmem:[%s1183] ss:$2 sm:$0xff] %v160
  %v1193 = vld.sshfl [vmem:[#allocation1 + $0x30] sm:$0xff pattern:$0x75316420]
  %1194 = vrot.lane.b32.xlu0 %v1176, 80
  %v1195 = vpop.permute.xlu0 %1194
  %1196 = vrot.lane.b32.xlu0 %v1179, 80
  %v1197 = vpop.permute.xlu0 %1196
  %1198 = vrot.lane.b32.xlu0 %v1182, 80
  %v1199 = vpop.permute.xlu0 %1198
  %1200 = vrot.lane.b32.xlu0 %v1185, 80
  %v1201 = vpop.permute.xlu0 %1200
  %1202 = vrot.lane.b32.xlu0 %v1187, 80
  %v1203 = vpop.permute.xlu0 %1202
  %1204 = vrot.lane.b32.xlu0 %v1189, 80
  %v1205 = vpop.permute.xlu0 %1204
  %1206 = vrot.lane.b32.xlu0 %v1191, 80
  %v1207 = vpop.permute.xlu0 %1206
  %1208 = vrot.lane.b32.xlu0 %v1193, 80
  %v1209 = vpop.permute.xlu0 %1208
  %v1218 = vsel %vm161, %v1195, 0.0
  %1219 = vadd.xlane.f32.xlu0 %v1218
  %v1220 = vpop.xlane.xlu0 %1219
  %v1221 = vsel %vm161, %v1197, 0.0
  %1222 = vadd.xlane.f32.xlu0 %v1221
  %v1223 = vpop.xlane.xlu0 %1222
  %v1224 = vsel %vm161, %v1199, 0.0
  %1225 = vadd.xlane.f32.xlu0 %v1224
  %v1226 = vpop.xlane.xlu0 %1225
  %v1227 = vsel %vm161, %v1201, 0.0
  %1228 = vadd.xlane.f32.xlu0 %v1227
  %v1229 = vpop.xlane.xlu0 %1228
  %v1230 = vsel %vm161, %v1203, 0.0
  %1231 = vadd.xlane.f32.xlu0 %v1230
  %v1232 = vpop.xlane.xlu0 %1231
  %v1233 = vsel %vm161, %v1205, 0.0
  %1234 = vadd.xlane.f32.xlu0 %v1233
  %v1235 = vpop.xlane.xlu0 %1234
  %v1236 = vsel %vm161, %v1207, 0.0
  %1237 = vadd.xlane.f32.xlu0 %v1236
  %v1238 = vpop.xlane.xlu0 %1237
  %v1239 = vsel %vm161, %v1209, 0.0
  %1240 = vadd.xlane.f32.xlu0 %v1239
  %v1241 = vpop.xlane.xlu0 %1240
  %v1242 = vmax.f32 %v1220, 1e-24
  %v1243 = vmax.f32 %v1223, 1e-24
  %v1244 = vmax.f32 %v1226, 1e-24
  %v1245 = vmax.f32 %v1229, 1e-24
  %v1246 = vmax.f32 %v1232, 1e-24
  %v1247 = vmax.f32 %v1235, 1e-24
  %v1248 = vmax.f32 %v1238, 1e-24
  %v1249 = vmax.f32 %v1241, 1e-24
  %v1250 = vrsqrt.pop %v1242
  %v1251 = vmul.f32 %v1250, %v1242
  %v1252 = vmul.f32 %v1251, %v1250
  %v1253 = vmul.f32 0.5, %v1252
  %v1254 = vsub.f32 1.5, %v1253
  %v1255 = vmul.f32 %v1250, %v1254
  %vm1256 = vweird.f32 %v1242
  %vm1257 = vweird.f32 %v1250
  %vm1258 = vmor %vm1256, %vm1257
  %v1259 = vsel %vm1258, %v1250, %v1255
  %v1260 = vrsqrt.pop %v1243
  %v1261 = vmul.f32 %v1260, %v1243
  %v1262 = vmul.f32 %v1261, %v1260
  %v1263 = vmul.f32 0.5, %v1262
  %v1264 = vsub.f32 1.5, %v1263
  %v1265 = vmul.f32 %v1260, %v1264
  %vm1266 = vweird.f32 %v1243
  %vm1267 = vweird.f32 %v1260
  %vm1268 = vmor %vm1266, %vm1267
  %v1269 = vsel %vm1268, %v1260, %v1265
  %v1270 = vrsqrt.pop %v1244
  %v1271 = vmul.f32 %v1270, %v1244
  %v1272 = vmul.f32 %v1271, %v1270
  %v1273 = vmul.f32 0.5, %v1272
  %v1274 = vsub.f32 1.5, %v1273
  %v1275 = vmul.f32 %v1270, %v1274
  %vm1276 = vweird.f32 %v1244
  %vm1277 = vweird.f32 %v1270
  %vm1278 = vmor %vm1276, %vm1277
  %v1279 = vsel %vm1278, %v1270, %v1275
  %v1280 = vrsqrt.pop %v1245
  %v1281 = vmul.f32 %v1280, %v1245
  %v1282 = vmul.f32 %v1281, %v1280
  %v1283 = vmul.f32 0.5, %v1282
  %v1284 = vsub.f32 1.5, %v1283
  %v1285 = vmul.f32 %v1280, %v1284
  %vm1286 = vweird.f32 %v1245
  %vm1287 = vweird.f32 %v1280
  %vm1288 = vmor %vm1286, %vm1287
  %v1289 = vsel %vm1288, %v1280, %v1285
  %v1290 = vrsqrt.pop %v1246
  %v1291 = vmul.f32 %v1290, %v1246
  %v1292 = vmul.f32 %v1291, %v1290
  %v1293 = vmul.f32 0.5, %v1292
  %v1294 = vsub.f32 1.5, %v1293
  %v1295 = vmul.f32 %v1290, %v1294
  %vm1296 = vweird.f32 %v1246
  %vm1297 = vweird.f32 %v1290
  %vm1298 = vmor %vm1296, %vm1297
  %v1299 = vsel %vm1298, %v1290, %v1295
  %v1300 = vrsqrt.pop %v1247
  %v1301 = vmul.f32 %v1300, %v1247
  %v1302 = vmul.f32 %v1301, %v1300
  %v1303 = vmul.f32 0.5, %v1302
  %v1304 = vsub.f32 1.5, %v1303
  %v1305 = vmul.f32 %v1300, %v1304
  %vm1306 = vweird.f32 %v1247
  %vm1307 = vweird.f32 %v1300
  %vm1308 = vmor %vm1306, %vm1307
  %v1309 = vsel %vm1308, %v1300, %v1305
  %v1310 = vrsqrt.pop %v1248
  %v1311 = vmul.f32 %v1310, %v1248
  %v1312 = vmul.f32 %v1311, %v1310
  %v1313 = vmul.f32 0.5, %v1312
  %v1314 = vsub.f32 1.5, %v1313
  %v1315 = vmul.f32 %v1310, %v1314
  %vm1316 = vweird.f32 %v1248
  %vm1317 = vweird.f32 %v1310
  %vm1318 = vmor %vm1316, %vm1317
  %v1319 = vsel %vm1318, %v1310, %v1315
  %v1320 = vrsqrt.pop %v1249
  %v1321 = vmul.f32 %v1320, %v1249
  %v1322 = vmul.f32 %v1321, %v1320
  %v1323 = vmul.f32 0.5, %v1322
  %v1324 = vsub.f32 1.5, %v1323
  %v1325 = vmul.f32 %v1320, %v1324
  %vm1326 = vweird.f32 %v1249
  %vm1327 = vweird.f32 %v1320
  %vm1328 = vmor %vm1326, %vm1327
  %v1329 = vsel %vm1328, %v1320, %v1325
  %v1330 = vmul.f32 %v131, %v1259
  %v1331 = vmul.f32 %v144, %v1269
  %v1332 = vmul.f32 %v133, %v1279
  %v1333 = vmul.f32 %v145, %v1289
  %v1334 = vmul.f32 %v136, %v1299
  %v1335 = vmul.f32 %v146, %v1309
  %v1336 = vmul.f32 %v138, %v1319
  %v1337 = vmul.f32 %v147, %v1329
  %1339 = vst [vmem:[#allocation1] ss:$2 sm:$0xff] %v1167
  %v1340 = vld.sshfl [vmem:[#allocation1] sm:$0xff pattern:$0x75316420]
  %1341 = vrot.lane.b32.xlu0 %v1340, 112
  %v1342 = vpop.permute.xlu0 %1341
  %1344 = vst [vmem:[#allocation1] ss:$2 sm:$0xff] %v1330
  %v1345 = vld.sshfl [vmem:[#allocation1] sm:$0xff pattern:$0x75316420]
  %1346 = vrot.lane.b32.xlu0 %v1345, 80
  %v1347 = vpop.permute.xlu0 %1346
  %v1348 = vsel %vm458, %v1342, 0
  %v1350 = vsel %vm458, %v1347, 0
  %1352 = vmatpush.xpose.msra.mxu0 0.0
  %1353 = vmatpush.xpose.msra.mxu0 0.0
  %1354 = vmatpush.xpose.msra.mxu0 0.0
  %1355 = vmatpush.xpose.msra.mxu0 0.0
  %1356 = vmatpush.xpose.msra.mxu0 0.0
  %1357 = vmatpush.xpose.msra.mxu0 0.0
  %1358 = vmatpush.xpose.msra.mxu0 0.0
  %1359 = vmatpush.xpose.msra.mxu0 0.0
  %1360 = vmatpush.xpose.msra.mxu0 0.0
  %1361 = vmatpush.xpose.msra.mxu0 0.0
  %1362 = vmatpush.xpose.msra.mxu0 0.0
  %1363 = vmatpush.xpose.msra.mxu0 0.0
  %1364 = vmatpush.xpose.msra.mxu0 0.0
  %1365 = vmatpush.xpose.msra.mxu0 0.0
  %1366 = vmatpush.xpose.msra.mxu0 0.0
  %1367 = vmatpush.xpose.msra.mxu0 %v1350
  %1368 = vmatmul.f32.gmra.mxu0 %v1348
  %v1369 = vpop.f32.mrf.mxu0
  %v1370 = vadd.f32 0.0, %v1369
  %1371 = vdwg.mxu0
  %1373 = vst [vmem:[#allocation1] ss:$2 sm:$0xff] %v1168
  %v1374 = vld.sshfl [vmem:[#allocation1] sm:$0xff pattern:$0x75316420]
  %1375 = vrot.lane.b32.xlu0 %v1374, 112
  %v1376 = vpop.permute.xlu0 %1375
  %1378 = vst [vmem:[#allocation1] ss:$2 sm:$0xff] %v1331
  %v1379 = vld.sshfl [vmem:[#allocation1] sm:$0xff pattern:$0x75316420]
  %1380 = vrot.lane.b32.xlu0 %v1379, 80
  %v1381 = vpop.permute.xlu0 %1380
  %v1382 = vsel %vm458, %v1376, 0
  %v1384 = vsel %vm458, %v1381, 0
  %1386 = vmatpush.xpose.msra.mxu0 0.0
  %1387 = vmatpush.xpose.msra.mxu0 0.0
  %1388 = vmatpush.xpose.msra.mxu0 0.0
  %1389 = vmatpush.xpose.msra.mxu0 0.0
  %1390 = vmatpush.xpose.msra.mxu0 0.0
  %1391 = vmatpush.xpose.msra.mxu0 0.0
  %1392 = vmatpush.xpose.msra.mxu0 0.0
  %1393 = vmatpush.xpose.msra.mxu0 0.0
  %1394 = vmatpush.xpose.msra.mxu0 0.0
  %1395 = vmatpush.xpose.msra.mxu0 0.0
  %1396 = vmatpush.xpose.msra.mxu0 0.0
  %1397 = vmatpush.xpose.msra.mxu0 0.0
  %1398 = vmatpush.xpose.msra.mxu0 0.0
  %1399 = vmatpush.xpose.msra.mxu0 0.0
  %1400 = vmatpush.xpose.msra.mxu0 0.0
  %1401 = vmatpush.xpose.msra.mxu0 %v1384
  %1402 = vmatmul.f32.gmra.mxu0 %v1382
  %v1403 = vpop.f32.mrf.mxu0
  %v1404 = vadd.f32 0.0, %v1403
  %1405 = vdwg.mxu0
  %1407 = vst [vmem:[#allocation1] ss:$2 sm:$0xff] %v1169
  %v1408 = vld.sshfl [vmem:[#allocation1] sm:$0xff pattern:$0x75316420]
  %1409 = vrot.lane.b32.xlu0 %v1408, 112
  %v1410 = vpop.permute.xlu0 %1409
  %1412 = vst [vmem:[#allocation1] ss:$2 sm:$0xff] %v1332
  %v1413 = vld.sshfl [vmem:[#allocation1] sm:$0xff pattern:$0x75316420]
  %1414 = vrot.lane.b32.xlu0 %v1413, 80
  %v1415 = vpop.permute.xlu0 %1414
  %v1416 = vsel %vm458, %v1410, 0
  %v1418 = vsel %vm458, %v1415, 0
  %1420 = vmatpush.xpose.msra.mxu0 0.0
  %1421 = vmatpush.xpose.msra.mxu0 0.0
  %1422 = vmatpush.xpose.msra.mxu0 0.0
  %1423 = vmatpush.xpose.msra.mxu0 0.0
  %1424 = vmatpush.xpose.msra.mxu0 0.0
  %1425 = vmatpush.xpose.msra.mxu0 0.0
  %1426 = vmatpush.xpose.msra.mxu0 0.0
  %1427 = vmatpush.xpose.msra.mxu0 0.0
  %1428 = vmatpush.xpose.msra.mxu0 0.0
  %1429 = vmatpush.xpose.msra.mxu0 0.0
  %1430 = vmatpush.xpose.msra.mxu0 0.0
  %1431 = vmatpush.xpose.msra.mxu0 0.0
  %1432 = vmatpush.xpose.msra.mxu0 0.0
  %1433 = vmatpush.xpose.msra.mxu0 0.0
  %1434 = vmatpush.xpose.msra.mxu0 0.0
  %1435 = vmatpush.xpose.msra.mxu0 %v1418
  %1436 = vmatmul.f32.gmra.mxu0 %v1416
  %v1437 = vpop.f32.mrf.mxu0
  %v1438 = vadd.f32 0.0, %v1437
  %1439 = vdwg.mxu0
  %1441 = vst [vmem:[#allocation1] ss:$2 sm:$0xff] %v1170
  %v1442 = vld.sshfl [vmem:[#allocation1] sm:$0xff pattern:$0x75316420]
  %1443 = vrot.lane.b32.xlu0 %v1442, 112
  %v1444 = vpop.permute.xlu0 %1443
  %1446 = vst [vmem:[#allocation1] ss:$2 sm:$0xff] %v1333
  %v1447 = vld.sshfl [vmem:[#allocation1] sm:$0xff pattern:$0x75316420]
  %1448 = vrot.lane.b32.xlu0 %v1447, 80
  %v1449 = vpop.permute.xlu0 %1448
  %v1450 = vsel %vm458, %v1444, 0
  %v1452 = vsel %vm458, %v1449, 0
  %1454 = vmatpush.xpose.msra.mxu0 0.0
  %1455 = vmatpush.xpose.msra.mxu0 0.0
  %1456 = vmatpush.xpose.msra.mxu0 0.0
  %1457 = vmatpush.xpose.msra.mxu0 0.0
  %1458 = vmatpush.xpose.msra.mxu0 0.0
  %1459 = vmatpush.xpose.msra.mxu0 0.0
  %1460 = vmatpush.xpose.msra.mxu0 0.0
  %1461 = vmatpush.xpose.msra.mxu0 0.0
  %1462 = vmatpush.xpose.msra.mxu0 0.0
  %1463 = vmatpush.xpose.msra.mxu0 0.0
  %1464 = vmatpush.xpose.msra.mxu0 0.0
  %1465 = vmatpush.xpose.msra.mxu0 0.0
  %1466 = vmatpush.xpose.msra.mxu0 0.0
  %1467 = vmatpush.xpose.msra.mxu0 0.0
  %1468 = vmatpush.xpose.msra.mxu0 0.0
  %1469 = vmatpush.xpose.msra.mxu0 %v1452
  %1470 = vmatmul.f32.gmra.mxu0 %v1450
  %v1471 = vpop.f32.mrf.mxu0
  %v1472 = vadd.f32 0.0, %v1471
  %1473 = vdwg.mxu0
  %1475 = vst [vmem:[#allocation1] ss:$2 sm:$0xff] %v1171
  %v1476 = vld.sshfl [vmem:[#allocation1] sm:$0xff pattern:$0x75316420]
  %1477 = vrot.lane.b32.xlu0 %v1476, 112
  %v1478 = vpop.permute.xlu0 %1477
  %1480 = vst [vmem:[#allocation1] ss:$2 sm:$0xff] %v1334
  %v1481 = vld.sshfl [vmem:[#allocation1] sm:$0xff pattern:$0x75316420]
  %1482 = vrot.lane.b32.xlu0 %v1481, 80
  %v1483 = vpop.permute.xlu0 %1482
  %v1484 = vsel %vm458, %v1478, 0
  %v1486 = vsel %vm458, %v1483, 0
  %1488 = vmatpush.xpose.msra.mxu0 0.0
  %1489 = vmatpush.xpose.msra.mxu0 0.0
  %1490 = vmatpush.xpose.msra.mxu0 0.0
  %1491 = vmatpush.xpose.msra.mxu0 0.0
  %1492 = vmatpush.xpose.msra.mxu0 0.0
  %1493 = vmatpush.xpose.msra.mxu0 0.0
  %1494 = vmatpush.xpose.msra.mxu0 0.0
  %1495 = vmatpush.xpose.msra.mxu0 0.0
  %1496 = vmatpush.xpose.msra.mxu0 0.0
  %1497 = vmatpush.xpose.msra.mxu0 0.0
  %1498 = vmatpush.xpose.msra.mxu0 0.0
  %1499 = vmatpush.xpose.msra.mxu0 0.0
  %1500 = vmatpush.xpose.msra.mxu0 0.0
  %1501 = vmatpush.xpose.msra.mxu0 0.0
  %1502 = vmatpush.xpose.msra.mxu0 0.0
  %1503 = vmatpush.xpose.msra.mxu0 %v1486
  %1504 = vmatmul.f32.gmra.mxu0 %v1484
  %v1505 = vpop.f32.mrf.mxu0
  %v1506 = vadd.f32 0.0, %v1505
  %1507 = vdwg.mxu0
  %1509 = vst [vmem:[#allocation1] ss:$2 sm:$0xff] %v1172
  %v1510 = vld.sshfl [vmem:[#allocation1] sm:$0xff pattern:$0x75316420]
  %1511 = vrot.lane.b32.xlu0 %v1510, 112
  %v1512 = vpop.permute.xlu0 %1511
  %1514 = vst [vmem:[#allocation1] ss:$2 sm:$0xff] %v1335
  %v1515 = vld.sshfl [vmem:[#allocation1] sm:$0xff pattern:$0x75316420]
  %1516 = vrot.lane.b32.xlu0 %v1515, 80
  %v1517 = vpop.permute.xlu0 %1516
  %v1518 = vsel %vm458, %v1512, 0
  %v1520 = vsel %vm458, %v1517, 0
  %1522 = vmatpush.xpose.msra.mxu0 0.0
  %1523 = vmatpush.xpose.msra.mxu0 0.0
  %1524 = vmatpush.xpose.msra.mxu0 0.0
  %1525 = vmatpush.xpose.msra.mxu0 0.0
  %1526 = vmatpush.xpose.msra.mxu0 0.0
  %1527 = vmatpush.xpose.msra.mxu0 0.0
  %1528 = vmatpush.xpose.msra.mxu0 0.0
  %1529 = vmatpush.xpose.msra.mxu0 0.0
  %1530 = vmatpush.xpose.msra.mxu0 0.0
  %1531 = vmatpush.xpose.msra.mxu0 0.0
  %1532 = vmatpush.xpose.msra.mxu0 0.0
  %1533 = vmatpush.xpose.msra.mxu0 0.0
  %1534 = vmatpush.xpose.msra.mxu0 0.0
  %1535 = vmatpush.xpose.msra.mxu0 0.0
  %1536 = vmatpush.xpose.msra.mxu0 0.0
  %1537 = vmatpush.xpose.msra.mxu0 %v1520
  %1538 = vmatmul.f32.gmra.mxu0 %v1518
  %v1539 = vpop.f32.mrf.mxu0
  %v1540 = vadd.f32 0.0, %v1539
  %1541 = vdwg.mxu0
  %1543 = vst [vmem:[#allocation1] ss:$2 sm:$0xff] %v1173
  %v1544 = vld.sshfl [vmem:[#allocation1] sm:$0xff pattern:$0x75316420]
  %1545 = vrot.lane.b32.xlu0 %v1544, 112
  %v1546 = vpop.permute.xlu0 %1545
  %1548 = vst [vmem:[#allocation1] ss:$2 sm:$0xff] %v1336
  %v1549 = vld.sshfl [vmem:[#allocation1] sm:$0xff pattern:$0x75316420]
  %1550 = vrot.lane.b32.xlu0 %v1549, 80
  %v1551 = vpop.permute.xlu0 %1550
  %v1552 = vsel %vm458, %v1546, 0
  %v1554 = vsel %vm458, %v1551, 0
  %1556 = vmatpush.xpose.msra.mxu0 0.0
  %1557 = vmatpush.xpose.msra.mxu0 0.0
  %1558 = vmatpush.xpose.msra.mxu0 0.0
  %1559 = vmatpush.xpose.msra.mxu0 0.0
  %1560 = vmatpush.xpose.msra.mxu0 0.0
  %1561 = vmatpush.xpose.msra.mxu0 0.0
  %1562 = vmatpush.xpose.msra.mxu0 0.0
  %1563 = vmatpush.xpose.msra.mxu0 0.0
  %1564 = vmatpush.xpose.msra.mxu0 0.0
  %1565 = vmatpush.xpose.msra.mxu0 0.0
  %1566 = vmatpush.xpose.msra.mxu0 0.0
  %1567 = vmatpush.xpose.msra.mxu0 0.0
  %1568 = vmatpush.xpose.msra.mxu0 0.0
  %1569 = vmatpush.xpose.msra.mxu0 0.0
  %1570 = vmatpush.xpose.msra.mxu0 0.0
  %1571 = vmatpush.xpose.msra.mxu0 %v1554
  %1572 = vmatmul.f32.gmra.mxu0 %v1552
  %v1573 = vpop.f32.mrf.mxu0
  %v1574 = vadd.f32 0.0, %v1573
  %1575 = vdwg.mxu0
  %1577 = vst [vmem:[#allocation1] ss:$2 sm:$0xff] %v1174
  %v1578 = vld.sshfl [vmem:[#allocation1] sm:$0xff pattern:$0x75316420]
  %1579 = vrot.lane.b32.xlu0 %v1578, 112
  %v1580 = vpop.permute.xlu0 %1579
  %1582 = vst [vmem:[#allocation1] ss:$2 sm:$0xff] %v1337
  %v1583 = vld.sshfl [vmem:[#allocation1] sm:$0xff pattern:$0x75316420]
  %1584 = vrot.lane.b32.xlu0 %v1583, 80
  %v1585 = vpop.permute.xlu0 %1584
  %v1586 = vsel %vm458, %v1580, 0
  %v1588 = vsel %vm458, %v1585, 0
  %1590 = vmatpush.xpose.msra.mxu0 0.0
  %1591 = vmatpush.xpose.msra.mxu0 0.0
  %1592 = vmatpush.xpose.msra.mxu0 0.0
  %1593 = vmatpush.xpose.msra.mxu0 0.0
  %1594 = vmatpush.xpose.msra.mxu0 0.0
  %1595 = vmatpush.xpose.msra.mxu0 0.0
  %1596 = vmatpush.xpose.msra.mxu0 0.0
  %1597 = vmatpush.xpose.msra.mxu0 0.0
  %1598 = vmatpush.xpose.msra.mxu0 0.0
  %1599 = vmatpush.xpose.msra.mxu0 0.0
  %1600 = vmatpush.xpose.msra.mxu0 0.0
  %1601 = vmatpush.xpose.msra.mxu0 0.0
  %1602 = vmatpush.xpose.msra.mxu0 0.0
  %1603 = vmatpush.xpose.msra.mxu0 0.0
  %1604 = vmatpush.xpose.msra.mxu0 0.0
  %1605 = vmatpush.xpose.msra.mxu0 %v1588
  %1606 = vmatmul.f32.gmra.mxu0 %v1586
  %v1607 = vpop.f32.mrf.mxu0
  %v1608 = vadd.f32 0.0, %v1607
  %1609 = vdwg.mxu0
  %1610 = vrot.lane.b32.xlu0 %v152, 127
  %v1611 = vpop.permute.xlu0 %1610
  %s1612 = vtos %v1611
  %v1613 = vstv %s1612
  %v1614 = vmul.f32 %v1370, %v1613
  %v1615 = vmul.f32 %v1404, %v1613
  %v1616 = vmul.f32 %v1438, %v1613
  %v1617 = vmul.f32 %v1472, %v1613
  %v1618 = vmul.f32 %v1506, %v1613
  %v1619 = vmul.f32 %v1540, %v1613
  %v1620 = vmul.f32 %v1574, %v1613
  %v1621 = vmul.f32 %v1608, %v1613
  %s1622 = scalar_lea.vmem %s4, 4
  %v1623 = vld [vmem:[%s1622] sm:$0xf]
  %v1624 = vadd.f32 %v1614, %v1623
  %v1625 = vadd.f32 %v1615, %v1623
  %v1626 = vadd.f32 %v1616, %v1623
  %v1627 = vadd.f32 %v1617, %v1623
  %v1628 = vadd.f32 %v1618, %v1623
  %v1629 = vadd.f32 %v1619, %v1623
  %v1630 = vadd.f32 %v1620, %v1623
  %v1631 = vadd.f32 %v1621, %v1623
  %v1632 = vsel %vm713, %v1624, -inf
  %1633 = vmax.xlane.f32.xlu0 %v1632
  %v1634 = vpop.xlane.xlu0 %1633
  %v1635 = vsel %vm713, %v1625, -inf
  %1636 = vmax.xlane.f32.xlu0 %v1635
  %v1637 = vpop.xlane.xlu0 %1636
  %v1638 = vsel %vm713, %v1626, -inf
  %1639 = vmax.xlane.f32.xlu0 %v1638
  %v1640 = vpop.xlane.xlu0 %1639
  %v1641 = vsel %vm713, %v1627, -inf
  %1642 = vmax.xlane.f32.xlu0 %v1641
  %v1643 = vpop.xlane.xlu0 %1642
  %v1644 = vsel %vm713, %v1628, -inf
  %1645 = vmax.xlane.f32.xlu0 %v1644
  %v1646 = vpop.xlane.xlu0 %1645
  %v1647 = vsel %vm713, %v1629, -inf
  %1648 = vmax.xlane.f32.xlu0 %v1647
  %v1649 = vpop.xlane.xlu0 %1648
  %v1650 = vsel %vm713, %v1630, -inf
  %1651 = vmax.xlane.f32.xlu0 %v1650
  %v1652 = vpop.xlane.xlu0 %1651
  %v1653 = vsel %vm713, %v1631, -inf
  %1654 = vmax.xlane.f32.xlu0 %v1653
  %v1655 = vpop.xlane.xlu0 %1654
  %v1656 = vsub.f32 %v1624, %v1634
  %v1657 = vsub.f32 %v1625, %v1637
  %v1658 = vsub.f32 %v1626, %v1640
  %v1659 = vsub.f32 %v1627, %v1643
  %v1660 = vsub.f32 %v1628, %v1646
  %v1661 = vsub.f32 %v1629, %v1649
  %v1662 = vsub.f32 %v1630, %v1652
  %v1663 = vsub.f32 %v1631, %v1655
  %v1664 = vmul.f32 %v1656, 1.442695
  %v1665 = vpow.pop %v1664
  %v1666 = vmul.f32 %v1657, 1.442695
  %v1667 = vpow.pop %v1666
  %v1668 = vmul.f32 %v1658, 1.442695
  %v1669 = vpow.pop %v1668
  %v1670 = vmul.f32 %v1659, 1.442695
  %v1671 = vpow.pop %v1670
  %v1672 = vmul.f32 %v1660, 1.442695
  %v1673 = vpow.pop %v1672
  %v1674 = vmul.f32 %v1661, 1.442695
  %v1675 = vpow.pop %v1674
  %v1676 = vmul.f32 %v1662, 1.442695
  %v1677 = vpow.pop %v1676
  %v1678 = vmul.f32 %v1663, 1.442695
  %v1679 = vpow.pop %v1678
  %v1680 = vsel %vm713, %v1665, 0.0
  %1681 = vadd.xlane.f32.xlu0 %v1680
  %v1682 = vpop.xlane.xlu0 %1681
  %v1683 = vsel %vm713, %v1667, 0.0
  %1684 = vadd.xlane.f32.xlu0 %v1683
  %v1685 = vpop.xlane.xlu0 %1684
  %v1686 = vsel %vm713, %v1669, 0.0
  %1687 = vadd.xlane.f32.xlu0 %v1686
  %v1688 = vpop.xlane.xlu0 %1687
  %v1689 = vsel %vm713, %v1671, 0.0
  %1690 = vadd.xlane.f32.xlu0 %v1689
  %v1691 = vpop.xlane.xlu0 %1690
  %v1692 = vsel %vm713, %v1673, 0.0
  %1693 = vadd.xlane.f32.xlu0 %v1692
  %v1694 = vpop.xlane.xlu0 %1693
  %v1695 = vsel %vm713, %v1675, 0.0
  %1696 = vadd.xlane.f32.xlu0 %v1695
  %v1697 = vpop.xlane.xlu0 %1696
  %v1698 = vsel %vm713, %v1677, 0.0
  %1699 = vadd.xlane.f32.xlu0 %v1698
  %v1700 = vpop.xlane.xlu0 %1699
  %v1701 = vsel %vm713, %v1679, 0.0
  %1702 = vadd.xlane.f32.xlu0 %v1701
  %v1703 = vpop.xlane.xlu0 %1702
  %v1704 = vrcp.pop %v1682
  %v1705 = vrcp.pop %v1685
  %v1706 = vrcp.pop %v1688
  %v1707 = vrcp.pop %v1691
  %v1708 = vrcp.pop %v1694
  %v1709 = vrcp.pop %v1697
  %v1710 = vrcp.pop %v1700
  %v1711 = vrcp.pop %v1703
  %v1712 = vmul.f32 %v1665, %v1704
  %v1713 = vmul.f32 %v1667, %v1705
  %v1714 = vmul.f32 %v1669, %v1706
  %v1715 = vmul.f32 %v1671, %v1707
  %v1716 = vmul.f32 %v1673, %v1708
  %v1717 = vmul.f32 %v1675, %v1709
  %v1718 = vmul.f32 %v1677, %v1710
  %v1719 = vmul.f32 %v1679, %v1711
  %v1720 = vpack.c.bf16 %v1712, %v1712
  %v1721 = vpack.c.bf16 %v1713, %v1713
  %v1722 = vpack.c.bf16 %v1714, %v1714
  %v1723 = vpack.c.bf16 %v1715, %v1715
  %v1724 = vpack.c.bf16 %v1716, %v1716
  %v1725 = vpack.c.bf16 %v1717, %v1717
  %v1726 = vpack.c.bf16 %v1718, %v1718
  %v1727 = vpack.c.bf16 %v1719, %v1719
  %1728 = vrot.lane.b32.xlu0 %v820, 48
  %v1729 = vpop.permute.xlu0 %1728
  %v1731 = vsel %vm823, %v1720, 0
  %v1734 = vsel %vm827, %v1729, 0
  %1736 = vmatpush.bf16.msra.mxu0 0
  %1737 = vmatpush.bf16.msra.mxu0 0
  %1738 = vmatpush.bf16.msra.mxu0 0
  %1739 = vmatpush.bf16.msra.mxu0 0
  %1740 = vmatpush.bf16.msra.mxu0 0
  %1741 = vmatpush.bf16.msra.mxu0 0
  %1742 = vmatpush.bf16.msra.mxu0 0
  %1743 = vmatpush.bf16.msra.mxu0 %v1734
  %1744 = vmatmul.bf16.gmra.mxu0 %v1731
  %v1745 = vpop.f32.mrf.mxu0
  %v1746 = vadd.f32 0.0, %v1745
  %v1747 = vpop.f32.mrf.mxu0
  %1748 = vdwg.mxu0
  %1749 = vrot.lane.b32.xlu0 %v846, 48
  %v1750 = vpop.permute.xlu0 %1749
  %v1752 = vsel %vm823, %v1721, 0
  %v1755 = vsel %vm827, %v1750, 0
  %1757 = vmatpush.bf16.msra.mxu0 0
  %1758 = vmatpush.bf16.msra.mxu0 0
  %1759 = vmatpush.bf16.msra.mxu0 0
  %1760 = vmatpush.bf16.msra.mxu0 0
  %1761 = vmatpush.bf16.msra.mxu0 0
  %1762 = vmatpush.bf16.msra.mxu0 0
  %1763 = vmatpush.bf16.msra.mxu0 0
  %1764 = vmatpush.bf16.msra.mxu0 %v1755
  %1765 = vmatmul.bf16.gmra.mxu0 %v1752
  %v1766 = vpop.f32.mrf.mxu0
  %v1767 = vadd.f32 0.0, %v1766
  %v1768 = vpop.f32.mrf.mxu0
  %1769 = vdwg.mxu0
  %1770 = vrot.lane.b32.xlu0 %v870, 48
  %v1771 = vpop.permute.xlu0 %1770
  %v1773 = vsel %vm823, %v1722, 0
  %v1776 = vsel %vm827, %v1771, 0
  %1778 = vmatpush.bf16.msra.mxu0 0
  %1779 = vmatpush.bf16.msra.mxu0 0
  %1780 = vmatpush.bf16.msra.mxu0 0
  %1781 = vmatpush.bf16.msra.mxu0 0
  %1782 = vmatpush.bf16.msra.mxu0 0
  %1783 = vmatpush.bf16.msra.mxu0 0
  %1784 = vmatpush.bf16.msra.mxu0 0
  %1785 = vmatpush.bf16.msra.mxu0 %v1776
  %1786 = vmatmul.bf16.gmra.mxu0 %v1773
  %v1787 = vpop.f32.mrf.mxu0
  %v1788 = vadd.f32 0.0, %v1787
  %v1789 = vpop.f32.mrf.mxu0
  %1790 = vdwg.mxu0
  %1791 = vrot.lane.b32.xlu0 %v894, 48
  %v1792 = vpop.permute.xlu0 %1791
  %v1794 = vsel %vm823, %v1723, 0
  %v1797 = vsel %vm827, %v1792, 0
  %1799 = vmatpush.bf16.msra.mxu0 0
  %1800 = vmatpush.bf16.msra.mxu0 0
  %1801 = vmatpush.bf16.msra.mxu0 0
  %1802 = vmatpush.bf16.msra.mxu0 0
  %1803 = vmatpush.bf16.msra.mxu0 0
  %1804 = vmatpush.bf16.msra.mxu0 0
  %1805 = vmatpush.bf16.msra.mxu0 0
  %1806 = vmatpush.bf16.msra.mxu0 %v1797
  %1807 = vmatmul.bf16.gmra.mxu0 %v1794
  %v1808 = vpop.f32.mrf.mxu0
  %v1809 = vadd.f32 0.0, %v1808
  %v1810 = vpop.f32.mrf.mxu0
  %1811 = vdwg.mxu0
  %1812 = vrot.lane.b32.xlu0 %v918, 48
  %v1813 = vpop.permute.xlu0 %1812
  %v1815 = vsel %vm823, %v1724, 0
  %v1818 = vsel %vm827, %v1813, 0
  %1820 = vmatpush.bf16.msra.mxu0 0
  %1821 = vmatpush.bf16.msra.mxu0 0
  %1822 = vmatpush.bf16.msra.mxu0 0
  %1823 = vmatpush.bf16.msra.mxu0 0
  %1824 = vmatpush.bf16.msra.mxu0 0
  %1825 = vmatpush.bf16.msra.mxu0 0
  %1826 = vmatpush.bf16.msra.mxu0 0
  %1827 = vmatpush.bf16.msra.mxu0 %v1818
  %1828 = vmatmul.bf16.gmra.mxu0 %v1815
  %v1829 = vpop.f32.mrf.mxu0
  %v1830 = vadd.f32 0.0, %v1829
  %v1831 = vpop.f32.mrf.mxu0
  %1832 = vdwg.mxu0
  %1833 = vrot.lane.b32.xlu0 %v942, 48
  %v1834 = vpop.permute.xlu0 %1833
  %v1836 = vsel %vm823, %v1725, 0
  %v1839 = vsel %vm827, %v1834, 0
  %1841 = vmatpush.bf16.msra.mxu0 0
  %1842 = vmatpush.bf16.msra.mxu0 0
  %1843 = vmatpush.bf16.msra.mxu0 0
  %1844 = vmatpush.bf16.msra.mxu0 0
  %1845 = vmatpush.bf16.msra.mxu0 0
  %1846 = vmatpush.bf16.msra.mxu0 0
  %1847 = vmatpush.bf16.msra.mxu0 0
  %1848 = vmatpush.bf16.msra.mxu0 %v1839
  %1849 = vmatmul.bf16.gmra.mxu0 %v1836
  %v1850 = vpop.f32.mrf.mxu0
  %v1851 = vadd.f32 0.0, %v1850
  %v1852 = vpop.f32.mrf.mxu0
  %1853 = vdwg.mxu0
  %1854 = vrot.lane.b32.xlu0 %v966, 48
  %v1855 = vpop.permute.xlu0 %1854
  %v1857 = vsel %vm823, %v1726, 0
  %v1860 = vsel %vm827, %v1855, 0
  %1862 = vmatpush.bf16.msra.mxu0 0
  %1863 = vmatpush.bf16.msra.mxu0 0
  %1864 = vmatpush.bf16.msra.mxu0 0
  %1865 = vmatpush.bf16.msra.mxu0 0
  %1866 = vmatpush.bf16.msra.mxu0 0
  %1867 = vmatpush.bf16.msra.mxu0 0
  %1868 = vmatpush.bf16.msra.mxu0 0
  %1869 = vmatpush.bf16.msra.mxu0 %v1860
  %1870 = vmatmul.bf16.gmra.mxu0 %v1857
  %v1871 = vpop.f32.mrf.mxu0
  %v1872 = vadd.f32 0.0, %v1871
  %v1873 = vpop.f32.mrf.mxu0
  %1874 = vdwg.mxu0
  %1875 = vrot.lane.b32.xlu0 %v990, 48
  %v1876 = vpop.permute.xlu0 %1875
  %v1878 = vsel %vm823, %v1727, 0
  %v1881 = vsel %vm827, %v1876, 0
  %1883 = vmatpush.bf16.msra.mxu0 0
  %1884 = vmatpush.bf16.msra.mxu0 0
  %1885 = vmatpush.bf16.msra.mxu0 0
  %1886 = vmatpush.bf16.msra.mxu0 0
  %1887 = vmatpush.bf16.msra.mxu0 0
  %1888 = vmatpush.bf16.msra.mxu0 0
  %1889 = vmatpush.bf16.msra.mxu0 0
  %1890 = vmatpush.bf16.msra.mxu0 %v1881
  %1891 = vmatmul.bf16.gmra.mxu0 %v1878
  %v1892 = vpop.f32.mrf.mxu0
  %v1893 = vadd.f32 0.0, %v1892
  %v1894 = vpop.f32.mrf.mxu0
  %1895 = vdwg.mxu0
  %1904 = vrot.lane.b32.xlu0 %v1746, 16
  %v1905 = vpop.permute.xlu0 %1904
  %1906 = vrot.lane.b32.xlu0 %v1767, 16
  %v1907 = vpop.permute.xlu0 %1906
  %1908 = vrot.lane.b32.xlu0 %v1788, 16
  %v1909 = vpop.permute.xlu0 %1908
  %1910 = vrot.lane.b32.xlu0 %v1809, 16
  %v1911 = vpop.permute.xlu0 %1910
  %1912 = vrot.lane.b32.xlu0 %v1830, 16
  %v1913 = vpop.permute.xlu0 %1912
  %1914 = vrot.lane.b32.xlu0 %v1851, 16
  %v1915 = vpop.permute.xlu0 %1914
  %1916 = vrot.lane.b32.xlu0 %v1872, 16
  %v1917 = vpop.permute.xlu0 %1916
  %1918 = vrot.lane.b32.xlu0 %v1893, 16
  %v1919 = vpop.permute.xlu0 %1918
  %v1928 = vsel %vm458, %v841, %v1905
  %v1929 = vsel %vm458, %v865, %v1907
  %v1930 = vsel %vm458, %v889, %v1909
  %v1931 = vsel %vm458, %v913, %v1911
  %v1932 = vsel %vm458, %v937, %v1913
  %v1933 = vsel %vm458, %v961, %v1915
  %v1934 = vsel %vm458, %v985, %v1917
  %v1935 = vsel %vm458, %v1009, %v1919
  %v1936 = vpack.c.bf16 %v1928, %v1928
  %v1937 = vpack.c.bf16 %v1929, %v1929
  %v1938 = vpack.c.bf16 %v1930, %v1930
  %v1939 = vpack.c.bf16 %v1931, %v1931
  %v1940 = vpack.c.bf16 %v1932, %v1932
  %v1941 = vpack.c.bf16 %v1933, %v1933
  %v1942 = vpack.c.bf16 %v1934, %v1934
  %v1943 = vpack.c.bf16 %v1935, %v1935
  %v1944 = vld [vmem:[%s5] sm:$0xf]
  %v1945 = vld [vmem:[%s5 + $0x4] sm:$0xf]
  %v1946 = vld [vmem:[%s5 + $0x8] sm:$0xf]
  %v1947 = vld [vmem:[%s5 + $0xc] sm:$0xf]
  %v1948 = vld [vmem:[%s6] sm:$0x1]
  %v1950 = vperm.slane %v1948, 0
  %1952 = vst [vmem:[#allocation1] ss:$4 sm:$0xff] %v1936
  %s1954 = scalar_lea.vmem [#allocation1], 1
  %1955 = vst [vmem:[%s1954] ss:$4 sm:$0xff] %v1937
  %s1957 = scalar_lea.vmem [#allocation1], 2
  %1958 = vst [vmem:[%s1957] ss:$4 sm:$0xff] %v1938
  %s1960 = scalar_lea.vmem [#allocation1], 3
  %1961 = vst [vmem:[%s1960] ss:$4 sm:$0xff] %v1939
  %s1963 = scalar_lea.vmem [#allocation1], 32
  %1964 = vst [vmem:[%s1963] ss:$4 sm:$0xff] %v1940
  %s1966 = scalar_lea.vmem [#allocation1], 33
  %1967 = vst [vmem:[%s1966] ss:$4 sm:$0xff] %v1941
  %s1969 = scalar_lea.vmem [#allocation1], 34
  %1970 = vst [vmem:[%s1969] ss:$4 sm:$0xff] %v1942
  %s1972 = scalar_lea.vmem [#allocation1], 35
  %1973 = vst [vmem:[%s1972] ss:$4 sm:$0xff] %v1943
  %v1974 = vld.sshfl [vmem:[#allocation1] sm:$0xff pattern:$0x73625140]
  %v1975 = vld.sshfl [vmem:[#allocation1 + $0x20] sm:$0xff pattern:$0x73625140]
  %v1980 = vunpack.c.l.b16 %v1944
  %v1981 = vunpack.c.l.b16 %v1945
  %v1982 = vunpack.c.l.b16 %v1946
  %v1983 = vunpack.c.l.b16 %v1947
  %v1984 = vpack.c.b16 %v1981, %v1980
  %v1985 = vpack.c.b16 %v1983, %v1982
  %1988 = vst [vmem:[#allocation1] ss:$2 sm:$0xff] %v1950
  %s1989 = scalar_lea.vmem [#allocation1], 1
  %1990 = vst [vmem:[%s1989] ss:$2 sm:$0xff] %v1950
  %s1991 = scalar_lea.vmem [#allocation1], 16
  %1992 = vst [vmem:[%s1991] ss:$2 sm:$0xff] %v1950
  %s1993 = scalar_lea.vmem [#allocation1], 17
  %1994 = vst [vmem:[%s1993] ss:$2 sm:$0xff] %v1950
  %s1995 = scalar_lea.vmem [#allocation1], 32
  %1996 = vst [vmem:[%s1995] ss:$2 sm:$0xff] %v1950
  %s1997 = scalar_lea.vmem [#allocation1], 33
  %1998 = vst [vmem:[%s1997] ss:$2 sm:$0xff] %v1950
  %s1999 = scalar_lea.vmem [#allocation1], 48
  %2000 = vst [vmem:[%s1999] ss:$2 sm:$0xff] %v1950
  %s2001 = scalar_lea.vmem [#allocation1], 49
  %2002 = vst [vmem:[%s2001] ss:$2 sm:$0xff] %v1950
  %v2003 = vld.sshfl [vmem:[#allocation1] sm:$0xff pattern:$0x75316420]
  %v2004 = vld.sshfl [vmem:[#allocation1 + $0x10] sm:$0xff pattern:$0x75316420]
  %v2005 = vld.sshfl [vmem:[#allocation1 + $0x20] sm:$0xff pattern:$0x75316420]
  %v2006 = vld.sshfl [vmem:[#allocation1 + $0x30] sm:$0xff pattern:$0x75316420]
  %v2011 = vsel %vm116, %v1974, 0
  %v2013 = vsel %vm116, %v1975, 0
  %2015 = vmatpush.bf16.msra.mxu0 0
  %2016 = vmatpush.bf16.msra.mxu0 0
  %2017 = vmatpush.bf16.msra.mxu0 0
  %2018 = vmatpush.bf16.msra.mxu0 0
  %2019 = vmatpush.bf16.msra.mxu0 0
  %2020 = vmatpush.bf16.msra.mxu0 0
  %2021 = vmatpush.bf16.msra.mxu0 %v1985
  %2022 = vmatpush.bf16.msra.mxu0 %v1984
  %2023 = vmatmul.bf16.gmra.mxu0 %v2011
  %v2024 = vpop.f32.mrf.mxu0
  %v2025 = vadd.f32 %v2003, %v2024
  %v2026 = vpop.f32.mrf.mxu0
  %v2027 = vadd.f32 %v2004, %v2026
  %2028 = vmatmul.bf16.gmra.mxu0 %v2013
  %v2029 = vpop.f32.mrf.mxu0
  %v2030 = vadd.f32 %v2005, %v2029
  %v2031 = vpop.f32.mrf.mxu0
  %v2032 = vadd.f32 %v2006, %v2031
  %2033 = vdwg.mxu0
  %v2038 = vrot.slane %v2025, 4
  %v2039 = vrot.slane %v2027, 4
  %v2040 = vrot.slane %v2030, 4
  %v2041 = vrot.slane %v2032, 4
  %v2046 = vld [vmem:[%s7] sm:$0x1]
  %v2047 = vld [vmem:[%s8] sm:$0x1]
  %vm2048 = vcmask 257024
  %v2049 = vsel %vm2048, %v2025, 0.0
  %2050 = vadd.xlane.f32.xlu0 %v2049
  %v2051 = vpop.xlane.xlu0 %2050
  %v2052 = vsel %vm2048, %v2038, 0.0
  %2053 = vadd.xlane.f32.xlu0 %v2052
  %v2054 = vpop.xlane.xlu0 %2053
  %v2055 = vsel %vm2048, %v2027, 0.0
  %2056 = vadd.xlane.f32.xlu0 %v2055
  %v2057 = vpop.xlane.xlu0 %2056
  %v2058 = vsel %vm2048, %v2039, 0.0
  %2059 = vadd.xlane.f32.xlu0 %v2058
  %v2060 = vpop.xlane.xlu0 %2059
  %v2061 = vsel %vm2048, %v2030, 0.0
  %2062 = vadd.xlane.f32.xlu0 %v2061
  %v2063 = vpop.xlane.xlu0 %2062
  %v2064 = vsel %vm2048, %v2040, 0.0
  %2065 = vadd.xlane.f32.xlu0 %v2064
  %v2066 = vpop.xlane.xlu0 %2065
  %v2067 = vsel %vm2048, %v2032, 0.0
  %2068 = vadd.xlane.f32.xlu0 %v2067
  %v2069 = vpop.xlane.xlu0 %2068
  %v2070 = vsel %vm2048, %v2041, 0.0
  %2071 = vadd.xlane.f32.xlu0 %v2070
  %v2072 = vpop.xlane.xlu0 %2071
  %v2073 = vrcp.pop 32.0
  %v2074 = vmul.f32 32.0, %v2073
  %v2075 = vsub.f32 1.0, %v2074
  %v2076 = vmul.f32 %v2073, %v2075
  %v2077 = vadd.f32 %v2073, %v2076
  %vm2078 = vweird.f32 %v2073
  %v2079 = vsel %vm2078, %v2073, %v2077
  %v2080 = vmul.f32 %v2051, %v2079
  %v2081 = vmul.f32 %v2054, %v2079
  %v2082 = vmul.f32 %v2057, %v2079
  %v2083 = vmul.f32 %v2060, %v2079
  %v2084 = vmul.f32 %v2063, %v2079
  %v2085 = vmul.f32 %v2066, %v2079
  %v2086 = vmul.f32 %v2069, %v2079
  %v2087 = vmul.f32 %v2072, %v2079
  %v2088 = vsub.f32 %v2025, %v2080
  %v2089 = vsub.f32 %v2038, %v2081
  %v2090 = vsub.f32 %v2027, %v2082
  %v2091 = vsub.f32 %v2039, %v2083
  %v2092 = vsub.f32 %v2030, %v2084
  %v2093 = vsub.f32 %v2040, %v2085
  %v2094 = vsub.f32 %v2032, %v2086
  %v2095 = vsub.f32 %v2041, %v2087
  %v2096 = vmul.f32 %v2088, %v2088
  %v2097 = vmul.f32 %v2089, %v2089
  %v2098 = vmul.f32 %v2090, %v2090
  %v2099 = vmul.f32 %v2091, %v2091
  %v2100 = vmul.f32 %v2092, %v2092
  %v2101 = vmul.f32 %v2093, %v2093
  %v2102 = vmul.f32 %v2094, %v2094
  %v2103 = vmul.f32 %v2095, %v2095
  %v2104 = vsel %vm2048, %v2096, 0.0
  %2105 = vadd.xlane.f32.xlu0 %v2104
  %v2106 = vpop.xlane.xlu0 %2105
  %v2107 = vsel %vm2048, %v2097, 0.0
  %2108 = vadd.xlane.f32.xlu0 %v2107
  %v2109 = vpop.xlane.xlu0 %2108
  %v2110 = vsel %vm2048, %v2098, 0.0
  %2111 = vadd.xlane.f32.xlu0 %v2110
  %v2112 = vpop.xlane.xlu0 %2111
  %v2113 = vsel %vm2048, %v2099, 0.0
  %2114 = vadd.xlane.f32.xlu0 %v2113
  %v2115 = vpop.xlane.xlu0 %2114
  %v2116 = vsel %vm2048, %v2100, 0.0
  %2117 = vadd.xlane.f32.xlu0 %v2116
  %v2118 = vpop.xlane.xlu0 %2117
  %v2119 = vsel %vm2048, %v2101, 0.0
  %2120 = vadd.xlane.f32.xlu0 %v2119
  %v2121 = vpop.xlane.xlu0 %2120
  %v2122 = vsel %vm2048, %v2102, 0.0
  %2123 = vadd.xlane.f32.xlu0 %v2122
  %v2124 = vpop.xlane.xlu0 %2123
  %v2125 = vsel %vm2048, %v2103, 0.0
  %2126 = vadd.xlane.f32.xlu0 %v2125
  %v2127 = vpop.xlane.xlu0 %2126
  %v2128 = vmul.f32 %v2106, %v2079
  %v2129 = vmul.f32 %v2109, %v2079
  %v2130 = vmul.f32 %v2112, %v2079
  %v2131 = vmul.f32 %v2115, %v2079
  %v2132 = vmul.f32 %v2118, %v2079
  %v2133 = vmul.f32 %v2121, %v2079
  %v2134 = vmul.f32 %v2124, %v2079
  %v2135 = vmul.f32 %v2127, %v2079
  %v2136 = vadd.f32 %v2128, 1e-05
  %v2137 = vadd.f32 %v2129, 1e-05
  %v2138 = vadd.f32 %v2130, 1e-05
  %v2139 = vadd.f32 %v2131, 1e-05
  %v2140 = vadd.f32 %v2132, 1e-05
  %v2141 = vadd.f32 %v2133, 1e-05
  %v2142 = vadd.f32 %v2134, 1e-05
  %v2143 = vadd.f32 %v2135, 1e-05
  %v2144 = vrsqrt.pop %v2136
  %v2145 = vmul.f32 %v2144, %v2136
  %v2146 = vmul.f32 %v2145, %v2144
  %v2147 = vmul.f32 0.5, %v2146
  %v2148 = vsub.f32 1.5, %v2147
  %v2149 = vmul.f32 %v2144, %v2148
  %vm2150 = vweird.f32 %v2136
  %vm2151 = vweird.f32 %v2144
  %vm2152 = vmor %vm2150, %vm2151
  %v2153 = vsel %vm2152, %v2144, %v2149
  %v2154 = vrsqrt.pop %v2137
  %v2155 = vmul.f32 %v2154, %v2137
  %v2156 = vmul.f32 %v2155, %v2154
  %v2157 = vmul.f32 0.5, %v2156
  %v2158 = vsub.f32 1.5, %v2157
  %v2159 = vmul.f32 %v2154, %v2158
  %vm2160 = vweird.f32 %v2137
  %vm2161 = vweird.f32 %v2154
  %vm2162 = vmor %vm2160, %vm2161
  %v2163 = vsel %vm2162, %v2154, %v2159
  %v2164 = vrsqrt.pop %v2138
  %v2165 = vmul.f32 %v2164, %v2138
  %v2166 = vmul.f32 %v2165, %v2164
  %v2167 = vmul.f32 0.5, %v2166
  %v2168 = vsub.f32 1.5, %v2167
  %v2169 = vmul.f32 %v2164, %v2168
  %vm2170 = vweird.f32 %v2138
  %vm2171 = vweird.f32 %v2164
  %vm2172 = vmor %vm2170, %vm2171
  %v2173 = vsel %vm2172, %v2164, %v2169
  %v2174 = vrsqrt.pop %v2139
  %v2175 = vmul.f32 %v2174, %v2139
  %v2176 = vmul.f32 %v2175, %v2174
  %v2177 = vmul.f32 0.5, %v2176
  %v2178 = vsub.f32 1.5, %v2177
  %v2179 = vmul.f32 %v2174, %v2178
  %vm2180 = vweird.f32 %v2139
  %vm2181 = vweird.f32 %v2174
  %vm2182 = vmor %vm2180, %vm2181
  %v2183 = vsel %vm2182, %v2174, %v2179
  %v2184 = vrsqrt.pop %v2140
  %v2185 = vmul.f32 %v2184, %v2140
  %v2186 = vmul.f32 %v2185, %v2184
  %v2187 = vmul.f32 0.5, %v2186
  %v2188 = vsub.f32 1.5, %v2187
  %v2189 = vmul.f32 %v2184, %v2188
  %vm2190 = vweird.f32 %v2140
  %vm2191 = vweird.f32 %v2184
  %vm2192 = vmor %vm2190, %vm2191
  %v2193 = vsel %vm2192, %v2184, %v2189
  %v2194 = vrsqrt.pop %v2141
  %v2195 = vmul.f32 %v2194, %v2141
  %v2196 = vmul.f32 %v2195, %v2194
  %v2197 = vmul.f32 0.5, %v2196
  %v2198 = vsub.f32 1.5, %v2197
  %v2199 = vmul.f32 %v2194, %v2198
  %vm2200 = vweird.f32 %v2141
  %vm2201 = vweird.f32 %v2194
  %vm2202 = vmor %vm2200, %vm2201
  %v2203 = vsel %vm2202, %v2194, %v2199
  %v2204 = vrsqrt.pop %v2142
  %v2205 = vmul.f32 %v2204, %v2142
  %v2206 = vmul.f32 %v2205, %v2204
  %v2207 = vmul.f32 0.5, %v2206
  %v2208 = vsub.f32 1.5, %v2207
  %v2209 = vmul.f32 %v2204, %v2208
  %vm2210 = vweird.f32 %v2142
  %vm2211 = vweird.f32 %v2204
  %vm2212 = vmor %vm2210, %vm2211
  %v2213 = vsel %vm2212, %v2204, %v2209
  %v2214 = vrsqrt.pop %v2143
  %v2215 = vmul.f32 %v2214, %v2143
  %v2216 = vmul.f32 %v2215, %v2214
  %v2217 = vmul.f32 0.5, %v2216
  %v2218 = vsub.f32 1.5, %v2217
  %v2219 = vmul.f32 %v2214, %v2218
  %vm2220 = vweird.f32 %v2143
  %vm2221 = vweird.f32 %v2214
  %vm2222 = vmor %vm2220, %vm2221
  %v2223 = vsel %vm2222, %v2214, %v2219
  %v2224 = vmul.f32 %v2088, %v2153
  %v2225 = vmul.f32 %v2089, %v2163
  %v2226 = vmul.f32 %v2090, %v2173
  %v2227 = vmul.f32 %v2091, %v2183
  %v2228 = vmul.f32 %v2092, %v2193
  %v2229 = vmul.f32 %v2093, %v2203
  %v2230 = vmul.f32 %v2094, %v2213
  %v2231 = vmul.f32 %v2095, %v2223
  %v2233 = vperm.slane %v2046, 0
  %v2235 = vmul.f32 %v2224, %v2233
  %v2236 = vmul.f32 %v2225, %v2233
  %v2237 = vmul.f32 %v2226, %v2233
  %v2238 = vmul.f32 %v2227, %v2233
  %v2239 = vmul.f32 %v2228, %v2233
  %v2240 = vmul.f32 %v2229, %v2233
  %v2241 = vmul.f32 %v2230, %v2233
  %v2242 = vmul.f32 %v2231, %v2233
  %v2244 = vperm.slane %v2047, 0
  %v2246 = vadd.f32 %v2235, %v2244
  %v2247 = vadd.f32 %v2236, %v2244
  %v2248 = vadd.f32 %v2237, %v2244
  %v2249 = vadd.f32 %v2238, %v2244
  %v2250 = vadd.f32 %v2239, %v2244
  %v2251 = vadd.f32 %v2240, %v2244
  %v2252 = vadd.f32 %v2241, %v2244
  %v2253 = vadd.f32 %v2242, %v2244
  %v2254 = vadd.f32 %v33, %v2246
  %v2255 = vadd.f32 %v34, %v2247
  %v2256 = vadd.f32 %v35, %v2248
  %v2257 = vadd.f32 %v36, %v2249
  %v2258 = vadd.f32 %v37, %v2250
  %v2259 = vadd.f32 %v38, %v2251
  %v2260 = vadd.f32 %v39, %v2252
  %v2261 = vadd.f32 %v40, %v2253
  %2262 = vst.msk [vmem:[%s9] sm:$0xf] %vm2048, %v2254
  %2263 = vst.msk [vmem:[%s9 + $0x4] sm:$0xf] %vm2048, %v2255
  %2264 = vst.msk [vmem:[%s9 + $0x8] sm:$0xf] %vm2048, %v2256
  %2265 = vst.msk [vmem:[%s9 + $0xc] sm:$0xf] %vm2048, %v2257
  %2266 = vst.msk [vmem:[%s9 + $0x10] sm:$0xf] %vm2048, %v2258
  %2267 = vst.msk [vmem:[%s9 + $0x14] sm:$0xf] %vm2048, %v2259
  %2268 = vst.msk [vmem:[%s9 + $0x18] sm:$0xf] %vm2048, %v2260
  %2269 = vst.msk [vmem:[%s9 + $0x1c] sm:$0xf] %vm2048, %v2261
  // Predicated region
  $region38: #{custom_swin_encoder_forward.11} parent=0 // pred_check
    _
  $region39: #{custom_swin_encoder_forward.11} parent=0 // pred_check_branch
    %2271 = sbr.rel (0) target = $region41
  $region40: #{custom_swin_encoder_forward.11} parent=0 // pred_region
    _
  $region41: #{custom_swin_encoder_forward.11} parent=0 // pred_fallthru
    _
  // Predicated region
  $region42: #{custom_swin_encoder_forward.11} parent=0 // pred_check
    _
  $region43: #{custom_swin_encoder_forward.11} parent=0 // pred_check_branch
    %2273 = sbr.rel (0) target = $region45
  $region44: #{custom_swin_encoder_forward.11} parent=0 // pred_region
    _
  $region45: #{custom_swin_encoder_forward.11} parent=0 // pred_fallthru
    _

// kernel: custom_swin_encoder_forward.13
$region0: #{custom_swin_encoder_forward.13}
  #allocation0 [shape = 'u32[]', space=smem, size = 0x4, offset = 0x4, fixed_abs, tag = 'smem constant byte address 0x4 - core index']
  #allocation1 [shape = 'u32[72,128]{1,0:T(1,128)}', space=vmem, size = 0x9000, scoped, tag = 'internal scratch']
  %s0 = inlined_call_operand.vmem [shape: f32[8,4,32], index: 0, kind: input, shape index: {}]
  %s1 = inlined_call_operand.vmem [shape: bf16[32,96], index: 1, kind: input, shape index: {}]
  %s2 = inlined_call_operand.vmem [shape: f32[1,96], index: 2, kind: input, shape index: {}]
  %s3 = inlined_call_operand.vmem [shape: f32[1,2], index: 3, kind: input, shape index: {}]
  %s4 = inlined_call_operand.vmem [shape: f32[2,4,4], index: 4, kind: input, shape index: {}]
  %s5 = inlined_call_operand.vmem [shape: f32[8,4,4], index: 5, kind: input, shape index: {}]
  %s6 = inlined_call_operand.vmem [shape: bf16[32,32], index: 6, kind: input, shape index: {}]
  %s7 = inlined_call_operand.vmem [shape: f32[1,32], index: 7, kind: input, shape index: {}]
  %s8 = inlined_call_operand.vmem [shape: f32[1,32], index: 8, kind: input, shape index: {}]
  %s9 = inlined_call_operand.vmem [shape: f32[1,32], index: 9, kind: input, shape index: {}]
  %s10 = inlined_call_operand.vmem [shape: f32[8,4,32], index: 10, kind: output, shape index: {}]
  %s11 = sld [smem:[#allocation0]]
  $region50: #{custom_swin_encoder_forward.13} parent=0
    _
  %s13 = ssub.s32 1, %s11
  %s14 = scalar_select 0, %s13, %s11
  // Predicated region
  $region2: #{custom_swin_encoder_forward.13} parent=0 // pred_check
    _
  $region3: #{custom_swin_encoder_forward.13} parent=0 // pred_check_branch
    %16 = sbr.rel (0) target = $region5
  $region4: #{custom_swin_encoder_forward.13} parent=0 // pred_region
    _
  $region5: #{custom_swin_encoder_forward.13} parent=0 // pred_fallthru
    _
  // Predicated region
  $region6: #{custom_swin_encoder_forward.13} parent=0 // pred_check
    _
  $region7: #{custom_swin_encoder_forward.13} parent=0 // pred_check_branch
    %18 = sbr.rel (0) target = $region9
  $region8: #{custom_swin_encoder_forward.13} parent=0 // pred_region
    _
  $region9: #{custom_swin_encoder_forward.13} parent=0 // pred_fallthru
    _
  // Predicated region
  $region10: #{custom_swin_encoder_forward.13} parent=0 // pred_check
    _
  $region11: #{custom_swin_encoder_forward.13} parent=0 // pred_check_branch
    %20 = sbr.rel (0) target = $region13
  $region12: #{custom_swin_encoder_forward.13} parent=0 // pred_region
    _
  $region13: #{custom_swin_encoder_forward.13} parent=0 // pred_fallthru
    _
  // Predicated region
  $region14: #{custom_swin_encoder_forward.13} parent=0 // pred_check
    _
  $region15: #{custom_swin_encoder_forward.13} parent=0 // pred_check_branch
    %22 = sbr.rel (0) target = $region17
  $region16: #{custom_swin_encoder_forward.13} parent=0 // pred_region
    _
  $region17: #{custom_swin_encoder_forward.13} parent=0 // pred_fallthru
    _
  // Predicated region
  $region18: #{custom_swin_encoder_forward.13} parent=0 // pred_check
    _
  $region19: #{custom_swin_encoder_forward.13} parent=0 // pred_check_branch
    %24 = sbr.rel (0) target = $region21
  $region20: #{custom_swin_encoder_forward.13} parent=0 // pred_region
    _
  $region21: #{custom_swin_encoder_forward.13} parent=0 // pred_fallthru
    _
  // Predicated region
  $region22: #{custom_swin_encoder_forward.13} parent=0 // pred_check
    _
  $region23: #{custom_swin_encoder_forward.13} parent=0 // pred_check_branch
    %26 = sbr.rel (0) target = $region25
  $region24: #{custom_swin_encoder_forward.13} parent=0 // pred_region
    _
  $region25: #{custom_swin_encoder_forward.13} parent=0 // pred_fallthru
    _
  // Predicated region
  $region26: #{custom_swin_encoder_forward.13} parent=0 // pred_check
    _
  $region27: #{custom_swin_encoder_forward.13} parent=0 // pred_check_branch
    %28 = sbr.rel (0) target = $region29
  $region28: #{custom_swin_encoder_forward.13} parent=0 // pred_region
    _
  $region29: #{custom_swin_encoder_forward.13} parent=0 // pred_fallthru
    _
  // Predicated region
  $region30: #{custom_swin_encoder_forward.13} parent=0 // pred_check
    _
  $region31: #{custom_swin_encoder_forward.13} parent=0 // pred_check_branch
    %30 = sbr.rel (0) target = $region33
  $region32: #{custom_swin_encoder_forward.13} parent=0 // pred_region
    _
  $region33: #{custom_swin_encoder_forward.13} parent=0 // pred_fallthru
    _
  // Predicated region
  $region34: #{custom_swin_encoder_forward.13} parent=0 // pred_check
    _
  $region35: #{custom_swin_encoder_forward.13} parent=0 // pred_check_branch
    %32 = sbr.rel (0) target = $region37
  $region36: #{custom_swin_encoder_forward.13} parent=0 // pred_region
    _
  $region37: #{custom_swin_encoder_forward.13} parent=0 // pred_fallthru
    _
  // Predicated region
  $region38: #{custom_swin_encoder_forward.13} parent=0 // pred_check
    _
  $region39: #{custom_swin_encoder_forward.13} parent=0 // pred_check_branch
    %34 = sbr.rel (0) target = $region41
  $region40: #{custom_swin_encoder_forward.13} parent=0 // pred_region
    _
  $region41: #{custom_swin_encoder_forward.13} parent=0 // pred_fallthru
    _
  %v36 = vld [vmem:[%s0] sm:$0xf]
  %v37 = vld [vmem:[%s0 + $0x4] sm:$0xf]
  %v38 = vld [vmem:[%s0 + $0x8] sm:$0xf]
  %v39 = vld [vmem:[%s0 + $0xc] sm:$0xf]
  %v40 = vld [vmem:[%s0 + $0x10] sm:$0xf]
  %v41 = vld [vmem:[%s0 + $0x14] sm:$0xf]
  %v42 = vld [vmem:[%s0 + $0x18] sm:$0xf]
  %v43 = vld [vmem:[%s0 + $0x1c] sm:$0xf]
  %v44 = vpack.c.bf16 %v36, %v36
  %v45 = vpack.c.bf16 %v37, %v37
  %v46 = vpack.c.bf16 %v38, %v38
  %v47 = vpack.c.bf16 %v39, %v39
  %v48 = vpack.c.bf16 %v40, %v40
  %v49 = vpack.c.bf16 %v41, %v41
  %v50 = vpack.c.bf16 %v42, %v42
  %v51 = vpack.c.bf16 %v43, %v43
  %v52 = vld [vmem:[%s1] sm:$0xf]
  %v53 = vld [vmem:[%s1 + $0x4] sm:$0xf]
  %v54 = vld [vmem:[%s1 + $0x8] sm:$0xf]
  %v55 = vld [vmem:[%s1 + $0xc] sm:$0xf]
  %v56 = vld [vmem:[%s2] sm:$0x1]
  %v58 = vperm.slane %v56, 0
  %60 = vst [vmem:[#allocation1] ss:$4 sm:$0xff] %v44
  %s62 = scalar_lea.vmem [#allocation1], 1
  %63 = vst [vmem:[%s62] ss:$4 sm:$0xff] %v45
  %s65 = scalar_lea.vmem [#allocation1], 2
  %66 = vst [vmem:[%s65] ss:$4 sm:$0xff] %v46
  %s68 = scalar_lea.vmem [#allocation1], 3
  %69 = vst [vmem:[%s68] ss:$4 sm:$0xff] %v47
  %s71 = scalar_lea.vmem [#allocation1], 32
  %72 = vst [vmem:[%s71] ss:$4 sm:$0xff] %v48
  %s74 = scalar_lea.vmem [#allocation1], 33
  %75 = vst [vmem:[%s74] ss:$4 sm:$0xff] %v49
  %s77 = scalar_lea.vmem [#allocation1], 34
  %78 = vst [vmem:[%s77] ss:$4 sm:$0xff] %v50
  %s80 = scalar_lea.vmem [#allocation1], 35
  %81 = vst [vmem:[%s80] ss:$4 sm:$0xff] %v51
  %v82 = vld.sshfl [vmem:[#allocation1] sm:$0xff pattern:$0x73625140]
  %v83 = vld.sshfl [vmem:[#allocation1 + $0x20] sm:$0xff pattern:$0x73625140]
  %v88 = vunpack.c.l.b16 %v52
  %v89 = vunpack.c.l.b16 %v53
  %v90 = vunpack.c.l.b16 %v54
  %v91 = vunpack.c.l.b16 %v55
  %v92 = vpack.c.b16 %v89, %v88
  %v93 = vpack.c.b16 %v91, %v90
  %96 = vst [vmem:[#allocation1] ss:$2 sm:$0xff] %v58
  %s97 = scalar_lea.vmem [#allocation1], 1
  %98 = vst [vmem:[%s97] ss:$2 sm:$0xff] %v58
  %s99 = scalar_lea.vmem [#allocation1], 16
  %100 = vst [vmem:[%s99] ss:$2 sm:$0xff] %v58
  %s101 = scalar_lea.vmem [#allocation1], 17
  %102 = vst [vmem:[%s101] ss:$2 sm:$0xff] %v58
  %s103 = scalar_lea.vmem [#allocation1], 32
  %104 = vst [vmem:[%s103] ss:$2 sm:$0xff] %v58
  %s105 = scalar_lea.vmem [#allocation1], 33
  %106 = vst [vmem:[%s105] ss:$2 sm:$0xff] %v58
  %s107 = scalar_lea.vmem [#allocation1], 48
  %108 = vst [vmem:[%s107] ss:$2 sm:$0xff] %v58
  %s109 = scalar_lea.vmem [#allocation1], 49
  %110 = vst [vmem:[%s109] ss:$2 sm:$0xff] %v58
  %v111 = vld.sshfl [vmem:[#allocation1] sm:$0xff pattern:$0x75316420]
  %v112 = vld.sshfl [vmem:[#allocation1 + $0x10] sm:$0xff pattern:$0x75316420]
  %v113 = vld.sshfl [vmem:[#allocation1 + $0x20] sm:$0xff pattern:$0x75316420]
  %v114 = vld.sshfl [vmem:[#allocation1 + $0x30] sm:$0xff pattern:$0x75316420]
  %vm119 = vcmask 261120
  %v120 = vsel %vm119, %v82, 0
  %v122 = vsel %vm119, %v83, 0
  %124 = vmatpush.bf16.msra.mxu0 0
  %125 = vmatpush.bf16.msra.mxu0 0
  %126 = vmatpush.bf16.msra.mxu0 0
  %127 = vmatpush.bf16.msra.mxu0 0
  %128 = vmatpush.bf16.msra.mxu0 0
  %129 = vmatpush.bf16.msra.mxu0 0
  %130 = vmatpush.bf16.msra.mxu0 %v93
  %131 = vmatpush.bf16.msra.mxu0 %v92
  %132 = vmatmul.bf16.gmra.mxu0 %v120
  %v133 = vpop.f32.mrf.mxu0
  %v134 = vadd.f32 %v111, %v133
  %v135 = vpop.f32.mrf.mxu0
  %v136 = vadd.f32 %v112, %v135
  %137 = vmatmul.bf16.gmra.mxu0 %v122
  %v138 = vpop.f32.mrf.mxu0
  %v139 = vadd.f32 %v113, %v138
  %v140 = vpop.f32.mrf.mxu0
  %v141 = vadd.f32 %v114, %v140
  %142 = vdwg.mxu0
  %v147 = vrot.slane %v134, 4
  %v148 = vrot.slane %v136, 4
  %v149 = vrot.slane %v139, 4
  %v150 = vrot.slane %v141, 4
  %v155 = vld [vmem:[%s3] sm:$0x1]
  %v156 = vld [vmem:[%s5] sm:$0xf]
  %v157 = vld [vmem:[%s5 + $0x4] sm:$0xf]
  %v158 = vld [vmem:[%s5 + $0x8] sm:$0xf]
  %v159 = vld [vmem:[%s5 + $0xc] sm:$0xf]
  %v160 = vld [vmem:[%s5 + $0x10] sm:$0xf]
  %v161 = vld [vmem:[%s5 + $0x14] sm:$0xf]
  %v162 = vld [vmem:[%s5 + $0x18] sm:$0xf]
  %v163 = vld [vmem:[%s5 + $0x1c] sm:$0xf]
  %v164 = vmul.f32 %v134, %v134
  %v165 = vmul.f32 %v147, %v147
  %v166 = vmul.f32 %v136, %v136
  %v167 = vmul.f32 %v148, %v148
  %v168 = vmul.f32 %v139, %v139
  %v169 = vmul.f32 %v149, %v149
  %v170 = vmul.f32 %v141, %v141
  %v171 = vmul.f32 %v150, %v150
  %vm172 = vcmask 125952
  %v173 = vsel %vm172, %v164, 0.0
  %174 = vadd.xlane.f32.xlu0 %v173
  %v175 = vpop.xlane.xlu0 %174
  %v176 = vsel %vm172, %v165, 0.0
  %177 = vadd.xlane.f32.xlu0 %v176
  %v178 = vpop.xlane.xlu0 %177
  %v179 = vsel %vm172, %v166, 0.0
  %180 = vadd.xlane.f32.xlu0 %v179
  %v181 = vpop.xlane.xlu0 %180
  %v182 = vsel %vm172, %v167, 0.0
  %183 = vadd.xlane.f32.xlu0 %v182
  %v184 = vpop.xlane.xlu0 %183
  %v185 = vsel %vm172, %v168, 0.0
  %186 = vadd.xlane.f32.xlu0 %v185
  %v187 = vpop.xlane.xlu0 %186
  %v188 = vsel %vm172, %v169, 0.0
  %189 = vadd.xlane.f32.xlu0 %v188
  %v190 = vpop.xlane.xlu0 %189
  %v191 = vsel %vm172, %v170, 0.0
  %192 = vadd.xlane.f32.xlu0 %v191
  %v193 = vpop.xlane.xlu0 %192
  %v194 = vsel %vm172, %v171, 0.0
  %195 = vadd.xlane.f32.xlu0 %v194
  %v196 = vpop.xlane.xlu0 %195
  %v197 = vmax.f32 %v175, 1e-24
  %v198 = vmax.f32 %v178, 1e-24
  %v199 = vmax.f32 %v181, 1e-24
  %v200 = vmax.f32 %v184, 1e-24
  %v201 = vmax.f32 %v187, 1e-24
  %v202 = vmax.f32 %v190, 1e-24
  %v203 = vmax.f32 %v193, 1e-24
  %v204 = vmax.f32 %v196, 1e-24
  %v205 = vrsqrt.pop %v197
  %v206 = vmul.f32 %v205, %v197
  %v207 = vmul.f32 %v206, %v205
  %v208 = vmul.f32 0.5, %v207
  %v209 = vsub.f32 1.5, %v208
  %v210 = vmul.f32 %v205, %v209
  %vm211 = vweird.f32 %v197
  %vm212 = vweird.f32 %v205
  %vm213 = vmor %vm211, %vm212
  %v214 = vsel %vm213, %v205, %v210
  %v215 = vrsqrt.pop %v198
  %v216 = vmul.f32 %v215, %v198
  %v217 = vmul.f32 %v216, %v215
  %v218 = vmul.f32 0.5, %v217
  %v219 = vsub.f32 1.5, %v218
  %v220 = vmul.f32 %v215, %v219
  %vm221 = vweird.f32 %v198
  %vm222 = vweird.f32 %v215
  %vm223 = vmor %vm221, %vm222
  %v224 = vsel %vm223, %v215, %v220
  %v225 = vrsqrt.pop %v199
  %v226 = vmul.f32 %v225, %v199
  %v227 = vmul.f32 %v226, %v225
  %v228 = vmul.f32 0.5, %v227
  %v229 = vsub.f32 1.5, %v228
  %v230 = vmul.f32 %v225, %v229
  %vm231 = vweird.f32 %v199
  %vm232 = vweird.f32 %v225
  %vm233 = vmor %vm231, %vm232
  %v234 = vsel %vm233, %v225, %v230
  %v235 = vrsqrt.pop %v200
  %v236 = vmul.f32 %v235, %v200
  %v237 = vmul.f32 %v236, %v235
  %v238 = vmul.f32 0.5, %v237
  %v239 = vsub.f32 1.5, %v238
  %v240 = vmul.f32 %v235, %v239
  %vm241 = vweird.f32 %v200
  %vm242 = vweird.f32 %v235
  %vm243 = vmor %vm241, %vm242
  %v244 = vsel %vm243, %v235, %v240
  %v245 = vrsqrt.pop %v201
  %v246 = vmul.f32 %v245, %v201
  %v247 = vmul.f32 %v246, %v245
  %v248 = vmul.f32 0.5, %v247
  %v249 = vsub.f32 1.5, %v248
  %v250 = vmul.f32 %v245, %v249
  %vm251 = vweird.f32 %v201
  %vm252 = vweird.f32 %v245
  %vm253 = vmor %vm251, %vm252
  %v254 = vsel %vm253, %v245, %v250
  %v255 = vrsqrt.pop %v202
  %v256 = vmul.f32 %v255, %v202
  %v257 = vmul.f32 %v256, %v255
  %v258 = vmul.f32 0.5, %v257
  %v259 = vsub.f32 1.5, %v258
  %v260 = vmul.f32 %v255, %v259
  %vm261 = vweird.f32 %v202
  %vm262 = vweird.f32 %v255
  %vm263 = vmor %vm261, %vm262
  %v264 = vsel %vm263, %v255, %v260
  %v265 = vrsqrt.pop %v203
  %v266 = vmul.f32 %v265, %v203
  %v267 = vmul.f32 %v266, %v265
  %v268 = vmul.f32 0.5, %v267
  %v269 = vsub.f32 1.5, %v268
  %v270 = vmul.f32 %v265, %v269
  %vm271 = vweird.f32 %v203
  %vm272 = vweird.f32 %v265
  %vm273 = vmor %vm271, %vm272
  %v274 = vsel %vm273, %v265, %v270
  %v275 = vrsqrt.pop %v204
  %v276 = vmul.f32 %v275, %v204
  %v277 = vmul.f32 %v276, %v275
  %v278 = vmul.f32 0.5, %v277
  %v279 = vsub.f32 1.5, %v278
  %v280 = vmul.f32 %v275, %v279
  %vm281 = vweird.f32 %v204
  %vm282 = vweird.f32 %v275
  %vm283 = vmor %vm281, %vm282
  %v284 = vsel %vm283, %v275, %v280
  %v285 = vmul.f32 %v134, %v214
  %v286 = vmul.f32 %v147, %v224
  %v287 = vmul.f32 %v136, %v234
  %v288 = vmul.f32 %v148, %v244
  %v289 = vmul.f32 %v139, %v254
  %v290 = vmul.f32 %v149, %v264
  %v291 = vmul.f32 %v141, %v274
  %v292 = vmul.f32 %v150, %v284
  %301 = vst [vmem:[#allocation1] ss:$2 sm:$0xff] %v164
  %v302 = vld.sshfl [vmem:[#allocation1] sm:$0xff pattern:$0x75316420]
  %s303 = scalar_lea.vmem [#allocation1], 16
  %304 = vst [vmem:[%s303] ss:$2 sm:$0xff] %v165
  %v305 = vld.sshfl [vmem:[#allocation1 + $0x10] sm:$0xff pattern:$0x75316420]
  %s306 = scalar_lea.vmem [#allocation1], 32
  %307 = vst [vmem:[%s306] ss:$2 sm:$0xff] %v166
  %v308 = vld.sshfl [vmem:[#allocation1 + $0x20] sm:$0xff pattern:$0x75316420]
  %s309 = scalar_lea.vmem [#allocation1], 48
  %310 = vst [vmem:[%s309] ss:$2 sm:$0xff] %v167
  %v311 = vld.sshfl [vmem:[#allocation1 + $0x30] sm:$0xff pattern:$0x75316420]
  %312 = vst [vmem:[#allocation1] ss:$2 sm:$0xff] %v168
  %v313 = vld.sshfl [vmem:[#allocation1] sm:$0xff pattern:$0x75316420]
  %314 = vst [vmem:[%s303] ss:$2 sm:$0xff] %v169
  %v315 = vld.sshfl [vmem:[#allocation1 + $0x10] sm:$0xff pattern:$0x75316420]
  %316 = vst [vmem:[%s306] ss:$2 sm:$0xff] %v170
  %v317 = vld.sshfl [vmem:[#allocation1 + $0x20] sm:$0xff pattern:$0x75316420]
  %318 = vst [vmem:[%s309] ss:$2 sm:$0xff] %v171
  %v319 = vld.sshfl [vmem:[#allocation1 + $0x30] sm:$0xff pattern:$0x75316420]
  %320 = vrot.lane.b32.xlu0 %v302, 96
  %v321 = vpop.permute.xlu0 %320
  %322 = vrot.lane.b32.xlu0 %v305, 96
  %v323 = vpop.permute.xlu0 %322
  %324 = vrot.lane.b32.xlu0 %v308, 96
  %v325 = vpop.permute.xlu0 %324
  %326 = vrot.lane.b32.xlu0 %v311, 96
  %v327 = vpop.permute.xlu0 %326
  %328 = vrot.lane.b32.xlu0 %v313, 96
  %v329 = vpop.permute.xlu0 %328
  %330 = vrot.lane.b32.xlu0 %v315, 96
  %v331 = vpop.permute.xlu0 %330
  %332 = vrot.lane.b32.xlu0 %v317, 96
  %v333 = vpop.permute.xlu0 %332
  %334 = vrot.lane.b32.xlu0 %v319, 96
  %v335 = vpop.permute.xlu0 %334
  %v344 = vsel %vm172, %v321, 0.0
  %345 = vadd.xlane.f32.xlu0 %v344
  %v346 = vpop.xlane.xlu0 %345
  %v347 = vsel %vm172, %v323, 0.0
  %348 = vadd.xlane.f32.xlu0 %v347
  %v349 = vpop.xlane.xlu0 %348
  %v350 = vsel %vm172, %v325, 0.0
  %351 = vadd.xlane.f32.xlu0 %v350
  %v352 = vpop.xlane.xlu0 %351
  %v353 = vsel %vm172, %v327, 0.0
  %354 = vadd.xlane.f32.xlu0 %v353
  %v355 = vpop.xlane.xlu0 %354
  %v356 = vsel %vm172, %v329, 0.0
  %357 = vadd.xlane.f32.xlu0 %v356
  %v358 = vpop.xlane.xlu0 %357
  %v359 = vsel %vm172, %v331, 0.0
  %360 = vadd.xlane.f32.xlu0 %v359
  %v361 = vpop.xlane.xlu0 %360
  %v362 = vsel %vm172, %v333, 0.0
  %363 = vadd.xlane.f32.xlu0 %v362
  %v364 = vpop.xlane.xlu0 %363
  %v365 = vsel %vm172, %v335, 0.0
  %366 = vadd.xlane.f32.xlu0 %v365
  %v367 = vpop.xlane.xlu0 %366
  %v368 = vmax.f32 %v346, 1e-24
  %v369 = vmax.f32 %v349, 1e-24
  %v370 = vmax.f32 %v352, 1e-24
  %v371 = vmax.f32 %v355, 1e-24
  %v372 = vmax.f32 %v358, 1e-24
  %v373 = vmax.f32 %v361, 1e-24
  %v374 = vmax.f32 %v364, 1e-24
  %v375 = vmax.f32 %v367, 1e-24
  %v376 = vrsqrt.pop %v368
  %v377 = vmul.f32 %v376, %v368
  %v378 = vmul.f32 %v377, %v376
  %v379 = vmul.f32 0.5, %v378
  %v380 = vsub.f32 1.5, %v379
  %v381 = vmul.f32 %v376, %v380
  %vm382 = vweird.f32 %v368
  %vm383 = vweird.f32 %v376
  %vm384 = vmor %vm382, %vm383
  %v385 = vsel %vm384, %v376, %v381
  %v386 = vrsqrt.pop %v369
  %v387 = vmul.f32 %v386, %v369
  %v388 = vmul.f32 %v387, %v386
  %v389 = vmul.f32 0.5, %v388
  %v390 = vsub.f32 1.5, %v389
  %v391 = vmul.f32 %v386, %v390
  %vm392 = vweird.f32 %v369
  %vm393 = vweird.f32 %v386
  %vm394 = vmor %vm392, %vm393
  %v395 = vsel %vm394, %v386, %v391
  %v396 = vrsqrt.pop %v370
  %v397 = vmul.f32 %v396, %v370
  %v398 = vmul.f32 %v397, %v396
  %v399 = vmul.f32 0.5, %v398
  %v400 = vsub.f32 1.5, %v399
  %v401 = vmul.f32 %v396, %v400
  %vm402 = vweird.f32 %v370
  %vm403 = vweird.f32 %v396
  %vm404 = vmor %vm402, %vm403
  %v405 = vsel %vm404, %v396, %v401
  %v406 = vrsqrt.pop %v371
  %v407 = vmul.f32 %v406, %v371
  %v408 = vmul.f32 %v407, %v406
  %v409 = vmul.f32 0.5, %v408
  %v410 = vsub.f32 1.5, %v409
  %v411 = vmul.f32 %v406, %v410
  %vm412 = vweird.f32 %v371
  %vm413 = vweird.f32 %v406
  %vm414 = vmor %vm412, %vm413
  %v415 = vsel %vm414, %v406, %v411
  %v416 = vrsqrt.pop %v372
  %v417 = vmul.f32 %v416, %v372
  %v418 = vmul.f32 %v417, %v416
  %v419 = vmul.f32 0.5, %v418
  %v420 = vsub.f32 1.5, %v419
  %v421 = vmul.f32 %v416, %v420
  %vm422 = vweird.f32 %v372
  %vm423 = vweird.f32 %v416
  %vm424 = vmor %vm422, %vm423
  %v425 = vsel %vm424, %v416, %v421
  %v426 = vrsqrt.pop %v373
  %v427 = vmul.f32 %v426, %v373
  %v428 = vmul.f32 %v427, %v426
  %v429 = vmul.f32 0.5, %v428
  %v430 = vsub.f32 1.5, %v429
  %v431 = vmul.f32 %v426, %v430
  %vm432 = vweird.f32 %v373
  %vm433 = vweird.f32 %v426
  %vm434 = vmor %vm432, %vm433
  %v435 = vsel %vm434, %v426, %v431
  %v436 = vrsqrt.pop %v374
  %v437 = vmul.f32 %v436, %v374
  %v438 = vmul.f32 %v437, %v436
  %v439 = vmul.f32 0.5, %v438
  %v440 = vsub.f32 1.5, %v439
  %v441 = vmul.f32 %v436, %v440
  %vm442 = vweird.f32 %v374
  %vm443 = vweird.f32 %v436
  %vm444 = vmor %vm442, %vm443
  %v445 = vsel %vm444, %v436, %v441
  %v446 = vrsqrt.pop %v375
  %v447 = vmul.f32 %v446, %v375
  %v448 = vmul.f32 %v447, %v446
  %v449 = vmul.f32 0.5, %v448
  %v450 = vsub.f32 1.5, %v449
  %v451 = vmul.f32 %v446, %v450
  %vm452 = vweird.f32 %v375
  %vm453 = vweird.f32 %v446
  %vm454 = vmor %vm452, %vm453
  %v455 = vsel %vm454, %v446, %v451
  %v456 = vmul.f32 %v134, %v385
  %v457 = vmul.f32 %v147, %v395
  %v458 = vmul.f32 %v136, %v405
  %v459 = vmul.f32 %v148, %v415
  %v460 = vmul.f32 %v139, %v425
  %v461 = vmul.f32 %v149, %v435
  %v462 = vmul.f32 %v141, %v445
  %v463 = vmul.f32 %v150, %v455
  %465 = vst [vmem:[#allocation1] ss:$2 sm:$0xff] %v456
  %v466 = vld.sshfl [vmem:[#allocation1] sm:$0xff pattern:$0x75316420]
  %467 = vrot.lane.b32.xlu0 %v466, 96
  %v468 = vpop.permute.xlu0 %467
  %vm469 = vcmask 130048
  %v471 = vsel %vm469, %v285, 0
  %v473 = vsel %vm469, %v468, 0
  %475 = vmatpush.xpose.msra.mxu0 0.0
  %476 = vmatpush.xpose.msra.mxu0 0.0
  %477 = vmatpush.xpose.msra.mxu0 0.0
  %478 = vmatpush.xpose.msra.mxu0 0.0
  %479 = vmatpush.xpose.msra.mxu0 0.0
  %480 = vmatpush.xpose.msra.mxu0 0.0
  %481 = vmatpush.xpose.msra.mxu0 0.0
  %482 = vmatpush.xpose.msra.mxu0 0.0
  %483 = vmatpush.xpose.msra.mxu0 0.0
  %484 = vmatpush.xpose.msra.mxu0 0.0
  %485 = vmatpush.xpose.msra.mxu0 0.0
  %486 = vmatpush.xpose.msra.mxu0 0.0
  %487 = vmatpush.xpose.msra.mxu0 0.0
  %488 = vmatpush.xpose.msra.mxu0 0.0
  %489 = vmatpush.xpose.msra.mxu0 0.0
  %490 = vmatpush.xpose.msra.mxu0 %v473
  %491 = vmatmul.f32.gmra.mxu0 %v471
  %v492 = vpop.f32.mrf.mxu0
  %v493 = vadd.f32 0.0, %v492
  %494 = vdwg.mxu0
  %496 = vst [vmem:[#allocation1] ss:$2 sm:$0xff] %v457
  %v497 = vld.sshfl [vmem:[#allocation1] sm:$0xff pattern:$0x75316420]
  %498 = vrot.lane.b32.xlu0 %v497, 96
  %v499 = vpop.permute.xlu0 %498
  %v501 = vsel %vm469, %v286, 0
  %v503 = vsel %vm469, %v499, 0
  %505 = vmatpush.xpose.msra.mxu0 0.0
  %506 = vmatpush.xpose.msra.mxu0 0.0
  %507 = vmatpush.xpose.msra.mxu0 0.0
  %508 = vmatpush.xpose.msra.mxu0 0.0
  %509 = vmatpush.xpose.msra.mxu0 0.0
  %510 = vmatpush.xpose.msra.mxu0 0.0
  %511 = vmatpush.xpose.msra.mxu0 0.0
  %512 = vmatpush.xpose.msra.mxu0 0.0
  %513 = vmatpush.xpose.msra.mxu0 0.0
  %514 = vmatpush.xpose.msra.mxu0 0.0
  %515 = vmatpush.xpose.msra.mxu0 0.0
  %516 = vmatpush.xpose.msra.mxu0 0.0
  %517 = vmatpush.xpose.msra.mxu0 0.0
  %518 = vmatpush.xpose.msra.mxu0 0.0
  %519 = vmatpush.xpose.msra.mxu0 0.0
  %520 = vmatpush.xpose.msra.mxu0 %v503
  %521 = vmatmul.f32.gmra.mxu0 %v501
  %v522 = vpop.f32.mrf.mxu0
  %v523 = vadd.f32 0.0, %v522
  %524 = vdwg.mxu0
  %526 = vst [vmem:[#allocation1] ss:$2 sm:$0xff] %v458
  %v527 = vld.sshfl [vmem:[#allocation1] sm:$0xff pattern:$0x75316420]
  %528 = vrot.lane.b32.xlu0 %v527, 96
  %v529 = vpop.permute.xlu0 %528
  %v531 = vsel %vm469, %v287, 0
  %v533 = vsel %vm469, %v529, 0
  %535 = vmatpush.xpose.msra.mxu0 0.0
  %536 = vmatpush.xpose.msra.mxu0 0.0
  %537 = vmatpush.xpose.msra.mxu0 0.0
  %538 = vmatpush.xpose.msra.mxu0 0.0
  %539 = vmatpush.xpose.msra.mxu0 0.0
  %540 = vmatpush.xpose.msra.mxu0 0.0
  %541 = vmatpush.xpose.msra.mxu0 0.0
  %542 = vmatpush.xpose.msra.mxu0 0.0
  %543 = vmatpush.xpose.msra.mxu0 0.0
  %544 = vmatpush.xpose.msra.mxu0 0.0
  %545 = vmatpush.xpose.msra.mxu0 0.0
  %546 = vmatpush.xpose.msra.mxu0 0.0
  %547 = vmatpush.xpose.msra.mxu0 0.0
  %548 = vmatpush.xpose.msra.mxu0 0.0
  %549 = vmatpush.xpose.msra.mxu0 0.0
  %550 = vmatpush.xpose.msra.mxu0 %v533
  %551 = vmatmul.f32.gmra.mxu0 %v531
  %v552 = vpop.f32.mrf.mxu0
  %v553 = vadd.f32 0.0, %v552
  %554 = vdwg.mxu0
  %556 = vst [vmem:[#allocation1] ss:$2 sm:$0xff] %v459
  %v557 = vld.sshfl [vmem:[#allocation1] sm:$0xff pattern:$0x75316420]
  %558 = vrot.lane.b32.xlu0 %v557, 96
  %v559 = vpop.permute.xlu0 %558
  %v561 = vsel %vm469, %v288, 0
  %v563 = vsel %vm469, %v559, 0
  %565 = vmatpush.xpose.msra.mxu0 0.0
  %566 = vmatpush.xpose.msra.mxu0 0.0
  %567 = vmatpush.xpose.msra.mxu0 0.0
  %568 = vmatpush.xpose.msra.mxu0 0.0
  %569 = vmatpush.xpose.msra.mxu0 0.0
  %570 = vmatpush.xpose.msra.mxu0 0.0
  %571 = vmatpush.xpose.msra.mxu0 0.0
  %572 = vmatpush.xpose.msra.mxu0 0.0
  %573 = vmatpush.xpose.msra.mxu0 0.0
  %574 = vmatpush.xpose.msra.mxu0 0.0
  %575 = vmatpush.xpose.msra.mxu0 0.0
  %576 = vmatpush.xpose.msra.mxu0 0.0
  %577 = vmatpush.xpose.msra.mxu0 0.0
  %578 = vmatpush.xpose.msra.mxu0 0.0
  %579 = vmatpush.xpose.msra.mxu0 0.0
  %580 = vmatpush.xpose.msra.mxu0 %v563
  %581 = vmatmul.f32.gmra.mxu0 %v561
  %v582 = vpop.f32.mrf.mxu0
  %v583 = vadd.f32 0.0, %v582
  %584 = vdwg.mxu0
  %586 = vst [vmem:[#allocation1] ss:$2 sm:$0xff] %v460
  %v587 = vld.sshfl [vmem:[#allocation1] sm:$0xff pattern:$0x75316420]
  %588 = vrot.lane.b32.xlu0 %v587, 96
  %v589 = vpop.permute.xlu0 %588
  %v591 = vsel %vm469, %v289, 0
  %v593 = vsel %vm469, %v589, 0
  %595 = vmatpush.xpose.msra.mxu0 0.0
  %596 = vmatpush.xpose.msra.mxu0 0.0
  %597 = vmatpush.xpose.msra.mxu0 0.0
  %598 = vmatpush.xpose.msra.mxu0 0.0
  %599 = vmatpush.xpose.msra.mxu0 0.0
  %600 = vmatpush.xpose.msra.mxu0 0.0
  %601 = vmatpush.xpose.msra.mxu0 0.0
  %602 = vmatpush.xpose.msra.mxu0 0.0
  %603 = vmatpush.xpose.msra.mxu0 0.0
  %604 = vmatpush.xpose.msra.mxu0 0.0
  %605 = vmatpush.xpose.msra.mxu0 0.0
  %606 = vmatpush.xpose.msra.mxu0 0.0
  %607 = vmatpush.xpose.msra.mxu0 0.0
  %608 = vmatpush.xpose.msra.mxu0 0.0
  %609 = vmatpush.xpose.msra.mxu0 0.0
  %610 = vmatpush.xpose.msra.mxu0 %v593
  %611 = vmatmul.f32.gmra.mxu0 %v591
  %v612 = vpop.f32.mrf.mxu0
  %v613 = vadd.f32 0.0, %v612
  %614 = vdwg.mxu0
  %616 = vst [vmem:[#allocation1] ss:$2 sm:$0xff] %v461
  %v617 = vld.sshfl [vmem:[#allocation1] sm:$0xff pattern:$0x75316420]
  %618 = vrot.lane.b32.xlu0 %v617, 96
  %v619 = vpop.permute.xlu0 %618
  %v621 = vsel %vm469, %v290, 0
  %v623 = vsel %vm469, %v619, 0
  %625 = vmatpush.xpose.msra.mxu0 0.0
  %626 = vmatpush.xpose.msra.mxu0 0.0
  %627 = vmatpush.xpose.msra.mxu0 0.0
  %628 = vmatpush.xpose.msra.mxu0 0.0
  %629 = vmatpush.xpose.msra.mxu0 0.0
  %630 = vmatpush.xpose.msra.mxu0 0.0
  %631 = vmatpush.xpose.msra.mxu0 0.0
  %632 = vmatpush.xpose.msra.mxu0 0.0
  %633 = vmatpush.xpose.msra.mxu0 0.0
  %634 = vmatpush.xpose.msra.mxu0 0.0
  %635 = vmatpush.xpose.msra.mxu0 0.0
  %636 = vmatpush.xpose.msra.mxu0 0.0
  %637 = vmatpush.xpose.msra.mxu0 0.0
  %638 = vmatpush.xpose.msra.mxu0 0.0
  %639 = vmatpush.xpose.msra.mxu0 0.0
  %640 = vmatpush.xpose.msra.mxu0 %v623
  %641 = vmatmul.f32.gmra.mxu0 %v621
  %v642 = vpop.f32.mrf.mxu0
  %v643 = vadd.f32 0.0, %v642
  %644 = vdwg.mxu0
  %646 = vst [vmem:[#allocation1] ss:$2 sm:$0xff] %v462
  %v647 = vld.sshfl [vmem:[#allocation1] sm:$0xff pattern:$0x75316420]
  %648 = vrot.lane.b32.xlu0 %v647, 96
  %v649 = vpop.permute.xlu0 %648
  %v651 = vsel %vm469, %v291, 0
  %v653 = vsel %vm469, %v649, 0
  %655 = vmatpush.xpose.msra.mxu0 0.0
  %656 = vmatpush.xpose.msra.mxu0 0.0
  %657 = vmatpush.xpose.msra.mxu0 0.0
  %658 = vmatpush.xpose.msra.mxu0 0.0
  %659 = vmatpush.xpose.msra.mxu0 0.0
  %660 = vmatpush.xpose.msra.mxu0 0.0
  %661 = vmatpush.xpose.msra.mxu0 0.0
  %662 = vmatpush.xpose.msra.mxu0 0.0
  %663 = vmatpush.xpose.msra.mxu0 0.0
  %664 = vmatpush.xpose.msra.mxu0 0.0
  %665 = vmatpush.xpose.msra.mxu0 0.0
  %666 = vmatpush.xpose.msra.mxu0 0.0
  %667 = vmatpush.xpose.msra.mxu0 0.0
  %668 = vmatpush.xpose.msra.mxu0 0.0
  %669 = vmatpush.xpose.msra.mxu0 0.0
  %670 = vmatpush.xpose.msra.mxu0 %v653
  %671 = vmatmul.f32.gmra.mxu0 %v651
  %v672 = vpop.f32.mrf.mxu0
  %v673 = vadd.f32 0.0, %v672
  %674 = vdwg.mxu0
  %676 = vst [vmem:[#allocation1] ss:$2 sm:$0xff] %v463
  %v677 = vld.sshfl [vmem:[#allocation1] sm:$0xff pattern:$0x75316420]
  %678 = vrot.lane.b32.xlu0 %v677, 96
  %v679 = vpop.permute.xlu0 %678
  %v681 = vsel %vm469, %v292, 0
  %v683 = vsel %vm469, %v679, 0
  %685 = vmatpush.xpose.msra.mxu0 0.0
  %686 = vmatpush.xpose.msra.mxu0 0.0
  %687 = vmatpush.xpose.msra.mxu0 0.0
  %688 = vmatpush.xpose.msra.mxu0 0.0
  %689 = vmatpush.xpose.msra.mxu0 0.0
  %690 = vmatpush.xpose.msra.mxu0 0.0
  %691 = vmatpush.xpose.msra.mxu0 0.0
  %692 = vmatpush.xpose.msra.mxu0 0.0
  %693 = vmatpush.xpose.msra.mxu0 0.0
  %694 = vmatpush.xpose.msra.mxu0 0.0
  %695 = vmatpush.xpose.msra.mxu0 0.0
  %696 = vmatpush.xpose.msra.mxu0 0.0
  %697 = vmatpush.xpose.msra.mxu0 0.0
  %698 = vmatpush.xpose.msra.mxu0 0.0
  %699 = vmatpush.xpose.msra.mxu0 0.0
  %700 = vmatpush.xpose.msra.mxu0 %v683
  %701 = vmatmul.f32.gmra.mxu0 %v681
  %v702 = vpop.f32.mrf.mxu0
  %v703 = vadd.f32 0.0, %v702
  %704 = vdwg.mxu0
  %s705 = vtos %v155
  %v706 = vstv %s705
  %v707 = vmul.f32 %v493, %v706
  %v708 = vmul.f32 %v523, %v706
  %v709 = vmul.f32 %v553, %v706
  %v710 = vmul.f32 %v583, %v706
  %v711 = vmul.f32 %v613, %v706
  %v712 = vmul.f32 %v643, %v706
  %v713 = vmul.f32 %v673, %v706
  %v714 = vmul.f32 %v703, %v706
  %v715 = vld [vmem:[%s4] sm:$0xf]
  %v716 = vadd.f32 %v707, %v715
  %v717 = vadd.f32 %v708, %v715
  %v718 = vadd.f32 %v709, %v715
  %v719 = vadd.f32 %v710, %v715
  %v720 = vadd.f32 %v711, %v715
  %v721 = vadd.f32 %v712, %v715
  %v722 = vadd.f32 %v713, %v715
  %v723 = vadd.f32 %v714, %v715
  %v724 = vadd.f32 %v716, %v156
  %v725 = vadd.f32 %v717, %v157
  %v726 = vadd.f32 %v718, %v158
  %v727 = vadd.f32 %v719, %v159
  %v728 = vadd.f32 %v720, %v160
  %v729 = vadd.f32 %v721, %v161
  %v730 = vadd.f32 %v722, %v162
  %v731 = vadd.f32 %v723, %v163
  %vm732 = vcmask 27648
  %v733 = vsel %vm732, %v724, -inf
  %734 = vmax.xlane.f32.xlu0 %v733
  %v735 = vpop.xlane.xlu0 %734
  %v736 = vsel %vm732, %v725, -inf
  %737 = vmax.xlane.f32.xlu0 %v736
  %v738 = vpop.xlane.xlu0 %737
  %v739 = vsel %vm732, %v726, -inf
  %740 = vmax.xlane.f32.xlu0 %v739
  %v741 = vpop.xlane.xlu0 %740
  %v742 = vsel %vm732, %v727, -inf
  %743 = vmax.xlane.f32.xlu0 %v742
  %v744 = vpop.xlane.xlu0 %743
  %v745 = vsel %vm732, %v728, -inf
  %746 = vmax.xlane.f32.xlu0 %v745
  %v747 = vpop.xlane.xlu0 %746
  %v748 = vsel %vm732, %v729, -inf
  %749 = vmax.xlane.f32.xlu0 %v748
  %v750 = vpop.xlane.xlu0 %749
  %v751 = vsel %vm732, %v730, -inf
  %752 = vmax.xlane.f32.xlu0 %v751
  %v753 = vpop.xlane.xlu0 %752
  %v754 = vsel %vm732, %v731, -inf
  %755 = vmax.xlane.f32.xlu0 %v754
  %v756 = vpop.xlane.xlu0 %755
  %v757 = vsub.f32 %v724, %v735
  %v758 = vsub.f32 %v725, %v738
  %v759 = vsub.f32 %v726, %v741
  %v760 = vsub.f32 %v727, %v744
  %v761 = vsub.f32 %v728, %v747
  %v762 = vsub.f32 %v729, %v750
  %v763 = vsub.f32 %v730, %v753
  %v764 = vsub.f32 %v731, %v756
  %v765 = vmul.f32 %v757, 1.442695
  %v766 = vpow.pop %v765
  %v767 = vmul.f32 %v758, 1.442695
  %v768 = vpow.pop %v767
  %v769 = vmul.f32 %v759, 1.442695
  %v770 = vpow.pop %v769
  %v771 = vmul.f32 %v760, 1.442695
  %v772 = vpow.pop %v771
  %v773 = vmul.f32 %v761, 1.442695
  %v774 = vpow.pop %v773
  %v775 = vmul.f32 %v762, 1.442695
  %v776 = vpow.pop %v775
  %v777 = vmul.f32 %v763, 1.442695
  %v778 = vpow.pop %v777
  %v779 = vmul.f32 %v764, 1.442695
  %v780 = vpow.pop %v779
  %v781 = vsel %vm732, %v766, 0.0
  %782 = vadd.xlane.f32.xlu0 %v781
  %v783 = vpop.xlane.xlu0 %782
  %v784 = vsel %vm732, %v768, 0.0
  %785 = vadd.xlane.f32.xlu0 %v784
  %v786 = vpop.xlane.xlu0 %785
  %v787 = vsel %vm732, %v770, 0.0
  %788 = vadd.xlane.f32.xlu0 %v787
  %v789 = vpop.xlane.xlu0 %788
  %v790 = vsel %vm732, %v772, 0.0
  %791 = vadd.xlane.f32.xlu0 %v790
  %v792 = vpop.xlane.xlu0 %791
  %v793 = vsel %vm732, %v774, 0.0
  %794 = vadd.xlane.f32.xlu0 %v793
  %v795 = vpop.xlane.xlu0 %794
  %v796 = vsel %vm732, %v776, 0.0
  %797 = vadd.xlane.f32.xlu0 %v796
  %v798 = vpop.xlane.xlu0 %797
  %v799 = vsel %vm732, %v778, 0.0
  %800 = vadd.xlane.f32.xlu0 %v799
  %v801 = vpop.xlane.xlu0 %800
  %v802 = vsel %vm732, %v780, 0.0
  %803 = vadd.xlane.f32.xlu0 %v802
  %v804 = vpop.xlane.xlu0 %803
  %v805 = vrcp.pop %v783
  %v806 = vrcp.pop %v786
  %v807 = vrcp.pop %v789
  %v808 = vrcp.pop %v792
  %v809 = vrcp.pop %v795
  %v810 = vrcp.pop %v798
  %v811 = vrcp.pop %v801
  %v812 = vrcp.pop %v804
  %v813 = vmul.f32 %v766, %v805
  %v814 = vmul.f32 %v768, %v806
  %v815 = vmul.f32 %v770, %v807
  %v816 = vmul.f32 %v772, %v808
  %v817 = vmul.f32 %v774, %v809
  %v818 = vmul.f32 %v776, %v810
  %v819 = vmul.f32 %v778, %v811
  %v820 = vmul.f32 %v780, %v812
  %v821 = vpack.c.bf16 %v813, %v813
  %v822 = vpack.c.bf16 %v814, %v814
  %v823 = vpack.c.bf16 %v815, %v815
  %v824 = vpack.c.bf16 %v816, %v816
  %v825 = vpack.c.bf16 %v817, %v817
  %v826 = vpack.c.bf16 %v818, %v818
  %v827 = vpack.c.bf16 %v819, %v819
  %v828 = vpack.c.bf16 %v820, %v820
  %v829 = vpack.c.bf16 %v134, %v134
  %v830 = vpack.c.bf16 %v147, %v147
  %v831 = vpack.c.bf16 %v136, %v136
  %v832 = vpack.c.bf16 %v148, %v148
  %v833 = vpack.c.bf16 %v139, %v139
  %v834 = vpack.c.bf16 %v149, %v149
  %v835 = vpack.c.bf16 %v141, %v141
  %v836 = vpack.c.bf16 %v150, %v150
  %v838 = vunpack.c.l.b16 %v829
  %v839 = vpack.c.b16 %v838, %v838
  %840 = vrot.lane.b32.xlu0 %v839, 64
  %v841 = vpop.permute.xlu0 %840
  %vm842 = vcmask 31744
  %v844 = vsel %vm842, %v821, 0
  %vm846 = vcmask 1041408
  %v848 = vsel %vm846, %v841, 0
  %850 = vmatpush.bf16.msra.mxu0 0
  %851 = vmatpush.bf16.msra.mxu0 0
  %852 = vmatpush.bf16.msra.mxu0 0
  %853 = vmatpush.bf16.msra.mxu0 0
  %854 = vmatpush.bf16.msra.mxu0 0
  %855 = vmatpush.bf16.msra.mxu0 0
  %856 = vmatpush.bf16.msra.mxu0 0
  %857 = vmatpush.bf16.msra.mxu0 %v848
  %858 = vmatmul.bf16.gmra.mxu0 %v844
  %v859 = vpop.f32.mrf.mxu0
  %v860 = vadd.f32 0.0, %v859
  %v861 = vpop.f32.mrf.mxu0
  %862 = vdwg.mxu0
  %v864 = vunpack.c.l.b16 %v830
  %v865 = vpack.c.b16 %v864, %v864
  %866 = vrot.lane.b32.xlu0 %v865, 64
  %v867 = vpop.permute.xlu0 %866
  %v869 = vsel %vm842, %v822, 0
  %v872 = vsel %vm846, %v867, 0
  %874 = vmatpush.bf16.msra.mxu0 0
  %875 = vmatpush.bf16.msra.mxu0 0
  %876 = vmatpush.bf16.msra.mxu0 0
  %877 = vmatpush.bf16.msra.mxu0 0
  %878 = vmatpush.bf16.msra.mxu0 0
  %879 = vmatpush.bf16.msra.mxu0 0
  %880 = vmatpush.bf16.msra.mxu0 0
  %881 = vmatpush.bf16.msra.mxu0 %v872
  %882 = vmatmul.bf16.gmra.mxu0 %v869
  %v883 = vpop.f32.mrf.mxu0
  %v884 = vadd.f32 0.0, %v883
  %v885 = vpop.f32.mrf.mxu0
  %886 = vdwg.mxu0
  %v888 = vunpack.c.l.b16 %v831
  %v889 = vpack.c.b16 %v888, %v888
  %890 = vrot.lane.b32.xlu0 %v889, 64
  %v891 = vpop.permute.xlu0 %890
  %v893 = vsel %vm842, %v823, 0
  %v896 = vsel %vm846, %v891, 0
  %898 = vmatpush.bf16.msra.mxu0 0
  %899 = vmatpush.bf16.msra.mxu0 0
  %900 = vmatpush.bf16.msra.mxu0 0
  %901 = vmatpush.bf16.msra.mxu0 0
  %902 = vmatpush.bf16.msra.mxu0 0
  %903 = vmatpush.bf16.msra.mxu0 0
  %904 = vmatpush.bf16.msra.mxu0 0
  %905 = vmatpush.bf16.msra.mxu0 %v896
  %906 = vmatmul.bf16.gmra.mxu0 %v893
  %v907 = vpop.f32.mrf.mxu0
  %v908 = vadd.f32 0.0, %v907
  %v909 = vpop.f32.mrf.mxu0
  %910 = vdwg.mxu0
  %v912 = vunpack.c.l.b16 %v832
  %v913 = vpack.c.b16 %v912, %v912
  %914 = vrot.lane.b32.xlu0 %v913, 64
  %v915 = vpop.permute.xlu0 %914
  %v917 = vsel %vm842, %v824, 0
  %v920 = vsel %vm846, %v915, 0
  %922 = vmatpush.bf16.msra.mxu0 0
  %923 = vmatpush.bf16.msra.mxu0 0
  %924 = vmatpush.bf16.msra.mxu0 0
  %925 = vmatpush.bf16.msra.mxu0 0
  %926 = vmatpush.bf16.msra.mxu0 0
  %927 = vmatpush.bf16.msra.mxu0 0
  %928 = vmatpush.bf16.msra.mxu0 0
  %929 = vmatpush.bf16.msra.mxu0 %v920
  %930 = vmatmul.bf16.gmra.mxu0 %v917
  %v931 = vpop.f32.mrf.mxu0
  %v932 = vadd.f32 0.0, %v931
  %v933 = vpop.f32.mrf.mxu0
  %934 = vdwg.mxu0
  %v936 = vunpack.c.l.b16 %v833
  %v937 = vpack.c.b16 %v936, %v936
  %938 = vrot.lane.b32.xlu0 %v937, 64
  %v939 = vpop.permute.xlu0 %938
  %v941 = vsel %vm842, %v825, 0
  %v944 = vsel %vm846, %v939, 0
  %946 = vmatpush.bf16.msra.mxu0 0
  %947 = vmatpush.bf16.msra.mxu0 0
  %948 = vmatpush.bf16.msra.mxu0 0
  %949 = vmatpush.bf16.msra.mxu0 0
  %950 = vmatpush.bf16.msra.mxu0 0
  %951 = vmatpush.bf16.msra.mxu0 0
  %952 = vmatpush.bf16.msra.mxu0 0
  %953 = vmatpush.bf16.msra.mxu0 %v944
  %954 = vmatmul.bf16.gmra.mxu0 %v941
  %v955 = vpop.f32.mrf.mxu0
  %v956 = vadd.f32 0.0, %v955
  %v957 = vpop.f32.mrf.mxu0
  %958 = vdwg.mxu0
  %v960 = vunpack.c.l.b16 %v834
  %v961 = vpack.c.b16 %v960, %v960
  %962 = vrot.lane.b32.xlu0 %v961, 64
  %v963 = vpop.permute.xlu0 %962
  %v965 = vsel %vm842, %v826, 0
  %v968 = vsel %vm846, %v963, 0
  %970 = vmatpush.bf16.msra.mxu0 0
  %971 = vmatpush.bf16.msra.mxu0 0
  %972 = vmatpush.bf16.msra.mxu0 0
  %973 = vmatpush.bf16.msra.mxu0 0
  %974 = vmatpush.bf16.msra.mxu0 0
  %975 = vmatpush.bf16.msra.mxu0 0
  %976 = vmatpush.bf16.msra.mxu0 0
  %977 = vmatpush.bf16.msra.mxu0 %v968
  %978 = vmatmul.bf16.gmra.mxu0 %v965
  %v979 = vpop.f32.mrf.mxu0
  %v980 = vadd.f32 0.0, %v979
  %v981 = vpop.f32.mrf.mxu0
  %982 = vdwg.mxu0
  %v984 = vunpack.c.l.b16 %v835
  %v985 = vpack.c.b16 %v984, %v984
  %986 = vrot.lane.b32.xlu0 %v985, 64
  %v987 = vpop.permute.xlu0 %986
  %v989 = vsel %vm842, %v827, 0
  %v992 = vsel %vm846, %v987, 0
  %994 = vmatpush.bf16.msra.mxu0 0
  %995 = vmatpush.bf16.msra.mxu0 0
  %996 = vmatpush.bf16.msra.mxu0 0
  %997 = vmatpush.bf16.msra.mxu0 0
  %998 = vmatpush.bf16.msra.mxu0 0
  %999 = vmatpush.bf16.msra.mxu0 0
  %1000 = vmatpush.bf16.msra.mxu0 0
  %1001 = vmatpush.bf16.msra.mxu0 %v992
  %1002 = vmatmul.bf16.gmra.mxu0 %v989
  %v1003 = vpop.f32.mrf.mxu0
  %v1004 = vadd.f32 0.0, %v1003
  %v1005 = vpop.f32.mrf.mxu0
  %1006 = vdwg.mxu0
  %v1008 = vunpack.c.l.b16 %v836
  %v1009 = vpack.c.b16 %v1008, %v1008
  %1010 = vrot.lane.b32.xlu0 %v1009, 64
  %v1011 = vpop.permute.xlu0 %1010
  %v1013 = vsel %vm842, %v828, 0
  %v1016 = vsel %vm846, %v1011, 0
  %1018 = vmatpush.bf16.msra.mxu0 0
  %1019 = vmatpush.bf16.msra.mxu0 0
  %1020 = vmatpush.bf16.msra.mxu0 0
  %1021 = vmatpush.bf16.msra.mxu0 0
  %1022 = vmatpush.bf16.msra.mxu0 0
  %1023 = vmatpush.bf16.msra.mxu0 0
  %1024 = vmatpush.bf16.msra.mxu0 0
  %1025 = vmatpush.bf16.msra.mxu0 %v1016
  %1026 = vmatmul.bf16.gmra.mxu0 %v1013
  %v1027 = vpop.f32.mrf.mxu0
  %v1028 = vadd.f32 0.0, %v1027
  %v1029 = vpop.f32.mrf.mxu0
  %1030 = vdwg.mxu0
  %1031 = vst [vmem:[#allocation1] ss:$2 sm:$0xff] %v164
  %v1032 = vld.sshfl [vmem:[#allocation1] sm:$0xff pattern:$0x75316420]
  %s1033 = scalar_lea.vmem [#allocation1], 16
  %1034 = vst [vmem:[%s1033] ss:$2 sm:$0xff] %v165
  %v1035 = vld.sshfl [vmem:[#allocation1 + $0x10] sm:$0xff pattern:$0x75316420]
  %s1036 = scalar_lea.vmem [#allocation1], 32
  %1037 = vst [vmem:[%s1036] ss:$2 sm:$0xff] %v166
  %v1038 = vld.sshfl [vmem:[#allocation1 + $0x20] sm:$0xff pattern:$0x75316420]
  %s1039 = scalar_lea.vmem [#allocation1], 48
  %1040 = vst [vmem:[%s1039] ss:$2 sm:$0xff] %v167
  %v1041 = vld.sshfl [vmem:[#allocation1 + $0x30] sm:$0xff pattern:$0x75316420]
  %1042 = vst [vmem:[#allocation1] ss:$2 sm:$0xff] %v168
  %v1043 = vld.sshfl [vmem:[#allocation1] sm:$0xff pattern:$0x75316420]
  %1044 = vst [vmem:[%s1033] ss:$2 sm:$0xff] %v169
  %v1045 = vld.sshfl [vmem:[#allocation1 + $0x10] sm:$0xff pattern:$0x75316420]
  %1046 = vst [vmem:[%s1036] ss:$2 sm:$0xff] %v170
  %v1047 = vld.sshfl [vmem:[#allocation1 + $0x20] sm:$0xff pattern:$0x75316420]
  %1048 = vst [vmem:[%s1039] ss:$2 sm:$0xff] %v171
  %v1049 = vld.sshfl [vmem:[#allocation1 + $0x30] sm:$0xff pattern:$0x75316420]
  %1050 = vrot.lane.b32.xlu0 %v1032, 112
  %v1051 = vpop.permute.xlu0 %1050
  %1052 = vrot.lane.b32.xlu0 %v1035, 112
  %v1053 = vpop.permute.xlu0 %1052
  %1054 = vrot.lane.b32.xlu0 %v1038, 112
  %v1055 = vpop.permute.xlu0 %1054
  %1056 = vrot.lane.b32.xlu0 %v1041, 112
  %v1057 = vpop.permute.xlu0 %1056
  %1058 = vrot.lane.b32.xlu0 %v1043, 112
  %v1059 = vpop.permute.xlu0 %1058
  %1060 = vrot.lane.b32.xlu0 %v1045, 112
  %v1061 = vpop.permute.xlu0 %1060
  %1062 = vrot.lane.b32.xlu0 %v1047, 112
  %v1063 = vpop.permute.xlu0 %1062
  %1064 = vrot.lane.b32.xlu0 %v1049, 112
  %v1065 = vpop.permute.xlu0 %1064
  %v1074 = vsel %vm172, %v1051, 0.0
  %1075 = vadd.xlane.f32.xlu0 %v1074
  %v1076 = vpop.xlane.xlu0 %1075
  %v1077 = vsel %vm172, %v1053, 0.0
  %1078 = vadd.xlane.f32.xlu0 %v1077
  %v1079 = vpop.xlane.xlu0 %1078
  %v1080 = vsel %vm172, %v1055, 0.0
  %1081 = vadd.xlane.f32.xlu0 %v1080
  %v1082 = vpop.xlane.xlu0 %1081
  %v1083 = vsel %vm172, %v1057, 0.0
  %1084 = vadd.xlane.f32.xlu0 %v1083
  %v1085 = vpop.xlane.xlu0 %1084
  %v1086 = vsel %vm172, %v1059, 0.0
  %1087 = vadd.xlane.f32.xlu0 %v1086
  %v1088 = vpop.xlane.xlu0 %1087
  %v1089 = vsel %vm172, %v1061, 0.0
  %1090 = vadd.xlane.f32.xlu0 %v1089
  %v1091 = vpop.xlane.xlu0 %1090
  %v1092 = vsel %vm172, %v1063, 0.0
  %1093 = vadd.xlane.f32.xlu0 %v1092
  %v1094 = vpop.xlane.xlu0 %1093
  %v1095 = vsel %vm172, %v1065, 0.0
  %1096 = vadd.xlane.f32.xlu0 %v1095
  %v1097 = vpop.xlane.xlu0 %1096
  %v1098 = vmax.f32 %v1076, 1e-24
  %v1099 = vmax.f32 %v1079, 1e-24
  %v1100 = vmax.f32 %v1082, 1e-24
  %v1101 = vmax.f32 %v1085, 1e-24
  %v1102 = vmax.f32 %v1088, 1e-24
  %v1103 = vmax.f32 %v1091, 1e-24
  %v1104 = vmax.f32 %v1094, 1e-24
  %v1105 = vmax.f32 %v1097, 1e-24
  %v1106 = vrsqrt.pop %v1098
  %v1107 = vmul.f32 %v1106, %v1098
  %v1108 = vmul.f32 %v1107, %v1106
  %v1109 = vmul.f32 0.5, %v1108
  %v1110 = vsub.f32 1.5, %v1109
  %v1111 = vmul.f32 %v1106, %v1110
  %vm1112 = vweird.f32 %v1098
  %vm1113 = vweird.f32 %v1106
  %vm1114 = vmor %vm1112, %vm1113
  %v1115 = vsel %vm1114, %v1106, %v1111
  %v1116 = vrsqrt.pop %v1099
  %v1117 = vmul.f32 %v1116, %v1099
  %v1118 = vmul.f32 %v1117, %v1116
  %v1119 = vmul.f32 0.5, %v1118
  %v1120 = vsub.f32 1.5, %v1119
  %v1121 = vmul.f32 %v1116, %v1120
  %vm1122 = vweird.f32 %v1099
  %vm1123 = vweird.f32 %v1116
  %vm1124 = vmor %vm1122, %vm1123
  %v1125 = vsel %vm1124, %v1116, %v1121
  %v1126 = vrsqrt.pop %v1100
  %v1127 = vmul.f32 %v1126, %v1100
  %v1128 = vmul.f32 %v1127, %v1126
  %v1129 = vmul.f32 0.5, %v1128
  %v1130 = vsub.f32 1.5, %v1129
  %v1131 = vmul.f32 %v1126, %v1130
  %vm1132 = vweird.f32 %v1100
  %vm1133 = vweird.f32 %v1126
  %vm1134 = vmor %vm1132, %vm1133
  %v1135 = vsel %vm1134, %v1126, %v1131
  %v1136 = vrsqrt.pop %v1101
  %v1137 = vmul.f32 %v1136, %v1101
  %v1138 = vmul.f32 %v1137, %v1136
  %v1139 = vmul.f32 0.5, %v1138
  %v1140 = vsub.f32 1.5, %v1139
  %v1141 = vmul.f32 %v1136, %v1140
  %vm1142 = vweird.f32 %v1101
  %vm1143 = vweird.f32 %v1136
  %vm1144 = vmor %vm1142, %vm1143
  %v1145 = vsel %vm1144, %v1136, %v1141
  %v1146 = vrsqrt.pop %v1102
  %v1147 = vmul.f32 %v1146, %v1102
  %v1148 = vmul.f32 %v1147, %v1146
  %v1149 = vmul.f32 0.5, %v1148
  %v1150 = vsub.f32 1.5, %v1149
  %v1151 = vmul.f32 %v1146, %v1150
  %vm1152 = vweird.f32 %v1102
  %vm1153 = vweird.f32 %v1146
  %vm1154 = vmor %vm1152, %vm1153
  %v1155 = vsel %vm1154, %v1146, %v1151
  %v1156 = vrsqrt.pop %v1103
  %v1157 = vmul.f32 %v1156, %v1103
  %v1158 = vmul.f32 %v1157, %v1156
  %v1159 = vmul.f32 0.5, %v1158
  %v1160 = vsub.f32 1.5, %v1159
  %v1161 = vmul.f32 %v1156, %v1160
  %vm1162 = vweird.f32 %v1103
  %vm1163 = vweird.f32 %v1156
  %vm1164 = vmor %vm1162, %vm1163
  %v1165 = vsel %vm1164, %v1156, %v1161
  %v1166 = vrsqrt.pop %v1104
  %v1167 = vmul.f32 %v1166, %v1104
  %v1168 = vmul.f32 %v1167, %v1166
  %v1169 = vmul.f32 0.5, %v1168
  %v1170 = vsub.f32 1.5, %v1169
  %v1171 = vmul.f32 %v1166, %v1170
  %vm1172 = vweird.f32 %v1104
  %vm1173 = vweird.f32 %v1166
  %vm1174 = vmor %vm1172, %vm1173
  %v1175 = vsel %vm1174, %v1166, %v1171
  %v1176 = vrsqrt.pop %v1105
  %v1177 = vmul.f32 %v1176, %v1105
  %v1178 = vmul.f32 %v1177, %v1176
  %v1179 = vmul.f32 0.5, %v1178
  %v1180 = vsub.f32 1.5, %v1179
  %v1181 = vmul.f32 %v1176, %v1180
  %vm1182 = vweird.f32 %v1105
  %vm1183 = vweird.f32 %v1176
  %vm1184 = vmor %vm1182, %vm1183
  %v1185 = vsel %vm1184, %v1176, %v1181
  %v1186 = vmul.f32 %v134, %v1115
  %v1187 = vmul.f32 %v147, %v1125
  %v1188 = vmul.f32 %v136, %v1135
  %v1189 = vmul.f32 %v148, %v1145
  %v1190 = vmul.f32 %v139, %v1155
  %v1191 = vmul.f32 %v149, %v1165
  %v1192 = vmul.f32 %v141, %v1175
  %v1193 = vmul.f32 %v150, %v1185
  %1194 = vst [vmem:[#allocation1] ss:$2 sm:$0xff] %v164
  %v1195 = vld.sshfl [vmem:[#allocation1] sm:$0xff pattern:$0x75316420]
  %s1196 = scalar_lea.vmem [#allocation1], 16
  %1197 = vst [vmem:[%s1196] ss:$2 sm:$0xff] %v165
  %v1198 = vld.sshfl [vmem:[#allocation1 + $0x10] sm:$0xff pattern:$0x75316420]
  %s1199 = scalar_lea.vmem [#allocation1], 32
  %1200 = vst [vmem:[%s1199] ss:$2 sm:$0xff] %v166
  %v1201 = vld.sshfl [vmem:[#allocation1 + $0x20] sm:$0xff pattern:$0x75316420]
  %s1202 = scalar_lea.vmem [#allocation1], 48
  %1203 = vst [vmem:[%s1202] ss:$2 sm:$0xff] %v167
  %v1204 = vld.sshfl [vmem:[#allocation1 + $0x30] sm:$0xff pattern:$0x75316420]
  %1205 = vst [vmem:[#allocation1] ss:$2 sm:$0xff] %v168
  %v1206 = vld.sshfl [vmem:[#allocation1] sm:$0xff pattern:$0x75316420]
  %1207 = vst [vmem:[%s1196] ss:$2 sm:$0xff] %v169
  %v1208 = vld.sshfl [vmem:[#allocation1 + $0x10] sm:$0xff pattern:$0x75316420]
  %1209 = vst [vmem:[%s1199] ss:$2 sm:$0xff] %v170
  %v1210 = vld.sshfl [vmem:[#allocation1 + $0x20] sm:$0xff pattern:$0x75316420]
  %1211 = vst [vmem:[%s1202] ss:$2 sm:$0xff] %v171
  %v1212 = vld.sshfl [vmem:[#allocation1 + $0x30] sm:$0xff pattern:$0x75316420]
  %1213 = vrot.lane.b32.xlu0 %v1195, 80
  %v1214 = vpop.permute.xlu0 %1213
  %1215 = vrot.lane.b32.xlu0 %v1198, 80
  %v1216 = vpop.permute.xlu0 %1215
  %1217 = vrot.lane.b32.xlu0 %v1201, 80
  %v1218 = vpop.permute.xlu0 %1217
  %1219 = vrot.lane.b32.xlu0 %v1204, 80
  %v1220 = vpop.permute.xlu0 %1219
  %1221 = vrot.lane.b32.xlu0 %v1206, 80
  %v1222 = vpop.permute.xlu0 %1221
  %1223 = vrot.lane.b32.xlu0 %v1208, 80
  %v1224 = vpop.permute.xlu0 %1223
  %1225 = vrot.lane.b32.xlu0 %v1210, 80
  %v1226 = vpop.permute.xlu0 %1225
  %1227 = vrot.lane.b32.xlu0 %v1212, 80
  %v1228 = vpop.permute.xlu0 %1227
  %v1237 = vsel %vm172, %v1214, 0.0
  %1238 = vadd.xlane.f32.xlu0 %v1237
  %v1239 = vpop.xlane.xlu0 %1238
  %v1240 = vsel %vm172, %v1216, 0.0
  %1241 = vadd.xlane.f32.xlu0 %v1240
  %v1242 = vpop.xlane.xlu0 %1241
  %v1243 = vsel %vm172, %v1218, 0.0
  %1244 = vadd.xlane.f32.xlu0 %v1243
  %v1245 = vpop.xlane.xlu0 %1244
  %v1246 = vsel %vm172, %v1220, 0.0
  %1247 = vadd.xlane.f32.xlu0 %v1246
  %v1248 = vpop.xlane.xlu0 %1247
  %v1249 = vsel %vm172, %v1222, 0.0
  %1250 = vadd.xlane.f32.xlu0 %v1249
  %v1251 = vpop.xlane.xlu0 %1250
  %v1252 = vsel %vm172, %v1224, 0.0
  %1253 = vadd.xlane.f32.xlu0 %v1252
  %v1254 = vpop.xlane.xlu0 %1253
  %v1255 = vsel %vm172, %v1226, 0.0
  %1256 = vadd.xlane.f32.xlu0 %v1255
  %v1257 = vpop.xlane.xlu0 %1256
  %v1258 = vsel %vm172, %v1228, 0.0
  %1259 = vadd.xlane.f32.xlu0 %v1258
  %v1260 = vpop.xlane.xlu0 %1259
  %v1261 = vmax.f32 %v1239, 1e-24
  %v1262 = vmax.f32 %v1242, 1e-24
  %v1263 = vmax.f32 %v1245, 1e-24
  %v1264 = vmax.f32 %v1248, 1e-24
  %v1265 = vmax.f32 %v1251, 1e-24
  %v1266 = vmax.f32 %v1254, 1e-24
  %v1267 = vmax.f32 %v1257, 1e-24
  %v1268 = vmax.f32 %v1260, 1e-24
  %v1269 = vrsqrt.pop %v1261
  %v1270 = vmul.f32 %v1269, %v1261
  %v1271 = vmul.f32 %v1270, %v1269
  %v1272 = vmul.f32 0.5, %v1271
  %v1273 = vsub.f32 1.5, %v1272
  %v1274 = vmul.f32 %v1269, %v1273
  %vm1275 = vweird.f32 %v1261
  %vm1276 = vweird.f32 %v1269
  %vm1277 = vmor %vm1275, %vm1276
  %v1278 = vsel %vm1277, %v1269, %v1274
  %v1279 = vrsqrt.pop %v1262
  %v1280 = vmul.f32 %v1279, %v1262
  %v1281 = vmul.f32 %v1280, %v1279
  %v1282 = vmul.f32 0.5, %v1281
  %v1283 = vsub.f32 1.5, %v1282
  %v1284 = vmul.f32 %v1279, %v1283
  %vm1285 = vweird.f32 %v1262
  %vm1286 = vweird.f32 %v1279
  %vm1287 = vmor %vm1285, %vm1286
  %v1288 = vsel %vm1287, %v1279, %v1284
  %v1289 = vrsqrt.pop %v1263
  %v1290 = vmul.f32 %v1289, %v1263
  %v1291 = vmul.f32 %v1290, %v1289
  %v1292 = vmul.f32 0.5, %v1291
  %v1293 = vsub.f32 1.5, %v1292
  %v1294 = vmul.f32 %v1289, %v1293
  %vm1295 = vweird.f32 %v1263
  %vm1296 = vweird.f32 %v1289
  %vm1297 = vmor %vm1295, %vm1296
  %v1298 = vsel %vm1297, %v1289, %v1294
  %v1299 = vrsqrt.pop %v1264
  %v1300 = vmul.f32 %v1299, %v1264
  %v1301 = vmul.f32 %v1300, %v1299
  %v1302 = vmul.f32 0.5, %v1301
  %v1303 = vsub.f32 1.5, %v1302
  %v1304 = vmul.f32 %v1299, %v1303
  %vm1305 = vweird.f32 %v1264
  %vm1306 = vweird.f32 %v1299
  %vm1307 = vmor %vm1305, %vm1306
  %v1308 = vsel %vm1307, %v1299, %v1304
  %v1309 = vrsqrt.pop %v1265
  %v1310 = vmul.f32 %v1309, %v1265
  %v1311 = vmul.f32 %v1310, %v1309
  %v1312 = vmul.f32 0.5, %v1311
  %v1313 = vsub.f32 1.5, %v1312
  %v1314 = vmul.f32 %v1309, %v1313
  %vm1315 = vweird.f32 %v1265
  %vm1316 = vweird.f32 %v1309
  %vm1317 = vmor %vm1315, %vm1316
  %v1318 = vsel %vm1317, %v1309, %v1314
  %v1319 = vrsqrt.pop %v1266
  %v1320 = vmul.f32 %v1319, %v1266
  %v1321 = vmul.f32 %v1320, %v1319
  %v1322 = vmul.f32 0.5, %v1321
  %v1323 = vsub.f32 1.5, %v1322
  %v1324 = vmul.f32 %v1319, %v1323
  %vm1325 = vweird.f32 %v1266
  %vm1326 = vweird.f32 %v1319
  %vm1327 = vmor %vm1325, %vm1326
  %v1328 = vsel %vm1327, %v1319, %v1324
  %v1329 = vrsqrt.pop %v1267
  %v1330 = vmul.f32 %v1329, %v1267
  %v1331 = vmul.f32 %v1330, %v1329
  %v1332 = vmul.f32 0.5, %v1331
  %v1333 = vsub.f32 1.5, %v1332
  %v1334 = vmul.f32 %v1329, %v1333
  %vm1335 = vweird.f32 %v1267
  %vm1336 = vweird.f32 %v1329
  %vm1337 = vmor %vm1335, %vm1336
  %v1338 = vsel %vm1337, %v1329, %v1334
  %v1339 = vrsqrt.pop %v1268
  %v1340 = vmul.f32 %v1339, %v1268
  %v1341 = vmul.f32 %v1340, %v1339
  %v1342 = vmul.f32 0.5, %v1341
  %v1343 = vsub.f32 1.5, %v1342
  %v1344 = vmul.f32 %v1339, %v1343
  %vm1345 = vweird.f32 %v1268
  %vm1346 = vweird.f32 %v1339
  %vm1347 = vmor %vm1345, %vm1346
  %v1348 = vsel %vm1347, %v1339, %v1344
  %v1349 = vmul.f32 %v134, %v1278
  %v1350 = vmul.f32 %v147, %v1288
  %v1351 = vmul.f32 %v136, %v1298
  %v1352 = vmul.f32 %v148, %v1308
  %v1353 = vmul.f32 %v139, %v1318
  %v1354 = vmul.f32 %v149, %v1328
  %v1355 = vmul.f32 %v141, %v1338
  %v1356 = vmul.f32 %v150, %v1348
  %1358 = vst [vmem:[#allocation1] ss:$2 sm:$0xff] %v1186
  %v1359 = vld.sshfl [vmem:[#allocation1] sm:$0xff pattern:$0x75316420]
  %1360 = vrot.lane.b32.xlu0 %v1359, 112
  %v1361 = vpop.permute.xlu0 %1360
  %1363 = vst [vmem:[#allocation1] ss:$2 sm:$0xff] %v1349
  %v1364 = vld.sshfl [vmem:[#allocation1] sm:$0xff pattern:$0x75316420]
  %1365 = vrot.lane.b32.xlu0 %v1364, 80
  %v1366 = vpop.permute.xlu0 %1365
  %v1367 = vsel %vm469, %v1361, 0
  %v1369 = vsel %vm469, %v1366, 0
  %1371 = vmatpush.xpose.msra.mxu0 0.0
  %1372 = vmatpush.xpose.msra.mxu0 0.0
  %1373 = vmatpush.xpose.msra.mxu0 0.0
  %1374 = vmatpush.xpose.msra.mxu0 0.0
  %1375 = vmatpush.xpose.msra.mxu0 0.0
  %1376 = vmatpush.xpose.msra.mxu0 0.0
  %1377 = vmatpush.xpose.msra.mxu0 0.0
  %1378 = vmatpush.xpose.msra.mxu0 0.0
  %1379 = vmatpush.xpose.msra.mxu0 0.0
  %1380 = vmatpush.xpose.msra.mxu0 0.0
  %1381 = vmatpush.xpose.msra.mxu0 0.0
  %1382 = vmatpush.xpose.msra.mxu0 0.0
  %1383 = vmatpush.xpose.msra.mxu0 0.0
  %1384 = vmatpush.xpose.msra.mxu0 0.0
  %1385 = vmatpush.xpose.msra.mxu0 0.0
  %1386 = vmatpush.xpose.msra.mxu0 %v1369
  %1387 = vmatmul.f32.gmra.mxu0 %v1367
  %v1388 = vpop.f32.mrf.mxu0
  %v1389 = vadd.f32 0.0, %v1388
  %1390 = vdwg.mxu0
  %1392 = vst [vmem:[#allocation1] ss:$2 sm:$0xff] %v1187
  %v1393 = vld.sshfl [vmem:[#allocation1] sm:$0xff pattern:$0x75316420]
  %1394 = vrot.lane.b32.xlu0 %v1393, 112
  %v1395 = vpop.permute.xlu0 %1394
  %1397 = vst [vmem:[#allocation1] ss:$2 sm:$0xff] %v1350
  %v1398 = vld.sshfl [vmem:[#allocation1] sm:$0xff pattern:$0x75316420]
  %1399 = vrot.lane.b32.xlu0 %v1398, 80
  %v1400 = vpop.permute.xlu0 %1399
  %v1401 = vsel %vm469, %v1395, 0
  %v1403 = vsel %vm469, %v1400, 0
  %1405 = vmatpush.xpose.msra.mxu0 0.0
  %1406 = vmatpush.xpose.msra.mxu0 0.0
  %1407 = vmatpush.xpose.msra.mxu0 0.0
  %1408 = vmatpush.xpose.msra.mxu0 0.0
  %1409 = vmatpush.xpose.msra.mxu0 0.0
  %1410 = vmatpush.xpose.msra.mxu0 0.0
  %1411 = vmatpush.xpose.msra.mxu0 0.0
  %1412 = vmatpush.xpose.msra.mxu0 0.0
  %1413 = vmatpush.xpose.msra.mxu0 0.0
  %1414 = vmatpush.xpose.msra.mxu0 0.0
  %1415 = vmatpush.xpose.msra.mxu0 0.0
  %1416 = vmatpush.xpose.msra.mxu0 0.0
  %1417 = vmatpush.xpose.msra.mxu0 0.0
  %1418 = vmatpush.xpose.msra.mxu0 0.0
  %1419 = vmatpush.xpose.msra.mxu0 0.0
  %1420 = vmatpush.xpose.msra.mxu0 %v1403
  %1421 = vmatmul.f32.gmra.mxu0 %v1401
  %v1422 = vpop.f32.mrf.mxu0
  %v1423 = vadd.f32 0.0, %v1422
  %1424 = vdwg.mxu0
  %1426 = vst [vmem:[#allocation1] ss:$2 sm:$0xff] %v1188
  %v1427 = vld.sshfl [vmem:[#allocation1] sm:$0xff pattern:$0x75316420]
  %1428 = vrot.lane.b32.xlu0 %v1427, 112
  %v1429 = vpop.permute.xlu0 %1428
  %1431 = vst [vmem:[#allocation1] ss:$2 sm:$0xff] %v1351
  %v1432 = vld.sshfl [vmem:[#allocation1] sm:$0xff pattern:$0x75316420]
  %1433 = vrot.lane.b32.xlu0 %v1432, 80
  %v1434 = vpop.permute.xlu0 %1433
  %v1435 = vsel %vm469, %v1429, 0
  %v1437 = vsel %vm469, %v1434, 0
  %1439 = vmatpush.xpose.msra.mxu0 0.0
  %1440 = vmatpush.xpose.msra.mxu0 0.0
  %1441 = vmatpush.xpose.msra.mxu0 0.0
  %1442 = vmatpush.xpose.msra.mxu0 0.0
  %1443 = vmatpush.xpose.msra.mxu0 0.0
  %1444 = vmatpush.xpose.msra.mxu0 0.0
  %1445 = vmatpush.xpose.msra.mxu0 0.0
  %1446 = vmatpush.xpose.msra.mxu0 0.0
  %1447 = vmatpush.xpose.msra.mxu0 0.0
  %1448 = vmatpush.xpose.msra.mxu0 0.0
  %1449 = vmatpush.xpose.msra.mxu0 0.0
  %1450 = vmatpush.xpose.msra.mxu0 0.0
  %1451 = vmatpush.xpose.msra.mxu0 0.0
  %1452 = vmatpush.xpose.msra.mxu0 0.0
  %1453 = vmatpush.xpose.msra.mxu0 0.0
  %1454 = vmatpush.xpose.msra.mxu0 %v1437
  %1455 = vmatmul.f32.gmra.mxu0 %v1435
  %v1456 = vpop.f32.mrf.mxu0
  %v1457 = vadd.f32 0.0, %v1456
  %1458 = vdwg.mxu0
  %1460 = vst [vmem:[#allocation1] ss:$2 sm:$0xff] %v1189
  %v1461 = vld.sshfl [vmem:[#allocation1] sm:$0xff pattern:$0x75316420]
  %1462 = vrot.lane.b32.xlu0 %v1461, 112
  %v1463 = vpop.permute.xlu0 %1462
  %1465 = vst [vmem:[#allocation1] ss:$2 sm:$0xff] %v1352
  %v1466 = vld.sshfl [vmem:[#allocation1] sm:$0xff pattern:$0x75316420]
  %1467 = vrot.lane.b32.xlu0 %v1466, 80
  %v1468 = vpop.permute.xlu0 %1467
  %v1469 = vsel %vm469, %v1463, 0
  %v1471 = vsel %vm469, %v1468, 0
  %1473 = vmatpush.xpose.msra.mxu0 0.0
  %1474 = vmatpush.xpose.msra.mxu0 0.0
  %1475 = vmatpush.xpose.msra.mxu0 0.0
  %1476 = vmatpush.xpose.msra.mxu0 0.0
  %1477 = vmatpush.xpose.msra.mxu0 0.0
  %1478 = vmatpush.xpose.msra.mxu0 0.0
  %1479 = vmatpush.xpose.msra.mxu0 0.0
  %1480 = vmatpush.xpose.msra.mxu0 0.0
  %1481 = vmatpush.xpose.msra.mxu0 0.0
  %1482 = vmatpush.xpose.msra.mxu0 0.0
  %1483 = vmatpush.xpose.msra.mxu0 0.0
  %1484 = vmatpush.xpose.msra.mxu0 0.0
  %1485 = vmatpush.xpose.msra.mxu0 0.0
  %1486 = vmatpush.xpose.msra.mxu0 0.0
  %1487 = vmatpush.xpose.msra.mxu0 0.0
  %1488 = vmatpush.xpose.msra.mxu0 %v1471
  %1489 = vmatmul.f32.gmra.mxu0 %v1469
  %v1490 = vpop.f32.mrf.mxu0
  %v1491 = vadd.f32 0.0, %v1490
  %1492 = vdwg.mxu0
  %1494 = vst [vmem:[#allocation1] ss:$2 sm:$0xff] %v1190
  %v1495 = vld.sshfl [vmem:[#allocation1] sm:$0xff pattern:$0x75316420]
  %1496 = vrot.lane.b32.xlu0 %v1495, 112
  %v1497 = vpop.permute.xlu0 %1496
  %1499 = vst [vmem:[#allocation1] ss:$2 sm:$0xff] %v1353
  %v1500 = vld.sshfl [vmem:[#allocation1] sm:$0xff pattern:$0x75316420]
  %1501 = vrot.lane.b32.xlu0 %v1500, 80
  %v1502 = vpop.permute.xlu0 %1501
  %v1503 = vsel %vm469, %v1497, 0
  %v1505 = vsel %vm469, %v1502, 0
  %1507 = vmatpush.xpose.msra.mxu0 0.0
  %1508 = vmatpush.xpose.msra.mxu0 0.0
  %1509 = vmatpush.xpose.msra.mxu0 0.0
  %1510 = vmatpush.xpose.msra.mxu0 0.0
  %1511 = vmatpush.xpose.msra.mxu0 0.0
  %1512 = vmatpush.xpose.msra.mxu0 0.0
  %1513 = vmatpush.xpose.msra.mxu0 0.0
  %1514 = vmatpush.xpose.msra.mxu0 0.0
  %1515 = vmatpush.xpose.msra.mxu0 0.0
  %1516 = vmatpush.xpose.msra.mxu0 0.0
  %1517 = vmatpush.xpose.msra.mxu0 0.0
  %1518 = vmatpush.xpose.msra.mxu0 0.0
  %1519 = vmatpush.xpose.msra.mxu0 0.0
  %1520 = vmatpush.xpose.msra.mxu0 0.0
  %1521 = vmatpush.xpose.msra.mxu0 0.0
  %1522 = vmatpush.xpose.msra.mxu0 %v1505
  %1523 = vmatmul.f32.gmra.mxu0 %v1503
  %v1524 = vpop.f32.mrf.mxu0
  %v1525 = vadd.f32 0.0, %v1524
  %1526 = vdwg.mxu0
  %1528 = vst [vmem:[#allocation1] ss:$2 sm:$0xff] %v1191
  %v1529 = vld.sshfl [vmem:[#allocation1] sm:$0xff pattern:$0x75316420]
  %1530 = vrot.lane.b32.xlu0 %v1529, 112
  %v1531 = vpop.permute.xlu0 %1530
  %1533 = vst [vmem:[#allocation1] ss:$2 sm:$0xff] %v1354
  %v1534 = vld.sshfl [vmem:[#allocation1] sm:$0xff pattern:$0x75316420]
  %1535 = vrot.lane.b32.xlu0 %v1534, 80
  %v1536 = vpop.permute.xlu0 %1535
  %v1537 = vsel %vm469, %v1531, 0
  %v1539 = vsel %vm469, %v1536, 0
  %1541 = vmatpush.xpose.msra.mxu0 0.0
  %1542 = vmatpush.xpose.msra.mxu0 0.0
  %1543 = vmatpush.xpose.msra.mxu0 0.0
  %1544 = vmatpush.xpose.msra.mxu0 0.0
  %1545 = vmatpush.xpose.msra.mxu0 0.0
  %1546 = vmatpush.xpose.msra.mxu0 0.0
  %1547 = vmatpush.xpose.msra.mxu0 0.0
  %1548 = vmatpush.xpose.msra.mxu0 0.0
  %1549 = vmatpush.xpose.msra.mxu0 0.0
  %1550 = vmatpush.xpose.msra.mxu0 0.0
  %1551 = vmatpush.xpose.msra.mxu0 0.0
  %1552 = vmatpush.xpose.msra.mxu0 0.0
  %1553 = vmatpush.xpose.msra.mxu0 0.0
  %1554 = vmatpush.xpose.msra.mxu0 0.0
  %1555 = vmatpush.xpose.msra.mxu0 0.0
  %1556 = vmatpush.xpose.msra.mxu0 %v1539
  %1557 = vmatmul.f32.gmra.mxu0 %v1537
  %v1558 = vpop.f32.mrf.mxu0
  %v1559 = vadd.f32 0.0, %v1558
  %1560 = vdwg.mxu0
  %1562 = vst [vmem:[#allocation1] ss:$2 sm:$0xff] %v1192
  %v1563 = vld.sshfl [vmem:[#allocation1] sm:$0xff pattern:$0x75316420]
  %1564 = vrot.lane.b32.xlu0 %v1563, 112
  %v1565 = vpop.permute.xlu0 %1564
  %1567 = vst [vmem:[#allocation1] ss:$2 sm:$0xff] %v1355
  %v1568 = vld.sshfl [vmem:[#allocation1] sm:$0xff pattern:$0x75316420]
  %1569 = vrot.lane.b32.xlu0 %v1568, 80
  %v1570 = vpop.permute.xlu0 %1569
  %v1571 = vsel %vm469, %v1565, 0
  %v1573 = vsel %vm469, %v1570, 0
  %1575 = vmatpush.xpose.msra.mxu0 0.0
  %1576 = vmatpush.xpose.msra.mxu0 0.0
  %1577 = vmatpush.xpose.msra.mxu0 0.0
  %1578 = vmatpush.xpose.msra.mxu0 0.0
  %1579 = vmatpush.xpose.msra.mxu0 0.0
  %1580 = vmatpush.xpose.msra.mxu0 0.0
  %1581 = vmatpush.xpose.msra.mxu0 0.0
  %1582 = vmatpush.xpose.msra.mxu0 0.0
  %1583 = vmatpush.xpose.msra.mxu0 0.0
  %1584 = vmatpush.xpose.msra.mxu0 0.0
  %1585 = vmatpush.xpose.msra.mxu0 0.0
  %1586 = vmatpush.xpose.msra.mxu0 0.0
  %1587 = vmatpush.xpose.msra.mxu0 0.0
  %1588 = vmatpush.xpose.msra.mxu0 0.0
  %1589 = vmatpush.xpose.msra.mxu0 0.0
  %1590 = vmatpush.xpose.msra.mxu0 %v1573
  %1591 = vmatmul.f32.gmra.mxu0 %v1571
  %v1592 = vpop.f32.mrf.mxu0
  %v1593 = vadd.f32 0.0, %v1592
  %1594 = vdwg.mxu0
  %1596 = vst [vmem:[#allocation1] ss:$2 sm:$0xff] %v1193
  %v1597 = vld.sshfl [vmem:[#allocation1] sm:$0xff pattern:$0x75316420]
  %1598 = vrot.lane.b32.xlu0 %v1597, 112
  %v1599 = vpop.permute.xlu0 %1598
  %1601 = vst [vmem:[#allocation1] ss:$2 sm:$0xff] %v1356
  %v1602 = vld.sshfl [vmem:[#allocation1] sm:$0xff pattern:$0x75316420]
  %1603 = vrot.lane.b32.xlu0 %v1602, 80
  %v1604 = vpop.permute.xlu0 %1603
  %v1605 = vsel %vm469, %v1599, 0
  %v1607 = vsel %vm469, %v1604, 0
  %1609 = vmatpush.xpose.msra.mxu0 0.0
  %1610 = vmatpush.xpose.msra.mxu0 0.0
  %1611 = vmatpush.xpose.msra.mxu0 0.0
  %1612 = vmatpush.xpose.msra.mxu0 0.0
  %1613 = vmatpush.xpose.msra.mxu0 0.0
  %1614 = vmatpush.xpose.msra.mxu0 0.0
  %1615 = vmatpush.xpose.msra.mxu0 0.0
  %1616 = vmatpush.xpose.msra.mxu0 0.0
  %1617 = vmatpush.xpose.msra.mxu0 0.0
  %1618 = vmatpush.xpose.msra.mxu0 0.0
  %1619 = vmatpush.xpose.msra.mxu0 0.0
  %1620 = vmatpush.xpose.msra.mxu0 0.0
  %1621 = vmatpush.xpose.msra.mxu0 0.0
  %1622 = vmatpush.xpose.msra.mxu0 0.0
  %1623 = vmatpush.xpose.msra.mxu0 0.0
  %1624 = vmatpush.xpose.msra.mxu0 %v1607
  %1625 = vmatmul.f32.gmra.mxu0 %v1605
  %v1626 = vpop.f32.mrf.mxu0
  %v1627 = vadd.f32 0.0, %v1626
  %1628 = vdwg.mxu0
  %1629 = vrot.lane.b32.xlu0 %v155, 127
  %v1630 = vpop.permute.xlu0 %1629
  %s1631 = vtos %v1630
  %v1632 = vstv %s1631
  %v1633 = vmul.f32 %v1389, %v1632
  %v1634 = vmul.f32 %v1423, %v1632
  %v1635 = vmul.f32 %v1457, %v1632
  %v1636 = vmul.f32 %v1491, %v1632
  %v1637 = vmul.f32 %v1525, %v1632
  %v1638 = vmul.f32 %v1559, %v1632
  %v1639 = vmul.f32 %v1593, %v1632
  %v1640 = vmul.f32 %v1627, %v1632
  %s1641 = scalar_lea.vmem %s4, 4
  %v1642 = vld [vmem:[%s1641] sm:$0xf]
  %v1643 = vadd.f32 %v1633, %v1642
  %v1644 = vadd.f32 %v1634, %v1642
  %v1645 = vadd.f32 %v1635, %v1642
  %v1646 = vadd.f32 %v1636, %v1642
  %v1647 = vadd.f32 %v1637, %v1642
  %v1648 = vadd.f32 %v1638, %v1642
  %v1649 = vadd.f32 %v1639, %v1642
  %v1650 = vadd.f32 %v1640, %v1642
  %v1651 = vadd.f32 %v1643, %v156
  %v1652 = vadd.f32 %v1644, %v157
  %v1653 = vadd.f32 %v1645, %v158
  %v1654 = vadd.f32 %v1646, %v159
  %v1655 = vadd.f32 %v1647, %v160
  %v1656 = vadd.f32 %v1648, %v161
  %v1657 = vadd.f32 %v1649, %v162
  %v1658 = vadd.f32 %v1650, %v163
  %v1659 = vsel %vm732, %v1651, -inf
  %1660 = vmax.xlane.f32.xlu0 %v1659
  %v1661 = vpop.xlane.xlu0 %1660
  %v1662 = vsel %vm732, %v1652, -inf
  %1663 = vmax.xlane.f32.xlu0 %v1662
  %v1664 = vpop.xlane.xlu0 %1663
  %v1665 = vsel %vm732, %v1653, -inf
  %1666 = vmax.xlane.f32.xlu0 %v1665
  %v1667 = vpop.xlane.xlu0 %1666
  %v1668 = vsel %vm732, %v1654, -inf
  %1669 = vmax.xlane.f32.xlu0 %v1668
  %v1670 = vpop.xlane.xlu0 %1669
  %v1671 = vsel %vm732, %v1655, -inf
  %1672 = vmax.xlane.f32.xlu0 %v1671
  %v1673 = vpop.xlane.xlu0 %1672
  %v1674 = vsel %vm732, %v1656, -inf
  %1675 = vmax.xlane.f32.xlu0 %v1674
  %v1676 = vpop.xlane.xlu0 %1675
  %v1677 = vsel %vm732, %v1657, -inf
  %1678 = vmax.xlane.f32.xlu0 %v1677
  %v1679 = vpop.xlane.xlu0 %1678
  %v1680 = vsel %vm732, %v1658, -inf
  %1681 = vmax.xlane.f32.xlu0 %v1680
  %v1682 = vpop.xlane.xlu0 %1681
  %v1683 = vsub.f32 %v1651, %v1661
  %v1684 = vsub.f32 %v1652, %v1664
  %v1685 = vsub.f32 %v1653, %v1667
  %v1686 = vsub.f32 %v1654, %v1670
  %v1687 = vsub.f32 %v1655, %v1673
  %v1688 = vsub.f32 %v1656, %v1676
  %v1689 = vsub.f32 %v1657, %v1679
  %v1690 = vsub.f32 %v1658, %v1682
  %v1691 = vmul.f32 %v1683, 1.442695
  %v1692 = vpow.pop %v1691
  %v1693 = vmul.f32 %v1684, 1.442695
  %v1694 = vpow.pop %v1693
  %v1695 = vmul.f32 %v1685, 1.442695
  %v1696 = vpow.pop %v1695
  %v1697 = vmul.f32 %v1686, 1.442695
  %v1698 = vpow.pop %v1697
  %v1699 = vmul.f32 %v1687, 1.442695
  %v1700 = vpow.pop %v1699
  %v1701 = vmul.f32 %v1688, 1.442695
  %v1702 = vpow.pop %v1701
  %v1703 = vmul.f32 %v1689, 1.442695
  %v1704 = vpow.pop %v1703
  %v1705 = vmul.f32 %v1690, 1.442695
  %v1706 = vpow.pop %v1705
  %v1707 = vsel %vm732, %v1692, 0.0
  %1708 = vadd.xlane.f32.xlu0 %v1707
  %v1709 = vpop.xlane.xlu0 %1708
  %v1710 = vsel %vm732, %v1694, 0.0
  %1711 = vadd.xlane.f32.xlu0 %v1710
  %v1712 = vpop.xlane.xlu0 %1711
  %v1713 = vsel %vm732, %v1696, 0.0
  %1714 = vadd.xlane.f32.xlu0 %v1713
  %v1715 = vpop.xlane.xlu0 %1714
  %v1716 = vsel %vm732, %v1698, 0.0
  %1717 = vadd.xlane.f32.xlu0 %v1716
  %v1718 = vpop.xlane.xlu0 %1717
  %v1719 = vsel %vm732, %v1700, 0.0
  %1720 = vadd.xlane.f32.xlu0 %v1719
  %v1721 = vpop.xlane.xlu0 %1720
  %v1722 = vsel %vm732, %v1702, 0.0
  %1723 = vadd.xlane.f32.xlu0 %v1722
  %v1724 = vpop.xlane.xlu0 %1723
  %v1725 = vsel %vm732, %v1704, 0.0
  %1726 = vadd.xlane.f32.xlu0 %v1725
  %v1727 = vpop.xlane.xlu0 %1726
  %v1728 = vsel %vm732, %v1706, 0.0
  %1729 = vadd.xlane.f32.xlu0 %v1728
  %v1730 = vpop.xlane.xlu0 %1729
  %v1731 = vrcp.pop %v1709
  %v1732 = vrcp.pop %v1712
  %v1733 = vrcp.pop %v1715
  %v1734 = vrcp.pop %v1718
  %v1735 = vrcp.pop %v1721
  %v1736 = vrcp.pop %v1724
  %v1737 = vrcp.pop %v1727
  %v1738 = vrcp.pop %v1730
  %v1739 = vmul.f32 %v1692, %v1731
  %v1740 = vmul.f32 %v1694, %v1732
  %v1741 = vmul.f32 %v1696, %v1733
  %v1742 = vmul.f32 %v1698, %v1734
  %v1743 = vmul.f32 %v1700, %v1735
  %v1744 = vmul.f32 %v1702, %v1736
  %v1745 = vmul.f32 %v1704, %v1737
  %v1746 = vmul.f32 %v1706, %v1738
  %v1747 = vpack.c.bf16 %v1739, %v1739
  %v1748 = vpack.c.bf16 %v1740, %v1740
  %v1749 = vpack.c.bf16 %v1741, %v1741
  %v1750 = vpack.c.bf16 %v1742, %v1742
  %v1751 = vpack.c.bf16 %v1743, %v1743
  %v1752 = vpack.c.bf16 %v1744, %v1744
  %v1753 = vpack.c.bf16 %v1745, %v1745
  %v1754 = vpack.c.bf16 %v1746, %v1746
  %1755 = vrot.lane.b32.xlu0 %v839, 48
  %v1756 = vpop.permute.xlu0 %1755
  %v1758 = vsel %vm842, %v1747, 0
  %v1761 = vsel %vm846, %v1756, 0
  %1763 = vmatpush.bf16.msra.mxu0 0
  %1764 = vmatpush.bf16.msra.mxu0 0
  %1765 = vmatpush.bf16.msra.mxu0 0
  %1766 = vmatpush.bf16.msra.mxu0 0
  %1767 = vmatpush.bf16.msra.mxu0 0
  %1768 = vmatpush.bf16.msra.mxu0 0
  %1769 = vmatpush.bf16.msra.mxu0 0
  %1770 = vmatpush.bf16.msra.mxu0 %v1761
  %1771 = vmatmul.bf16.gmra.mxu0 %v1758
  %v1772 = vpop.f32.mrf.mxu0
  %v1773 = vadd.f32 0.0, %v1772
  %v1774 = vpop.f32.mrf.mxu0
  %1775 = vdwg.mxu0
  %1776 = vrot.lane.b32.xlu0 %v865, 48
  %v1777 = vpop.permute.xlu0 %1776
  %v1779 = vsel %vm842, %v1748, 0
  %v1782 = vsel %vm846, %v1777, 0
  %1784 = vmatpush.bf16.msra.mxu0 0
  %1785 = vmatpush.bf16.msra.mxu0 0
  %1786 = vmatpush.bf16.msra.mxu0 0
  %1787 = vmatpush.bf16.msra.mxu0 0
  %1788 = vmatpush.bf16.msra.mxu0 0
  %1789 = vmatpush.bf16.msra.mxu0 0
  %1790 = vmatpush.bf16.msra.mxu0 0
  %1791 = vmatpush.bf16.msra.mxu0 %v1782
  %1792 = vmatmul.bf16.gmra.mxu0 %v1779
  %v1793 = vpop.f32.mrf.mxu0
  %v1794 = vadd.f32 0.0, %v1793
  %v1795 = vpop.f32.mrf.mxu0
  %1796 = vdwg.mxu0
  %1797 = vrot.lane.b32.xlu0 %v889, 48
  %v1798 = vpop.permute.xlu0 %1797
  %v1800 = vsel %vm842, %v1749, 0
  %v1803 = vsel %vm846, %v1798, 0
  %1805 = vmatpush.bf16.msra.mxu0 0
  %1806 = vmatpush.bf16.msra.mxu0 0
  %1807 = vmatpush.bf16.msra.mxu0 0
  %1808 = vmatpush.bf16.msra.mxu0 0
  %1809 = vmatpush.bf16.msra.mxu0 0
  %1810 = vmatpush.bf16.msra.mxu0 0
  %1811 = vmatpush.bf16.msra.mxu0 0
  %1812 = vmatpush.bf16.msra.mxu0 %v1803
  %1813 = vmatmul.bf16.gmra.mxu0 %v1800
  %v1814 = vpop.f32.mrf.mxu0
  %v1815 = vadd.f32 0.0, %v1814
  %v1816 = vpop.f32.mrf.mxu0
  %1817 = vdwg.mxu0
  %1818 = vrot.lane.b32.xlu0 %v913, 48
  %v1819 = vpop.permute.xlu0 %1818
  %v1821 = vsel %vm842, %v1750, 0
  %v1824 = vsel %vm846, %v1819, 0
  %1826 = vmatpush.bf16.msra.mxu0 0
  %1827 = vmatpush.bf16.msra.mxu0 0
  %1828 = vmatpush.bf16.msra.mxu0 0
  %1829 = vmatpush.bf16.msra.mxu0 0
  %1830 = vmatpush.bf16.msra.mxu0 0
  %1831 = vmatpush.bf16.msra.mxu0 0
  %1832 = vmatpush.bf16.msra.mxu0 0
  %1833 = vmatpush.bf16.msra.mxu0 %v1824
  %1834 = vmatmul.bf16.gmra.mxu0 %v1821
  %v1835 = vpop.f32.mrf.mxu0
  %v1836 = vadd.f32 0.0, %v1835
  %v1837 = vpop.f32.mrf.mxu0
  %1838 = vdwg.mxu0
  %1839 = vrot.lane.b32.xlu0 %v937, 48
  %v1840 = vpop.permute.xlu0 %1839
  %v1842 = vsel %vm842, %v1751, 0
  %v1845 = vsel %vm846, %v1840, 0
  %1847 = vmatpush.bf16.msra.mxu0 0
  %1848 = vmatpush.bf16.msra.mxu0 0
  %1849 = vmatpush.bf16.msra.mxu0 0
  %1850 = vmatpush.bf16.msra.mxu0 0
  %1851 = vmatpush.bf16.msra.mxu0 0
  %1852 = vmatpush.bf16.msra.mxu0 0
  %1853 = vmatpush.bf16.msra.mxu0 0
  %1854 = vmatpush.bf16.msra.mxu0 %v1845
  %1855 = vmatmul.bf16.gmra.mxu0 %v1842
  %v1856 = vpop.f32.mrf.mxu0
  %v1857 = vadd.f32 0.0, %v1856
  %v1858 = vpop.f32.mrf.mxu0
  %1859 = vdwg.mxu0
  %1860 = vrot.lane.b32.xlu0 %v961, 48
  %v1861 = vpop.permute.xlu0 %1860
  %v1863 = vsel %vm842, %v1752, 0
  %v1866 = vsel %vm846, %v1861, 0
  %1868 = vmatpush.bf16.msra.mxu0 0
  %1869 = vmatpush.bf16.msra.mxu0 0
  %1870 = vmatpush.bf16.msra.mxu0 0
  %1871 = vmatpush.bf16.msra.mxu0 0
  %1872 = vmatpush.bf16.msra.mxu0 0
  %1873 = vmatpush.bf16.msra.mxu0 0
  %1874 = vmatpush.bf16.msra.mxu0 0
  %1875 = vmatpush.bf16.msra.mxu0 %v1866
  %1876 = vmatmul.bf16.gmra.mxu0 %v1863
  %v1877 = vpop.f32.mrf.mxu0
  %v1878 = vadd.f32 0.0, %v1877
  %v1879 = vpop.f32.mrf.mxu0
  %1880 = vdwg.mxu0
  %1881 = vrot.lane.b32.xlu0 %v985, 48
  %v1882 = vpop.permute.xlu0 %1881
  %v1884 = vsel %vm842, %v1753, 0
  %v1887 = vsel %vm846, %v1882, 0
  %1889 = vmatpush.bf16.msra.mxu0 0
  %1890 = vmatpush.bf16.msra.mxu0 0
  %1891 = vmatpush.bf16.msra.mxu0 0
  %1892 = vmatpush.bf16.msra.mxu0 0
  %1893 = vmatpush.bf16.msra.mxu0 0
  %1894 = vmatpush.bf16.msra.mxu0 0
  %1895 = vmatpush.bf16.msra.mxu0 0
  %1896 = vmatpush.bf16.msra.mxu0 %v1887
  %1897 = vmatmul.bf16.gmra.mxu0 %v1884
  %v1898 = vpop.f32.mrf.mxu0
  %v1899 = vadd.f32 0.0, %v1898
  %v1900 = vpop.f32.mrf.mxu0
  %1901 = vdwg.mxu0
  %1902 = vrot.lane.b32.xlu0 %v1009, 48
  %v1903 = vpop.permute.xlu0 %1902
  %v1905 = vsel %vm842, %v1754, 0
  %v1908 = vsel %vm846, %v1903, 0
  %1910 = vmatpush.bf16.msra.mxu0 0
  %1911 = vmatpush.bf16.msra.mxu0 0
  %1912 = vmatpush.bf16.msra.mxu0 0
  %1913 = vmatpush.bf16.msra.mxu0 0
  %1914 = vmatpush.bf16.msra.mxu0 0
  %1915 = vmatpush.bf16.msra.mxu0 0
  %1916 = vmatpush.bf16.msra.mxu0 0
  %1917 = vmatpush.bf16.msra.mxu0 %v1908
  %1918 = vmatmul.bf16.gmra.mxu0 %v1905
  %v1919 = vpop.f32.mrf.mxu0
  %v1920 = vadd.f32 0.0, %v1919
  %v1921 = vpop.f32.mrf.mxu0
  %1922 = vdwg.mxu0
  %1931 = vrot.lane.b32.xlu0 %v1773, 16
  %v1932 = vpop.permute.xlu0 %1931
  %1933 = vrot.lane.b32.xlu0 %v1794, 16
  %v1934 = vpop.permute.xlu0 %1933
  %1935 = vrot.lane.b32.xlu0 %v1815, 16
  %v1936 = vpop.permute.xlu0 %1935
  %1937 = vrot.lane.b32.xlu0 %v1836, 16
  %v1938 = vpop.permute.xlu0 %1937
  %1939 = vrot.lane.b32.xlu0 %v1857, 16
  %v1940 = vpop.permute.xlu0 %1939
  %1941 = vrot.lane.b32.xlu0 %v1878, 16
  %v1942 = vpop.permute.xlu0 %1941
  %1943 = vrot.lane.b32.xlu0 %v1899, 16
  %v1944 = vpop.permute.xlu0 %1943
  %1945 = vrot.lane.b32.xlu0 %v1920, 16
  %v1946 = vpop.permute.xlu0 %1945
  %v1955 = vsel %vm469, %v860, %v1932
  %v1956 = vsel %vm469, %v884, %v1934
  %v1957 = vsel %vm469, %v908, %v1936
  %v1958 = vsel %vm469, %v932, %v1938
  %v1959 = vsel %vm469, %v956, %v1940
  %v1960 = vsel %vm469, %v980, %v1942
  %v1961 = vsel %vm469, %v1004, %v1944
  %v1962 = vsel %vm469, %v1028, %v1946
  %v1963 = vpack.c.bf16 %v1955, %v1955
  %v1964 = vpack.c.bf16 %v1956, %v1956
  %v1965 = vpack.c.bf16 %v1957, %v1957
  %v1966 = vpack.c.bf16 %v1958, %v1958
  %v1967 = vpack.c.bf16 %v1959, %v1959
  %v1968 = vpack.c.bf16 %v1960, %v1960
  %v1969 = vpack.c.bf16 %v1961, %v1961
  %v1970 = vpack.c.bf16 %v1962, %v1962
  %v1971 = vld [vmem:[%s6] sm:$0xf]
  %v1972 = vld [vmem:[%s6 + $0x4] sm:$0xf]
  %v1973 = vld [vmem:[%s6 + $0x8] sm:$0xf]
  %v1974 = vld [vmem:[%s6 + $0xc] sm:$0xf]
  %v1975 = vld [vmem:[%s7] sm:$0x1]
  %v1977 = vperm.slane %v1975, 0
  %1979 = vst [vmem:[#allocation1] ss:$4 sm:$0xff] %v1963
  %s1981 = scalar_lea.vmem [#allocation1], 1
  %1982 = vst [vmem:[%s1981] ss:$4 sm:$0xff] %v1964
  %s1984 = scalar_lea.vmem [#allocation1], 2
  %1985 = vst [vmem:[%s1984] ss:$4 sm:$0xff] %v1965
  %s1987 = scalar_lea.vmem [#allocation1], 3
  %1988 = vst [vmem:[%s1987] ss:$4 sm:$0xff] %v1966
  %s1990 = scalar_lea.vmem [#allocation1], 32
  %1991 = vst [vmem:[%s1990] ss:$4 sm:$0xff] %v1967
  %s1993 = scalar_lea.vmem [#allocation1], 33
  %1994 = vst [vmem:[%s1993] ss:$4 sm:$0xff] %v1968
  %s1996 = scalar_lea.vmem [#allocation1], 34
  %1997 = vst [vmem:[%s1996] ss:$4 sm:$0xff] %v1969
  %s1999 = scalar_lea.vmem [#allocation1], 35
  %2000 = vst [vmem:[%s1999] ss:$4 sm:$0xff] %v1970
  %v2001 = vld.sshfl [vmem:[#allocation1] sm:$0xff pattern:$0x73625140]
  %v2002 = vld.sshfl [vmem:[#allocation1 + $0x20] sm:$0xff pattern:$0x73625140]
  %v2007 = vunpack.c.l.b16 %v1971
  %v2008 = vunpack.c.l.b16 %v1972
  %v2009 = vunpack.c.l.b16 %v1973
  %v2010 = vunpack.c.l.b16 %v1974
  %v2011 = vpack.c.b16 %v2008, %v2007
  %v2012 = vpack.c.b16 %v2010, %v2009
  %2015 = vst [vmem:[#allocation1] ss:$2 sm:$0xff] %v1977
  %s2016 = scalar_lea.vmem [#allocation1], 1
  %2017 = vst [vmem:[%s2016] ss:$2 sm:$0xff] %v1977
  %s2018 = scalar_lea.vmem [#allocation1], 16
  %2019 = vst [vmem:[%s2018] ss:$2 sm:$0xff] %v1977
  %s2020 = scalar_lea.vmem [#allocation1], 17
  %2021 = vst [vmem:[%s2020] ss:$2 sm:$0xff] %v1977
  %s2022 = scalar_lea.vmem [#allocation1], 32
  %2023 = vst [vmem:[%s2022] ss:$2 sm:$0xff] %v1977
  %s2024 = scalar_lea.vmem [#allocation1], 33
  %2025 = vst [vmem:[%s2024] ss:$2 sm:$0xff] %v1977
  %s2026 = scalar_lea.vmem [#allocation1], 48
  %2027 = vst [vmem:[%s2026] ss:$2 sm:$0xff] %v1977
  %s2028 = scalar_lea.vmem [#allocation1], 49
  %2029 = vst [vmem:[%s2028] ss:$2 sm:$0xff] %v1977
  %v2030 = vld.sshfl [vmem:[#allocation1] sm:$0xff pattern:$0x75316420]
  %v2031 = vld.sshfl [vmem:[#allocation1 + $0x10] sm:$0xff pattern:$0x75316420]
  %v2032 = vld.sshfl [vmem:[#allocation1 + $0x20] sm:$0xff pattern:$0x75316420]
  %v2033 = vld.sshfl [vmem:[#allocation1 + $0x30] sm:$0xff pattern:$0x75316420]
  %v2038 = vsel %vm119, %v2001, 0
  %v2040 = vsel %vm119, %v2002, 0
  %2042 = vmatpush.bf16.msra.mxu0 0
  %2043 = vmatpush.bf16.msra.mxu0 0
  %2044 = vmatpush.bf16.msra.mxu0 0
  %2045 = vmatpush.bf16.msra.mxu0 0
  %2046 = vmatpush.bf16.msra.mxu0 0
  %2047 = vmatpush.bf16.msra.mxu0 0
  %2048 = vmatpush.bf16.msra.mxu0 %v2012
  %2049 = vmatpush.bf16.msra.mxu0 %v2011
  %2050 = vmatmul.bf16.gmra.mxu0 %v2038
  %v2051 = vpop.f32.mrf.mxu0
  %v2052 = vadd.f32 %v2030, %v2051
  %v2053 = vpop.f32.mrf.mxu0
  %v2054 = vadd.f32 %v2031, %v2053
  %2055 = vmatmul.bf16.gmra.mxu0 %v2040
  %v2056 = vpop.f32.mrf.mxu0
  %v2057 = vadd.f32 %v2032, %v2056
  %v2058 = vpop.f32.mrf.mxu0
  %v2059 = vadd.f32 %v2033, %v2058
  %2060 = vdwg.mxu0
  %v2065 = vrot.slane %v2052, 4
  %v2066 = vrot.slane %v2054, 4
  %v2067 = vrot.slane %v2057, 4
  %v2068 = vrot.slane %v2059, 4
  %v2073 = vld [vmem:[%s8] sm:$0x1]
  %v2074 = vld [vmem:[%s9] sm:$0x1]
  %vm2075 = vcmask 257024
  %v2076 = vsel %vm2075, %v2052, 0.0
  %2077 = vadd.xlane.f32.xlu0 %v2076
  %v2078 = vpop.xlane.xlu0 %2077
  %v2079 = vsel %vm2075, %v2065, 0.0
  %2080 = vadd.xlane.f32.xlu0 %v2079
  %v2081 = vpop.xlane.xlu0 %2080
  %v2082 = vsel %vm2075, %v2054, 0.0
  %2083 = vadd.xlane.f32.xlu0 %v2082
  %v2084 = vpop.xlane.xlu0 %2083
  %v2085 = vsel %vm2075, %v2066, 0.0
  %2086 = vadd.xlane.f32.xlu0 %v2085
  %v2087 = vpop.xlane.xlu0 %2086
  %v2088 = vsel %vm2075, %v2057, 0.0
  %2089 = vadd.xlane.f32.xlu0 %v2088
  %v2090 = vpop.xlane.xlu0 %2089
  %v2091 = vsel %vm2075, %v2067, 0.0
  %2092 = vadd.xlane.f32.xlu0 %v2091
  %v2093 = vpop.xlane.xlu0 %2092
  %v2094 = vsel %vm2075, %v2059, 0.0
  %2095 = vadd.xlane.f32.xlu0 %v2094
  %v2096 = vpop.xlane.xlu0 %2095
  %v2097 = vsel %vm2075, %v2068, 0.0
  %2098 = vadd.xlane.f32.xlu0 %v2097
  %v2099 = vpop.xlane.xlu0 %2098
  %v2100 = vrcp.pop 32.0
  %v2101 = vmul.f32 32.0, %v2100
  %v2102 = vsub.f32 1.0, %v2101
  %v2103 = vmul.f32 %v2100, %v2102
  %v2104 = vadd.f32 %v2100, %v2103
  %vm2105 = vweird.f32 %v2100
  %v2106 = vsel %vm2105, %v2100, %v2104
  %v2107 = vmul.f32 %v2078, %v2106
  %v2108 = vmul.f32 %v2081, %v2106
  %v2109 = vmul.f32 %v2084, %v2106
  %v2110 = vmul.f32 %v2087, %v2106
  %v2111 = vmul.f32 %v2090, %v2106
  %v2112 = vmul.f32 %v2093, %v2106
  %v2113 = vmul.f32 %v2096, %v2106
  %v2114 = vmul.f32 %v2099, %v2106
  %v2115 = vsub.f32 %v2052, %v2107
  %v2116 = vsub.f32 %v2065, %v2108
  %v2117 = vsub.f32 %v2054, %v2109
  %v2118 = vsub.f32 %v2066, %v2110
  %v2119 = vsub.f32 %v2057, %v2111
  %v2120 = vsub.f32 %v2067, %v2112
  %v2121 = vsub.f32 %v2059, %v2113
  %v2122 = vsub.f32 %v2068, %v2114
  %v2123 = vmul.f32 %v2115, %v2115
  %v2124 = vmul.f32 %v2116, %v2116
  %v2125 = vmul.f32 %v2117, %v2117
  %v2126 = vmul.f32 %v2118, %v2118
  %v2127 = vmul.f32 %v2119, %v2119
  %v2128 = vmul.f32 %v2120, %v2120
  %v2129 = vmul.f32 %v2121, %v2121
  %v2130 = vmul.f32 %v2122, %v2122
  %v2131 = vsel %vm2075, %v2123, 0.0
  %2132 = vadd.xlane.f32.xlu0 %v2131
  %v2133 = vpop.xlane.xlu0 %2132
  %v2134 = vsel %vm2075, %v2124, 0.0
  %2135 = vadd.xlane.f32.xlu0 %v2134
  %v2136 = vpop.xlane.xlu0 %2135
  %v2137 = vsel %vm2075, %v2125, 0.0
  %2138 = vadd.xlane.f32.xlu0 %v2137
  %v2139 = vpop.xlane.xlu0 %2138
  %v2140 = vsel %vm2075, %v2126, 0.0
  %2141 = vadd.xlane.f32.xlu0 %v2140
  %v2142 = vpop.xlane.xlu0 %2141
  %v2143 = vsel %vm2075, %v2127, 0.0
  %2144 = vadd.xlane.f32.xlu0 %v2143
  %v2145 = vpop.xlane.xlu0 %2144
  %v2146 = vsel %vm2075, %v2128, 0.0
  %2147 = vadd.xlane.f32.xlu0 %v2146
  %v2148 = vpop.xlane.xlu0 %2147
  %v2149 = vsel %vm2075, %v2129, 0.0
  %2150 = vadd.xlane.f32.xlu0 %v2149
  %v2151 = vpop.xlane.xlu0 %2150
  %v2152 = vsel %vm2075, %v2130, 0.0
  %2153 = vadd.xlane.f32.xlu0 %v2152
  %v2154 = vpop.xlane.xlu0 %2153
  %v2155 = vmul.f32 %v2133, %v2106
  %v2156 = vmul.f32 %v2136, %v2106
  %v2157 = vmul.f32 %v2139, %v2106
  %v2158 = vmul.f32 %v2142, %v2106
  %v2159 = vmul.f32 %v2145, %v2106
  %v2160 = vmul.f32 %v2148, %v2106
  %v2161 = vmul.f32 %v2151, %v2106
  %v2162 = vmul.f32 %v2154, %v2106
  %v2163 = vadd.f32 %v2155, 1e-05
  %v2164 = vadd.f32 %v2156, 1e-05
  %v2165 = vadd.f32 %v2157, 1e-05
  %v2166 = vadd.f32 %v2158, 1e-05
  %v2167 = vadd.f32 %v2159, 1e-05
  %v2168 = vadd.f32 %v2160, 1e-05
  %v2169 = vadd.f32 %v2161, 1e-05
  %v2170 = vadd.f32 %v2162, 1e-05
  %v2171 = vrsqrt.pop %v2163
  %v2172 = vmul.f32 %v2171, %v2163
  %v2173 = vmul.f32 %v2172, %v2171
  %v2174 = vmul.f32 0.5, %v2173
  %v2175 = vsub.f32 1.5, %v2174
  %v2176 = vmul.f32 %v2171, %v2175
  %vm2177 = vweird.f32 %v2163
  %vm2178 = vweird.f32 %v2171
  %vm2179 = vmor %vm2177, %vm2178
  %v2180 = vsel %vm2179, %v2171, %v2176
  %v2181 = vrsqrt.pop %v2164
  %v2182 = vmul.f32 %v2181, %v2164
  %v2183 = vmul.f32 %v2182, %v2181
  %v2184 = vmul.f32 0.5, %v2183
  %v2185 = vsub.f32 1.5, %v2184
  %v2186 = vmul.f32 %v2181, %v2185
  %vm2187 = vweird.f32 %v2164
  %vm2188 = vweird.f32 %v2181
  %vm2189 = vmor %vm2187, %vm2188
  %v2190 = vsel %vm2189, %v2181, %v2186
  %v2191 = vrsqrt.pop %v2165
  %v2192 = vmul.f32 %v2191, %v2165
  %v2193 = vmul.f32 %v2192, %v2191
  %v2194 = vmul.f32 0.5, %v2193
  %v2195 = vsub.f32 1.5, %v2194
  %v2196 = vmul.f32 %v2191, %v2195
  %vm2197 = vweird.f32 %v2165
  %vm2198 = vweird.f32 %v2191
  %vm2199 = vmor %vm2197, %vm2198
  %v2200 = vsel %vm2199, %v2191, %v2196
  %v2201 = vrsqrt.pop %v2166
  %v2202 = vmul.f32 %v2201, %v2166
  %v2203 = vmul.f32 %v2202, %v2201
  %v2204 = vmul.f32 0.5, %v2203
  %v2205 = vsub.f32 1.5, %v2204
  %v2206 = vmul.f32 %v2201, %v2205
  %vm2207 = vweird.f32 %v2166
  %vm2208 = vweird.f32 %v2201
  %vm2209 = vmor %vm2207, %vm2208
  %v2210 = vsel %vm2209, %v2201, %v2206
  %v2211 = vrsqrt.pop %v2167
  %v2212 = vmul.f32 %v2211, %v2167
  %v2213 = vmul.f32 %v2212, %v2211
  %v2214 = vmul.f32 0.5, %v2213
  %v2215 = vsub.f32 1.5, %v2214
  %v2216 = vmul.f32 %v2211, %v2215
  %vm2217 = vweird.f32 %v2167
  %vm2218 = vweird.f32 %v2211
  %vm2219 = vmor %vm2217, %vm2218
  %v2220 = vsel %vm2219, %v2211, %v2216
  %v2221 = vrsqrt.pop %v2168
  %v2222 = vmul.f32 %v2221, %v2168
  %v2223 = vmul.f32 %v2222, %v2221
  %v2224 = vmul.f32 0.5, %v2223
  %v2225 = vsub.f32 1.5, %v2224
  %v2226 = vmul.f32 %v2221, %v2225
  %vm2227 = vweird.f32 %v2168
  %vm2228 = vweird.f32 %v2221
  %vm2229 = vmor %vm2227, %vm2228
  %v2230 = vsel %vm2229, %v2221, %v2226
  %v2231 = vrsqrt.pop %v2169
  %v2232 = vmul.f32 %v2231, %v2169
  %v2233 = vmul.f32 %v2232, %v2231
  %v2234 = vmul.f32 0.5, %v2233
  %v2235 = vsub.f32 1.5, %v2234
  %v2236 = vmul.f32 %v2231, %v2235
  %vm2237 = vweird.f32 %v2169
  %vm2238 = vweird.f32 %v2231
  %vm2239 = vmor %vm2237, %vm2238
  %v2240 = vsel %vm2239, %v2231, %v2236
  %v2241 = vrsqrt.pop %v2170
  %v2242 = vmul.f32 %v2241, %v2170
  %v2243 = vmul.f32 %v2242, %v2241
  %v2244 = vmul.f32 0.5, %v2243
  %v2245 = vsub.f32 1.5, %v2244
  %v2246 = vmul.f32 %v2241, %v2245
  %vm2247 = vweird.f32 %v2170
  %vm2248 = vweird.f32 %v2241
  %vm2249 = vmor %vm2247, %vm2248
  %v2250 = vsel %vm2249, %v2241, %v2246
  %v2251 = vmul.f32 %v2115, %v2180
  %v2252 = vmul.f32 %v2116, %v2190
  %v2253 = vmul.f32 %v2117, %v2200
  %v2254 = vmul.f32 %v2118, %v2210
  %v2255 = vmul.f32 %v2119, %v2220
  %v2256 = vmul.f32 %v2120, %v2230
  %v2257 = vmul.f32 %v2121, %v2240
  %v2258 = vmul.f32 %v2122, %v2250
  %v2260 = vperm.slane %v2073, 0
  %v2262 = vmul.f32 %v2251, %v2260
  %v2263 = vmul.f32 %v2252, %v2260
  %v2264 = vmul.f32 %v2253, %v2260
  %v2265 = vmul.f32 %v2254, %v2260
  %v2266 = vmul.f32 %v2255, %v2260
  %v2267 = vmul.f32 %v2256, %v2260
  %v2268 = vmul.f32 %v2257, %v2260
  %v2269 = vmul.f32 %v2258, %v2260
  %v2271 = vperm.slane %v2074, 0
  %v2273 = vadd.f32 %v2262, %v2271
  %v2274 = vadd.f32 %v2263, %v2271
  %v2275 = vadd.f32 %v2264, %v2271
  %v2276 = vadd.f32 %v2265, %v2271
  %v2277 = vadd.f32 %v2266, %v2271
  %v2278 = vadd.f32 %v2267, %v2271
  %v2279 = vadd.f32 %v2268, %v2271
  %v2280 = vadd.f32 %v2269, %v2271
  %v2281 = vadd.f32 %v36, %v2273
  %v2282 = vadd.f32 %v37, %v2274
  %v2283 = vadd.f32 %v38, %v2275
  %v2284 = vadd.f32 %v39, %v2276
  %v2285 = vadd.f32 %v40, %v2277
  %v2286 = vadd.f32 %v41, %v2278
  %v2287 = vadd.f32 %v42, %v2279
  %v2288 = vadd.f32 %v43, %v2280
  %2289 = vst.msk [vmem:[%s10] sm:$0xf] %vm2075, %v2281
  %2290 = vst.msk [vmem:[%s10 + $0x4] sm:$0xf] %vm2075, %v2282
  %2291 = vst.msk [vmem:[%s10 + $0x8] sm:$0xf] %vm2075, %v2283
  %2292 = vst.msk [vmem:[%s10 + $0xc] sm:$0xf] %vm2075, %v2284
  %2293 = vst.msk [vmem:[%s10 + $0x10] sm:$0xf] %vm2075, %v2285
  %2294 = vst.msk [vmem:[%s10 + $0x14] sm:$0xf] %vm2075, %v2286
  %2295 = vst.msk [vmem:[%s10 + $0x18] sm:$0xf] %vm2075, %v2287
  %2296 = vst.msk [vmem:[%s10 + $0x1c] sm:$0xf] %vm2075, %v2288
  // Predicated region
  $region42: #{custom_swin_encoder_forward.13} parent=0 // pred_check
    _
  $region43: #{custom_swin_encoder_forward.13} parent=0 // pred_check_branch
    %2298 = sbr.rel (0) target = $region45
  $region44: #{custom_swin_encoder_forward.13} parent=0 // pred_region
    _
  $region45: #{custom_swin_encoder_forward.13} parent=0 // pred_fallthru
    _
  // Predicated region
  $region46: #{custom_swin_encoder_forward.13} parent=0 // pred_check
    _
  $region47: #{custom_swin_encoder_forward.13} parent=0 // pred_check_branch
    %2300 = sbr.rel (0) target = $region49
  $region48: #{custom_swin_encoder_forward.13} parent=0 // pred_region
    _
  $region49: #{custom_swin_encoder_forward.13} parent=0 // pred_fallthru
    _

// kernel: custom_swin_encoder_forward.17
$region0: #{custom_swin_encoder_forward.17}
  #allocation0 [shape = 'u32[]', space=smem, size = 0x4, offset = 0x4, fixed_abs, tag = 'smem constant byte address 0x4 - core index']
  #allocation1 [shape = 'u32[72,128]{1,0:T(1,128)}', space=vmem, size = 0x9000, scoped, tag = 'internal scratch']
  %s0 = inlined_call_operand.vmem [shape: f32[8,64], index: 0, kind: input, shape index: {}]
  %s1 = inlined_call_operand.vmem [shape: bf16[64,256], index: 1, kind: input, shape index: {}]
  %s2 = inlined_call_operand.vmem [shape: f32[1,256], index: 2, kind: input, shape index: {}]
  %s3 = inlined_call_operand.vmem [shape: bf16[256,64], index: 3, kind: input, shape index: {}]
  %s4 = inlined_call_operand.vmem [shape: f32[1,64], index: 4, kind: input, shape index: {}]
  %s5 = inlined_call_operand.vmem [shape: f32[1,64], index: 5, kind: input, shape index: {}]
  %s6 = inlined_call_operand.vmem [shape: f32[1,64], index: 6, kind: input, shape index: {}]
  %s7 = inlined_call_operand.vmem [shape: f32[8,64], index: 7, kind: output, shape index: {}]
  %s8 = sld [smem:[#allocation0]]
  $region38: #{custom_swin_encoder_forward.17} parent=0
    _
  %s10 = ssub.s32 1, %s8
  %s11 = scalar_select 0, %s10, %s8
  // Predicated region
  $region2: #{custom_swin_encoder_forward.17} parent=0 // pred_check
    _
  $region3: #{custom_swin_encoder_forward.17} parent=0 // pred_check_branch
    %13 = sbr.rel (0) target = $region5
  $region4: #{custom_swin_encoder_forward.17} parent=0 // pred_region
    _
  $region5: #{custom_swin_encoder_forward.17} parent=0 // pred_fallthru
    _
  // Predicated region
  $region6: #{custom_swin_encoder_forward.17} parent=0 // pred_check
    _
  $region7: #{custom_swin_encoder_forward.17} parent=0 // pred_check_branch
    %15 = sbr.rel (0) target = $region9
  $region8: #{custom_swin_encoder_forward.17} parent=0 // pred_region
    _
  $region9: #{custom_swin_encoder_forward.17} parent=0 // pred_fallthru
    _
  // Predicated region
  $region10: #{custom_swin_encoder_forward.17} parent=0 // pred_check
    _
  $region11: #{custom_swin_encoder_forward.17} parent=0 // pred_check_branch
    %17 = sbr.rel (0) target = $region13
  $region12: #{custom_swin_encoder_forward.17} parent=0 // pred_region
    _
  $region13: #{custom_swin_encoder_forward.17} parent=0 // pred_fallthru
    _
  // Predicated region
  $region14: #{custom_swin_encoder_forward.17} parent=0 // pred_check
    _
  $region15: #{custom_swin_encoder_forward.17} parent=0 // pred_check_branch
    %19 = sbr.rel (0) target = $region17
  $region16: #{custom_swin_encoder_forward.17} parent=0 // pred_region
    _
  $region17: #{custom_swin_encoder_forward.17} parent=0 // pred_fallthru
    _
  // Predicated region
  $region18: #{custom_swin_encoder_forward.17} parent=0 // pred_check
    _
  $region19: #{custom_swin_encoder_forward.17} parent=0 // pred_check_branch
    %21 = sbr.rel (0) target = $region21
  $region20: #{custom_swin_encoder_forward.17} parent=0 // pred_region
    _
  $region21: #{custom_swin_encoder_forward.17} parent=0 // pred_fallthru
    _
  // Predicated region
  $region22: #{custom_swin_encoder_forward.17} parent=0 // pred_check
    _
  $region23: #{custom_swin_encoder_forward.17} parent=0 // pred_check_branch
    %23 = sbr.rel (0) target = $region25
  $region24: #{custom_swin_encoder_forward.17} parent=0 // pred_region
    _
  $region25: #{custom_swin_encoder_forward.17} parent=0 // pred_fallthru
    _
  // Predicated region
  $region26: #{custom_swin_encoder_forward.17} parent=0 // pred_check
    _
  $region27: #{custom_swin_encoder_forward.17} parent=0 // pred_check_branch
    %25 = sbr.rel (0) target = $region29
  $region28: #{custom_swin_encoder_forward.17} parent=0 // pred_region
    _
  $region29: #{custom_swin_encoder_forward.17} parent=0 // pred_fallthru
    _
  %v27 = vld [vmem:[%s0] sm:$0xff]
  %v28 = vpack.c.bf16 %v27, %v27
  %v29 = vld [vmem:[%s1] sm:$0xff]
  %v30 = vld [vmem:[%s1 + $0x8] sm:$0xff]
  %v31 = vld [vmem:[%s1 + $0x10] sm:$0xff]
  %v32 = vld [vmem:[%s1 + $0x18] sm:$0xff]
  %v33 = vld [vmem:[%s1 + $0x20] sm:$0xff]
  %v34 = vld [vmem:[%s1 + $0x28] sm:$0xff]
  %v35 = vld [vmem:[%s1 + $0x30] sm:$0xff]
  %v36 = vld [vmem:[%s1 + $0x38] sm:$0xff]
  %v37 = vld [vmem:[%s2] sm:$0x3]
  %v39 = vperm.slane %v37, 0
  %v40 = vperm.slane %v37, 1
  %v51 = vunpack.c.l.b16 %v29
  %v52 = vunpack.c.h.b16 %v29
  %v53 = vunpack.c.l.b16 %v30
  %v54 = vunpack.c.h.b16 %v30
  %v55 = vunpack.c.l.b16 %v31
  %v56 = vunpack.c.h.b16 %v31
  %v57 = vunpack.c.l.b16 %v32
  %v58 = vunpack.c.h.b16 %v32
  %v59 = vunpack.c.l.b16 %v33
  %v60 = vunpack.c.h.b16 %v33
  %v61 = vunpack.c.l.b16 %v34
  %v62 = vunpack.c.h.b16 %v34
  %v63 = vunpack.c.l.b16 %v35
  %v64 = vunpack.c.h.b16 %v35
  %v65 = vunpack.c.l.b16 %v36
  %v66 = vunpack.c.h.b16 %v36
  %v67 = vpack.c.b16 %v53, %v51
  %v68 = vpack.c.b16 %v54, %v52
  %v69 = vpack.c.b16 %v57, %v55
  %v70 = vpack.c.b16 %v58, %v56
  %v71 = vpack.c.b16 %v61, %v59
  %v72 = vpack.c.b16 %v62, %v60
  %v73 = vpack.c.b16 %v65, %v63
  %v74 = vpack.c.b16 %v66, %v64
  %vm83 = vcmask 523264
  %v85 = vsel %vm83, %v28, 0
  %87 = vmatpush.bf16.msra.mxu0 0
  %88 = vmatpush.bf16.msra.mxu0 0
  %89 = vmatpush.bf16.msra.mxu0 0
  %90 = vmatpush.bf16.msra.mxu0 0
  %91 = vmatpush.bf16.msra.mxu0 %v73
  %92 = vmatpush.bf16.msra.mxu0 %v71
  %93 = vmatpush.bf16.msra.mxu0 %v69
  %94 = vmatpush.bf16.msra.mxu0 %v67
  %95 = vmatmul.bf16.gmra.mxu0 %v85
  %v96 = vpop.f32.mrf.mxu0
  %v97 = vadd.f32 %v39, %v96
  %v98 = vpop.f32.mrf.mxu0
  %99 = vdwg.mxu0
  %100 = vmatpush.bf16.msra.mxu0 0
  %101 = vmatpush.bf16.msra.mxu0 0
  %102 = vmatpush.bf16.msra.mxu0 0
  %103 = vmatpush.bf16.msra.mxu0 0
  %104 = vmatpush.bf16.msra.mxu0 %v74
  %105 = vmatpush.bf16.msra.mxu0 %v72
  %106 = vmatpush.bf16.msra.mxu0 %v70
  %107 = vmatpush.bf16.msra.mxu0 %v68
  %108 = vmatmul.bf16.gmra.mxu0 %v85
  %v109 = vpop.f32.mrf.mxu0
  %v110 = vadd.f32 %v40, %v109
  %v111 = vpop.f32.mrf.mxu0
  %112 = vdwg.mxu0
  %v113 = vmul.f32 %v97, 0.5
  %v114 = vmul.f32 %v110, 0.5
  %v115 = vmul.f32 %v97, 0.044715
  %v116 = vmul.f32 %v110, 0.044715
  %v117 = vmul.f32 %v115, %v97
  %v118 = vmul.f32 %v116, %v110
  %v119 = vmul.f32 %v117, %v97
  %v120 = vmul.f32 %v118, %v110
  %v121 = vadd.f32 %v97, %v119
  %v122 = vadd.f32 %v110, %v120
  %v123 = vmul.f32 %v121, 0.7978846
  %v124 = vmul.f32 %v122, 0.7978846
  %v125 = vtanh.pop %v123
  %v126 = vtanh.pop %v124
  %v127 = vadd.f32 %v125, 1.0
  %v128 = vadd.f32 %v126, 1.0
  %v129 = vmul.f32 %v113, %v127
  %v130 = vmul.f32 %v114, %v128
  %v131 = vpack.c.bf16 %v129, %v129
  %v132 = vpack.c.bf16 %v130, %v130
  %v133 = vld [vmem:[%s3] sm:$0xf]
  %v134 = vld [vmem:[%s3 + $0x4] sm:$0xf]
  %v135 = vld [vmem:[%s3 + $0x8] sm:$0xf]
  %v136 = vld [vmem:[%s3 + $0xc] sm:$0xf]
  %v137 = vld [vmem:[%s3 + $0x10] sm:$0xf]
  %v138 = vld [vmem:[%s3 + $0x14] sm:$0xf]
  %v139 = vld [vmem:[%s3 + $0x18] sm:$0xf]
  %v140 = vld [vmem:[%s3 + $0x1c] sm:$0xf]
  %v141 = vld [vmem:[%s3 + $0x20] sm:$0xf]
  %v142 = vld [vmem:[%s3 + $0x24] sm:$0xf]
  %v143 = vld [vmem:[%s3 + $0x28] sm:$0xf]
  %v144 = vld [vmem:[%s3 + $0x2c] sm:$0xf]
  %v145 = vld [vmem:[%s3 + $0x30] sm:$0xf]
  %v146 = vld [vmem:[%s3 + $0x34] sm:$0xf]
  %v147 = vld [vmem:[%s3 + $0x38] sm:$0xf]
  %v148 = vld [vmem:[%s3 + $0x3c] sm:$0xf]
  %v149 = vld [vmem:[%s3 + $0x40] sm:$0xf]
  %v150 = vld [vmem:[%s3 + $0x44] sm:$0xf]
  %v151 = vld [vmem:[%s3 + $0x48] sm:$0xf]
  %v152 = vld [vmem:[%s3 + $0x4c] sm:$0xf]
  %v153 = vld [vmem:[%s3 + $0x50] sm:$0xf]
  %v154 = vld [vmem:[%s3 + $0x54] sm:$0xf]
  %v155 = vld [vmem:[%s3 + $0x58] sm:$0xf]
  %v156 = vld [vmem:[%s3 + $0x5c] sm:$0xf]
  %v157 = vld [vmem:[%s3 + $0x60] sm:$0xf]
  %v158 = vld [vmem:[%s3 + $0x64] sm:$0xf]
  %v159 = vld [vmem:[%s3 + $0x68] sm:$0xf]
  %v160 = vld [vmem:[%s3 + $0x6c] sm:$0xf]
  %v161 = vld [vmem:[%s3 + $0x70] sm:$0xf]
  %v162 = vld [vmem:[%s3 + $0x74] sm:$0xf]
  %v163 = vld [vmem:[%s3 + $0x78] sm:$0xf]
  %v164 = vld [vmem:[%s3 + $0x7c] sm:$0xf]
  %v165 = vld [vmem:[%s4] sm:$0x1]
  %v167 = vperm.slane %v165, 0
  %v201 = vunpack.c.l.b16 %v133
  %v202 = vunpack.c.l.b16 %v134
  %v203 = vunpack.c.l.b16 %v135
  %v204 = vunpack.c.l.b16 %v136
  %v205 = vunpack.c.l.b16 %v137
  %v206 = vunpack.c.l.b16 %v138
  %v207 = vunpack.c.l.b16 %v139
  %v208 = vunpack.c.l.b16 %v140
  %v209 = vunpack.c.l.b16 %v141
  %v210 = vunpack.c.l.b16 %v142
  %v211 = vunpack.c.l.b16 %v143
  %v212 = vunpack.c.l.b16 %v144
  %v213 = vunpack.c.l.b16 %v145
  %v214 = vunpack.c.l.b16 %v146
  %v215 = vunpack.c.l.b16 %v147
  %v216 = vunpack.c.l.b16 %v148
  %v217 = vunpack.c.l.b16 %v149
  %v218 = vunpack.c.l.b16 %v150
  %v219 = vunpack.c.l.b16 %v151
  %v220 = vunpack.c.l.b16 %v152
  %v221 = vunpack.c.l.b16 %v153
  %v222 = vunpack.c.l.b16 %v154
  %v223 = vunpack.c.l.b16 %v155
  %v224 = vunpack.c.l.b16 %v156
  %v225 = vunpack.c.l.b16 %v157
  %v226 = vunpack.c.l.b16 %v158
  %v227 = vunpack.c.l.b16 %v159
  %v228 = vunpack.c.l.b16 %v160
  %v229 = vunpack.c.l.b16 %v161
  %v230 = vunpack.c.l.b16 %v162
  %v231 = vunpack.c.l.b16 %v163
  %v232 = vunpack.c.l.b16 %v164
  %v233 = vpack.c.b16 %v202, %v201
  %v234 = vpack.c.b16 %v204, %v203
  %v235 = vpack.c.b16 %v206, %v205
  %v236 = vpack.c.b16 %v208, %v207
  %v237 = vpack.c.b16 %v210, %v209
  %v238 = vpack.c.b16 %v212, %v211
  %v239 = vpack.c.b16 %v214, %v213
  %v240 = vpack.c.b16 %v216, %v215
  %v241 = vpack.c.b16 %v218, %v217
  %v242 = vpack.c.b16 %v220, %v219
  %v243 = vpack.c.b16 %v222, %v221
  %v244 = vpack.c.b16 %v224, %v223
  %v245 = vpack.c.b16 %v226, %v225
  %v246 = vpack.c.b16 %v228, %v227
  %v247 = vpack.c.b16 %v230, %v229
  %v248 = vpack.c.b16 %v232, %v231
  %265 = vmatpush.bf16.msra.mxu0 %v240
  %266 = vmatpush.bf16.msra.mxu0 %v239
  %267 = vmatpush.bf16.msra.mxu0 %v238
  %268 = vmatpush.bf16.msra.mxu0 %v237
  %269 = vmatpush.bf16.msra.mxu0 %v236
  %270 = vmatpush.bf16.msra.mxu0 %v235
  %271 = vmatpush.bf16.msra.mxu0 %v234
  %272 = vmatpush.bf16.msra.mxu0 %v233
  %273 = vmatmul.bf16.gmra.mxu0 %v131
  %v274 = vpop.f32.mrf.mxu0
  %v275 = vadd.f32 %v167, %v274
  %v276 = vpop.f32.mrf.mxu0
  %277 = vdwg.mxu0
  %278 = vmatpush.bf16.msra.mxu0 %v248
  %279 = vmatpush.bf16.msra.mxu0 %v247
  %280 = vmatpush.bf16.msra.mxu0 %v246
  %281 = vmatpush.bf16.msra.mxu0 %v245
  %282 = vmatpush.bf16.msra.mxu0 %v244
  %283 = vmatpush.bf16.msra.mxu0 %v243
  %284 = vmatpush.bf16.msra.mxu0 %v242
  %285 = vmatpush.bf16.msra.mxu0 %v241
  %286 = vmatmul.bf16.gmra.mxu0 %v132
  %v287 = vpop.f32.mrf.mxu0
  %v288 = vadd.f32 %v275, %v287
  %v289 = vpop.f32.mrf.mxu0
  %290 = vdwg.mxu0
  %v291 = vld [vmem:[%s5] sm:$0x1]
  %v292 = vld [vmem:[%s6] sm:$0x1]
  %v293 = vsel %vm83, %v288, 0.0
  %294 = vadd.xlane.f32.xlu0 %v293
  %v295 = vpop.xlane.xlu0 %294
  %v296 = vrcp.pop 64.0
  %v297 = vmul.f32 64.0, %v296
  %v298 = vsub.f32 1.0, %v297
  %v299 = vmul.f32 %v296, %v298
  %v300 = vadd.f32 %v296, %v299
  %vm301 = vweird.f32 %v296
  %v302 = vsel %vm301, %v296, %v300
  %v303 = vmul.f32 %v295, %v302
  %v304 = vsub.f32 %v288, %v303
  %v305 = vmul.f32 %v304, %v304
  %v306 = vsel %vm83, %v305, 0.0
  %307 = vadd.xlane.f32.xlu0 %v306
  %v308 = vpop.xlane.xlu0 %307
  %v309 = vmul.f32 %v308, %v302
  %v310 = vadd.f32 %v309, 1e-05
  %v311 = vrsqrt.pop %v310
  %v312 = vmul.f32 %v311, %v310
  %v313 = vmul.f32 %v312, %v311
  %v314 = vmul.f32 0.5, %v313
  %v315 = vsub.f32 1.5, %v314
  %v316 = vmul.f32 %v311, %v315
  %vm317 = vweird.f32 %v310
  %vm318 = vweird.f32 %v311
  %vm319 = vmor %vm317, %vm318
  %v320 = vsel %vm319, %v311, %v316
  %v321 = vmul.f32 %v304, %v320
  %v323 = vperm.slane %v291, 0
  %v325 = vmul.f32 %v321, %v323
  %v327 = vperm.slane %v292, 0
  %v329 = vadd.f32 %v325, %v327
  %v330 = vadd.f32 %v27, %v329
  %331 = vst.msk [vmem:[%s7] sm:$0xff] %vm83, %v330
  // Predicated region
  $region30: #{custom_swin_encoder_forward.17} parent=0 // pred_check
    _
  $region31: #{custom_swin_encoder_forward.17} parent=0 // pred_check_branch
    %333 = sbr.rel (0) target = $region33
  $region32: #{custom_swin_encoder_forward.17} parent=0 // pred_region
    _
  $region33: #{custom_swin_encoder_forward.17} parent=0 // pred_fallthru
    _
  // Predicated region
  $region34: #{custom_swin_encoder_forward.17} parent=0 // pred_check
    _
  $region35: #{custom_swin_encoder_forward.17} parent=0 // pred_check_branch
    %335 = sbr.rel (0) target = $region37
  $region36: #{custom_swin_encoder_forward.17} parent=0 // pred_region
    _
  $region37: #{custom_swin_encoder_forward.17} parent=0 // pred_fallthru
    _

// kernel: custom_swin_encoder_forward.16
$region0: #{custom_swin_encoder_forward.16}
  #allocation0 [shape = 'u32[]', space=smem, size = 0x4, offset = 0x4, fixed_abs, tag = 'smem constant byte address 0x4 - core index']
  #allocation1 [shape = 'u32[72,128]{1,0:T(1,128)}', space=vmem, size = 0x9000, scoped, tag = 'internal scratch']
  %s0 = inlined_call_operand.vmem [shape: f32[2,4,64], index: 0, kind: input, shape index: {}]
  %s1 = inlined_call_operand.vmem [shape: bf16[64,192], index: 1, kind: input, shape index: {}]
  %s2 = inlined_call_operand.vmem [shape: f32[1,192], index: 2, kind: input, shape index: {}]
  %s3 = inlined_call_operand.vmem [shape: f32[1,4], index: 3, kind: input, shape index: {}]
  %s4 = inlined_call_operand.vmem [shape: f32[4,4,4], index: 4, kind: input, shape index: {}]
  %s5 = inlined_call_operand.vmem [shape: bf16[64,64], index: 5, kind: input, shape index: {}]
  %s6 = inlined_call_operand.vmem [shape: f32[1,64], index: 6, kind: input, shape index: {}]
  %s7 = inlined_call_operand.vmem [shape: f32[1,64], index: 7, kind: input, shape index: {}]
  %s8 = inlined_call_operand.vmem [shape: f32[1,64], index: 8, kind: input, shape index: {}]
  %s9 = inlined_call_operand.vmem [shape: f32[2,4,64], index: 9, kind: output, shape index: {}]
  %s10 = sld [smem:[#allocation0]]
  $region46: #{custom_swin_encoder_forward.16} parent=0
    _
  %s12 = ssub.s32 1, %s10
  %s13 = scalar_select 0, %s12, %s10
  // Predicated region
  $region2: #{custom_swin_encoder_forward.16} parent=0 // pred_check
    _
  $region3: #{custom_swin_encoder_forward.16} parent=0 // pred_check_branch
    %15 = sbr.rel (0) target = $region5
  $region4: #{custom_swin_encoder_forward.16} parent=0 // pred_region
    _
  $region5: #{custom_swin_encoder_forward.16} parent=0 // pred_fallthru
    _
  // Predicated region
  $region6: #{custom_swin_encoder_forward.16} parent=0 // pred_check
    _
  $region7: #{custom_swin_encoder_forward.16} parent=0 // pred_check_branch
    %17 = sbr.rel (0) target = $region9
  $region8: #{custom_swin_encoder_forward.16} parent=0 // pred_region
    _
  $region9: #{custom_swin_encoder_forward.16} parent=0 // pred_fallthru
    _
  // Predicated region
  $region10: #{custom_swin_encoder_forward.16} parent=0 // pred_check
    _
  $region11: #{custom_swin_encoder_forward.16} parent=0 // pred_check_branch
    %19 = sbr.rel (0) target = $region13
  $region12: #{custom_swin_encoder_forward.16} parent=0 // pred_region
    _
  $region13: #{custom_swin_encoder_forward.16} parent=0 // pred_fallthru
    _
  // Predicated region
  $region14: #{custom_swin_encoder_forward.16} parent=0 // pred_check
    _
  $region15: #{custom_swin_encoder_forward.16} parent=0 // pred_check_branch
    %21 = sbr.rel (0) target = $region17
  $region16: #{custom_swin_encoder_forward.16} parent=0 // pred_region
    _
  $region17: #{custom_swin_encoder_forward.16} parent=0 // pred_fallthru
    _
  // Predicated region
  $region18: #{custom_swin_encoder_forward.16} parent=0 // pred_check
    _
  $region19: #{custom_swin_encoder_forward.16} parent=0 // pred_check_branch
    %23 = sbr.rel (0) target = $region21
  $region20: #{custom_swin_encoder_forward.16} parent=0 // pred_region
    _
  $region21: #{custom_swin_encoder_forward.16} parent=0 // pred_fallthru
    _
  // Predicated region
  $region22: #{custom_swin_encoder_forward.16} parent=0 // pred_check
    _
  $region23: #{custom_swin_encoder_forward.16} parent=0 // pred_check_branch
    %25 = sbr.rel (0) target = $region25
  $region24: #{custom_swin_encoder_forward.16} parent=0 // pred_region
    _
  $region25: #{custom_swin_encoder_forward.16} parent=0 // pred_fallthru
    _
  // Predicated region
  $region26: #{custom_swin_encoder_forward.16} parent=0 // pred_check
    _
  $region27: #{custom_swin_encoder_forward.16} parent=0 // pred_check_branch
    %27 = sbr.rel (0) target = $region29
  $region28: #{custom_swin_encoder_forward.16} parent=0 // pred_region
    _
  $region29: #{custom_swin_encoder_forward.16} parent=0 // pred_fallthru
    _
  // Predicated region
  $region30: #{custom_swin_encoder_forward.16} parent=0 // pred_check
    _
  $region31: #{custom_swin_encoder_forward.16} parent=0 // pred_check_branch
    %29 = sbr.rel (0) target = $region33
  $region32: #{custom_swin_encoder_forward.16} parent=0 // pred_region
    _
  $region33: #{custom_swin_encoder_forward.16} parent=0 // pred_fallthru
    _
  // Predicated region
  $region34: #{custom_swin_encoder_forward.16} parent=0 // pred_check
    _
  $region35: #{custom_swin_encoder_forward.16} parent=0 // pred_check_branch
    %31 = sbr.rel (0) target = $region37
  $region36: #{custom_swin_encoder_forward.16} parent=0 // pred_region
    _
  $region37: #{custom_swin_encoder_forward.16} parent=0 // pred_fallthru
    _
  %v33 = vld [vmem:[%s0] sm:$0xf]
  %v34 = vld [vmem:[%s0 + $0x4] sm:$0xf]
  %v35 = vpack.c.bf16 %v33, %v33
  %v36 = vpack.c.bf16 %v34, %v34
  %v37 = vld [vmem:[%s1] sm:$0xff]
  %v38 = vld [vmem:[%s1 + $0x8] sm:$0xff]
  %v39 = vld [vmem:[%s1 + $0x10] sm:$0xff]
  %v40 = vld [vmem:[%s1 + $0x18] sm:$0xff]
  %v41 = vld [vmem:[%s1 + $0x20] sm:$0xff]
  %v42 = vld [vmem:[%s1 + $0x28] sm:$0xff]
  %v43 = vld [vmem:[%s1 + $0x30] sm:$0xff]
  %v44 = vld [vmem:[%s1 + $0x38] sm:$0xff]
  %v45 = vld [vmem:[%s2] sm:$0x3]
  %v47 = vperm.slane %v45, 0
  %v48 = vperm.slane %v45, 1
  %v49 = vrot.slane %v48, 4
  %vm50 = vcmask 1043456
  %v51 = vsel %vm50, %v47, %v49
  %53 = vst [vmem:[#allocation1] ss:$4 sm:$0xff] %v35
  %s55 = scalar_lea.vmem [#allocation1], 1
  %56 = vst [vmem:[%s55] ss:$4 sm:$0xff] %v36
  %v57 = vld.sshfl [vmem:[#allocation1] sm:$0xff pattern:$0x73625140]
  %v66 = vunpack.c.l.b16 %v37
  %v67 = vunpack.c.h.b16 %v37
  %v68 = vunpack.c.l.b16 %v38
  %v69 = vunpack.c.h.b16 %v38
  %v70 = vunpack.c.l.b16 %v39
  %v71 = vunpack.c.h.b16 %v39
  %v72 = vunpack.c.l.b16 %v40
  %v73 = vunpack.c.h.b16 %v40
  %v74 = vunpack.c.l.b16 %v41
  %v75 = vunpack.c.h.b16 %v41
  %v76 = vunpack.c.l.b16 %v42
  %v77 = vunpack.c.h.b16 %v42
  %v78 = vunpack.c.l.b16 %v43
  %v79 = vunpack.c.h.b16 %v43
  %v80 = vunpack.c.l.b16 %v44
  %v81 = vunpack.c.h.b16 %v44
  %v82 = vpack.c.b16 %v68, %v66
  %v83 = vpack.c.b16 %v69, %v67
  %v84 = vpack.c.b16 %v72, %v70
  %v85 = vpack.c.b16 %v73, %v71
  %v86 = vpack.c.b16 %v76, %v74
  %v87 = vpack.c.b16 %v77, %v75
  %v88 = vpack.c.b16 %v80, %v78
  %v89 = vpack.c.b16 %v81, %v79
  %98 = vst [vmem:[#allocation1] ss:$2 sm:$0xff] %v51
  %s99 = scalar_lea.vmem [#allocation1], 1
  %100 = vst [vmem:[%s99] ss:$2 sm:$0xff] %v51
  %v101 = vld.sshfl [vmem:[#allocation1] sm:$0xff pattern:$0x75316420]
  %v102 = vld.sshfl [vmem:[#allocation1 + $0x8] sm:$0xff pattern:$0x75316420]
  %vm105 = vcmask 523264
  %v106 = vsel %vm105, %v57, 0
  %108 = vmatpush.bf16.msra.mxu0 0
  %109 = vmatpush.bf16.msra.mxu0 0
  %110 = vmatpush.bf16.msra.mxu0 0
  %111 = vmatpush.bf16.msra.mxu0 0
  %112 = vmatpush.bf16.msra.mxu0 %v88
  %113 = vmatpush.bf16.msra.mxu0 %v86
  %114 = vmatpush.bf16.msra.mxu0 %v84
  %115 = vmatpush.bf16.msra.mxu0 %v82
  %116 = vmatmul.bf16.gmra.mxu0 %v106
  %v117 = vpop.f32.mrf.mxu0
  %v118 = vadd.f32 %v101, %v117
  %v119 = vpop.f32.mrf.mxu0
  %120 = vdwg.mxu0
  %121 = vmatpush.bf16.msra.mxu0 0
  %122 = vmatpush.bf16.msra.mxu0 0
  %123 = vmatpush.bf16.msra.mxu0 0
  %124 = vmatpush.bf16.msra.mxu0 0
  %125 = vmatpush.bf16.msra.mxu0 %v89
  %126 = vmatpush.bf16.msra.mxu0 %v87
  %127 = vmatpush.bf16.msra.mxu0 %v85
  %128 = vmatpush.bf16.msra.mxu0 %v83
  %129 = vmatmul.bf16.gmra.mxu0 %v106
  %v130 = vpop.f32.mrf.mxu0
  %v131 = vadd.f32 %v102, %v130
  %v132 = vpop.f32.mrf.mxu0
  %133 = vdwg.mxu0
  %v136 = vrot.slane %v131, 4
  %v137 = vsel %vm50, %v118, %v136
  %v138 = vsel %vm50, %v136, %v118
  %v139 = vrot.slane %v138, 4
  %v142 = vld [vmem:[%s3] sm:$0x1]
  %v143 = vmul.f32 %v137, %v137
  %v144 = vmul.f32 %v139, %v139
  %vm145 = vcmask 125952
  %v146 = vsel %vm145, %v143, 0.0
  %147 = vadd.xlane.f32.xlu0 %v146
  %v148 = vpop.xlane.xlu0 %147
  %v149 = vsel %vm145, %v144, 0.0
  %150 = vadd.xlane.f32.xlu0 %v149
  %v151 = vpop.xlane.xlu0 %150
  %v152 = vmax.f32 %v148, 1e-24
  %v153 = vmax.f32 %v151, 1e-24
  %v154 = vrsqrt.pop %v152
  %v155 = vmul.f32 %v154, %v152
  %v156 = vmul.f32 %v155, %v154
  %v157 = vmul.f32 0.5, %v156
  %v158 = vsub.f32 1.5, %v157
  %v159 = vmul.f32 %v154, %v158
  %vm160 = vweird.f32 %v152
  %vm161 = vweird.f32 %v154
  %vm162 = vmor %vm160, %vm161
  %v163 = vsel %vm162, %v154, %v159
  %v164 = vrsqrt.pop %v153
  %v165 = vmul.f32 %v164, %v153
  %v166 = vmul.f32 %v165, %v164
  %v167 = vmul.f32 0.5, %v166
  %v168 = vsub.f32 1.5, %v167
  %v169 = vmul.f32 %v164, %v168
  %vm170 = vweird.f32 %v153
  %vm171 = vweird.f32 %v164
  %vm172 = vmor %vm170, %vm171
  %v173 = vsel %vm172, %v164, %v169
  %v174 = vmul.f32 %v137, %v163
  %v175 = vmul.f32 %v139, %v173
  %178 = vst [vmem:[#allocation1] ss:$2 sm:$0xff] %v143
  %v179 = vld.sshfl [vmem:[#allocation1] sm:$0xff pattern:$0x75316420]
  %s180 = scalar_lea.vmem [#allocation1], 16
  %181 = vst [vmem:[%s180] ss:$2 sm:$0xff] %v144
  %v182 = vld.sshfl [vmem:[#allocation1 + $0x10] sm:$0xff pattern:$0x75316420]
  %183 = vrot.lane.b32.xlu0 %v179, 64
  %v184 = vpop.permute.xlu0 %183
  %185 = vrot.lane.b32.xlu0 %v182, 64
  %v186 = vpop.permute.xlu0 %185
  %v189 = vsel %vm145, %v184, 0.0
  %190 = vadd.xlane.f32.xlu0 %v189
  %v191 = vpop.xlane.xlu0 %190
  %v192 = vsel %vm145, %v186, 0.0
  %193 = vadd.xlane.f32.xlu0 %v192
  %v194 = vpop.xlane.xlu0 %193
  %v195 = vmax.f32 %v191, 1e-24
  %v196 = vmax.f32 %v194, 1e-24
  %v197 = vrsqrt.pop %v195
  %v198 = vmul.f32 %v197, %v195
  %v199 = vmul.f32 %v198, %v197
  %v200 = vmul.f32 0.5, %v199
  %v201 = vsub.f32 1.5, %v200
  %v202 = vmul.f32 %v197, %v201
  %vm203 = vweird.f32 %v195
  %vm204 = vweird.f32 %v197
  %vm205 = vmor %vm203, %vm204
  %v206 = vsel %vm205, %v197, %v202
  %v207 = vrsqrt.pop %v196
  %v208 = vmul.f32 %v207, %v196
  %v209 = vmul.f32 %v208, %v207
  %v210 = vmul.f32 0.5, %v209
  %v211 = vsub.f32 1.5, %v210
  %v212 = vmul.f32 %v207, %v211
  %vm213 = vweird.f32 %v196
  %vm214 = vweird.f32 %v207
  %vm215 = vmor %vm213, %vm214
  %v216 = vsel %vm215, %v207, %v212
  %v217 = vmul.f32 %v137, %v206
  %v218 = vmul.f32 %v139, %v216
  %220 = vst [vmem:[#allocation1] ss:$2 sm:$0xff] %v217
  %v221 = vld.sshfl [vmem:[#allocation1] sm:$0xff pattern:$0x75316420]
  %222 = vrot.lane.b32.xlu0 %v221, 64
  %v223 = vpop.permute.xlu0 %222
  %vm224 = vcmask 130048
  %v226 = vsel %vm224, %v174, 0
  %v228 = vsel %vm224, %v223, 0
  %230 = vmatpush.xpose.msra.mxu0 0.0
  %231 = vmatpush.xpose.msra.mxu0 0.0
  %232 = vmatpush.xpose.msra.mxu0 0.0
  %233 = vmatpush.xpose.msra.mxu0 0.0
  %234 = vmatpush.xpose.msra.mxu0 0.0
  %235 = vmatpush.xpose.msra.mxu0 0.0
  %236 = vmatpush.xpose.msra.mxu0 0.0
  %237 = vmatpush.xpose.msra.mxu0 0.0
  %238 = vmatpush.xpose.msra.mxu0 0.0
  %239 = vmatpush.xpose.msra.mxu0 0.0
  %240 = vmatpush.xpose.msra.mxu0 0.0
  %241 = vmatpush.xpose.msra.mxu0 0.0
  %242 = vmatpush.xpose.msra.mxu0 0.0
  %243 = vmatpush.xpose.msra.mxu0 0.0
  %244 = vmatpush.xpose.msra.mxu0 0.0
  %245 = vmatpush.xpose.msra.mxu0 %v228
  %246 = vmatmul.f32.gmra.mxu0 %v226
  %v247 = vpop.f32.mrf.mxu0
  %v248 = vadd.f32 0.0, %v247
  %249 = vdwg.mxu0
  %251 = vst [vmem:[#allocation1] ss:$2 sm:$0xff] %v218
  %v252 = vld.sshfl [vmem:[#allocation1] sm:$0xff pattern:$0x75316420]
  %253 = vrot.lane.b32.xlu0 %v252, 64
  %v254 = vpop.permute.xlu0 %253
  %v256 = vsel %vm224, %v175, 0
  %v258 = vsel %vm224, %v254, 0
  %260 = vmatpush.xpose.msra.mxu0 0.0
  %261 = vmatpush.xpose.msra.mxu0 0.0
  %262 = vmatpush.xpose.msra.mxu0 0.0
  %263 = vmatpush.xpose.msra.mxu0 0.0
  %264 = vmatpush.xpose.msra.mxu0 0.0
  %265 = vmatpush.xpose.msra.mxu0 0.0
  %266 = vmatpush.xpose.msra.mxu0 0.0
  %267 = vmatpush.xpose.msra.mxu0 0.0
  %268 = vmatpush.xpose.msra.mxu0 0.0
  %269 = vmatpush.xpose.msra.mxu0 0.0
  %270 = vmatpush.xpose.msra.mxu0 0.0
  %271 = vmatpush.xpose.msra.mxu0 0.0
  %272 = vmatpush.xpose.msra.mxu0 0.0
  %273 = vmatpush.xpose.msra.mxu0 0.0
  %274 = vmatpush.xpose.msra.mxu0 0.0
  %275 = vmatpush.xpose.msra.mxu0 %v258
  %276 = vmatmul.f32.gmra.mxu0 %v256
  %v277 = vpop.f32.mrf.mxu0
  %v278 = vadd.f32 0.0, %v277
  %279 = vdwg.mxu0
  %s280 = vtos %v142
  %v281 = vstv %s280
  %v282 = vmul.f32 %v248, %v281
  %v283 = vmul.f32 %v278, %v281
  %v284 = vld [vmem:[%s4] sm:$0xf]
  %v285 = vadd.f32 %v282, %v284
  %v286 = vadd.f32 %v283, %v284
  %vm287 = vcmask 27648
  %v288 = vsel %vm287, %v285, -inf
  %289 = vmax.xlane.f32.xlu0 %v288
  %v290 = vpop.xlane.xlu0 %289
  %v291 = vsel %vm287, %v286, -inf
  %292 = vmax.xlane.f32.xlu0 %v291
  %v293 = vpop.xlane.xlu0 %292
  %v294 = vsub.f32 %v285, %v290
  %v295 = vsub.f32 %v286, %v293
  %v296 = vmul.f32 %v294, 1.442695
  %v297 = vpow.pop %v296
  %v298 = vmul.f32 %v295, 1.442695
  %v299 = vpow.pop %v298
  %v300 = vsel %vm287, %v297, 0.0
  %301 = vadd.xlane.f32.xlu0 %v300
  %v302 = vpop.xlane.xlu0 %301
  %v303 = vsel %vm287, %v299, 0.0
  %304 = vadd.xlane.f32.xlu0 %v303
  %v305 = vpop.xlane.xlu0 %304
  %v306 = vrcp.pop %v302
  %v307 = vrcp.pop %v305
  %v308 = vmul.f32 %v297, %v306
  %v309 = vmul.f32 %v299, %v307
  %v310 = vpack.c.bf16 %v308, %v308
  %v311 = vpack.c.bf16 %v309, %v309
  %312 = vst [vmem:[#allocation1] ss:$2 sm:$0xff] %v137
  %v313 = vld.sshfl [vmem:[#allocation1 + $0x8] sm:$0xff pattern:$0x75316420]
  %s314 = scalar_lea.vmem [#allocation1], 16
  %315 = vst [vmem:[%s314] ss:$2 sm:$0xff] %v139
  %v316 = vld.sshfl [vmem:[#allocation1 + $0x18] sm:$0xff pattern:$0x75316420]
  %v319 = vpack.c.bf16 %v313, %v313
  %v320 = vpack.c.bf16 %v316, %v316
  %vm321 = vcmask 31744
  %v323 = vsel %vm321, %v310, 0
  %vm325 = vcmask 1041408
  %v327 = vsel %vm325, %v319, 0
  %329 = vmatpush.bf16.msra.mxu0 0
  %330 = vmatpush.bf16.msra.mxu0 0
  %331 = vmatpush.bf16.msra.mxu0 0
  %332 = vmatpush.bf16.msra.mxu0 0
  %333 = vmatpush.bf16.msra.mxu0 0
  %334 = vmatpush.bf16.msra.mxu0 0
  %335 = vmatpush.bf16.msra.mxu0 0
  %336 = vmatpush.bf16.msra.mxu0 %v327
  %337 = vmatmul.bf16.gmra.mxu0 %v323
  %v338 = vpop.f32.mrf.mxu0
  %v339 = vadd.f32 0.0, %v338
  %v340 = vpop.f32.mrf.mxu0
  %341 = vdwg.mxu0
  %v343 = vsel %vm321, %v311, 0
  %v346 = vsel %vm325, %v320, 0
  %348 = vmatpush.bf16.msra.mxu0 0
  %349 = vmatpush.bf16.msra.mxu0 0
  %350 = vmatpush.bf16.msra.mxu0 0
  %351 = vmatpush.bf16.msra.mxu0 0
  %352 = vmatpush.bf16.msra.mxu0 0
  %353 = vmatpush.bf16.msra.mxu0 0
  %354 = vmatpush.bf16.msra.mxu0 0
  %355 = vmatpush.bf16.msra.mxu0 %v346
  %356 = vmatmul.bf16.gmra.mxu0 %v343
  %v357 = vpop.f32.mrf.mxu0
  %v358 = vadd.f32 0.0, %v357
  %v359 = vpop.f32.mrf.mxu0
  %360 = vdwg.mxu0
  %361 = vst [vmem:[#allocation1] ss:$2 sm:$0xff] %v143
  %v362 = vld.sshfl [vmem:[#allocation1] sm:$0xff pattern:$0x75316420]
  %s363 = scalar_lea.vmem [#allocation1], 16
  %364 = vst [vmem:[%s363] ss:$2 sm:$0xff] %v144
  %v365 = vld.sshfl [vmem:[#allocation1 + $0x10] sm:$0xff pattern:$0x75316420]
  %366 = vrot.lane.b32.xlu0 %v362, 112
  %v367 = vpop.permute.xlu0 %366
  %368 = vrot.lane.b32.xlu0 %v365, 112
  %v369 = vpop.permute.xlu0 %368
  %v372 = vsel %vm145, %v367, 0.0
  %373 = vadd.xlane.f32.xlu0 %v372
  %v374 = vpop.xlane.xlu0 %373
  %v375 = vsel %vm145, %v369, 0.0
  %376 = vadd.xlane.f32.xlu0 %v375
  %v377 = vpop.xlane.xlu0 %376
  %v378 = vmax.f32 %v374, 1e-24
  %v379 = vmax.f32 %v377, 1e-24
  %v380 = vrsqrt.pop %v378
  %v381 = vmul.f32 %v380, %v378
  %v382 = vmul.f32 %v381, %v380
  %v383 = vmul.f32 0.5, %v382
  %v384 = vsub.f32 1.5, %v383
  %v385 = vmul.f32 %v380, %v384
  %vm386 = vweird.f32 %v378
  %vm387 = vweird.f32 %v380
  %vm388 = vmor %vm386, %vm387
  %v389 = vsel %vm388, %v380, %v385
  %v390 = vrsqrt.pop %v379
  %v391 = vmul.f32 %v390, %v379
  %v392 = vmul.f32 %v391, %v390
  %v393 = vmul.f32 0.5, %v392
  %v394 = vsub.f32 1.5, %v393
  %v395 = vmul.f32 %v390, %v394
  %vm396 = vweird.f32 %v379
  %vm397 = vweird.f32 %v390
  %vm398 = vmor %vm396, %vm397
  %v399 = vsel %vm398, %v390, %v395
  %v400 = vmul.f32 %v137, %v389
  %v401 = vmul.f32 %v139, %v399
  %402 = vst [vmem:[#allocation1] ss:$2 sm:$0xff] %v143
  %v403 = vld.sshfl [vmem:[#allocation1] sm:$0xff pattern:$0x75316420]
  %s404 = scalar_lea.vmem [#allocation1], 16
  %405 = vst [vmem:[%s404] ss:$2 sm:$0xff] %v144
  %v406 = vld.sshfl [vmem:[#allocation1 + $0x10] sm:$0xff pattern:$0x75316420]
  %407 = vrot.lane.b32.xlu0 %v403, 48
  %v408 = vpop.permute.xlu0 %407
  %409 = vrot.lane.b32.xlu0 %v406, 48
  %v410 = vpop.permute.xlu0 %409
  %v413 = vsel %vm145, %v408, 0.0
  %414 = vadd.xlane.f32.xlu0 %v413
  %v415 = vpop.xlane.xlu0 %414
  %v416 = vsel %vm145, %v410, 0.0
  %417 = vadd.xlane.f32.xlu0 %v416
  %v418 = vpop.xlane.xlu0 %417
  %v419 = vmax.f32 %v415, 1e-24
  %v420 = vmax.f32 %v418, 1e-24
  %v421 = vrsqrt.pop %v419
  %v422 = vmul.f32 %v421, %v419
  %v423 = vmul.f32 %v422, %v421
  %v424 = vmul.f32 0.5, %v423
  %v425 = vsub.f32 1.5, %v424
  %v426 = vmul.f32 %v421, %v425
  %vm427 = vweird.f32 %v419
  %vm428 = vweird.f32 %v421
  %vm429 = vmor %vm427, %vm428
  %v430 = vsel %vm429, %v421, %v426
  %v431 = vrsqrt.pop %v420
  %v432 = vmul.f32 %v431, %v420
  %v433 = vmul.f32 %v432, %v431
  %v434 = vmul.f32 0.5, %v433
  %v435 = vsub.f32 1.5, %v434
  %v436 = vmul.f32 %v431, %v435
  %vm437 = vweird.f32 %v420
  %vm438 = vweird.f32 %v431
  %vm439 = vmor %vm437, %vm438
  %v440 = vsel %vm439, %v431, %v436
  %v441 = vmul.f32 %v137, %v430
  %v442 = vmul.f32 %v139, %v440
  %444 = vst [vmem:[#allocation1] ss:$2 sm:$0xff] %v400
  %v445 = vld.sshfl [vmem:[#allocation1] sm:$0xff pattern:$0x75316420]
  %446 = vrot.lane.b32.xlu0 %v445, 112
  %v447 = vpop.permute.xlu0 %446
  %449 = vst [vmem:[#allocation1] ss:$2 sm:$0xff] %v441
  %v450 = vld.sshfl [vmem:[#allocation1] sm:$0xff pattern:$0x75316420]
  %451 = vrot.lane.b32.xlu0 %v450, 48
  %v452 = vpop.permute.xlu0 %451
  %v453 = vsel %vm224, %v447, 0
  %v455 = vsel %vm224, %v452, 0
  %457 = vmatpush.xpose.msra.mxu0 0.0
  %458 = vmatpush.xpose.msra.mxu0 0.0
  %459 = vmatpush.xpose.msra.mxu0 0.0
  %460 = vmatpush.xpose.msra.mxu0 0.0
  %461 = vmatpush.xpose.msra.mxu0 0.0
  %462 = vmatpush.xpose.msra.mxu0 0.0
  %463 = vmatpush.xpose.msra.mxu0 0.0
  %464 = vmatpush.xpose.msra.mxu0 0.0
  %465 = vmatpush.xpose.msra.mxu0 0.0
  %466 = vmatpush.xpose.msra.mxu0 0.0
  %467 = vmatpush.xpose.msra.mxu0 0.0
  %468 = vmatpush.xpose.msra.mxu0 0.0
  %469 = vmatpush.xpose.msra.mxu0 0.0
  %470 = vmatpush.xpose.msra.mxu0 0.0
  %471 = vmatpush.xpose.msra.mxu0 0.0
  %472 = vmatpush.xpose.msra.mxu0 %v455
  %473 = vmatmul.f32.gmra.mxu0 %v453
  %v474 = vpop.f32.mrf.mxu0
  %v475 = vadd.f32 0.0, %v474
  %476 = vdwg.mxu0
  %478 = vst [vmem:[#allocation1] ss:$2 sm:$0xff] %v401
  %v479 = vld.sshfl [vmem:[#allocation1] sm:$0xff pattern:$0x75316420]
  %480 = vrot.lane.b32.xlu0 %v479, 112
  %v481 = vpop.permute.xlu0 %480
  %483 = vst [vmem:[#allocation1] ss:$2 sm:$0xff] %v442
  %v484 = vld.sshfl [vmem:[#allocation1] sm:$0xff pattern:$0x75316420]
  %485 = vrot.lane.b32.xlu0 %v484, 48
  %v486 = vpop.permute.xlu0 %485
  %v487 = vsel %vm224, %v481, 0
  %v489 = vsel %vm224, %v486, 0
  %491 = vmatpush.xpose.msra.mxu0 0.0
  %492 = vmatpush.xpose.msra.mxu0 0.0
  %493 = vmatpush.xpose.msra.mxu0 0.0
  %494 = vmatpush.xpose.msra.mxu0 0.0
  %495 = vmatpush.xpose.msra.mxu0 0.0
  %496 = vmatpush.xpose.msra.mxu0 0.0
  %497 = vmatpush.xpose.msra.mxu0 0.0
  %498 = vmatpush.xpose.msra.mxu0 0.0
  %499 = vmatpush.xpose.msra.mxu0 0.0
  %500 = vmatpush.xpose.msra.mxu0 0.0
  %501 = vmatpush.xpose.msra.mxu0 0.0
  %502 = vmatpush.xpose.msra.mxu0 0.0
  %503 = vmatpush.xpose.msra.mxu0 0.0
  %504 = vmatpush.xpose.msra.mxu0 0.0
  %505 = vmatpush.xpose.msra.mxu0 0.0
  %506 = vmatpush.xpose.msra.mxu0 %v489
  %507 = vmatmul.f32.gmra.mxu0 %v487
  %v508 = vpop.f32.mrf.mxu0
  %v509 = vadd.f32 0.0, %v508
  %510 = vdwg.mxu0
  %511 = vrot.lane.b32.xlu0 %v142, 127
  %v512 = vpop.permute.xlu0 %511
  %s513 = vtos %v512
  %v514 = vstv %s513
  %v515 = vmul.f32 %v475, %v514
  %v516 = vmul.f32 %v509, %v514
  %s517 = scalar_lea.vmem %s4, 4
  %v518 = vld [vmem:[%s517] sm:$0xf]
  %v519 = vadd.f32 %v515, %v518
  %v520 = vadd.f32 %v516, %v518
  %v521 = vsel %vm287, %v519, -inf
  %522 = vmax.xlane.f32.xlu0 %v521
  %v523 = vpop.xlane.xlu0 %522
  %v524 = vsel %vm287, %v520, -inf
  %525 = vmax.xlane.f32.xlu0 %v524
  %v526 = vpop.xlane.xlu0 %525
  %v527 = vsub.f32 %v519, %v523
  %v528 = vsub.f32 %v520, %v526
  %v529 = vmul.f32 %v527, 1.442695
  %v530 = vpow.pop %v529
  %v531 = vmul.f32 %v528, 1.442695
  %v532 = vpow.pop %v531
  %v533 = vsel %vm287, %v530, 0.0
  %534 = vadd.xlane.f32.xlu0 %v533
  %v535 = vpop.xlane.xlu0 %534
  %v536 = vsel %vm287, %v532, 0.0
  %537 = vadd.xlane.f32.xlu0 %v536
  %v538 = vpop.xlane.xlu0 %537
  %v539 = vrcp.pop %v535
  %v540 = vrcp.pop %v538
  %v541 = vmul.f32 %v530, %v539
  %v542 = vmul.f32 %v532, %v540
  %v543 = vpack.c.bf16 %v541, %v541
  %v544 = vpack.c.bf16 %v542, %v542
  %545 = vst [vmem:[#allocation1] ss:$2 sm:$0xff] %v137
  %v546 = vld.sshfl [vmem:[#allocation1 + $0x8] sm:$0xff pattern:$0x75316420]
  %s547 = scalar_lea.vmem [#allocation1], 16
  %548 = vst [vmem:[%s547] ss:$2 sm:$0xff] %v139
  %v549 = vld.sshfl [vmem:[#allocation1 + $0x18] sm:$0xff pattern:$0x75316420]
  %550 = vrot.lane.b32.xlu0 %v546, 112
  %v551 = vpop.permute.xlu0 %550
  %552 = vrot.lane.b32.xlu0 %v549, 112
  %v553 = vpop.permute.xlu0 %552
  %v556 = vpack.c.bf16 %v551, %v551
  %v557 = vpack.c.bf16 %v553, %v553
  %v559 = vsel %vm321, %v543, 0
  %v562 = vsel %vm325, %v556, 0
  %564 = vmatpush.bf16.msra.mxu0 0
  %565 = vmatpush.bf16.msra.mxu0 0
  %566 = vmatpush.bf16.msra.mxu0 0
  %567 = vmatpush.bf16.msra.mxu0 0
  %568 = vmatpush.bf16.msra.mxu0 0
  %569 = vmatpush.bf16.msra.mxu0 0
  %570 = vmatpush.bf16.msra.mxu0 0
  %571 = vmatpush.bf16.msra.mxu0 %v562
  %572 = vmatmul.bf16.gmra.mxu0 %v559
  %v573 = vpop.f32.mrf.mxu0
  %v574 = vadd.f32 0.0, %v573
  %v575 = vpop.f32.mrf.mxu0
  %576 = vdwg.mxu0
  %v578 = vsel %vm321, %v544, 0
  %v581 = vsel %vm325, %v557, 0
  %583 = vmatpush.bf16.msra.mxu0 0
  %584 = vmatpush.bf16.msra.mxu0 0
  %585 = vmatpush.bf16.msra.mxu0 0
  %586 = vmatpush.bf16.msra.mxu0 0
  %587 = vmatpush.bf16.msra.mxu0 0
  %588 = vmatpush.bf16.msra.mxu0 0
  %589 = vmatpush.bf16.msra.mxu0 0
  %590 = vmatpush.bf16.msra.mxu0 %v581
  %591 = vmatmul.bf16.gmra.mxu0 %v578
  %v592 = vpop.f32.mrf.mxu0
  %v593 = vadd.f32 0.0, %v592
  %v594 = vpop.f32.mrf.mxu0
  %595 = vdwg.mxu0
  %596 = vst [vmem:[#allocation1] ss:$2 sm:$0xff] %v143
  %v597 = vld.sshfl [vmem:[#allocation1] sm:$0xff pattern:$0x75316420]
  %s598 = scalar_lea.vmem [#allocation1], 16
  %599 = vst [vmem:[%s598] ss:$2 sm:$0xff] %v144
  %v600 = vld.sshfl [vmem:[#allocation1 + $0x10] sm:$0xff pattern:$0x75316420]
  %601 = vrot.lane.b32.xlu0 %v597, 96
  %v602 = vpop.permute.xlu0 %601
  %603 = vrot.lane.b32.xlu0 %v600, 96
  %v604 = vpop.permute.xlu0 %603
  %v607 = vsel %vm145, %v602, 0.0
  %608 = vadd.xlane.f32.xlu0 %v607
  %v609 = vpop.xlane.xlu0 %608
  %v610 = vsel %vm145, %v604, 0.0
  %611 = vadd.xlane.f32.xlu0 %v610
  %v612 = vpop.xlane.xlu0 %611
  %v613 = vmax.f32 %v609, 1e-24
  %v614 = vmax.f32 %v612, 1e-24
  %v615 = vrsqrt.pop %v613
  %v616 = vmul.f32 %v615, %v613
  %v617 = vmul.f32 %v616, %v615
  %v618 = vmul.f32 0.5, %v617
  %v619 = vsub.f32 1.5, %v618
  %v620 = vmul.f32 %v615, %v619
  %vm621 = vweird.f32 %v613
  %vm622 = vweird.f32 %v615
  %vm623 = vmor %vm621, %vm622
  %v624 = vsel %vm623, %v615, %v620
  %v625 = vrsqrt.pop %v614
  %v626 = vmul.f32 %v625, %v614
  %v627 = vmul.f32 %v626, %v625
  %v628 = vmul.f32 0.5, %v627
  %v629 = vsub.f32 1.5, %v628
  %v630 = vmul.f32 %v625, %v629
  %vm631 = vweird.f32 %v614
  %vm632 = vweird.f32 %v625
  %vm633 = vmor %vm631, %vm632
  %v634 = vsel %vm633, %v625, %v630
  %v635 = vmul.f32 %v137, %v624
  %v636 = vmul.f32 %v139, %v634
  %637 = vst [vmem:[#allocation1] ss:$2 sm:$0xff] %v143
  %v638 = vld.sshfl [vmem:[#allocation1] sm:$0xff pattern:$0x75316420]
  %s639 = scalar_lea.vmem [#allocation1], 16
  %640 = vst [vmem:[%s639] ss:$2 sm:$0xff] %v144
  %v641 = vld.sshfl [vmem:[#allocation1 + $0x10] sm:$0xff pattern:$0x75316420]
  %642 = vrot.lane.b32.xlu0 %v638, 32
  %v643 = vpop.permute.xlu0 %642
  %644 = vrot.lane.b32.xlu0 %v641, 32
  %v645 = vpop.permute.xlu0 %644
  %v648 = vsel %vm145, %v643, 0.0
  %649 = vadd.xlane.f32.xlu0 %v648
  %v650 = vpop.xlane.xlu0 %649
  %v651 = vsel %vm145, %v645, 0.0
  %652 = vadd.xlane.f32.xlu0 %v651
  %v653 = vpop.xlane.xlu0 %652
  %v654 = vmax.f32 %v650, 1e-24
  %v655 = vmax.f32 %v653, 1e-24
  %v656 = vrsqrt.pop %v654
  %v657 = vmul.f32 %v656, %v654
  %v658 = vmul.f32 %v657, %v656
  %v659 = vmul.f32 0.5, %v658
  %v660 = vsub.f32 1.5, %v659
  %v661 = vmul.f32 %v656, %v660
  %vm662 = vweird.f32 %v654
  %vm663 = vweird.f32 %v656
  %vm664 = vmor %vm662, %vm663
  %v665 = vsel %vm664, %v656, %v661
  %v666 = vrsqrt.pop %v655
  %v667 = vmul.f32 %v666, %v655
  %v668 = vmul.f32 %v667, %v666
  %v669 = vmul.f32 0.5, %v668
  %v670 = vsub.f32 1.5, %v669
  %v671 = vmul.f32 %v666, %v670
  %vm672 = vweird.f32 %v655
  %vm673 = vweird.f32 %v666
  %vm674 = vmor %vm672, %vm673
  %v675 = vsel %vm674, %v666, %v671
  %v676 = vmul.f32 %v137, %v665
  %v677 = vmul.f32 %v139, %v675
  %679 = vst [vmem:[#allocation1] ss:$2 sm:$0xff] %v635
  %v680 = vld.sshfl [vmem:[#allocation1] sm:$0xff pattern:$0x75316420]
  %681 = vrot.lane.b32.xlu0 %v680, 96
  %v682 = vpop.permute.xlu0 %681
  %684 = vst [vmem:[#allocation1] ss:$2 sm:$0xff] %v676
  %v685 = vld.sshfl [vmem:[#allocation1] sm:$0xff pattern:$0x75316420]
  %686 = vrot.lane.b32.xlu0 %v685, 32
  %v687 = vpop.permute.xlu0 %686
  %v688 = vsel %vm224, %v682, 0
  %v690 = vsel %vm224, %v687, 0
  %692 = vmatpush.xpose.msra.mxu0 0.0
  %693 = vmatpush.xpose.msra.mxu0 0.0
  %694 = vmatpush.xpose.msra.mxu0 0.0
  %695 = vmatpush.xpose.msra.mxu0 0.0
  %696 = vmatpush.xpose.msra.mxu0 0.0
  %697 = vmatpush.xpose.msra.mxu0 0.0
  %698 = vmatpush.xpose.msra.mxu0 0.0
  %699 = vmatpush.xpose.msra.mxu0 0.0
  %700 = vmatpush.xpose.msra.mxu0 0.0
  %701 = vmatpush.xpose.msra.mxu0 0.0
  %702 = vmatpush.xpose.msra.mxu0 0.0
  %703 = vmatpush.xpose.msra.mxu0 0.0
  %704 = vmatpush.xpose.msra.mxu0 0.0
  %705 = vmatpush.xpose.msra.mxu0 0.0
  %706 = vmatpush.xpose.msra.mxu0 0.0
  %707 = vmatpush.xpose.msra.mxu0 %v690
  %708 = vmatmul.f32.gmra.mxu0 %v688
  %v709 = vpop.f32.mrf.mxu0
  %v710 = vadd.f32 0.0, %v709
  %711 = vdwg.mxu0
  %713 = vst [vmem:[#allocation1] ss:$2 sm:$0xff] %v636
  %v714 = vld.sshfl [vmem:[#allocation1] sm:$0xff pattern:$0x75316420]
  %715 = vrot.lane.b32.xlu0 %v714, 96
  %v716 = vpop.permute.xlu0 %715
  %718 = vst [vmem:[#allocation1] ss:$2 sm:$0xff] %v677
  %v719 = vld.sshfl [vmem:[#allocation1] sm:$0xff pattern:$0x75316420]
  %720 = vrot.lane.b32.xlu0 %v719, 32
  %v721 = vpop.permute.xlu0 %720
  %v722 = vsel %vm224, %v716, 0
  %v724 = vsel %vm224, %v721, 0
  %726 = vmatpush.xpose.msra.mxu0 0.0
  %727 = vmatpush.xpose.msra.mxu0 0.0
  %728 = vmatpush.xpose.msra.mxu0 0.0
  %729 = vmatpush.xpose.msra.mxu0 0.0
  %730 = vmatpush.xpose.msra.mxu0 0.0
  %731 = vmatpush.xpose.msra.mxu0 0.0
  %732 = vmatpush.xpose.msra.mxu0 0.0
  %733 = vmatpush.xpose.msra.mxu0 0.0
  %734 = vmatpush.xpose.msra.mxu0 0.0
  %735 = vmatpush.xpose.msra.mxu0 0.0
  %736 = vmatpush.xpose.msra.mxu0 0.0
  %737 = vmatpush.xpose.msra.mxu0 0.0
  %738 = vmatpush.xpose.msra.mxu0 0.0
  %739 = vmatpush.xpose.msra.mxu0 0.0
  %740 = vmatpush.xpose.msra.mxu0 0.0
  %741 = vmatpush.xpose.msra.mxu0 %v724
  %742 = vmatmul.f32.gmra.mxu0 %v722
  %v743 = vpop.f32.mrf.mxu0
  %v744 = vadd.f32 0.0, %v743
  %745 = vdwg.mxu0
  %746 = vrot.lane.b32.xlu0 %v142, 126
  %v747 = vpop.permute.xlu0 %746
  %s748 = vtos %v747
  %v749 = vstv %s748
  %v750 = vmul.f32 %v710, %v749
  %v751 = vmul.f32 %v744, %v749
  %s752 = scalar_lea.vmem %s4, 8
  %v753 = vld [vmem:[%s752] sm:$0xf]
  %v754 = vadd.f32 %v750, %v753
  %v755 = vadd.f32 %v751, %v753
  %v756 = vsel %vm287, %v754, -inf
  %757 = vmax.xlane.f32.xlu0 %v756
  %v758 = vpop.xlane.xlu0 %757
  %v759 = vsel %vm287, %v755, -inf
  %760 = vmax.xlane.f32.xlu0 %v759
  %v761 = vpop.xlane.xlu0 %760
  %v762 = vsub.f32 %v754, %v758
  %v763 = vsub.f32 %v755, %v761
  %v764 = vmul.f32 %v762, 1.442695
  %v765 = vpow.pop %v764
  %v766 = vmul.f32 %v763, 1.442695
  %v767 = vpow.pop %v766
  %v768 = vsel %vm287, %v765, 0.0
  %769 = vadd.xlane.f32.xlu0 %v768
  %v770 = vpop.xlane.xlu0 %769
  %v771 = vsel %vm287, %v767, 0.0
  %772 = vadd.xlane.f32.xlu0 %v771
  %v773 = vpop.xlane.xlu0 %772
  %v774 = vrcp.pop %v770
  %v775 = vrcp.pop %v773
  %v776 = vmul.f32 %v765, %v774
  %v777 = vmul.f32 %v767, %v775
  %v778 = vpack.c.bf16 %v776, %v776
  %v779 = vpack.c.bf16 %v777, %v777
  %780 = vst [vmem:[#allocation1] ss:$2 sm:$0xff] %v137
  %v781 = vld.sshfl [vmem:[#allocation1 + $0x8] sm:$0xff pattern:$0x75316420]
  %s782 = scalar_lea.vmem [#allocation1], 16
  %783 = vst [vmem:[%s782] ss:$2 sm:$0xff] %v139
  %v784 = vld.sshfl [vmem:[#allocation1 + $0x18] sm:$0xff pattern:$0x75316420]
  %785 = vrot.lane.b32.xlu0 %v781, 96
  %v786 = vpop.permute.xlu0 %785
  %787 = vrot.lane.b32.xlu0 %v784, 96
  %v788 = vpop.permute.xlu0 %787
  %v791 = vpack.c.bf16 %v786, %v786
  %v792 = vpack.c.bf16 %v788, %v788
  %v794 = vsel %vm321, %v778, 0
  %v797 = vsel %vm325, %v791, 0
  %799 = vmatpush.bf16.msra.mxu0 0
  %800 = vmatpush.bf16.msra.mxu0 0
  %801 = vmatpush.bf16.msra.mxu0 0
  %802 = vmatpush.bf16.msra.mxu0 0
  %803 = vmatpush.bf16.msra.mxu0 0
  %804 = vmatpush.bf16.msra.mxu0 0
  %805 = vmatpush.bf16.msra.mxu0 0
  %806 = vmatpush.bf16.msra.mxu0 %v797
  %807 = vmatmul.bf16.gmra.mxu0 %v794
  %v808 = vpop.f32.mrf.mxu0
  %v809 = vadd.f32 0.0, %v808
  %v810 = vpop.f32.mrf.mxu0
  %811 = vdwg.mxu0
  %v813 = vsel %vm321, %v779, 0
  %v816 = vsel %vm325, %v792, 0
  %818 = vmatpush.bf16.msra.mxu0 0
  %819 = vmatpush.bf16.msra.mxu0 0
  %820 = vmatpush.bf16.msra.mxu0 0
  %821 = vmatpush.bf16.msra.mxu0 0
  %822 = vmatpush.bf16.msra.mxu0 0
  %823 = vmatpush.bf16.msra.mxu0 0
  %824 = vmatpush.bf16.msra.mxu0 0
  %825 = vmatpush.bf16.msra.mxu0 %v816
  %826 = vmatmul.bf16.gmra.mxu0 %v813
  %v827 = vpop.f32.mrf.mxu0
  %v828 = vadd.f32 0.0, %v827
  %v829 = vpop.f32.mrf.mxu0
  %830 = vdwg.mxu0
  %831 = vst [vmem:[#allocation1] ss:$2 sm:$0xff] %v143
  %v832 = vld.sshfl [vmem:[#allocation1] sm:$0xff pattern:$0x75316420]
  %s833 = scalar_lea.vmem [#allocation1], 16
  %834 = vst [vmem:[%s833] ss:$2 sm:$0xff] %v144
  %v835 = vld.sshfl [vmem:[#allocation1 + $0x10] sm:$0xff pattern:$0x75316420]
  %836 = vrot.lane.b32.xlu0 %v832, 80
  %v837 = vpop.permute.xlu0 %836
  %838 = vrot.lane.b32.xlu0 %v835, 80
  %v839 = vpop.permute.xlu0 %838
  %v842 = vsel %vm145, %v837, 0.0
  %843 = vadd.xlane.f32.xlu0 %v842
  %v844 = vpop.xlane.xlu0 %843
  %v845 = vsel %vm145, %v839, 0.0
  %846 = vadd.xlane.f32.xlu0 %v845
  %v847 = vpop.xlane.xlu0 %846
  %v848 = vmax.f32 %v844, 1e-24
  %v849 = vmax.f32 %v847, 1e-24
  %v850 = vrsqrt.pop %v848
  %v851 = vmul.f32 %v850, %v848
  %v852 = vmul.f32 %v851, %v850
  %v853 = vmul.f32 0.5, %v852
  %v854 = vsub.f32 1.5, %v853
  %v855 = vmul.f32 %v850, %v854
  %vm856 = vweird.f32 %v848
  %vm857 = vweird.f32 %v850
  %vm858 = vmor %vm856, %vm857
  %v859 = vsel %vm858, %v850, %v855
  %v860 = vrsqrt.pop %v849
  %v861 = vmul.f32 %v860, %v849
  %v862 = vmul.f32 %v861, %v860
  %v863 = vmul.f32 0.5, %v862
  %v864 = vsub.f32 1.5, %v863
  %v865 = vmul.f32 %v860, %v864
  %vm866 = vweird.f32 %v849
  %vm867 = vweird.f32 %v860
  %vm868 = vmor %vm866, %vm867
  %v869 = vsel %vm868, %v860, %v865
  %v870 = vmul.f32 %v137, %v859
  %v871 = vmul.f32 %v139, %v869
  %872 = vst [vmem:[#allocation1] ss:$2 sm:$0xff] %v143
  %v873 = vld.sshfl [vmem:[#allocation1] sm:$0xff pattern:$0x75316420]
  %s874 = scalar_lea.vmem [#allocation1], 16
  %875 = vst [vmem:[%s874] ss:$2 sm:$0xff] %v144
  %v876 = vld.sshfl [vmem:[#allocation1 + $0x10] sm:$0xff pattern:$0x75316420]
  %877 = vrot.lane.b32.xlu0 %v873, 16
  %v878 = vpop.permute.xlu0 %877
  %879 = vrot.lane.b32.xlu0 %v876, 16
  %v880 = vpop.permute.xlu0 %879
  %v883 = vsel %vm145, %v878, 0.0
  %884 = vadd.xlane.f32.xlu0 %v883
  %v885 = vpop.xlane.xlu0 %884
  %v886 = vsel %vm145, %v880, 0.0
  %887 = vadd.xlane.f32.xlu0 %v886
  %v888 = vpop.xlane.xlu0 %887
  %v889 = vmax.f32 %v885, 1e-24
  %v890 = vmax.f32 %v888, 1e-24
  %v891 = vrsqrt.pop %v889
  %v892 = vmul.f32 %v891, %v889
  %v893 = vmul.f32 %v892, %v891
  %v894 = vmul.f32 0.5, %v893
  %v895 = vsub.f32 1.5, %v894
  %v896 = vmul.f32 %v891, %v895
  %vm897 = vweird.f32 %v889
  %vm898 = vweird.f32 %v891
  %vm899 = vmor %vm897, %vm898
  %v900 = vsel %vm899, %v891, %v896
  %v901 = vrsqrt.pop %v890
  %v902 = vmul.f32 %v901, %v890
  %v903 = vmul.f32 %v902, %v901
  %v904 = vmul.f32 0.5, %v903
  %v905 = vsub.f32 1.5, %v904
  %v906 = vmul.f32 %v901, %v905
  %vm907 = vweird.f32 %v890
  %vm908 = vweird.f32 %v901
  %vm909 = vmor %vm907, %vm908
  %v910 = vsel %vm909, %v901, %v906
  %v911 = vmul.f32 %v137, %v900
  %v912 = vmul.f32 %v139, %v910
  %914 = vst [vmem:[#allocation1] ss:$2 sm:$0xff] %v870
  %v915 = vld.sshfl [vmem:[#allocation1] sm:$0xff pattern:$0x75316420]
  %916 = vrot.lane.b32.xlu0 %v915, 80
  %v917 = vpop.permute.xlu0 %916
  %919 = vst [vmem:[#allocation1] ss:$2 sm:$0xff] %v911
  %v920 = vld.sshfl [vmem:[#allocation1] sm:$0xff pattern:$0x75316420]
  %921 = vrot.lane.b32.xlu0 %v920, 16
  %v922 = vpop.permute.xlu0 %921
  %v923 = vsel %vm224, %v917, 0
  %v925 = vsel %vm224, %v922, 0
  %927 = vmatpush.xpose.msra.mxu0 0.0
  %928 = vmatpush.xpose.msra.mxu0 0.0
  %929 = vmatpush.xpose.msra.mxu0 0.0
  %930 = vmatpush.xpose.msra.mxu0 0.0
  %931 = vmatpush.xpose.msra.mxu0 0.0
  %932 = vmatpush.xpose.msra.mxu0 0.0
  %933 = vmatpush.xpose.msra.mxu0 0.0
  %934 = vmatpush.xpose.msra.mxu0 0.0
  %935 = vmatpush.xpose.msra.mxu0 0.0
  %936 = vmatpush.xpose.msra.mxu0 0.0
  %937 = vmatpush.xpose.msra.mxu0 0.0
  %938 = vmatpush.xpose.msra.mxu0 0.0
  %939 = vmatpush.xpose.msra.mxu0 0.0
  %940 = vmatpush.xpose.msra.mxu0 0.0
  %941 = vmatpush.xpose.msra.mxu0 0.0
  %942 = vmatpush.xpose.msra.mxu0 %v925
  %943 = vmatmul.f32.gmra.mxu0 %v923
  %v944 = vpop.f32.mrf.mxu0
  %v945 = vadd.f32 0.0, %v944
  %946 = vdwg.mxu0
  %948 = vst [vmem:[#allocation1] ss:$2 sm:$0xff] %v871
  %v949 = vld.sshfl [vmem:[#allocation1] sm:$0xff pattern:$0x75316420]
  %950 = vrot.lane.b32.xlu0 %v949, 80
  %v951 = vpop.permute.xlu0 %950
  %953 = vst [vmem:[#allocation1] ss:$2 sm:$0xff] %v912
  %v954 = vld.sshfl [vmem:[#allocation1] sm:$0xff pattern:$0x75316420]
  %955 = vrot.lane.b32.xlu0 %v954, 16
  %v956 = vpop.permute.xlu0 %955
  %v957 = vsel %vm224, %v951, 0
  %v959 = vsel %vm224, %v956, 0
  %961 = vmatpush.xpose.msra.mxu0 0.0
  %962 = vmatpush.xpose.msra.mxu0 0.0
  %963 = vmatpush.xpose.msra.mxu0 0.0
  %964 = vmatpush.xpose.msra.mxu0 0.0
  %965 = vmatpush.xpose.msra.mxu0 0.0
  %966 = vmatpush.xpose.msra.mxu0 0.0
  %967 = vmatpush.xpose.msra.mxu0 0.0
  %968 = vmatpush.xpose.msra.mxu0 0.0
  %969 = vmatpush.xpose.msra.mxu0 0.0
  %970 = vmatpush.xpose.msra.mxu0 0.0
  %971 = vmatpush.xpose.msra.mxu0 0.0
  %972 = vmatpush.xpose.msra.mxu0 0.0
  %973 = vmatpush.xpose.msra.mxu0 0.0
  %974 = vmatpush.xpose.msra.mxu0 0.0
  %975 = vmatpush.xpose.msra.mxu0 0.0
  %976 = vmatpush.xpose.msra.mxu0 %v959
  %977 = vmatmul.f32.gmra.mxu0 %v957
  %v978 = vpop.f32.mrf.mxu0
  %v979 = vadd.f32 0.0, %v978
  %980 = vdwg.mxu0
  %981 = vrot.lane.b32.xlu0 %v142, 125
  %v982 = vpop.permute.xlu0 %981
  %s983 = vtos %v982
  %v984 = vstv %s983
  %v985 = vmul.f32 %v945, %v984
  %v986 = vmul.f32 %v979, %v984
  %s987 = scalar_lea.vmem %s4, 12
  %v988 = vld [vmem:[%s987] sm:$0xf]
  %v989 = vadd.f32 %v985, %v988
  %v990 = vadd.f32 %v986, %v988
  %v991 = vsel %vm287, %v989, -inf
  %992 = vmax.xlane.f32.xlu0 %v991
  %v993 = vpop.xlane.xlu0 %992
  %v994 = vsel %vm287, %v990, -inf
  %995 = vmax.xlane.f32.xlu0 %v994
  %v996 = vpop.xlane.xlu0 %995
  %v997 = vsub.f32 %v989, %v993
  %v998 = vsub.f32 %v990, %v996
  %v999 = vmul.f32 %v997, 1.442695
  %v1000 = vpow.pop %v999
  %v1001 = vmul.f32 %v998, 1.442695
  %v1002 = vpow.pop %v1001
  %v1003 = vsel %vm287, %v1000, 0.0
  %1004 = vadd.xlane.f32.xlu0 %v1003
  %v1005 = vpop.xlane.xlu0 %1004
  %v1006 = vsel %vm287, %v1002, 0.0
  %1007 = vadd.xlane.f32.xlu0 %v1006
  %v1008 = vpop.xlane.xlu0 %1007
  %v1009 = vrcp.pop %v1005
  %v1010 = vrcp.pop %v1008
  %v1011 = vmul.f32 %v1000, %v1009
  %v1012 = vmul.f32 %v1002, %v1010
  %v1013 = vpack.c.bf16 %v1011, %v1011
  %v1014 = vpack.c.bf16 %v1012, %v1012
  %1015 = vst [vmem:[#allocation1] ss:$2 sm:$0xff] %v137
  %v1016 = vld.sshfl [vmem:[#allocation1 + $0x8] sm:$0xff pattern:$0x75316420]
  %s1017 = scalar_lea.vmem [#allocation1], 16
  %1018 = vst [vmem:[%s1017] ss:$2 sm:$0xff] %v139
  %v1019 = vld.sshfl [vmem:[#allocation1 + $0x18] sm:$0xff pattern:$0x75316420]
  %1020 = vrot.lane.b32.xlu0 %v1016, 80
  %v1021 = vpop.permute.xlu0 %1020
  %1022 = vrot.lane.b32.xlu0 %v1019, 80
  %v1023 = vpop.permute.xlu0 %1022
  %v1026 = vpack.c.bf16 %v1021, %v1021
  %v1027 = vpack.c.bf16 %v1023, %v1023
  %v1029 = vsel %vm321, %v1013, 0
  %v1032 = vsel %vm325, %v1026, 0
  %1034 = vmatpush.bf16.msra.mxu0 0
  %1035 = vmatpush.bf16.msra.mxu0 0
  %1036 = vmatpush.bf16.msra.mxu0 0
  %1037 = vmatpush.bf16.msra.mxu0 0
  %1038 = vmatpush.bf16.msra.mxu0 0
  %1039 = vmatpush.bf16.msra.mxu0 0
  %1040 = vmatpush.bf16.msra.mxu0 0
  %1041 = vmatpush.bf16.msra.mxu0 %v1032
  %1042 = vmatmul.bf16.gmra.mxu0 %v1029
  %v1043 = vpop.f32.mrf.mxu0
  %v1044 = vadd.f32 0.0, %v1043
  %v1045 = vpop.f32.mrf.mxu0
  %1046 = vdwg.mxu0
  %v1048 = vsel %vm321, %v1014, 0
  %v1051 = vsel %vm325, %v1027, 0
  %1053 = vmatpush.bf16.msra.mxu0 0
  %1054 = vmatpush.bf16.msra.mxu0 0
  %1055 = vmatpush.bf16.msra.mxu0 0
  %1056 = vmatpush.bf16.msra.mxu0 0
  %1057 = vmatpush.bf16.msra.mxu0 0
  %1058 = vmatpush.bf16.msra.mxu0 0
  %1059 = vmatpush.bf16.msra.mxu0 0
  %1060 = vmatpush.bf16.msra.mxu0 %v1051
  %1061 = vmatmul.bf16.gmra.mxu0 %v1048
  %v1062 = vpop.f32.mrf.mxu0
  %v1063 = vadd.f32 0.0, %v1062
  %v1064 = vpop.f32.mrf.mxu0
  %1065 = vdwg.mxu0
  %1068 = vrot.lane.b32.xlu0 %v574, 16
  %v1069 = vpop.permute.xlu0 %1068
  %1070 = vrot.lane.b32.xlu0 %v593, 16
  %v1071 = vpop.permute.xlu0 %1070
  %1076 = vrot.lane.b32.xlu0 %v809, 32
  %v1077 = vpop.permute.xlu0 %1076
  %1078 = vrot.lane.b32.xlu0 %v828, 32
  %v1079 = vpop.permute.xlu0 %1078
  %1084 = vrot.lane.b32.xlu0 %v1044, 48
  %v1085 = vpop.permute.xlu0 %1084
  %1086 = vrot.lane.b32.xlu0 %v1063, 48
  %v1087 = vpop.permute.xlu0 %1086
  %v1090 = vsel %vm224, %v339, %v1069
  %v1091 = vsel %vm224, %v358, %v1071
  %vm1092 = vcmask 261120
  %v1093 = vsel %vm1092, %v1090, %v1077
  %v1094 = vsel %vm1092, %v1091, %v1079
  %vm1095 = vcmask 392192
  %v1096 = vsel %vm1095, %v1093, %v1085
  %v1097 = vsel %vm1095, %v1094, %v1087
  %v1098 = vpack.c.bf16 %v1096, %v1096
  %v1099 = vpack.c.bf16 %v1097, %v1097
  %v1100 = vld [vmem:[%s5] sm:$0xf]
  %v1101 = vld [vmem:[%s5 + $0x4] sm:$0xf]
  %v1102 = vld [vmem:[%s5 + $0x8] sm:$0xf]
  %v1103 = vld [vmem:[%s5 + $0xc] sm:$0xf]
  %v1104 = vld [vmem:[%s5 + $0x10] sm:$0xf]
  %v1105 = vld [vmem:[%s5 + $0x14] sm:$0xf]
  %v1106 = vld [vmem:[%s5 + $0x18] sm:$0xf]
  %v1107 = vld [vmem:[%s5 + $0x1c] sm:$0xf]
  %v1108 = vld [vmem:[%s6] sm:$0x1]
  %v1110 = vperm.slane %v1108, 0
  %1112 = vst [vmem:[#allocation1] ss:$4 sm:$0xff] %v1098
  %s1114 = scalar_lea.vmem [#allocation1], 1
  %1115 = vst [vmem:[%s1114] ss:$4 sm:$0xff] %v1099
  %v1116 = vld.sshfl [vmem:[#allocation1] sm:$0xff pattern:$0x73625140]
  %v1125 = vunpack.c.l.b16 %v1100
  %v1126 = vunpack.c.l.b16 %v1101
  %v1127 = vunpack.c.l.b16 %v1102
  %v1128 = vunpack.c.l.b16 %v1103
  %v1129 = vunpack.c.l.b16 %v1104
  %v1130 = vunpack.c.l.b16 %v1105
  %v1131 = vunpack.c.l.b16 %v1106
  %v1132 = vunpack.c.l.b16 %v1107
  %v1133 = vpack.c.b16 %v1126, %v1125
  %v1134 = vpack.c.b16 %v1128, %v1127
  %v1135 = vpack.c.b16 %v1130, %v1129
  %v1136 = vpack.c.b16 %v1132, %v1131
  %1141 = vst [vmem:[#allocation1] ss:$2 sm:$0xff] %v1110
  %s1142 = scalar_lea.vmem [#allocation1], 1
  %1143 = vst [vmem:[%s1142] ss:$2 sm:$0xff] %v1110
  %v1144 = vld.sshfl [vmem:[#allocation1] sm:$0xff pattern:$0x75316420]
  %v1146 = vsel %vm105, %v1116, 0
  %1148 = vmatpush.bf16.msra.mxu0 0
  %1149 = vmatpush.bf16.msra.mxu0 0
  %1150 = vmatpush.bf16.msra.mxu0 0
  %1151 = vmatpush.bf16.msra.mxu0 0
  %1152 = vmatpush.bf16.msra.mxu0 %v1136
  %1153 = vmatpush.bf16.msra.mxu0 %v1135
  %1154 = vmatpush.bf16.msra.mxu0 %v1134
  %1155 = vmatpush.bf16.msra.mxu0 %v1133
  %1156 = vmatmul.bf16.gmra.mxu0 %v1146
  %v1157 = vpop.f32.mrf.mxu0
  %v1158 = vadd.f32 %v1144, %v1157
  %v1159 = vpop.f32.mrf.mxu0
  %1160 = vdwg.mxu0
  %v1162 = vrot.slane %v1158, 4
  %v1164 = vld [vmem:[%s7] sm:$0x1]
  %v1165 = vld [vmem:[%s8] sm:$0x1]
  %vm1166 = vcmask 519168
  %v1167 = vsel %vm1166, %v1158, 0.0
  %1168 = vadd.xlane.f32.xlu0 %v1167
  %v1169 = vpop.xlane.xlu0 %1168
  %v1170 = vsel %vm1166, %v1162, 0.0
  %1171 = vadd.xlane.f32.xlu0 %v1170
  %v1172 = vpop.xlane.xlu0 %1171
  %v1173 = vrcp.pop 64.0
  %v1174 = vmul.f32 64.0, %v1173
  %v1175 = vsub.f32 1.0, %v1174
  %v1176 = vmul.f32 %v1173, %v1175
  %v1177 = vadd.f32 %v1173, %v1176
  %vm1178 = vweird.f32 %v1173
  %v1179 = vsel %vm1178, %v1173, %v1177
  %v1180 = vmul.f32 %v1169, %v1179
  %v1181 = vmul.f32 %v1172, %v1179
  %v1182 = vsub.f32 %v1158, %v1180
  %v1183 = vsub.f32 %v1162, %v1181
  %v1184 = vmul.f32 %v1182, %v1182
  %v1185 = vmul.f32 %v1183, %v1183
  %v1186 = vsel %vm1166, %v1184, 0.0
  %1187 = vadd.xlane.f32.xlu0 %v1186
  %v1188 = vpop.xlane.xlu0 %1187
  %v1189 = vsel %vm1166, %v1185, 0.0
  %1190 = vadd.xlane.f32.xlu0 %v1189
  %v1191 = vpop.xlane.xlu0 %1190
  %v1192 = vmul.f32 %v1188, %v1179
  %v1193 = vmul.f32 %v1191, %v1179
  %v1194 = vadd.f32 %v1192, 1e-05
  %v1195 = vadd.f32 %v1193, 1e-05
  %v1196 = vrsqrt.pop %v1194
  %v1197 = vmul.f32 %v1196, %v1194
  %v1198 = vmul.f32 %v1197, %v1196
  %v1199 = vmul.f32 0.5, %v1198
  %v1200 = vsub.f32 1.5, %v1199
  %v1201 = vmul.f32 %v1196, %v1200
  %vm1202 = vweird.f32 %v1194
  %vm1203 = vweird.f32 %v1196
  %vm1204 = vmor %vm1202, %vm1203
  %v1205 = vsel %vm1204, %v1196, %v1201
  %v1206 = vrsqrt.pop %v1195
  %v1207 = vmul.f32 %v1206, %v1195
  %v1208 = vmul.f32 %v1207, %v1206
  %v1209 = vmul.f32 0.5, %v1208
  %v1210 = vsub.f32 1.5, %v1209
  %v1211 = vmul.f32 %v1206, %v1210
  %vm1212 = vweird.f32 %v1195
  %vm1213 = vweird.f32 %v1206
  %vm1214 = vmor %vm1212, %vm1213
  %v1215 = vsel %vm1214, %v1206, %v1211
  %v1216 = vmul.f32 %v1182, %v1205
  %v1217 = vmul.f32 %v1183, %v1215
  %v1219 = vperm.slane %v1164, 0
  %v1221 = vmul.f32 %v1216, %v1219
  %v1222 = vmul.f32 %v1217, %v1219
  %v1224 = vperm.slane %v1165, 0
  %v1226 = vadd.f32 %v1221, %v1224
  %v1227 = vadd.f32 %v1222, %v1224
  %v1228 = vadd.f32 %v33, %v1226
  %v1229 = vadd.f32 %v34, %v1227
  %1230 = vst.msk [vmem:[%s9] sm:$0xf] %vm1166, %v1228
  %1231 = vst.msk [vmem:[%s9 + $0x4] sm:$0xf] %vm1166, %v1229
  // Predicated region
  $region38: #{custom_swin_encoder_forward.16} parent=0 // pred_check
    _
  $region39: #{custom_swin_encoder_forward.16} parent=0 // pred_check_branch
    %1233 = sbr.rel (0) target = $region41
  $region40: #{custom_swin_encoder_forward.16} parent=0 // pred_region
    _
  $region41: #{custom_swin_encoder_forward.16} parent=0 // pred_fallthru
    _
  // Predicated region
  $region42: #{custom_swin_encoder_forward.16} parent=0 // pred_check
    _
  $region43: #{custom_swin_encoder_forward.16} parent=0 // pred_check_branch
    %1235 = sbr.rel (0) target = $region45
  $region44: #{custom_swin_encoder_forward.16} parent=0 // pred_region
    _
  $region45: #{custom_swin_encoder_forward.16} parent=0 // pred_fallthru
    _

// kernel: custom_swin_encoder_forward.19
$region0: #{custom_swin_encoder_forward.19}
  #allocation0 [shape = 'u32[]', space=smem, size = 0x4, offset = 0x4, fixed_abs, tag = 'smem constant byte address 0x4 - core index']
  #allocation1 [shape = 'u32[72,128]{1,0:T(1,128)}', space=vmem, size = 0x9000, scoped, tag = 'internal scratch']
  %s0 = inlined_call_operand.vmem [shape: f32[8,64], index: 0, kind: input, shape index: {}]
  %s1 = inlined_call_operand.vmem [shape: bf16[64,256], index: 1, kind: input, shape index: {}]
  %s2 = inlined_call_operand.vmem [shape: f32[1,256], index: 2, kind: input, shape index: {}]
  %s3 = inlined_call_operand.vmem [shape: bf16[256,64], index: 3, kind: input, shape index: {}]
  %s4 = inlined_call_operand.vmem [shape: f32[1,64], index: 4, kind: input, shape index: {}]
  %s5 = inlined_call_operand.vmem [shape: f32[1,64], index: 5, kind: input, shape index: {}]
  %s6 = inlined_call_operand.vmem [shape: f32[1,64], index: 6, kind: input, shape index: {}]
  %s7 = inlined_call_operand.hbm [shape: f32[8,64], index: 7, kind: output, shape index: {}]
  %s8 = sld [smem:[#allocation0]]
  $region38: #{custom_swin_encoder_forward.19} parent=0
    _
  %s10 = ssub.s32 1, %s8
  %s11 = scalar_select 0, %s10, %s8
  $region1: #{custom_swin_encoder_forward.19} parent=0
    #allocation2 [shape = 'u8[4096]{0}', space=vmem, size = 0x1000, scoped, tag = 'output window, operand 0, single buffered']
    #allocation3 [shape = 's32[1]{0}', space=sflag, size = 0x4, scoped, tag = 'scoped memory for custom_swin_encoder_forward.19']
    %12 = vsyncpa [#allocation3], 0
    // Predicated region
    $region2: #{custom_swin_encoder_forward.19} parent=1 // pred_check
      _
    $region3: #{custom_swin_encoder_forward.19} parent=1 // pred_check_branch
      %14 = sbr.rel (0) target = $region5
    $region4: #{custom_swin_encoder_forward.19} parent=1 // pred_region
      _
    $region5: #{custom_swin_encoder_forward.19} parent=1 // pred_fallthru
      _
    // Predicated region
    $region6: #{custom_swin_encoder_forward.19} parent=1 // pred_check
      _
    $region7: #{custom_swin_encoder_forward.19} parent=1 // pred_check_branch
      %16 = sbr.rel (0) target = $region9
    $region8: #{custom_swin_encoder_forward.19} parent=1 // pred_region
      _
    $region9: #{custom_swin_encoder_forward.19} parent=1 // pred_fallthru
      _
    // Predicated region
    $region10: #{custom_swin_encoder_forward.19} parent=1 // pred_check
      _
    $region11: #{custom_swin_encoder_forward.19} parent=1 // pred_check_branch
      %18 = sbr.rel (0) target = $region13
    $region12: #{custom_swin_encoder_forward.19} parent=1 // pred_region
      _
    $region13: #{custom_swin_encoder_forward.19} parent=1 // pred_fallthru
      _
    // Predicated region
    $region14: #{custom_swin_encoder_forward.19} parent=1 // pred_check
      _
    $region15: #{custom_swin_encoder_forward.19} parent=1 // pred_check_branch
      %20 = sbr.rel (0) target = $region17
    $region16: #{custom_swin_encoder_forward.19} parent=1 // pred_region
      _
    $region17: #{custom_swin_encoder_forward.19} parent=1 // pred_fallthru
      _
    // Predicated region
    $region18: #{custom_swin_encoder_forward.19} parent=1 // pred_check
      _
    $region19: #{custom_swin_encoder_forward.19} parent=1 // pred_check_branch
      %22 = sbr.rel (0) target = $region21
    $region20: #{custom_swin_encoder_forward.19} parent=1 // pred_region
      _
    $region21: #{custom_swin_encoder_forward.19} parent=1 // pred_fallthru
      _
    // Predicated region
    $region22: #{custom_swin_encoder_forward.19} parent=1 // pred_check
      _
    $region23: #{custom_swin_encoder_forward.19} parent=1 // pred_check_branch
      %24 = sbr.rel (0) target = $region25
    $region24: #{custom_swin_encoder_forward.19} parent=1 // pred_region
      _
    $region25: #{custom_swin_encoder_forward.19} parent=1 // pred_fallthru
      _
    // Predicated region
    $region26: #{custom_swin_encoder_forward.19} parent=1 // pred_check
      _
    $region27: #{custom_swin_encoder_forward.19} parent=1 // pred_check_branch
      %26 = sbr.rel (0) target = $region29
    $region28: #{custom_swin_encoder_forward.19} parent=1 // pred_region
      _
    $region29: #{custom_swin_encoder_forward.19} parent=1 // pred_fallthru
      _
    %v28 = vld [vmem:[%s0] sm:$0xff]
    %v29 = vpack.c.bf16 %v28, %v28
    %v30 = vld [vmem:[%s1] sm:$0xff]
    %v31 = vld [vmem:[%s1 + $0x8] sm:$0xff]
    %v32 = vld [vmem:[%s1 + $0x10] sm:$0xff]
    %v33 = vld [vmem:[%s1 + $0x18] sm:$0xff]
    %v34 = vld [vmem:[%s1 + $0x20] sm:$0xff]
    %v35 = vld [vmem:[%s1 + $0x28] sm:$0xff]
    %v36 = vld [vmem:[%s1 + $0x30] sm:$0xff]
    %v37 = vld [vmem:[%s1 + $0x38] sm:$0xff]
    %v38 = vld [vmem:[%s2] sm:$0x3]
    %v40 = vperm.slane %v38, 0
    %v41 = vperm.slane %v38, 1
    %v52 = vunpack.c.l.b16 %v30
    %v53 = vunpack.c.h.b16 %v30
    %v54 = vunpack.c.l.b16 %v31
    %v55 = vunpack.c.h.b16 %v31
    %v56 = vunpack.c.l.b16 %v32
    %v57 = vunpack.c.h.b16 %v32
    %v58 = vunpack.c.l.b16 %v33
    %v59 = vunpack.c.h.b16 %v33
    %v60 = vunpack.c.l.b16 %v34
    %v61 = vunpack.c.h.b16 %v34
    %v62 = vunpack.c.l.b16 %v35
    %v63 = vunpack.c.h.b16 %v35
    %v64 = vunpack.c.l.b16 %v36
    %v65 = vunpack.c.h.b16 %v36
    %v66 = vunpack.c.l.b16 %v37
    %v67 = vunpack.c.h.b16 %v37
    %v68 = vpack.c.b16 %v54, %v52
    %v69 = vpack.c.b16 %v55, %v53
    %v70 = vpack.c.b16 %v58, %v56
    %v71 = vpack.c.b16 %v59, %v57
    %v72 = vpack.c.b16 %v62, %v60
    %v73 = vpack.c.b16 %v63, %v61
    %v74 = vpack.c.b16 %v66, %v64
    %v75 = vpack.c.b16 %v67, %v65
    %vm84 = vcmask 523264
    %v86 = vsel %vm84, %v29, 0
    %88 = vmatpush.bf16.msra.mxu0 0
    %89 = vmatpush.bf16.msra.mxu0 0
    %90 = vmatpush.bf16.msra.mxu0 0
    %91 = vmatpush.bf16.msra.mxu0 0
    %92 = vmatpush.bf16.msra.mxu0 %v74
    %93 = vmatpush.bf16.msra.mxu0 %v72
    %94 = vmatpush.bf16.msra.mxu0 %v70
    %95 = vmatpush.bf16.msra.mxu0 %v68
    %96 = vmatmul.bf16.gmra.mxu0 %v86
    %v97 = vpop.f32.mrf.mxu0
    %v98 = vadd.f32 %v40, %v97
    %v99 = vpop.f32.mrf.mxu0
    %100 = vdwg.mxu0
    %101 = vmatpush.bf16.msra.mxu0 0
    %102 = vmatpush.bf16.msra.mxu0 0
    %103 = vmatpush.bf16.msra.mxu0 0
    %104 = vmatpush.bf16.msra.mxu0 0
    %105 = vmatpush.bf16.msra.mxu0 %v75
    %106 = vmatpush.bf16.msra.mxu0 %v73
    %107 = vmatpush.bf16.msra.mxu0 %v71
    %108 = vmatpush.bf16.msra.mxu0 %v69
    %109 = vmatmul.bf16.gmra.mxu0 %v86
    %v110 = vpop.f32.mrf.mxu0
    %v111 = vadd.f32 %v41, %v110
    %v112 = vpop.f32.mrf.mxu0
    %113 = vdwg.mxu0
    %v114 = vmul.f32 %v98, 0.5
    %v115 = vmul.f32 %v111, 0.5
    %v116 = vmul.f32 %v98, 0.044715
    %v117 = vmul.f32 %v111, 0.044715
    %v118 = vmul.f32 %v116, %v98
    %v119 = vmul.f32 %v117, %v111
    %v120 = vmul.f32 %v118, %v98
    %v121 = vmul.f32 %v119, %v111
    %v122 = vadd.f32 %v98, %v120
    %v123 = vadd.f32 %v111, %v121
    %v124 = vmul.f32 %v122, 0.7978846
    %v125 = vmul.f32 %v123, 0.7978846
    %v126 = vtanh.pop %v124
    %v127 = vtanh.pop %v125
    %v128 = vadd.f32 %v126, 1.0
    %v129 = vadd.f32 %v127, 1.0
    %v130 = vmul.f32 %v114, %v128
    %v131 = vmul.f32 %v115, %v129
    %v132 = vpack.c.bf16 %v130, %v130
    %v133 = vpack.c.bf16 %v131, %v131
    %v134 = vld [vmem:[%s3] sm:$0xf]
    %v135 = vld [vmem:[%s3 + $0x4] sm:$0xf]
    %v136 = vld [vmem:[%s3 + $0x8] sm:$0xf]
    %v137 = vld [vmem:[%s3 + $0xc] sm:$0xf]
    %v138 = vld [vmem:[%s3 + $0x10] sm:$0xf]
    %v139 = vld [vmem:[%s3 + $0x14] sm:$0xf]
    %v140 = vld [vmem:[%s3 + $0x18] sm:$0xf]
    %v141 = vld [vmem:[%s3 + $0x1c] sm:$0xf]
    %v142 = vld [vmem:[%s3 + $0x20] sm:$0xf]
    %v143 = vld [vmem:[%s3 + $0x24] sm:$0xf]
    %v144 = vld [vmem:[%s3 + $0x28] sm:$0xf]
    %v145 = vld [vmem:[%s3 + $0x2c] sm:$0xf]
    %v146 = vld [vmem:[%s3 + $0x30] sm:$0xf]
    %v147 = vld [vmem:[%s3 + $0x34] sm:$0xf]
    %v148 = vld [vmem:[%s3 + $0x38] sm:$0xf]
    %v149 = vld [vmem:[%s3 + $0x3c] sm:$0xf]
    %v150 = vld [vmem:[%s3 + $0x40] sm:$0xf]
    %v151 = vld [vmem:[%s3 + $0x44] sm:$0xf]
    %v152 = vld [vmem:[%s3 + $0x48] sm:$0xf]
    %v153 = vld [vmem:[%s3 + $0x4c] sm:$0xf]
    %v154 = vld [vmem:[%s3 + $0x50] sm:$0xf]
    %v155 = vld [vmem:[%s3 + $0x54] sm:$0xf]
    %v156 = vld [vmem:[%s3 + $0x58] sm:$0xf]
    %v157 = vld [vmem:[%s3 + $0x5c] sm:$0xf]
    %v158 = vld [vmem:[%s3 + $0x60] sm:$0xf]
    %v159 = vld [vmem:[%s3 + $0x64] sm:$0xf]
    %v160 = vld [vmem:[%s3 + $0x68] sm:$0xf]
    %v161 = vld [vmem:[%s3 + $0x6c] sm:$0xf]
    %v162 = vld [vmem:[%s3 + $0x70] sm:$0xf]
    %v163 = vld [vmem:[%s3 + $0x74] sm:$0xf]
    %v164 = vld [vmem:[%s3 + $0x78] sm:$0xf]
    %v165 = vld [vmem:[%s3 + $0x7c] sm:$0xf]
    %v166 = vld [vmem:[%s4] sm:$0x1]
    %v168 = vperm.slane %v166, 0
    %v202 = vunpack.c.l.b16 %v134
    %v203 = vunpack.c.l.b16 %v135
    %v204 = vunpack.c.l.b16 %v136
    %v205 = vunpack.c.l.b16 %v137
    %v206 = vunpack.c.l.b16 %v138
    %v207 = vunpack.c.l.b16 %v139
    %v208 = vunpack.c.l.b16 %v140
    %v209 = vunpack.c.l.b16 %v141
    %v210 = vunpack.c.l.b16 %v142
    %v211 = vunpack.c.l.b16 %v143
    %v212 = vunpack.c.l.b16 %v144
    %v213 = vunpack.c.l.b16 %v145
    %v214 = vunpack.c.l.b16 %v146
    %v215 = vunpack.c.l.b16 %v147
    %v216 = vunpack.c.l.b16 %v148
    %v217 = vunpack.c.l.b16 %v149
    %v218 = vunpack.c.l.b16 %v150
    %v219 = vunpack.c.l.b16 %v151
    %v220 = vunpack.c.l.b16 %v152
    %v221 = vunpack.c.l.b16 %v153
    %v222 = vunpack.c.l.b16 %v154
    %v223 = vunpack.c.l.b16 %v155
    %v224 = vunpack.c.l.b16 %v156
    %v225 = vunpack.c.l.b16 %v157
    %v226 = vunpack.c.l.b16 %v158
    %v227 = vunpack.c.l.b16 %v159
    %v228 = vunpack.c.l.b16 %v160
    %v229 = vunpack.c.l.b16 %v161
    %v230 = vunpack.c.l.b16 %v162
    %v231 = vunpack.c.l.b16 %v163
    %v232 = vunpack.c.l.b16 %v164
    %v233 = vunpack.c.l.b16 %v165
    %v234 = vpack.c.b16 %v203, %v202
    %v235 = vpack.c.b16 %v205, %v204
    %v236 = vpack.c.b16 %v207, %v206
    %v237 = vpack.c.b16 %v209, %v208
    %v238 = vpack.c.b16 %v211, %v210
    %v239 = vpack.c.b16 %v213, %v212
    %v240 = vpack.c.b16 %v215, %v214
    %v241 = vpack.c.b16 %v217, %v216
    %v242 = vpack.c.b16 %v219, %v218
    %v243 = vpack.c.b16 %v221, %v220
    %v244 = vpack.c.b16 %v223, %v222
    %v245 = vpack.c.b16 %v225, %v224
    %v246 = vpack.c.b16 %v227, %v226
    %v247 = vpack.c.b16 %v229, %v228
    %v248 = vpack.c.b16 %v231, %v230
    %v249 = vpack.c.b16 %v233, %v232
    %266 = vmatpush.bf16.msra.mxu0 %v241
    %267 = vmatpush.bf16.msra.mxu0 %v240
    %268 = vmatpush.bf16.msra.mxu0 %v239
    %269 = vmatpush.bf16.msra.mxu0 %v238
    %270 = vmatpush.bf16.msra.mxu0 %v237
    %271 = vmatpush.bf16.msra.mxu0 %v236
    %272 = vmatpush.bf16.msra.mxu0 %v235
    %273 = vmatpush.bf16.msra.mxu0 %v234
    %274 = vmatmul.bf16.gmra.mxu0 %v132
    %v275 = vpop.f32.mrf.mxu0
    %v276 = vadd.f32 %v168, %v275
    %v277 = vpop.f32.mrf.mxu0
    %278 = vdwg.mxu0
    %279 = vmatpush.bf16.msra.mxu0 %v249
    %280 = vmatpush.bf16.msra.mxu0 %v248
    %281 = vmatpush.bf16.msra.mxu0 %v247
    %282 = vmatpush.bf16.msra.mxu0 %v246
    %283 = vmatpush.bf16.msra.mxu0 %v245
    %284 = vmatpush.bf16.msra.mxu0 %v244
    %285 = vmatpush.bf16.msra.mxu0 %v243
    %286 = vmatpush.bf16.msra.mxu0 %v242
    %287 = vmatmul.bf16.gmra.mxu0 %v133
    %v288 = vpop.f32.mrf.mxu0
    %v289 = vadd.f32 %v276, %v288
    %v290 = vpop.f32.mrf.mxu0
    %291 = vdwg.mxu0
    %v292 = vld [vmem:[%s5] sm:$0x1]
    %v293 = vld [vmem:[%s6] sm:$0x1]
    %v294 = vsel %vm84, %v289, 0.0
    %295 = vadd.xlane.f32.xlu0 %v294
    %v296 = vpop.xlane.xlu0 %295
    %v297 = vrcp.pop 64.0
    %v298 = vmul.f32 64.0, %v297
    %v299 = vsub.f32 1.0, %v298
    %v300 = vmul.f32 %v297, %v299
    %v301 = vadd.f32 %v297, %v300
    %vm302 = vweird.f32 %v297
    %v303 = vsel %vm302, %v297, %v301
    %v304 = vmul.f32 %v296, %v303
    %v305 = vsub.f32 %v289, %v304
    %v306 = vmul.f32 %v305, %v305
    %v307 = vsel %vm84, %v306, 0.0
    %308 = vadd.xlane.f32.xlu0 %v307
    %v309 = vpop.xlane.xlu0 %308
    %v310 = vmul.f32 %v309, %v303
    %v311 = vadd.f32 %v310, 1e-05
    %v312 = vrsqrt.pop %v311
    %v313 = vmul.f32 %v312, %v311
    %v314 = vmul.f32 %v313, %v312
    %v315 = vmul.f32 0.5, %v314
    %v316 = vsub.f32 1.5, %v315
    %v317 = vmul.f32 %v312, %v316
    %vm318 = vweird.f32 %v311
    %vm319 = vweird.f32 %v312
    %vm320 = vmor %vm318, %vm319
    %v321 = vsel %vm320, %v312, %v317
    %v322 = vmul.f32 %v305, %v321
    %v324 = vperm.slane %v292, 0
    %v326 = vmul.f32 %v322, %v324
    %v328 = vperm.slane %v293, 0
    %v330 = vadd.f32 %v326, %v328
    %v331 = vadd.f32 %v28, %v330
    %332 = vst.msk [vmem:[#allocation2] sm:$0xff] %vm84, %v331
    // Predicated region
    $region30: #{custom_swin_encoder_forward.19} parent=1 // pred_check
      _
    $region31: #{custom_swin_encoder_forward.19} parent=1 // pred_check_branch
      %334 = sbr.rel (0) target = $region33
    $region32: #{custom_swin_encoder_forward.19} parent=1 // pred_region
      %336 = vsyncadd [#allocation3], 0
      %s338 = sshll.u32 [#allocation2], 4
      %s339 = int_to_ptr.vmem [resolvable:$true] %s338
      %s340 = sshll.u32 %s7, 4
      %s341 = int_to_ptr.hbm [resolvable:$true] %s340
      %343 = dma.vmem_to_hbm [thread:$0]  %s339, 128, %s341, [#allocation3]
    $region33: #{custom_swin_encoder_forward.19} parent=1 // pred_fallthru
      _
    // Predicated region
    $region34: #{custom_swin_encoder_forward.19} parent=1 // pred_check
      _
    $region35: #{custom_swin_encoder_forward.19} parent=1 // pred_check_branch
      %345 = sbr.rel (0) target = $region37
    $region36: #{custom_swin_encoder_forward.19} parent=1 // pred_region
      %347 = dma.done [#allocation3], 128
    $region37: #{custom_swin_encoder_forward.19} parent=1 // pred_fallthru
      _
    %348 = vsyncpa [#allocation3], 1

</llo_original>
